<compile_context>
chip_gen: v6e
topology: v6e:2x2x1
jax: 0.10.0
libtpu: 0.0.40
codegen_flags: <defaults>
</compile_context>

<pallas_src>
import functools

import jax
import jax.numpy as jnp
from jax.experimental import pallas as pl
from jax.experimental.pallas import tpu as pltpu

EPS = 1e-5


def _vmem_limit_bytes():
    # Stay well under v7x's 64 MiB physical per-TC VMEM while still raising the default
    # scoped limit on v5e/v6e.
    try:
        cap = pltpu.get_tpu_info().vmem_capacity_bytes
        return int(min(48 * 1024 * 1024, (cap * 3) // 4))
    except Exception:
        return 48 * 1024 * 1024


VMEM_LIMIT = _vmem_limit_bytes()


# ---------------------------------------------------------------------------
# MaxPool3d(kernel_size=2)  ->  zero-padded channels-last buffer for the conv
# ---------------------------------------------------------------------------
def _maxpool_pad_kernel(a_ref, b_ref, o_ref, *, C, H2, W2, D2):
    # a_ref / b_ref: (1, H2, 2, W2, 2*C) -- the two depth planes of each 2x2x2 window.
    dp = pl.program_id(1)
    v = jnp.maximum(a_ref[0], b_ref[0])                 # depth pair   -> (H2, 2, W2, 2C)
    v = jnp.maximum(v[:, 0], v[:, 1])                   # height pair  -> (H2, W2, 2C)
    v = jnp.maximum(v[..., :C], v[..., C:])             # width pair   -> (H2, W2, C)
    interior = jnp.logical_and(dp >= 1, dp <= D2)       # depth-padding planes are all-zero
    v = jnp.where(interior, v, jnp.zeros_like(v))
    o_ref[...] = jnp.zeros_like(o_ref)                  # (H, W) halo border stays zero
    o_ref[0, 0, 1:H2 + 1, 1:W2 + 1, :] = v


def maxpool3d_2x2x2_pad(xl):
    """(N, D, H, W, C) channels-last -> zero-padded (N, D/2+2, H/2+3, W/2+2, C).

    The pooled activation is written directly in the padded layout the following conv
    consumes, so no separate XLA-side jnp.pad pass ever touches HBM.
    """
    N, D, H, W, C = xl.shape
    # TODO(synk): PyTorch MaxPool3d(2) floors odd trailing dims; only even dims supported.
    assert D % 2 == 0 and H % 2 == 0 and W % 2 == 0
    D2, H2, W2 = D // 2, H // 2, W // 2
    Dp, Hp, Wp = D2 + 2, H2 + 3, W2 + 2
    xr = xl.reshape(N * D, H2, 2, W2, 2 * C)            # free reshape; pooling pairs on
                                                        # leading dims / lane halves

    def a_map(n, dp):
        j = n * D2 + jnp.clip(dp - 1, 0, D2 - 1)        # clamped; boundary planes zeroed in-kernel
        return (2 * j, 0, 0, 0, 0)

    def b_map(n, dp):
        j = n * D2 + jnp.clip(dp - 1, 0, D2 - 1)
        return (2 * j + 1, 0, 0, 0, 0)

    return pl.pallas_call(
        functools.partial(_maxpool_pad_kernel, C=C, H2=H2, W2=W2, D2=D2),
        out_shape=jax.ShapeDtypeStruct((N, Dp, Hp, Wp, C), xl.dtype),
        grid=(N, Dp),
        in_specs=[pl.BlockSpec((1, H2, 2, W2, 2 * C), a_map),
                  pl.BlockSpec((1, H2, 2, W2, 2 * C), b_map)],
        out_specs=pl.BlockSpec((1, 1, Hp, Wp, C), lambda n, dp: (n, dp, 0, 0, 0)),
        compiler_params=pltpu.CompilerParams(
            dimension_semantics=("parallel", "parallel"), vmem_limit_bytes=VMEM_LIMIT),
    )(xr, xr)


# ---------------------------------------------------------------------------
# Conv3d(k=3, p=1) as a single tap-folded matmul  +  BatchNorm partial stats
# ---------------------------------------------------------------------------
def _conv_im2col_kernel(xc_ref, xh1_ref, xh2_ref, w_ref, m_ref, z_ref, st_ref, stk_ref,
                        *, Dt, Pp, Wp, Cin, L, tail):
    # Stage the Dt + 2 padded depth planes contiguously (rows = flattened (Hp, Wp)).
    for t in range(Dt):
        stk_ref[t * Pp:(t + 1) * Pp, :] = xc_ref[0, t]
    stk_ref[Dt * Pp:(Dt + 1) * Pp, :] = xh1_ref[0, 0]
    stk_ref[(Dt + 1) * Pp:(Dt + 2) * Pp, :] = xh2_ref[0, 0]
    stk_ref[(Dt + 2) * Pp:, :] = jnp.zeros((tail, Cin), stk_ref.dtype)   # over-read rows stay finite

    # im2col: every tap window is a plain sublane-offset slice; lane-concatenating the 27
    # windows folds all taps into the contraction dim -> one (L, 27*Cin) x (27*Cin, Cout) dot.
    pieces = []
    for kd in range(3):
        for kh in range(3):
            for kw in range(3):
                s = kd * Pp + kh * Wp + kw
                pieces.append(stk_ref[s:s + L, :])
    lhs = jnp.concatenate(pieces, axis=-1)                                 # (L, 27*Cin) bf16
    acc = jnp.dot(lhs, w_ref[...], preferred_element_type=jnp.float32)    # (L, Cout) f32

    z_ref[0, 0] = acc.astype(z_ref.dtype)                                  # bf16 intermediate
    am = acc * m_ref[...]                                                  # hoisted 0/1 row mask
    st_ref[0, 0, 0:1, :] = jnp.sum(am, axis=0, keepdims=True)
    st_ref[0, 0, 1:2, :] = jnp.sum(am * acc, axis=0, keepdims=True)


# ---------------------------------------------------------------------------
# BatchNorm affine + ReLU (pass 2): padded buffer for the next conv, or final output
# ---------------------------------------------------------------------------
def _bn_relu_pad_kernel(z_ref, s_ref, t_ref, o_ref, *, H, W, D2):
    # Writes one depth plane of the NEXT conv's zero-padded input buffer.
    dp = pl.program_id(1)
    v = z_ref[0, 0, 0:H, 0:W, :].astype(jnp.float32)      # strip garbage rows/cols
    y = jnp.maximum(v * s_ref[...] + t_ref[...], 0.0)
    interior = jnp.logical_and(dp >= 1, dp <= D2)
    y = jnp.where(interior, y, jnp.zeros_like(y))
    o_ref[...] = jnp.zeros_like(o_ref)
    o_ref[0, 0, 1:H + 1, 1:W + 1, :] = y.astype(o_ref.dtype)


def _bn_relu_out_kernel(z_ref, s_ref, t_ref, o_ref, *, H, W):
    v = z_ref[0, :, 0:H, 0:W, :].astype(jnp.float32)
    y = jnp.maximum(v * s_ref[...] + t_ref[...], 0.0)
    o_ref[0] = y.astype(o_ref.dtype)


def _pick_dt(D2, Pp, Cin, Cout, budget):
    """Largest divisor of D2 whose per-step working set fits the VMEM budget."""
    dt = 1
    for cand in range(1, D2 + 1):
        if D2 % cand:
            continue
        l = cand * Pp
        per_step = (2 * l * Cin * 2                    # center block (double-buffered)
                    + 4 * Pp * Cin * 2                 # halo planes (double-buffered)
                    + ((cand + 2) * Pp + 64) * Cin * 2 # plane-stack scratch
                    + l * 27 * Cin * 2                 # im2col operand
                    + l * Cout * 4                     # f32 matmul result
                    + 2 * l * Cout * 2)                # z output block (double-buffered)
        if per_step <= budget:
            dt = cand
    return dt


def conv3x3x3_bn_relu(x_pad, w, gamma, beta, *, final):
    """x_pad: zero-padded channels-last activations (N, D+2, H+3, W+2, Cin), bf16.

    Returns the next conv's zero-padded input buffer (final=False, bf16) or the compact
    (N, D, H, W, Cout) float32 activations (final=True).
    """
    N, Dp, Hp, Wp, Cin = x_pad.shape
    D2, H, W = Dp - 2, Hp - 3, Wp - 2
    Cout = w.shape[0]
    Pp = Hp * Wp                      # flattened padded plane rows (incl. garbage rows/cols)
    K = 27 * Cin
    Dt = _pick_dt(D2, Pp, Cin, Cout, VMEM_LIMIT // 4)
    Gd = D2 // Dt
    L = Dt * Pp
    tail = 2 * Wp + 2                 # scratch rows touched by the last tap window

    xf = x_pad.reshape(N, Dp, Pp, Cin)                    # free reshape (rows -> sublanes)
    # tap-major weights: K index = ((kd*3+kh)*3+kw)*Cin + cin  -> matches the lane concat.
    wt = jnp.transpose(w, (2, 3, 4, 1, 0)).reshape(K, Cout).astype(jnp.bfloat16)
    # Hoisted 0/1 validity mask for the garbage rows/cols (BN stats only see real outputs).
    q = jnp.arange(L, dtype=jnp.int32) % Pp
    mask = (((q // Wp) < H) & ((q % Wp) < W)).astype(jnp.float32).reshape(L, 1)

    def halo_map(k):
        return lambda n, db: (n, db * Dt + Dt + k, 0, 0)

    flops = 2 * N * Gd * L * K * Cout
    bytes_accessed = (N * (D2 + 2 * Gd) * Pp * Cin * 2 + K * Cout * 2
                      + N * Gd * L * Cout * 2 + N * Gd * 2 * Cout * 4)

    z, stats = pl.pallas_call(
        functools.partial(_conv_im2col_kernel, Dt=Dt, Pp=Pp, Wp=Wp, Cin=Cin, L=L, tail=tail),
        out_shape=(jax.ShapeDtypeStruct((N, Gd, L, Cout), jnp.bfloat16),
                   jax.ShapeDtypeStruct((N, Gd, 2, Cout), jnp.float32)),
        grid=(N, Gd),
        in_specs=[pl.BlockSpec((1, Dt, Pp, Cin), lambda n, db: (n, db, 0, 0)),
                  pl.BlockSpec((1, 1, Pp, Cin), halo_map(0)),
                  pl.BlockSpec((1, 1, Pp, Cin), halo_map(1)),
                  # Weight / mask block indices never change, so they stay resident in VMEM.
                  pl.BlockSpec((K, Cout), lambda n, db: (0, 0)),
                  pl.BlockSpec((L, 1), lambda n, db: (0, 0))],
        out_specs=(pl.BlockSpec((1, 1, L, Cout), lambda n, db: (n, db, 0, 0)),
                   pl.BlockSpec((1, 1, 2, Cout), lambda n, db: (n, db, 0, 0))),
        scratch_shapes=[pltpu.VMEM(((Dt + 2) * Pp + tail, Cin), jnp.bfloat16)],
        compiler_params=pltpu.CompilerParams(
            dimension_semantics=("parallel", "parallel"), vmem_limit_bytes=VMEM_LIMIT),
        cost_estimate=pl.CostEstimate(flops=flops, transcendentals=0,
                                      bytes_accessed=bytes_accessed),
    )(xf, xf, xf, wt, mask)

    # Global batch statistics (PyTorch BatchNorm3d train mode: biased var, eps=1e-5).
    count = N * D2 * H * W
    mean = stats[:, :, 0, :].sum(axis=(0, 1)) / count
    var = jnp.maximum(stats[:, :, 1, :].sum(axis=(0, 1)) / count - mean * mean, 0.0)
    scale = (gamma * jax.lax.rsqrt(var + EPS)).reshape(1, Cout)
    shift = beta.reshape(1, Cout) - mean.reshape(1, Cout) * scale
    # NOTE: the Conv3d bias is omitted on purpose -- with batch-stat BN the mean absorbs it,
    # so the normalized output is mathematically identical without it.

    z5 = z.reshape(N, D2, Hp, Wp, Cout)                   # free reshape back to (plane, row, col)

    if final:
        return pl.pallas_call(
            functools.partial(_bn_relu_out_kernel, H=H, W=W),
            out_shape=jax.ShapeDtypeStruct((N, D2, H, W, Cout), jnp.float32),
            grid=(N, Gd),
            in_specs=[pl.BlockSpec((1, Dt, Hp, Wp, Cout), lambda n, db: (n, db, 0, 0, 0)),
                      pl.BlockSpec((1, Cout), lambda n, db: (0, 0)),
                      pl.BlockSpec((1, Cout), lambda n, db: (0, 0))],
            out_specs=pl.BlockSpec((1, Dt, H, W, Cout), lambda n, db: (n, db, 0, 0, 0)),
            compiler_params=pltpu.CompilerParams(
                dimension_semantics=("parallel", "parallel"), vmem_limit_bytes=VMEM_LIMIT),
        )(z5, scale, shift)

    return pl.pallas_call(
        functools.partial(_bn_relu_pad_kernel, H=H, W=W, D2=D2),
        out_shape=jax.ShapeDtypeStruct((N, Dp, Hp, Wp, Cout), jnp.bfloat16),
        grid=(N, Dp),
        in_specs=[pl.BlockSpec((1, 1, Hp, Wp, Cout),
                               lambda n, dp: (n, jnp.clip(dp - 1, 0, D2 - 1), 0, 0, 0)),
                  pl.BlockSpec((1, Cout), lambda n, dp: (0, 0)),
                  pl.BlockSpec((1, Cout), lambda n, dp: (0, 0))],
        out_specs=pl.BlockSpec((1, 1, Hp, Wp, Cout), lambda n, dp: (n, dp, 0, 0, 0)),
        compiler_params=pltpu.CompilerParams(
            dimension_semantics=("parallel", "parallel"), vmem_limit_bytes=VMEM_LIMIT),
    )(z5, scale, shift)


# ---------------------------------------------------------------------------
# SendDown forward
# ---------------------------------------------------------------------------
@jax.jit
def send_down(x, params):
    """x: (N, C_in, D, H, W)  ->  (N, C_out, D/2, H/2, W/2)."""
    xl = jnp.transpose(x, (0, 2, 3, 4, 1)).astype(jnp.bfloat16)      # NCDHW -> NDHWC
    p = maxpool3d_2x2x2_pad(xl)                                      # padded pooled buffer
    h = conv3x3x3_bn_relu(p, params["w1"], params["g1"], params["be1"], final=False)
    o = conv3x3x3_bn_relu(h, params["w2"], params["g2"], params["be2"], final=True)
    return jnp.transpose(o, (0, 4, 1, 2, 3))                         # back to NCDHW


def init_params(key, in_channels, out_channels):
    mid_channels = out_channels
    k = jax.random.split(key, 4)

    def conv_init(kw, kb, cout, cin):
        bound = 1.0 / jnp.sqrt(cin * 27.0)                           # kaiming-uniform style
        w = jax.random.uniform(kw, (cout, cin, 3, 3, 3), jnp.float32, -bound, bound)
        b = jax.random.uniform(kb, (cout,), jnp.float32, -bound, bound)
        return w, b

    w1, b1 = conv_init(k[0], k[1], mid_channels, in_channels)
    w2, b2 = conv_init(k[2], k[3], out_channels, mid_channels)
    return {
        # b1/b2 kept for state-dict parity with PyTorch; they cancel under batch-stat BN
        # and are therefore not used in the kernels.
        "w1": w1, "b1": b1,
        "g1": jnp.ones((mid_channels,), jnp.float32),                # BN weight init = 1
        "be1": jnp.zeros((mid_channels,), jnp.float32),              # BN bias init = 0
        "w2": w2, "b2": b2,
        "g2": jnp.ones((out_channels,), jnp.float32),
        "be2": jnp.zeros((out_channels,), jnp.float32),
    }


if __name__ == "__main__":
    key = jax.random.PRNGKey(0)
    k_x, k_p = jax.random.split(key)

    N, C_in, C_out = 2, 4, 8
    D = H = W = 8                                                    # pooled to 4x4x4
    x = jax.random.normal(k_x, (N, C_in, D, H, W), jnp.float32)      # NCDHW like PyTorch
    params = init_params(k_p, C_in, C_out)

    out = send_down(x, params)
    out = jax.block_until_ready(out)
    assert out.shape == (N, C_out, D // 2, H // 2, W // 2), out.shape
    assert bool(jnp.all(out >= 0.0))                                 # ReLU output
    print("KERNEL_OK")
</pallas_src>

<mosaic_0001>
module attributes {stable_mosaic.version = 11 : i64} {
  func.func @_maxpool_pad_kernel(%arg0: i32, %arg1: i32, %arg2: memref<1x4x2x4x8xbf16, #tpu.memory_space<vmem>>, %arg3: memref<1x4x2x4x8xbf16, #tpu.memory_space<vmem>>, %arg4: memref<1x1x7x6x4xbf16, #tpu.memory_space<vmem>>) attributes {dimension_semantics = [#tpu.dimension_semantics<parallel>, #tpu.dimension_semantics<parallel>], iteration_bounds = array<i64: 2, 6>, scalar_prefetch = 0 : i64, scratch_operands = 0 : i64, tpu.core_type = #tpu.core_type<tc>, window_params = [{transform_indices = @transform_0, window_bounds = array<i64: 1, 4, 2, 4, 8>}, {transform_indices = @transform_1, window_bounds = array<i64: 1, 4, 2, 4, 8>}, {transform_indices = @transform_2, window_bounds = array<i64: 1, 1, 7, 6, 4>}]} {
    %c0 = arith.constant 0 : index
    %c0_0 = arith.constant 0 : index
    %c0_1 = arith.constant 0 : index
    %c0_2 = arith.constant 0 : index
    %c0_3 = arith.constant 0 : index
    %0 = vector.load %arg2[%c0, %c0_0, %c0_1, %c0_2, %c0_3] : memref<1x4x2x4x8xbf16, #tpu.memory_space<vmem>>, vector<1x4x2x4x8xbf16>
    %1 = vector.shape_cast %0 : vector<1x4x2x4x8xbf16> to vector<4x2x4x8xbf16>
    %c0_4 = arith.constant 0 : index
    %c0_5 = arith.constant 0 : index
    %c0_6 = arith.constant 0 : index
    %c0_7 = arith.constant 0 : index
    %c0_8 = arith.constant 0 : index
    %2 = vector.load %arg3[%c0_4, %c0_5, %c0_6, %c0_7, %c0_8] : memref<1x4x2x4x8xbf16, #tpu.memory_space<vmem>>, vector<1x4x2x4x8xbf16>
    %3 = vector.shape_cast %2 : vector<1x4x2x4x8xbf16> to vector<4x2x4x8xbf16>
    %4 = arith.maximumf %1, %3 : vector<4x2x4x8xbf16>
    %5 = vector.extract_strided_slice %4 {offsets = [0, 0, 0, 0], sizes = [4, 1, 4, 8], strides = [1, 1, 1, 1]} : vector<4x2x4x8xbf16> to vector<4x1x4x8xbf16>
    %6 = vector.shape_cast %5 : vector<4x1x4x8xbf16> to vector<4x4x8xbf16>
    %7 = vector.extract_strided_slice %4 {offsets = [0, 1, 0, 0], sizes = [4, 1, 4, 8], strides = [1, 1, 1, 1]} : vector<4x2x4x8xbf16> to vector<4x1x4x8xbf16>
    %8 = vector.shape_cast %7 : vector<4x1x4x8xbf16> to vector<4x4x8xbf16>
    %9 = arith.maximumf %6, %8 : vector<4x4x8xbf16>
    %10 = vector.extract_strided_slice %9 {offsets = [0, 0, 0], sizes = [4, 4, 4], strides = [1, 1, 1]} : vector<4x4x8xbf16> to vector<4x4x4xbf16>
    %11 = vector.extract_strided_slice %9 {offsets = [0, 0, 4], sizes = [4, 4, 4], strides = [1, 1, 1]} : vector<4x4x8xbf16> to vector<4x4x4xbf16>
    %12 = arith.maximumf %10, %11 : vector<4x4x4xbf16>
    %c1_i32 = arith.constant 1 : i32
    %13 = arith.cmpi sge, %arg1, %c1_i32 : i32
    %c4_i32 = arith.constant 4 : i32
    %14 = arith.cmpi sle, %arg1, %c4_i32 : i32
    %15 = arith.andi %13, %14 : i1
    %cst = arith.constant 0.000000e+00 : bf16
    %16 = vector.broadcast %cst : bf16 to vector<4x4x4xbf16>
    %17 = arith.select %15, %12, %16 : vector<4x4x4xbf16>
    %cst_9 = arith.constant 0.000000e+00 : bf16
    %18 = vector.broadcast %cst_9 : bf16 to vector<1x1x7x6x4xbf16>
    %c0_10 = arith.constant 0 : index
    %c0_11 = arith.constant 0 : index
    %c0_12 = arith.constant 0 : index
    %c0_13 = arith.constant 0 : index
    %c0_14 = arith.constant 0 : index
    %19 = vector.load %arg4[%c0_10, %c0_11, %c0_12, %c0_13, %c0_14] : memref<1x1x7x6x4xbf16, #tpu.memory_space<vmem>>, vector<1x1x7x6x4xbf16>
    tpu.vector_store %arg4[%c0_10, %c0_11, %c0_12, %c0_13, %c0_14], %18 {strides = array<i32>} : memref<1x1x7x6x4xbf16, #tpu.memory_space<vmem>>, vector<1x1x7x6x4xbf16>,
    %c0_15 = arith.constant 0 : index
    %c0_16 = arith.constant 0 : index
    %c1 = arith.constant 1 : index
    %c1_17 = arith.constant 1 : index
    %c0_18 = arith.constant 0 : index
    %20 = vector.load %arg4[%c0_15, %c0_16, %c1, %c1_17, %c0_18] : memref<1x1x7x6x4xbf16, #tpu.memory_space<vmem>>, vector<1x1x4x4x4xbf16>
    %21 = vector.shape_cast %20 : vector<1x1x4x4x4xbf16> to vector<4x4x4xbf16>
    %22 = vector.shape_cast %17 : vector<4x4x4xbf16> to vector<1x1x4x4x4xbf16>
    tpu.vector_store %arg4[%c0_15, %c0_16, %c1, %c1_17, %c0_18], %22 {strides = array<i32>} : memref<1x1x7x6x4xbf16, #tpu.memory_space<vmem>>, vector<1x1x4x4x4xbf16>,
    return
  }
  func.func @transform_0(%arg0: i32, %arg1: i32) -> (i32, i32, i32, i32, i32) {
    %c4_i32 = arith.constant 4 : i32
    %0 = arith.muli %arg0, %c4_i32 : i32
    %c1_i32 = arith.constant 1 : i32
    %1 = arith.subi %arg1, %c1_i32 : i32
    %c0_i32 = arith.constant 0 : i32
    %c3_i32 = arith.constant 3 : i32
    %2 = arith.maxsi %c0_i32, %1 : i32
    %3 = arith.minsi %c3_i32, %2 : i32
    %4 = arith.addi %0, %3 : i32
    %c2_i32 = arith.constant 2 : i32
    %5 = arith.muli %c2_i32, %4 : i32
    %c0_i32_0 = arith.constant 0 : i32
    %c0_i32_1 = arith.constant 0 : i32
    %c0_i32_2 = arith.constant 0 : i32
    %c0_i32_3 = arith.constant 0 : i32
    %c0_i32_4 = arith.constant 0 : i32
    return %5, %c0_i32_0, %c0_i32_1, %c0_i32_2, %c0_i32_3 : i32, i32, i32, i32, i32
  }
  func.func @transform_1(%arg0: i32, %arg1: i32) -> (i32, i32, i32, i32, i32) {
    %c4_i32 = arith.constant 4 : i32
    %0 = arith.muli %arg0, %c4_i32 : i32
    %c1_i32 = arith.constant 1 : i32
    %1 = arith.subi %arg1, %c1_i32 : i32
    %c0_i32 = arith.constant 0 : i32
    %c3_i32 = arith.constant 3 : i32
    %2 = arith.maxsi %c0_i32, %1 : i32
    %3 = arith.minsi %c3_i32, %2 : i32
    %4 = arith.addi %0, %3 : i32
    %c2_i32 = arith.constant 2 : i32
    %5 = arith.muli %c2_i32, %4 : i32
    %c1_i32_0 = arith.constant 1 : i32
    %6 = arith.addi %5, %c1_i32_0 : i32
    %c0_i32_1 = arith.constant 0 : i32
    %c0_i32_2 = arith.constant 0 : i32
    %c0_i32_3 = arith.constant 0 : i32
    %c0_i32_4 = arith.constant 0 : i32
    %c0_i32_5 = arith.constant 0 : i32
    return %6, %c0_i32_1, %c0_i32_2, %c0_i32_3, %c0_i32_4 : i32, i32, i32, i32, i32
  }
  func.func @transform_2(%arg0: i32, %arg1: i32) -> (i32, i32, i32, i32, i32) {
    %c0_i32 = arith.constant 0 : i32
    %c0_i32_0 = arith.constant 0 : i32
    %c0_i32_1 = arith.constant 0 : i32
    %c0_i32_2 = arith.constant 0 : i32
    return %arg0, %arg1, %c0_i32, %c0_i32_0, %c0_i32_1 : i32, i32, i32, i32, i32
  }
}

module attributes {stable_mosaic.version = 11 : i64} {
  func.func @_conv_im2col_kernel(%arg0: i32, %arg1: i32, %arg2: memref<1x4x42x4xbf16, #tpu.memory_space<vmem>>, %arg3: memref<1x1x42x4xbf16, #tpu.memory_space<vmem>>, %arg4: memref<1x1x42x4xbf16, #tpu.memory_space<vmem>>, %arg5: memref<108x8xbf16, #tpu.memory_space<vmem>>, %arg6: memref<168x1xf32, #tpu.memory_space<vmem>>, %arg7: memref<1x1x168x8xbf16, #tpu.memory_space<vmem>>, %arg8: memref<1x1x2x8xf32, #tpu.memory_space<vmem>>, %arg9: memref<266x4xbf16, #tpu.memory_space<vmem>>) attributes {dimension_semantics = [#tpu.dimension_semantics<parallel>, #tpu.dimension_semantics<parallel>], iteration_bounds = array<i64: 2, 1>, scalar_prefetch = 0 : i64, scratch_operands = 1 : i64, tpu.core_type = #tpu.core_type<tc>, window_params = [{transform_indices = @transform_0, window_bounds = array<i64: 1, 4, 42, 4>}, {transform_indices = @transform_1, window_bounds = array<i64: 1, 1, 42, 4>}, {transform_indices = @transform_2, window_bounds = array<i64: 1, 1, 42, 4>}, {pipeline_mode = #tpu.pipeline_mode<synchronous>, transform_indices = @transform_3, window_bounds = array<i64: 108, 8>}, {pipeline_mode = #tpu.pipeline_mode<synchronous>, transform_indices = @transform_4, window_bounds = array<i64: 168, 1>}, {transform_indices = @transform_5, window_bounds = array<i64: 1, 1, 168, 8>}, {transform_indices = @transform_6, window_bounds = array<i64: 1, 1, 2, 8>}]} {
    %c0 = arith.constant 0 : index
    %c0_0 = arith.constant 0 : index
    %c0_1 = arith.constant 0 : index
    %c0_2 = arith.constant 0 : index
    %0 = vector.load %arg2[%c0, %c0_0, %c0_1, %c0_2] : memref<1x4x42x4xbf16, #tpu.memory_space<vmem>>, vector<1x1x42x4xbf16>
    %1 = vector.shape_cast %0 : vector<1x1x42x4xbf16> to vector<42x4xbf16>
    %c0_3 = arith.constant 0 : index
    %c0_4 = arith.constant 0 : index
    %2 = vector.load %arg9[%c0_3, %c0_4] : memref<266x4xbf16, #tpu.memory_space<vmem>>, vector<42x4xbf16>
    tpu.vector_store %arg9[%c0_3, %c0_4], %1 {strides = array<i32>} : memref<266x4xbf16, #tpu.memory_space<vmem>>, vector<42x4xbf16>,
    %c0_5 = arith.constant 0 : index
    %c1 = arith.constant 1 : index
    %c0_6 = arith.constant 0 : index
    %c0_7 = arith.constant 0 : index
    %3 = vector.load %arg2[%c0_5, %c1, %c0_6, %c0_7] : memref<1x4x42x4xbf16, #tpu.memory_space<vmem>>, vector<1x1x42x4xbf16>
    %4 = vector.shape_cast %3 : vector<1x1x42x4xbf16> to vector<42x4xbf16>
    %c42 = arith.constant 42 : index
    %c0_8 = arith.constant 0 : index
    %5 = vector.load %arg9[%c42, %c0_8] : memref<266x4xbf16, #tpu.memory_space<vmem>>, vector<42x4xbf16>
    tpu.vector_store %arg9[%c42, %c0_8], %4 {strides = array<i32>} : memref<266x4xbf16, #tpu.memory_space<vmem>>, vector<42x4xbf16>,
    %c0_9 = arith.constant 0 : index
    %c2 = arith.constant 2 : index
    %c0_10 = arith.constant 0 : index
    %c0_11 = arith.constant 0 : index
    %6 = vector.load %arg2[%c0_9, %c2, %c0_10, %c0_11] : memref<1x4x42x4xbf16, #tpu.memory_space<vmem>>, vector<1x1x42x4xbf16>
    %7 = vector.shape_cast %6 : vector<1x1x42x4xbf16> to vector<42x4xbf16>
    %c84 = arith.constant 84 : index
    %c0_12 = arith.constant 0 : index
    %8 = vector.load %arg9[%c84, %c0_12] : memref<266x4xbf16, #tpu.memory_space<vmem>>, vector<42x4xbf16>
    tpu.vector_store %arg9[%c84, %c0_12], %7 {strides = array<i32>} : memref<266x4xbf16, #tpu.memory_space<vmem>>, vector<42x4xbf16>,
    %c0_13 = arith.constant 0 : index
    %c3 = arith.constant 3 : index
    %c0_14 = arith.constant 0 : index
    %c0_15 = arith.constant 0 : index
    %9 = vector.load %arg2[%c0_13, %c3, %c0_14, %c0_15] : memref<1x4x42x4xbf16, #tpu.memory_space<vmem>>, vector<1x1x42x4xbf16>
    %10 = vector.shape_cast %9 : vector<1x1x42x4xbf16> to vector<42x4xbf16>
    %c126 = arith.constant 126 : index
    %c0_16 = arith.constant 0 : index
    %11 = vector.load %arg9[%c126, %c0_16] : memref<266x4xbf16, #tpu.memory_space<vmem>>, vector<42x4xbf16>
    tpu.vector_store %arg9[%c126, %c0_16], %10 {strides = array<i32>} : memref<266x4xbf16, #tpu.memory_space<vmem>>, vector<42x4xbf16>,
    %c0_17 = arith.constant 0 : index
    %c0_18 = arith.constant 0 : index
    %c0_19 = arith.constant 0 : index
    %c0_20 = arith.constant 0 : index
    %12 = vector.load %arg3[%c0_17, %c0_18, %c0_19, %c0_20] : memref<1x1x42x4xbf16, #tpu.memory_space<vmem>>, vector<1x1x42x4xbf16>
    %13 = vector.shape_cast %12 : vector<1x1x42x4xbf16> to vector<42x4xbf16>
    %c168 = arith.constant 168 : index
    %c0_21 = arith.constant 0 : index
    %14 = vector.load %arg9[%c168, %c0_21] : memref<266x4xbf16, #tpu.memory_space<vmem>>, vector<42x4xbf16>
    tpu.vector_store %arg9[%c168, %c0_21], %13 {strides = array<i32>} : memref<266x4xbf16, #tpu.memory_space<vmem>>, vector<42x4xbf16>,
    %c0_22 = arith.constant 0 : index
    %c0_23 = arith.constant 0 : index
    %c0_24 = arith.constant 0 : index
    %c0_25 = arith.constant 0 : index
    %15 = vector.load %arg4[%c0_22, %c0_23, %c0_24, %c0_25] : memref<1x1x42x4xbf16, #tpu.memory_space<vmem>>, vector<1x1x42x4xbf16>
    %16 = vector.shape_cast %15 : vector<1x1x42x4xbf16> to vector<42x4xbf16>
    %c210 = arith.constant 210 : index
    %c0_26 = arith.constant 0 : index
    %17 = vector.load %arg9[%c210, %c0_26] : memref<266x4xbf16, #tpu.memory_space<vmem>>, vector<42x4xbf16>
    tpu.vector_store %arg9[%c210, %c0_26], %16 {strides = array<i32>} : memref<266x4xbf16, #tpu.memory_space<vmem>>, vector<42x4xbf16>,
    %cst = arith.constant 0.000000e+00 : bf16
    %18 = vector.broadcast %cst : bf16 to vector<14x4xbf16>
    %c252 = arith.constant 252 : index
    %c0_27 = arith.constant 0 : index
    %19 = vector.load %arg9[%c252, %c0_27] : memref<266x4xbf16, #tpu.memory_space<vmem>>, vector<14x4xbf16>
    tpu.vector_store %arg9[%c252, %c0_27], %18 {strides = array<i32>} : memref<266x4xbf16, #tpu.memory_space<vmem>>, vector<14x4xbf16>,
    %c0_28 = arith.constant 0 : index
    %c0_29 = arith.constant 0 : index
    %20 = vector.load %arg9[%c0_28, %c0_29] : memref<266x4xbf16, #tpu.memory_space<vmem>>, vector<168x4xbf16>
    %c1_30 = arith.constant 1 : index
    %c0_31 = arith.constant 0 : index
    %21 = vector.load %arg9[%c1_30, %c0_31] : memref<266x4xbf16, #tpu.memory_space<vmem>>, vector<168x4xbf16>
    %c2_32 = arith.constant 2 : index
    %c0_33 = arith.constant 0 : index
    %22 = vector.load %arg9[%c2_32, %c0_33] : memref<266x4xbf16, #tpu.memory_space<vmem>>, vector<168x4xbf16>
    %c6 = arith.constant 6 : index
    %c0_34 = arith.constant 0 : index
    %23 = vector.load %arg9[%c6, %c0_34] : memref<266x4xbf16, #tpu.memory_space<vmem>>, vector<168x4xbf16>
    %c7 = arith.constant 7 : index
    %c0_35 = arith.constant 0 : index
    %24 = vector.load %arg9[%c7, %c0_35] : memref<266x4xbf16, #tpu.memory_space<vmem>>, vector<168x4xbf16>
    %c8 = arith.constant 8 : index
    %c0_36 = arith.constant 0 : index
    %25 = vector.load %arg9[%c8, %c0_36] : memref<266x4xbf16, #tpu.memory_space<vmem>>, vector<168x4xbf16>
    %c12 = arith.constant 12 : index
    %c0_37 = arith.constant 0 : index
    %26 = vector.load %arg9[%c12, %c0_37] : memref<266x4xbf16, #tpu.memory_space<vmem>>, vector<168x4xbf16>
    %c13 = arith.constant 13 : index
    %c0_38 = arith.constant 0 : index
    %27 = vector.load %arg9[%c13, %c0_38] : memref<266x4xbf16, #tpu.memory_space<vmem>>, vector<168x4xbf16>
    %c14 = arith.constant 14 : index
    %c0_39 = arith.constant 0 : index
    %28 = vector.load %arg9[%c14, %c0_39] : memref<266x4xbf16, #tpu.memory_space<vmem>>, vector<168x4xbf16>
    %c42_40 = arith.constant 42 : index
    %c0_41 = arith.constant 0 : index
    %29 = vector.load %arg9[%c42_40, %c0_41] : memref<266x4xbf16, #tpu.memory_space<vmem>>, vector<168x4xbf16>
    %c43 = arith.constant 43 : index
    %c0_42 = arith.constant 0 : index
    %30 = vector.load %arg9[%c43, %c0_42] : memref<266x4xbf16, #tpu.memory_space<vmem>>, vector<168x4xbf16>
    %c44 = arith.constant 44 : index
    %c0_43 = arith.constant 0 : index
    %31 = vector.load %arg9[%c44, %c0_43] : memref<266x4xbf16, #tpu.memory_space<vmem>>, vector<168x4xbf16>
    %c48 = arith.constant 48 : index
    %c0_44 = arith.constant 0 : index
    %32 = vector.load %arg9[%c48, %c0_44] : memref<266x4xbf16, #tpu.memory_space<vmem>>, vector<168x4xbf16>
    %c49 = arith.constant 49 : index
    %c0_45 = arith.constant 0 : index
    %33 = vector.load %arg9[%c49, %c0_45] : memref<266x4xbf16, #tpu.memory_space<vmem>>, vector<168x4xbf16>
    %c50 = arith.constant 50 : index
    %c0_46 = arith.constant 0 : index
    %34 = vector.load %arg9[%c50, %c0_46] : memref<266x4xbf16, #tpu.memory_space<vmem>>, vector<168x4xbf16>
    %c54 = arith.constant 54 : index
    %c0_47 = arith.constant 0 : index
    %35 = vector.load %arg9[%c54, %c0_47] : memref<266x4xbf16, #tpu.memory_space<vmem>>, vector<168x4xbf16>
    %c55 = arith.constant 55 : index
    %c0_48 = arith.constant 0 : index
    %36 = vector.load %arg9[%c55, %c0_48] : memref<266x4xbf16, #tpu.memory_space<vmem>>, vector<168x4xbf16>
    %c56 = arith.constant 56 : index
    %c0_49 = arith.constant 0 : index
    %37 = vector.load %arg9[%c56, %c0_49] : memref<266x4xbf16, #tpu.memory_space<vmem>>, vector<168x4xbf16>
    %c84_50 = arith.constant 84 : index
    %c0_51 = arith.constant 0 : index
    %38 = vector.load %arg9[%c84_50, %c0_51] : memref<266x4xbf16, #tpu.memory_space<vmem>>, vector<168x4xbf16>
    %c85 = arith.constant 85 : index
    %c0_52 = arith.constant 0 : index
    %39 = vector.load %arg9[%c85, %c0_52] : memref<266x4xbf16, #tpu.memory_space<vmem>>, vector<168x4xbf16>
    %c86 = arith.constant 86 : index
    %c0_53 = arith.constant 0 : index
    %40 = vector.load %arg9[%c86, %c0_53] : memref<266x4xbf16, #tpu.memory_space<vmem>>, vector<168x4xbf16>
    %c90 = arith.constant 90 : index
    %c0_54 = arith.constant 0 : index
    %41 = vector.load %arg9[%c90, %c0_54] : memref<266x4xbf16, #tpu.memory_space<vmem>>, vector<168x4xbf16>
    %c91 = arith.constant 91 : index
    %c0_55 = arith.constant 0 : index
    %42 = vector.load %arg9[%c91, %c0_55] : memref<266x4xbf16, #tpu.memory_space<vmem>>, vector<168x4xbf16>
    %c92 = arith.constant 92 : index
    %c0_56 = arith.constant 0 : index
    %43 = vector.load %arg9[%c92, %c0_56] : memref<266x4xbf16, #tpu.memory_space<vmem>>, vector<168x4xbf16>
    %c96 = arith.constant 96 : index
    %c0_57 = arith.constant 0 : index
    %44 = vector.load %arg9[%c96, %c0_57] : memref<266x4xbf16, #tpu.memory_space<vmem>>, vector<168x4xbf16>
    %c97 = arith.constant 97 : index
    %c0_58 = arith.constant 0 : index
    %45 = vector.load %arg9[%c97, %c0_58] : memref<266x4xbf16, #tpu.memory_space<vmem>>, vector<168x4xbf16>
    %c98 = arith.constant 98 : index
    %c0_59 = arith.constant 0 : index
    %46 = vector.load %arg9[%c98, %c0_59] : memref<266x4xbf16, #tpu.memory_space<vmem>>, vector<168x4xbf16>
    %47 = tpu.concatenate %20, %21, %22, %23, %24, %25, %26, %27, %28, %29, %30, %31, %32, %33, %34, %35 in 1 : vector<168x4xbf16>, vector<168x4xbf16>, vector<168x4xbf16>, vector<168x4xbf16>, vector<168x4xbf16>, vector<168x4xbf16>, vector<168x4xbf16>, vector<168x4xbf16>, vector<168x4xbf16>, vector<168x4xbf16>, vector<168x4xbf16>, vector<168x4xbf16>, vector<168x4xbf16>, vector<168x4xbf16>, vector<168x4xbf16>, vector<168x4xbf16> -> vector<168x64xbf16>
    %48 = tpu.concatenate %36, %37, %38, %39, %40, %41, %42, %43, %44, %45, %46 in 1 : vector<168x4xbf16>, vector<168x4xbf16>, vector<168x4xbf16>, vector<168x4xbf16>, vector<168x4xbf16>, vector<168x4xbf16>, vector<168x4xbf16>, vector<168x4xbf16>, vector<168x4xbf16>, vector<168x4xbf16>, vector<168x4xbf16> -> vector<168x44xbf16>
    %49 = tpu.concatenate %47, %48 in 1 : vector<168x64xbf16>, vector<168x44xbf16> -> vector<168x108xbf16>
    %c0_60 = arith.constant 0 : index
    %c0_61 = arith.constant 0 : index
    %50 = vector.load %arg5[%c0_60, %c0_61] : memref<108x8xbf16, #tpu.memory_space<vmem>>, vector<108x8xbf16>
    %cst_62 = arith.constant dense<0.000000e+00> : vector<168x8xf32>
    %51 = tpu.matmul %49, %50, %cst_62 {dimension_numbers = #tpu.dot_dimension_numbers<[1], [0], [0], [1], [0, 0, 1, 1], [], []>} : vector<168x108xbf16>, vector<108x8xbf16>, vector<168x8xf32> -> vector<168x8xf32>
    %52 = arith.truncf %51 : vector<168x8xf32> to vector<168x8xbf16>
    %c0_63 = arith.constant 0 : index
    %c0_64 = arith.constant 0 : index
    %c0_65 = arith.constant 0 : index
    %c0_66 = arith.constant 0 : index
    %53 = vector.load %arg7[%c0_63, %c0_64, %c0_65, %c0_66] : memref<1x1x168x8xbf16, #tpu.memory_space<vmem>>, vector<1x1x168x8xbf16>
    %54 = vector.shape_cast %53 : vector<1x1x168x8xbf16> to vector<168x8xbf16>
    %55 = vector.shape_cast %52 : vector<168x8xbf16> to vector<1x1x168x8xbf16>
    tpu.vector_store %arg7[%c0_63, %c0_64, %c0_65, %c0_66], %55 {strides = array<i32>} : memref<1x1x168x8xbf16, #tpu.memory_space<vmem>>, vector<1x1x168x8xbf16>,
    %c0_67 = arith.constant 0 : index
    %c0_68 = arith.constant 0 : index
    %56 = vector.load %arg6[%c0_67, %c0_68] : memref<168x1xf32, #tpu.memory_space<vmem>>, vector<168x1xf32>
    %57 = vector.broadcast %56 : vector<168x1xf32> to vector<168x8xf32>
    %58 = arith.mulf %51, %57 : vector<168x8xf32>
    %cst_69 = arith.constant dense<0.000000e+00> : vector<8xf32>
    %59 = vector.multi_reduction <add>, %58, %cst_69 [0] : vector<168x8xf32> to vector<8xf32>
    %60 = vector.shape_cast %59 : vector<8xf32> to vector<1x8xf32>
    %c0_70 = arith.constant 0 : index
    %c0_71 = arith.constant 0 : index
    %c0_72 = arith.constant 0 : index
    %c0_73 = arith.constant 0 : index
    %61 = vector.load %arg8[%c0_70, %c0_71, %c0_72, %c0_73] : memref<1x1x2x8xf32, #tpu.memory_space<vmem>>, vector<1x1x1x8xf32>
    %62 = vector.shape_cast %61 : vector<1x1x1x8xf32> to vector<1x8xf32>
    %63 = vector.shape_cast %60 : vector<1x8xf32> to vector<1x1x1x8xf32>
    tpu.vector_store %arg8[%c0_70, %c0_71, %c0_72, %c0_73], %63 {strides = array<i32>} : memref<1x1x2x8xf32, #tpu.memory_space<vmem>>, vector<1x1x1x8xf32>,
    %64 = arith.mulf %58, %51 : vector<168x8xf32>
    %cst_74 = arith.constant dense<0.000000e+00> : vector<8xf32>
    %65 = vector.multi_reduction <add>, %64, %cst_74 [0] : vector<168x8xf32> to vector<8xf32>
    %66 = vector.shape_cast %65 : vector<8xf32> to vector<1x8xf32>
    %c0_75 = arith.constant 0 : index
    %c0_76 = arith.constant 0 : index
    %c1_77 = arith.constant 1 : index
    %c0_78 = arith.constant 0 : index
    %67 = vector.load %arg8[%c0_75, %c0_76, %c1_77, %c0_78] : memref<1x1x2x8xf32, #tpu.memory_space<vmem>>, vector<1x1x1x8xf32>
    %68 = vector.shape_cast %67 : vector<1x1x1x8xf32> to vector<1x8xf32>
    %69 = vector.shape_cast %66 : vector<1x8xf32> to vector<1x1x1x8xf32>
    tpu.vector_store %arg8[%c0_75, %c0_76, %c1_77, %c0_78], %69 {strides = array<i32>} : memref<1x1x2x8xf32, #tpu.memory_space<vmem>>, vector<1x1x1x8xf32>,
    return
  }
  func.func @transform_0(%arg0: i32, %arg1: i32) -> (i32, i32, i32, i32) {
    %c0_i32 = arith.constant 0 : i32
    %c0_i32_0 = arith.constant 0 : i32
    %c0_i32_1 = arith.constant 0 : i32
    return %arg0, %arg1, %c0_i32, %c0_i32_0 : i32, i32, i32, i32
  }
  func.func @transform_1(%arg0: i32, %arg1: i32) -> (i32, i32, i32, i32) {
    %c4_i32 = arith.constant 4 : i32
    %0 = arith.muli %arg1, %c4_i32 : i32
    %c4_i32_0 = arith.constant 4 : i32
    %1 = arith.addi %0, %c4_i32_0 : i32
    %c0_i32 = arith.constant 0 : i32
    %2 = arith.addi %1, %c0_i32 : i32
    %c0_i32_1 = arith.constant 0 : i32
    %c0_i32_2 = arith.constant 0 : i32
    %c0_i32_3 = arith.constant 0 : i32
    return %arg0, %2, %c0_i32_1, %c0_i32_2 : i32, i32, i32, i32
  }
  func.func @transform_2(%arg0: i32, %arg1: i32) -> (i32, i32, i32, i32) {
    %c4_i32 = arith.constant 4 : i32
    %0 = arith.muli %arg1, %c4_i32 : i32
    %c4_i32_0 = arith.constant 4 : i32
    %1 = arith.addi %0, %c4_i32_0 : i32
    %c1_i32 = arith.constant 1 : i32
    %2 = arith.addi %1, %c1_i32 : i32
    %c0_i32 = arith.constant 0 : i32
    %c0_i32_1 = arith.constant 0 : i32
    %c0_i32_2 = arith.constant 0 : i32
    return %arg0, %2, %c0_i32, %c0_i32_1 : i32, i32, i32, i32
  }
  func.func @transform_3(%arg0: i32, %arg1: i32) -> (i32, i32) {
    %c0_i32 = arith.constant 0 : i32
    %c0_i32_0 = arith.constant 0 : i32
    %c0_i32_1 = arith.constant 0 : i32
    return %c0_i32, %c0_i32_0 : i32, i32
  }
  func.func @transform_4(%arg0: i32, %arg1: i32) -> (i32, i32) {
    %c0_i32 = arith.constant 0 : i32
    %c0_i32_0 = arith.constant 0 : i32
    %c0_i32_1 = arith.constant 0 : i32
    return %c0_i32, %c0_i32_0 : i32, i32
  }
  func.func @transform_5(%arg0: i32, %arg1: i32) -> (i32, i32, i32, i32) {
    %c0_i32 = arith.constant 0 : i32
    %c0_i32_0 = arith.constant 0 : i32
    %c0_i32_1 = arith.constant 0 : i32
    return %arg0, %arg1, %c0_i32, %c0_i32_0 : i32, i32, i32, i32
  }
  func.func @transform_6(%arg0: i32, %arg1: i32) -> (i32, i32, i32, i32) {
    %c0_i32 = arith.constant 0 : i32
    %c0_i32_0 = arith.constant 0 : i32
    %c0_i32_1 = arith.constant 0 : i32
    return %arg0, %arg1, %c0_i32, %c0_i32_0 : i32, i32, i32, i32
  }
}

module attributes {stable_mosaic.version = 11 : i64} {
  func.func @_bn_relu_pad_kernel(%arg0: i32, %arg1: i32, %arg2: memref<1x1x7x6x8xbf16, #tpu.memory_space<vmem>>, %arg3: memref<1x8xf32, #tpu.memory_space<vmem>>, %arg4: memref<1x8xf32, #tpu.memory_space<vmem>>, %arg5: memref<1x1x7x6x8xbf16, #tpu.memory_space<vmem>>) attributes {dimension_semantics = [#tpu.dimension_semantics<parallel>, #tpu.dimension_semantics<parallel>], iteration_bounds = array<i64: 2, 6>, scalar_prefetch = 0 : i64, scratch_operands = 0 : i64, tpu.core_type = #tpu.core_type<tc>, window_params = [{transform_indices = @transform_0, window_bounds = array<i64: 1, 1, 7, 6, 8>}, {pipeline_mode = #tpu.pipeline_mode<synchronous>, transform_indices = @transform_1, window_bounds = array<i64: 1, 8>}, {pipeline_mode = #tpu.pipeline_mode<synchronous>, transform_indices = @transform_2, window_bounds = array<i64: 1, 8>}, {transform_indices = @transform_3, window_bounds = array<i64: 1, 1, 7, 6, 8>}]} {
    %c0 = arith.constant 0 : index
    %c0_0 = arith.constant 0 : index
    %c0_1 = arith.constant 0 : index
    %c0_2 = arith.constant 0 : index
    %c0_3 = arith.constant 0 : index
    %0 = vector.load %arg2[%c0, %c0_0, %c0_1, %c0_2, %c0_3] : memref<1x1x7x6x8xbf16, #tpu.memory_space<vmem>>, vector<1x1x4x4x8xbf16>
    %1 = vector.shape_cast %0 : vector<1x1x4x4x8xbf16> to vector<4x4x8xbf16>
    %2 = arith.extf %1 : vector<4x4x8xbf16> to vector<4x4x8xf32>
    %c0_4 = arith.constant 0 : index
    %c0_5 = arith.constant 0 : index
    %3 = vector.load %arg3[%c0_4, %c0_5] : memref<1x8xf32, #tpu.memory_space<vmem>>, vector<1x8xf32>
    %4 = vector.shape_cast %3 : vector<1x8xf32> to vector<1x1x8xf32>
    %5 = vector.broadcast %4 : vector<1x1x8xf32> to vector<4x4x8xf32>
    %6 = arith.mulf %2, %5 : vector<4x4x8xf32>
    %c0_6 = arith.constant 0 : index
    %c0_7 = arith.constant 0 : index
    %7 = vector.load %arg4[%c0_6, %c0_7] : memref<1x8xf32, #tpu.memory_space<vmem>>, vector<1x8xf32>
    %8 = vector.shape_cast %7 : vector<1x8xf32> to vector<1x1x8xf32>
    %9 = vector.broadcast %8 : vector<1x1x8xf32> to vector<4x4x8xf32>
    %10 = arith.addf %6, %9 : vector<4x4x8xf32>
    %cst = arith.constant 0.000000e+00 : f32
    %11 = vector.broadcast %cst : f32 to vector<4x4x8xf32>
    %12 = arith.maximumf %10, %11 : vector<4x4x8xf32>
    %c1_i32 = arith.constant 1 : i32
    %13 = arith.cmpi sge, %arg1, %c1_i32 : i32
    %c4_i32 = arith.constant 4 : i32
    %14 = arith.cmpi sle, %arg1, %c4_i32 : i32
    %15 = arith.andi %13, %14 : i1
    %cst_8 = arith.constant 0.000000e+00 : f32
    %16 = vector.broadcast %cst_8 : f32 to vector<4x4x8xf32>
    %17 = arith.select %15, %12, %16 : vector<4x4x8xf32>
    %cst_9 = arith.constant 0.000000e+00 : bf16
    %18 = vector.broadcast %cst_9 : bf16 to vector<1x1x7x6x8xbf16>
    %c0_10 = arith.constant 0 : index
    %c0_11 = arith.constant 0 : index
    %c0_12 = arith.constant 0 : index
    %c0_13 = arith.constant 0 : index
    %c0_14 = arith.constant 0 : index
    %19 = vector.load %arg5[%c0_10, %c0_11, %c0_12, %c0_13, %c0_14] : memref<1x1x7x6x8xbf16, #tpu.memory_space<vmem>>, vector<1x1x7x6x8xbf16>
    tpu.vector_store %arg5[%c0_10, %c0_11, %c0_12, %c0_13, %c0_14], %18 {strides = array<i32>} : memref<1x1x7x6x8xbf16, #tpu.memory_space<vmem>>, vector<1x1x7x6x8xbf16>,
    %20 = arith.truncf %17 : vector<4x4x8xf32> to vector<4x4x8xbf16>
    %c0_15 = arith.constant 0 : index
    %c0_16 = arith.constant 0 : index
    %c1 = arith.constant 1 : index
    %c1_17 = arith.constant 1 : index
    %c0_18 = arith.constant 0 : index
    %21 = vector.load %arg5[%c0_15, %c0_16, %c1, %c1_17, %c0_18] : memref<1x1x7x6x8xbf16, #tpu.memory_space<vmem>>, vector<1x1x4x4x8xbf16>
    %22 = vector.shape_cast %21 : vector<1x1x4x4x8xbf16> to vector<4x4x8xbf16>
    %23 = vector.shape_cast %20 : vector<4x4x8xbf16> to vector<1x1x4x4x8xbf16>
    tpu.vector_store %arg5[%c0_15, %c0_16, %c1, %c1_17, %c0_18], %23 {strides = array<i32>} : memref<1x1x7x6x8xbf16, #tpu.memory_space<vmem>>, vector<1x1x4x4x8xbf16>,
    return
  }
  func.func @transform_0(%arg0: i32, %arg1: i32) -> (i32, i32, i32, i32, i32) {
    %c1_i32 = arith.constant 1 : i32
    %0 = arith.subi %arg1, %c1_i32 : i32
    %c0_i32 = arith.constant 0 : i32
    %c3_i32 = arith.constant 3 : i32
    %1 = arith.maxsi %c0_i32, %0 : i32
    %2 = arith.minsi %c3_i32, %1 : i32
    %c0_i32_0 = arith.constant 0 : i32
    %c0_i32_1 = arith.constant 0 : i32
    %c0_i32_2 = arith.constant 0 : i32
    %c0_i32_3 = arith.constant 0 : i32
    return %arg0, %2, %c0_i32_0, %c0_i32_1, %c0_i32_2 : i32, i32, i32, i32, i32
  }
  func.func @transform_1(%arg0: i32, %arg1: i32) -> (i32, i32) {
    %c0_i32 = arith.constant 0 : i32
    %c0_i32_0 = arith.constant 0 : i32
    %c0_i32_1 = arith.constant 0 : i32
    return %c0_i32, %c0_i32_0 : i32, i32
  }
  func.func @transform_2(%arg0: i32, %arg1: i32) -> (i32, i32) {
    %c0_i32 = arith.constant 0 : i32
    %c0_i32_0 = arith.constant 0 : i32
    %c0_i32_1 = arith.constant 0 : i32
    return %c0_i32, %c0_i32_0 : i32, i32
  }
  func.func @transform_3(%arg0: i32, %arg1: i32) -> (i32, i32, i32, i32, i32) {
    %c0_i32 = arith.constant 0 : i32
    %c0_i32_0 = arith.constant 0 : i32
    %c0_i32_1 = arith.constant 0 : i32
    %c0_i32_2 = arith.constant 0 : i32
    return %arg0, %arg1, %c0_i32, %c0_i32_0, %c0_i32_1 : i32, i32, i32, i32, i32
  }
}

module attributes {stable_mosaic.version = 11 : i64} {
  func.func @_conv_im2col_kernel(%arg0: i32, %arg1: i32, %arg2: memref<1x4x42x8xbf16, #tpu.memory_space<vmem>>, %arg3: memref<1x1x42x8xbf16, #tpu.memory_space<vmem>>, %arg4: memref<1x1x42x8xbf16, #tpu.memory_space<vmem>>, %arg5: memref<216x8xbf16, #tpu.memory_space<vmem>>, %arg6: memref<168x1xf32, #tpu.memory_space<vmem>>, %arg7: memref<1x1x168x8xbf16, #tpu.memory_space<vmem>>, %arg8: memref<1x1x2x8xf32, #tpu.memory_space<vmem>>, %arg9: memref<266x8xbf16, #tpu.memory_space<vmem>>) attributes {dimension_semantics = [#tpu.dimension_semantics<parallel>, #tpu.dimension_semantics<parallel>], iteration_bounds = array<i64: 2, 1>, scalar_prefetch = 0 : i64, scratch_operands = 1 : i64, tpu.core_type = #tpu.core_type<tc>, window_params = [{transform_indices = @transform_0, window_bounds = array<i64: 1, 4, 42, 8>}, {transform_indices = @transform_1, window_bounds = array<i64: 1, 1, 42, 8>}, {transform_indices = @transform_2, window_bounds = array<i64: 1, 1, 42, 8>}, {pipeline_mode = #tpu.pipeline_mode<synchronous>, transform_indices = @transform_3, window_bounds = array<i64: 216, 8>}, {pipeline_mode = #tpu.pipeline_mode<synchronous>, transform_indices = @transform_4, window_bounds = array<i64: 168, 1>}, {transform_indices = @transform_5, window_bounds = array<i64: 1, 1, 168, 8>}, {transform_indices = @transform_6, window_bounds = array<i64: 1, 1, 2, 8>}]} {
    %c0 = arith.constant 0 : index
    %c0_0 = arith.constant 0 : index
    %c0_1 = arith.constant 0 : index
    %c0_2 = arith.constant 0 : index
    %0 = vector.load %arg2[%c0, %c0_0, %c0_1, %c0_2] : memref<1x4x42x8xbf16, #tpu.memory_space<vmem>>, vector<1x1x42x8xbf16>
    %1 = vector.shape_cast %0 : vector<1x1x42x8xbf16> to vector<42x8xbf16>
    %c0_3 = arith.constant 0 : index
    %c0_4 = arith.constant 0 : index
    %2 = vector.load %arg9[%c0_3, %c0_4] : memref<266x8xbf16, #tpu.memory_space<vmem>>, vector<42x8xbf16>
    tpu.vector_store %arg9[%c0_3, %c0_4], %1 {strides = array<i32>} : memref<266x8xbf16, #tpu.memory_space<vmem>>, vector<42x8xbf16>,
    %c0_5 = arith.constant 0 : index
    %c1 = arith.constant 1 : index
    %c0_6 = arith.constant 0 : index
    %c0_7 = arith.constant 0 : index
    %3 = vector.load %arg2[%c0_5, %c1, %c0_6, %c0_7] : memref<1x4x42x8xbf16, #tpu.memory_space<vmem>>, vector<1x1x42x8xbf16>
    %4 = vector.shape_cast %3 : vector<1x1x42x8xbf16> to vector<42x8xbf16>
    %c42 = arith.constant 42 : index
    %c0_8 = arith.constant 0 : index
    %5 = vector.load %arg9[%c42, %c0_8] : memref<266x8xbf16, #tpu.memory_space<vmem>>, vector<42x8xbf16>
    tpu.vector_store %arg9[%c42, %c0_8], %4 {strides = array<i32>} : memref<266x8xbf16, #tpu.memory_space<vmem>>, vector<42x8xbf16>,
    %c0_9 = arith.constant 0 : index
    %c2 = arith.constant 2 : index
    %c0_10 = arith.constant 0 : index
    %c0_11 = arith.constant 0 : index
    %6 = vector.load %arg2[%c0_9, %c2, %c0_10, %c0_11] : memref<1x4x42x8xbf16, #tpu.memory_space<vmem>>, vector<1x1x42x8xbf16>
    %7 = vector.shape_cast %6 : vector<1x1x42x8xbf16> to vector<42x8xbf16>
    %c84 = arith.constant 84 : index
    %c0_12 = arith.constant 0 : index
    %8 = vector.load %arg9[%c84, %c0_12] : memref<266x8xbf16, #tpu.memory_space<vmem>>, vector<42x8xbf16>
    tpu.vector_store %arg9[%c84, %c0_12], %7 {strides = array<i32>} : memref<266x8xbf16, #tpu.memory_space<vmem>>, vector<42x8xbf16>,
    %c0_13 = arith.constant 0 : index
    %c3 = arith.constant 3 : index
    %c0_14 = arith.constant 0 : index
    %c0_15 = arith.constant 0 : index
    %9 = vector.load %arg2[%c0_13, %c3, %c0_14, %c0_15] : memref<1x4x42x8xbf16, #tpu.memory_space<vmem>>, vector<1x1x42x8xbf16>
    %10 = vector.shape_cast %9 : vector<1x1x42x8xbf16> to vector<42x8xbf16>
    %c126 = arith.constant 126 : index
    %c0_16 = arith.constant 0 : index
    %11 = vector.load %arg9[%c126, %c0_16] : memref<266x8xbf16, #tpu.memory_space<vmem>>, vector<42x8xbf16>
    tpu.vector_store %arg9[%c126, %c0_16], %10 {strides = array<i32>} : memref<266x8xbf16, #tpu.memory_space<vmem>>, vector<42x8xbf16>,
    %c0_17 = arith.constant 0 : index
    %c0_18 = arith.constant 0 : index
    %c0_19 = arith.constant 0 : index
    %c0_20 = arith.constant 0 : index
    %12 = vector.load %arg3[%c0_17, %c0_18, %c0_19, %c0_20] : memref<1x1x42x8xbf16, #tpu.memory_space<vmem>>, vector<1x1x42x8xbf16>
    %13 = vector.shape_cast %12 : vector<1x1x42x8xbf16> to vector<42x8xbf16>
    %c168 = arith.constant 168 : index
    %c0_21 = arith.constant 0 : index
    %14 = vector.load %arg9[%c168, %c0_21] : memref<266x8xbf16, #tpu.memory_space<vmem>>, vector<42x8xbf16>
    tpu.vector_store %arg9[%c168, %c0_21], %13 {strides = array<i32>} : memref<266x8xbf16, #tpu.memory_space<vmem>>, vector<42x8xbf16>,
    %c0_22 = arith.constant 0 : index
    %c0_23 = arith.constant 0 : index
    %c0_24 = arith.constant 0 : index
    %c0_25 = arith.constant 0 : index
    %15 = vector.load %arg4[%c0_22, %c0_23, %c0_24, %c0_25] : memref<1x1x42x8xbf16, #tpu.memory_space<vmem>>, vector<1x1x42x8xbf16>
    %16 = vector.shape_cast %15 : vector<1x1x42x8xbf16> to vector<42x8xbf16>
    %c210 = arith.constant 210 : index
    %c0_26 = arith.constant 0 : index
    %17 = vector.load %arg9[%c210, %c0_26] : memref<266x8xbf16, #tpu.memory_space<vmem>>, vector<42x8xbf16>
    tpu.vector_store %arg9[%c210, %c0_26], %16 {strides = array<i32>} : memref<266x8xbf16, #tpu.memory_space<vmem>>, vector<42x8xbf16>,
    %cst = arith.constant 0.000000e+00 : bf16
    %18 = vector.broadcast %cst : bf16 to vector<14x8xbf16>
    %c252 = arith.constant 252 : index
    %c0_27 = arith.constant 0 : index
    %19 = vector.load %arg9[%c252, %c0_27] : memref<266x8xbf16, #tpu.memory_space<vmem>>, vector<14x8xbf16>
    tpu.vector_store %arg9[%c252, %c0_27], %18 {strides = array<i32>} : memref<266x8xbf16, #tpu.memory_space<vmem>>, vector<14x8xbf16>,
    %c0_28 = arith.constant 0 : index
    %c0_29 = arith.constant 0 : index
    %20 = vector.load %arg9[%c0_28, %c0_29] : memref<266x8xbf16, #tpu.memory_space<vmem>>, vector<168x8xbf16>
    %c1_30 = arith.constant 1 : index
    %c0_31 = arith.constant 0 : index
    %21 = vector.load %arg9[%c1_30, %c0_31] : memref<266x8xbf16, #tpu.memory_space<vmem>>, vector<168x8xbf16>
    %c2_32 = arith.constant 2 : index
    %c0_33 = arith.constant 0 : index
    %22 = vector.load %arg9[%c2_32, %c0_33] : memref<266x8xbf16, #tpu.memory_space<vmem>>, vector<168x8xbf16>
    %c6 = arith.constant 6 : index
    %c0_34 = arith.constant 0 : index
    %23 = vector.load %arg9[%c6, %c0_34] : memref<266x8xbf16, #tpu.memory_space<vmem>>, vector<168x8xbf16>
    %c7 = arith.constant 7 : index
    %c0_35 = arith.constant 0 : index
    %24 = vector.load %arg9[%c7, %c0_35] : memref<266x8xbf16, #tpu.memory_space<vmem>>, vector<168x8xbf16>
    %c8 = arith.constant 8 : index
    %c0_36 = arith.constant 0 : index
    %25 = vector.load %arg9[%c8, %c0_36] : memref<266x8xbf16, #tpu.memory_space<vmem>>, vector<168x8xbf16>
    %c12 = arith.constant 12 : index
    %c0_37 = arith.constant 0 : index
    %26 = vector.load %arg9[%c12, %c0_37] : memref<266x8xbf16, #tpu.memory_space<vmem>>, vector<168x8xbf16>
    %c13 = arith.constant 13 : index
    %c0_38 = arith.constant 0 : index
    %27 = vector.load %arg9[%c13, %c0_38] : memref<266x8xbf16, #tpu.memory_space<vmem>>, vector<168x8xbf16>
    %c14 = arith.constant 14 : index
    %c0_39 = arith.constant 0 : index
    %28 = vector.load %arg9[%c14, %c0_39] : memref<266x8xbf16, #tpu.memory_space<vmem>>, vector<168x8xbf16>
    %c42_40 = arith.constant 42 : index
    %c0_41 = arith.constant 0 : index
    %29 = vector.load %arg9[%c42_40, %c0_41] : memref<266x8xbf16, #tpu.memory_space<vmem>>, vector<168x8xbf16>
    %c43 = arith.constant 43 : index
    %c0_42 = arith.constant 0 : index
    %30 = vector.load %arg9[%c43, %c0_42] : memref<266x8xbf16, #tpu.memory_space<vmem>>, vector<168x8xbf16>
    %c44 = arith.constant 44 : index
    %c0_43 = arith.constant 0 : index
    %31 = vector.load %arg9[%c44, %c0_43] : memref<266x8xbf16, #tpu.memory_space<vmem>>, vector<168x8xbf16>
    %c48 = arith.constant 48 : index
    %c0_44 = arith.constant 0 : index
    %32 = vector.load %arg9[%c48, %c0_44] : memref<266x8xbf16, #tpu.memory_space<vmem>>, vector<168x8xbf16>
    %c49 = arith.constant 49 : index
    %c0_45 = arith.constant 0 : index
    %33 = vector.load %arg9[%c49, %c0_45] : memref<266x8xbf16, #tpu.memory_space<vmem>>, vector<168x8xbf16>
    %c50 = arith.constant 50 : index
    %c0_46 = arith.constant 0 : index
    %34 = vector.load %arg9[%c50, %c0_46] : memref<266x8xbf16, #tpu.memory_space<vmem>>, vector<168x8xbf16>
    %c54 = arith.constant 54 : index
    %c0_47 = arith.constant 0 : index
    %35 = vector.load %arg9[%c54, %c0_47] : memref<266x8xbf16, #tpu.memory_space<vmem>>, vector<168x8xbf16>
    %c55 = arith.constant 55 : index
    %c0_48 = arith.constant 0 : index
    %36 = vector.load %arg9[%c55, %c0_48] : memref<266x8xbf16, #tpu.memory_space<vmem>>, vector<168x8xbf16>
    %c56 = arith.constant 56 : index
    %c0_49 = arith.constant 0 : index
    %37 = vector.load %arg9[%c56, %c0_49] : memref<266x8xbf16, #tpu.memory_space<vmem>>, vector<168x8xbf16>
    %c84_50 = arith.constant 84 : index
    %c0_51 = arith.constant 0 : index
    %38 = vector.load %arg9[%c84_50, %c0_51] : memref<266x8xbf16, #tpu.memory_space<vmem>>, vector<168x8xbf16>
    %c85 = arith.constant 85 : index
    %c0_52 = arith.constant 0 : index
    %39 = vector.load %arg9[%c85, %c0_52] : memref<266x8xbf16, #tpu.memory_space<vmem>>, vector<168x8xbf16>
    %c86 = arith.constant 86 : index
    %c0_53 = arith.constant 0 : index
    %40 = vector.load %arg9[%c86, %c0_53] : memref<266x8xbf16, #tpu.memory_space<vmem>>, vector<168x8xbf16>
    %c90 = arith.constant 90 : index
    %c0_54 = arith.constant 0 : index
    %41 = vector.load %arg9[%c90, %c0_54] : memref<266x8xbf16, #tpu.memory_space<vmem>>, vector<168x8xbf16>
    %c91 = arith.constant 91 : index
    %c0_55 = arith.constant 0 : index
    %42 = vector.load %arg9[%c91, %c0_55] : memref<266x8xbf16, #tpu.memory_space<vmem>>, vector<168x8xbf16>
    %c92 = arith.constant 92 : index
    %c0_56 = arith.constant 0 : index
    %43 = vector.load %arg9[%c92, %c0_56] : memref<266x8xbf16, #tpu.memory_space<vmem>>, vector<168x8xbf16>
    %c96 = arith.constant 96 : index
    %c0_57 = arith.constant 0 : index
    %44 = vector.load %arg9[%c96, %c0_57] : memref<266x8xbf16, #tpu.memory_space<vmem>>, vector<168x8xbf16>
    %c97 = arith.constant 97 : index
    %c0_58 = arith.constant 0 : index
    %45 = vector.load %arg9[%c97, %c0_58] : memref<266x8xbf16, #tpu.memory_space<vmem>>, vector<168x8xbf16>
    %c98 = arith.constant 98 : index
    %c0_59 = arith.constant 0 : index
    %46 = vector.load %arg9[%c98, %c0_59] : memref<266x8xbf16, #tpu.memory_space<vmem>>, vector<168x8xbf16>
    %47 = tpu.concatenate %20, %21, %22, %23, %24, %25, %26, %27, %28, %29, %30, %31, %32, %33, %34, %35 in 1 : vector<168x8xbf16>, vector<168x8xbf16>, vector<168x8xbf16>, vector<168x8xbf16>, vector<168x8xbf16>, vector<168x8xbf16>, vector<168x8xbf16>, vector<168x8xbf16>, vector<168x8xbf16>, vector<168x8xbf16>, vector<168x8xbf16>, vector<168x8xbf16>, vector<168x8xbf16>, vector<168x8xbf16>, vector<168x8xbf16>, vector<168x8xbf16> -> vector<168x128xbf16>
    %48 = tpu.concatenate %36, %37, %38, %39, %40, %41, %42, %43, %44, %45, %46 in 1 : vector<168x8xbf16>, vector<168x8xbf16>, vector<168x8xbf16>, vector<168x8xbf16>, vector<168x8xbf16>, vector<168x8xbf16>, vector<168x8xbf16>, vector<168x8xbf16>, vector<168x8xbf16>, vector<168x8xbf16>, vector<168x8xbf16> -> vector<168x88xbf16>
    %49 = tpu.concatenate %47, %48 in 1 : vector<168x128xbf16>, vector<168x88xbf16> -> vector<168x216xbf16>
    %c0_60 = arith.constant 0 : index
    %c0_61 = arith.constant 0 : index
    %50 = vector.load %arg5[%c0_60, %c0_61] : memref<216x8xbf16, #tpu.memory_space<vmem>>, vector<216x8xbf16>
    %cst_62 = arith.constant dense<0.000000e+00> : vector<168x8xf32>
    %51 = tpu.matmul %49, %50, %cst_62 {dimension_numbers = #tpu.dot_dimension_numbers<[1], [0], [0], [1], [0, 0, 1, 1], [], []>} : vector<168x216xbf16>, vector<216x8xbf16>, vector<168x8xf32> -> vector<168x8xf32>
    %52 = arith.truncf %51 : vector<168x8xf32> to vector<168x8xbf16>
    %c0_63 = arith.constant 0 : index
    %c0_64 = arith.constant 0 : index
    %c0_65 = arith.constant 0 : index
    %c0_66 = arith.constant 0 : index
    %53 = vector.load %arg7[%c0_63, %c0_64, %c0_65, %c0_66] : memref<1x1x168x8xbf16, #tpu.memory_space<vmem>>, vector<1x1x168x8xbf16>
    %54 = vector.shape_cast %53 : vector<1x1x168x8xbf16> to vector<168x8xbf16>
    %55 = vector.shape_cast %52 : vector<168x8xbf16> to vector<1x1x168x8xbf16>
    tpu.vector_store %arg7[%c0_63, %c0_64, %c0_65, %c0_66], %55 {strides = array<i32>} : memref<1x1x168x8xbf16, #tpu.memory_space<vmem>>, vector<1x1x168x8xbf16>,
    %c0_67 = arith.constant 0 : index
    %c0_68 = arith.constant 0 : index
    %56 = vector.load %arg6[%c0_67, %c0_68] : memref<168x1xf32, #tpu.memory_space<vmem>>, vector<168x1xf32>
    %57 = vector.broadcast %56 : vector<168x1xf32> to vector<168x8xf32>
    %58 = arith.mulf %51, %57 : vector<168x8xf32>
    %cst_69 = arith.constant dense<0.000000e+00> : vector<8xf32>
    %59 = vector.multi_reduction <add>, %58, %cst_69 [0] : vector<168x8xf32> to vector<8xf32>
    %60 = vector.shape_cast %59 : vector<8xf32> to vector<1x8xf32>
    %c0_70 = arith.constant 0 : index
    %c0_71 = arith.constant 0 : index
    %c0_72 = arith.constant 0 : index
    %c0_73 = arith.constant 0 : index
    %61 = vector.load %arg8[%c0_70, %c0_71, %c0_72, %c0_73] : memref<1x1x2x8xf32, #tpu.memory_space<vmem>>, vector<1x1x1x8xf32>
    %62 = vector.shape_cast %61 : vector<1x1x1x8xf32> to vector<1x8xf32>
    %63 = vector.shape_cast %60 : vector<1x8xf32> to vector<1x1x1x8xf32>
    tpu.vector_store %arg8[%c0_70, %c0_71, %c0_72, %c0_73], %63 {strides = array<i32>} : memref<1x1x2x8xf32, #tpu.memory_space<vmem>>, vector<1x1x1x8xf32>,
    %64 = arith.mulf %58, %51 : vector<168x8xf32>
    %cst_74 = arith.constant dense<0.000000e+00> : vector<8xf32>
    %65 = vector.multi_reduction <add>, %64, %cst_74 [0] : vector<168x8xf32> to vector<8xf32>
    %66 = vector.shape_cast %65 : vector<8xf32> to vector<1x8xf32>
    %c0_75 = arith.constant 0 : index
    %c0_76 = arith.constant 0 : index
    %c1_77 = arith.constant 1 : index
    %c0_78 = arith.constant 0 : index
    %67 = vector.load %arg8[%c0_75, %c0_76, %c1_77, %c0_78] : memref<1x1x2x8xf32, #tpu.memory_space<vmem>>, vector<1x1x1x8xf32>
    %68 = vector.shape_cast %67 : vector<1x1x1x8xf32> to vector<1x8xf32>
    %69 = vector.shape_cast %66 : vector<1x8xf32> to vector<1x1x1x8xf32>
    tpu.vector_store %arg8[%c0_75, %c0_76, %c1_77, %c0_78], %69 {strides = array<i32>} : memref<1x1x2x8xf32, #tpu.memory_space<vmem>>, vector<1x1x1x8xf32>,
    return
  }
  func.func @transform_0(%arg0: i32, %arg1: i32) -> (i32, i32, i32, i32) {
    %c0_i32 = arith.constant 0 : i32
    %c0_i32_0 = arith.constant 0 : i32
    %c0_i32_1 = arith.constant 0 : i32
    return %arg0, %arg1, %c0_i32, %c0_i32_0 : i32, i32, i32, i32
  }
  func.func @transform_1(%arg0: i32, %arg1: i32) -> (i32, i32, i32, i32) {
    %c4_i32 = arith.constant 4 : i32
    %0 = arith.muli %arg1, %c4_i32 : i32
    %c4_i32_0 = arith.constant 4 : i32
    %1 = arith.addi %0, %c4_i32_0 : i32
    %c0_i32 = arith.constant 0 : i32
    %2 = arith.addi %1, %c0_i32 : i32
    %c0_i32_1 = arith.constant 0 : i32
    %c0_i32_2 = arith.constant 0 : i32
    %c0_i32_3 = arith.constant 0 : i32
    return %arg0, %2, %c0_i32_1, %c0_i32_2 : i32, i32, i32, i32
  }
  func.func @transform_2(%arg0: i32, %arg1: i32) -> (i32, i32, i32, i32) {
    %c4_i32 = arith.constant 4 : i32
    %0 = arith.muli %arg1, %c4_i32 : i32
    %c4_i32_0 = arith.constant 4 : i32
    %1 = arith.addi %0, %c4_i32_0 : i32
    %c1_i32 = arith.constant 1 : i32
    %2 = arith.addi %1, %c1_i32 : i32
    %c0_i32 = arith.constant 0 : i32
    %c0_i32_1 = arith.constant 0 : i32
    %c0_i32_2 = arith.constant 0 : i32
    return %arg0, %2, %c0_i32, %c0_i32_1 : i32, i32, i32, i32
  }
  func.func @transform_3(%arg0: i32, %arg1: i32) -> (i32, i32) {
    %c0_i32 = arith.constant 0 : i32
    %c0_i32_0 = arith.constant 0 : i32
    %c0_i32_1 = arith.constant 0 : i32
    return %c0_i32, %c0_i32_0 : i32, i32
  }
  func.func @transform_4(%arg0: i32, %arg1: i32) -> (i32, i32) {
    %c0_i32 = arith.constant 0 : i32
    %c0_i32_0 = arith.constant 0 : i32
    %c0_i32_1 = arith.constant 0 : i32
    return %c0_i32, %c0_i32_0 : i32, i32
  }
  func.func @transform_5(%arg0: i32, %arg1: i32) -> (i32, i32, i32, i32) {
    %c0_i32 = arith.constant 0 : i32
    %c0_i32_0 = arith.constant 0 : i32
    %c0_i32_1 = arith.constant 0 : i32
    return %arg0, %arg1, %c0_i32, %c0_i32_0 : i32, i32, i32, i32
  }
  func.func @transform_6(%arg0: i32, %arg1: i32) -> (i32, i32, i32, i32) {
    %c0_i32 = arith.constant 0 : i32
    %c0_i32_0 = arith.constant 0 : i32
    %c0_i32_1 = arith.constant 0 : i32
    return %arg0, %arg1, %c0_i32, %c0_i32_0 : i32, i32, i32, i32
  }
}

module attributes {stable_mosaic.version = 11 : i64} {
  func.func @_bn_relu_out_kernel(%arg0: i32, %arg1: i32, %arg2: memref<1x4x7x6x8xbf16, #tpu.memory_space<vmem>>, %arg3: memref<1x8xf32, #tpu.memory_space<vmem>>, %arg4: memref<1x8xf32, #tpu.memory_space<vmem>>, %arg5: memref<1x4x4x4x8xf32, #tpu.memory_space<vmem>>) attributes {dimension_semantics = [#tpu.dimension_semantics<parallel>, #tpu.dimension_semantics<parallel>], iteration_bounds = array<i64: 2, 1>, scalar_prefetch = 0 : i64, scratch_operands = 0 : i64, tpu.core_type = #tpu.core_type<tc>, window_params = [{transform_indices = @transform_0, window_bounds = array<i64: 1, 4, 7, 6, 8>}, {pipeline_mode = #tpu.pipeline_mode<synchronous>, transform_indices = @transform_1, window_bounds = array<i64: 1, 8>}, {pipeline_mode = #tpu.pipeline_mode<synchronous>, transform_indices = @transform_2, window_bounds = array<i64: 1, 8>}, {transform_indices = @transform_3, window_bounds = array<i64: 1, 4, 4, 4, 8>}]} {
    %c0 = arith.constant 0 : index
    %c0_0 = arith.constant 0 : index
    %c0_1 = arith.constant 0 : index
    %c0_2 = arith.constant 0 : index
    %c0_3 = arith.constant 0 : index
    %0 = vector.load %arg2[%c0, %c0_0, %c0_1, %c0_2, %c0_3] : memref<1x4x7x6x8xbf16, #tpu.memory_space<vmem>>, vector<1x4x4x4x8xbf16>
    %1 = vector.shape_cast %0 : vector<1x4x4x4x8xbf16> to vector<4x4x4x8xbf16>
    %2 = arith.extf %1 : vector<4x4x4x8xbf16> to vector<4x4x4x8xf32>
    %c0_4 = arith.constant 0 : index
    %c0_5 = arith.constant 0 : index
    %3 = vector.load %arg3[%c0_4, %c0_5] : memref<1x8xf32, #tpu.memory_space<vmem>>, vector<1x8xf32>
    %4 = vector.shape_cast %3 : vector<1x8xf32> to vector<1x1x1x8xf32>
    %5 = vector.broadcast %4 : vector<1x1x1x8xf32> to vector<4x4x4x8xf32>
    %6 = arith.mulf %2, %5 : vector<4x4x4x8xf32>
    %c0_6 = arith.constant 0 : index
    %c0_7 = arith.constant 0 : index
    %7 = vector.load %arg4[%c0_6, %c0_7] : memref<1x8xf32, #tpu.memory_space<vmem>>, vector<1x8xf32>
    %8 = vector.shape_cast %7 : vector<1x8xf32> to vector<1x1x1x8xf32>
    %9 = vector.broadcast %8 : vector<1x1x1x8xf32> to vector<4x4x4x8xf32>
    %10 = arith.addf %6, %9 : vector<4x4x4x8xf32>
    %cst = arith.constant 0.000000e+00 : f32
    %11 = vector.broadcast %cst : f32 to vector<4x4x4x8xf32>
    %12 = arith.maximumf %10, %11 : vector<4x4x4x8xf32>
    %c0_8 = arith.constant 0 : index
    %c0_9 = arith.constant 0 : index
    %c0_10 = arith.constant 0 : index
    %c0_11 = arith.constant 0 : index
    %c0_12 = arith.constant 0 : index
    %13 = vector.load %arg5[%c0_8, %c0_9, %c0_10, %c0_11, %c0_12] : memref<1x4x4x4x8xf32, #tpu.memory_space<vmem>>, vector<1x4x4x4x8xf32>
    %14 = vector.shape_cast %13 : vector<1x4x4x4x8xf32> to vector<4x4x4x8xf32>
    %15 = vector.shape_cast %12 : vector<4x4x4x8xf32> to vector<1x4x4x4x8xf32>
    tpu.vector_store %arg5[%c0_8, %c0_9, %c0_10, %c0_11, %c0_12], %15 {strides = array<i32>} : memref<1x4x4x4x8xf32, #tpu.memory_space<vmem>>, vector<1x4x4x4x8xf32>,
    return
  }
  func.func @transform_0(%arg0: i32, %arg1: i32) -> (i32, i32, i32, i32, i32) {
    %c0_i32 = arith.constant 0 : i32
    %c0_i32_0 = arith.constant 0 : i32
    %c0_i32_1 = arith.constant 0 : i32
    %c0_i32_2 = arith.constant 0 : i32
    return %arg0, %arg1, %c0_i32, %c0_i32_0, %c0_i32_1 : i32, i32, i32, i32, i32
  }
  func.func @transform_1(%arg0: i32, %arg1: i32) -> (i32, i32) {
    %c0_i32 = arith.constant 0 : i32
    %c0_i32_0 = arith.constant 0 : i32
    %c0_i32_1 = arith.constant 0 : i32
    return %c0_i32, %c0_i32_0 : i32, i32
  }
  func.func @transform_2(%arg0: i32, %arg1: i32) -> (i32, i32) {
    %c0_i32 = arith.constant 0 : i32
    %c0_i32_0 = arith.constant 0 : i32
    %c0_i32_1 = arith.constant 0 : i32
    return %c0_i32, %c0_i32_0 : i32, i32
  }
  func.func @transform_3(%arg0: i32, %arg1: i32) -> (i32, i32, i32, i32, i32) {
    %c0_i32 = arith.constant 0 : i32
    %c0_i32_0 = arith.constant 0 : i32
    %c0_i32_1 = arith.constant 0 : i32
    %c0_i32_2 = arith.constant 0 : i32
    return %arg0, %arg1, %c0_i32, %c0_i32_0, %c0_i32_1 : i32, i32, i32, i32, i32
  }
}

</mosaic_0001>

<llo_original>
// kernel: send_down.5
$region0: #{send_down.5}
  #allocation0 [shape = 'u32[]', space=smem, size = 0x4, offset = 0x4, fixed_abs, tag = 'smem constant byte address 0x4 - core index']
  #allocation1 [shape = 'u32[144,128]{1,0:T(1,128)}', space=vmem, size = 0x12000, scoped, tag = 'internal scratch']
  %s0 = inlined_call_operand.vmem [shape: bf16[16,4,2,4,8], index: 0, kind: input, shape index: {}, may-alias: {0,1}]
  %s1 = inlined_call_operand.vmem [shape: bf16[16,4,2,4,8], index: 1, kind: input, shape index: {}, may-alias: {0,1}]
  %s2 = inlined_call_operand.vmem [shape: bf16[2,6,7,6,4], index: 2, kind: output, shape index: {}]
  %s3 = sld [smem:[#allocation0]]
  $region41: #{send_down.5} parent=0
    _
  %s5 = ssub.s32 1, %s3
  %s6 = scalar_select 0, %s5, %s3
  loop: start=0, step=1, limit=14
  $region2: #{send_down.5} parent=0 // loop_pre_header
    _
  $region3: #{send_down.5} parent=0 // loop_header
    %s8 = sphi 0, %s12
    %p9 = scmp.ge.s32.totalorder %s8, 14
    %s15 = sphi 0, %s27
    %s16 = sphi 0, %s23
    %s17 = sphi 0, %s15
    %s18 = sphi 0, %s16
    %s19 = sphi 0, %s17
    %s20 = sphi 0, %s18
    %s46 = sphi 0, %s48
    %s49 = sphi 0, %s46
    %s50 = sphi 0, %s49
    %s66 = sphi 0, %s50
    %s90 = sphi 0, %s92
    %s93 = sphi 0, %s90
    %s94 = sphi 0, %s93
    %s110 = sphi 0, %s94
    %s118 = sphi 0, %s120
    %s121 = sphi 0, %s118
    %s122 = sphi 0, %s121
    %s138 = sphi 0, %s122
  $region4: #{send_down.5} parent=0 // loop_header_branch
    %11 = sbr.rel (%p9) target = $region8
  $region5: #{send_down.5} parent=0 // loop_body
    %s13 = ssub.s32 %s8, 1
    %s14 = ssub.s32 %s8, 2
    %s21 = sadd.s32 1, %s16
    %p22 = scmp.ge.s32.totalorder %s21, 6
    %s23 = scalar_select %p22, 0, %s21
    %s24 = sadd.s32 1, %s15
    %s25 = scalar_select %p22, %s24, %s15
    %p26 = scmp.ge.s32.totalorder %s25, 2
    %s27 = scalar_select %p26, 0, %s25
    %s28 = smul.u32 %s15, 4
    %s29 = ssub.s32 %s16, 1
    %p30 = scmp.gt.s32.totalorder %s29, 0
    %s31 = scalar_select %p30, %s29, 0
    %p32 = scmp.lt.s32.totalorder %s31, 3
    %s33 = scalar_select %p32, %s31, 3
    %s34 = sadd.s32 %s28, %s33
    %s35 = smul.u32 %s34, 2
    %s36 = smul.u32 %s27, 4
    %s37 = ssub.s32 %s23, 1
    %p38 = scmp.gt.s32.totalorder %s37, 0
    %s39 = scalar_select %p38, %s37, 0
    %p40 = scmp.lt.s32.totalorder %s39, 3
    %s41 = scalar_select %p40, %s39, 3
    %s42 = sadd.s32 %s36, %s41
    %s43 = smul.u32 %s42, 2
    %s44 = ssub.s32 %s35, %s43
    %p45 = scmp.eq.s32.totalorder %s44, 0
    %s47 = sadd.s32 %s46, 1
    %s48 = scalar_select %p45, %s46, %s47
    %p51 = pneg %p45
    %p52 = scmp.eq.s32.totalorder %s8, 11
    %p53 = por %p51, %p52
    %p54 = scmp.ne.s32.totalorder %s46, %s49
    %p55 = scmp.eq.s32.totalorder %s8, 0
    %p56 = por %p54, %p55
    %p57 = scmp.ne.s32.totalorder %s46, %s49
    %p58 = scmp.eq.s32.totalorder %s13, 11
    %p59 = por %p57, %p58
    %p60 = scmp.ne.s32.totalorder %s49, %s50
    %p61 = scmp.eq.s32.totalorder %s13, 0
    %p62 = por %p60, %p61
    %p63 = scmp.ne.s32.totalorder %s49, %s50
    %p64 = scmp.eq.s32.totalorder %s14, 11
    %p65 = por %p63, %p64
    %p67 = scmp.ne.s32.totalorder %s50, %s66
    %p68 = scmp.eq.s32.totalorder %s14, 0
    %p69 = por %p67, %p68
    %s70 = smul.u32 %s15, 4
    %s71 = ssub.s32 %s16, 1
    %p72 = scmp.gt.s32.totalorder %s71, 0
    %s73 = scalar_select %p72, %s71, 0
    %p74 = scmp.lt.s32.totalorder %s73, 3
    %s75 = scalar_select %p74, %s73, 3
    %s76 = sadd.s32 %s70, %s75
    %s77 = smul.u32 %s76, 2
    %s78 = sadd.s32 %s77, 1
    %s79 = smul.u32 %s27, 4
    %s80 = ssub.s32 %s23, 1
    %p81 = scmp.gt.s32.totalorder %s80, 0
    %s82 = scalar_select %p81, %s80, 0
    %p83 = scmp.lt.s32.totalorder %s82, 3
    %s84 = scalar_select %p83, %s82, 3
    %s85 = sadd.s32 %s79, %s84
    %s86 = smul.u32 %s85, 2
    %s87 = sadd.s32 %s86, 1
    %s88 = ssub.s32 %s78, %s87
    %p89 = scmp.eq.s32.totalorder %s88, 0
    %s91 = sadd.s32 %s90, 1
    %s92 = scalar_select %p89, %s90, %s91
    %p95 = pneg %p89
    %p96 = scmp.eq.s32.totalorder %s8, 11
    %p97 = por %p95, %p96
    %p98 = scmp.ne.s32.totalorder %s90, %s93
    %p99 = scmp.eq.s32.totalorder %s8, 0
    %p100 = por %p98, %p99
    %p101 = scmp.ne.s32.totalorder %s90, %s93
    %p102 = scmp.eq.s32.totalorder %s13, 11
    %p103 = por %p101, %p102
    %p104 = scmp.ne.s32.totalorder %s93, %s94
    %p105 = scmp.eq.s32.totalorder %s13, 0
    %p106 = por %p104, %p105
    %p107 = scmp.ne.s32.totalorder %s93, %s94
    %p108 = scmp.eq.s32.totalorder %s14, 11
    %p109 = por %p107, %p108
    %p111 = scmp.ne.s32.totalorder %s94, %s110
    %p112 = scmp.eq.s32.totalorder %s14, 0
    %p113 = por %p111, %p112
    %s114 = ssub.s32 %s15, %s27
    %s115 = ssub.s32 %s16, %s23
    %s116 = sor.u32 %s114, %s115
    %p117 = scmp.eq.s32.totalorder %s116, 0
    %s119 = sadd.s32 %s118, 1
    %s120 = scalar_select %p117, %s118, %s119
    %p123 = pneg %p117
    %p124 = scmp.eq.s32.totalorder %s8, 11
    %p125 = por %p123, %p124
    %p126 = scmp.ne.s32.totalorder %s118, %s121
    %p127 = scmp.eq.s32.totalorder %s8, 0
    %p128 = por %p126, %p127
    %p129 = scmp.ne.s32.totalorder %s118, %s121
    %p130 = scmp.eq.s32.totalorder %s13, 11
    %p131 = por %p129, %p130
    %p132 = scmp.ne.s32.totalorder %s121, %s122
    %p133 = scmp.eq.s32.totalorder %s13, 0
    %p134 = por %p132, %p133
    %p135 = scmp.ne.s32.totalorder %s121, %s122
    %p136 = scmp.eq.s32.totalorder %s14, 11
    %p137 = por %p135, %p136
    %p139 = scmp.ne.s32.totalorder %s122, %s138
    %p140 = scmp.eq.s32.totalorder %s14, 0
    %p141 = por %p139, %p140
    %p142 = scmp.le.s32.totalorder 1, %s8
    %p143 = scmp.lt.s32.totalorder %s8, 13
    %p144 = pnand %p142, %p143
    %p145 = pneg %p144
    // Predicated region
    $region9: #{send_down.5} parent=5 // pred_check
      _
    $region10: #{send_down.5} parent=5 // pred_check_branch
      %147 = sbr.rel (%p144) target = $region12
    $region11: #{send_down.5} parent=5 // pred_region
      %s148 = ssub.s32 %s8, 1
    $region12: #{send_down.5} parent=5 // pred_fallthru
      _
    %p149 = scmp.lt.s32.totalorder %s8, 12
    // Predicated region
    $region13: #{send_down.5} parent=5 // pred_check
      %p150 = pneg %p149
    $region14: #{send_down.5} parent=5 // pred_check_branch
      %152 = sbr.rel (%p150) target = $region16
    $region15: #{send_down.5} parent=5 // pred_region
      // Predicated region
      $region17: #{send_down.5} parent=15 // pred_check
        %p153 = pneg %p56
      $region18: #{send_down.5} parent=15 // pred_check_branch
        %155 = sbr.rel (%p153) target = $region20
      $region19: #{send_down.5} parent=15 // pred_region
        %s156 = smul.u32 %s15, 4
        %s157 = ssub.s32 %s16, 1
        %p158 = scmp.gt.s32.totalorder %s157, 0
        %s159 = scalar_select %p158, %s157, 0
        %p160 = scmp.lt.s32.totalorder %s159, 3
        %s161 = scalar_select %p160, %s159, 3
        %s162 = sadd.s32 %s156, %s161
        %s163 = smul.u32 %s162, 2
        %p164 = scmp.lt.s32.totalorder %s163, 15
        %s165 = scalar_select %p164, %s163, 15
        %s166 = smul.addr %s165, 8
        %s167 = smul.addr %s166, 2
        %s168 = scalar_lea.vmem %s0, %s167
        %s169 = smul.u32 %s15, 4
        %s170 = ssub.s32 %s16, 1
        %p171 = scmp.gt.s32.totalorder %s170, 0
        %s172 = scalar_select %p171, %s170, 0
        %p173 = scmp.lt.s32.totalorder %s172, 3
        %s174 = scalar_select %p173, %s172, 3
        %s175 = sadd.s32 %s169, %s174
        %s176 = smul.u32 %s175, 2
      $region20: #{send_down.5} parent=15 // pred_fallthru
        _
      // Predicated region
      $region21: #{send_down.5} parent=15 // pred_check
        %p177 = pneg %p100
      $region22: #{send_down.5} parent=15 // pred_check_branch
        %179 = sbr.rel (%p177) target = $region24
      $region23: #{send_down.5} parent=15 // pred_region
        %s180 = smul.u32 %s15, 4
        %s181 = ssub.s32 %s16, 1
        %p182 = scmp.gt.s32.totalorder %s181, 0
        %s183 = scalar_select %p182, %s181, 0
        %p184 = scmp.lt.s32.totalorder %s183, 3
        %s185 = scalar_select %p184, %s183, 3
        %s186 = sadd.s32 %s180, %s185
        %s187 = smul.u32 %s186, 2
        %s188 = sadd.s32 %s187, 1
        %p189 = scmp.lt.s32.totalorder %s188, 15
        %s190 = scalar_select %p189, %s188, 15
        %s191 = smul.addr %s190, 8
        %s192 = smul.addr %s191, 2
        %s193 = scalar_lea.vmem %s1, %s192
        %s194 = smul.u32 %s15, 4
        %s195 = ssub.s32 %s16, 1
        %p196 = scmp.gt.s32.totalorder %s195, 0
        %s197 = scalar_select %p196, %s195, 0
        %p198 = scmp.lt.s32.totalorder %s197, 3
        %s199 = scalar_select %p198, %s197, 3
        %s200 = sadd.s32 %s194, %s199
        %s201 = smul.u32 %s200, 2
        %s202 = sadd.s32 %s201, 1
      $region24: #{send_down.5} parent=15 // pred_fallthru
        _
    $region16: #{send_down.5} parent=5 // pred_fallthru
      _
    %p203 = scmp.le.s32.totalorder 1, %s8
    %p204 = scmp.lt.s32.totalorder %s8, 13
    %p205 = pnand %p203, %p204
    %p206 = pneg %p205
    // Predicated region
    $region25: #{send_down.5} parent=5 // pred_check
      _
    $region26: #{send_down.5} parent=5 // pred_check_branch
      %208 = sbr.rel (%p205) target = $region28
    $region27: #{send_down.5} parent=5 // pred_region
      %s209 = ssub.s32 %s8, 1
      %s210 = smul.u32 %s17, 4
      %s211 = ssub.s32 %s18, 1
      %p212 = scmp.gt.s32.totalorder %s211, 0
      %s213 = scalar_select %p212, %s211, 0
      %p214 = scmp.lt.s32.totalorder %s213, 3
      %s215 = scalar_select %p214, %s213, 3
      %s216 = sadd.s32 %s210, %s215
      %s217 = smul.u32 %s216, 2
      %p218 = scmp.lt.s32.totalorder %s217, 15
      %s219 = scalar_select %p218, %s217, 15
      %s220 = smul.addr %s219, 8
      %s221 = smul.addr %s220, 2
      %s222 = scalar_lea.vmem %s0, %s221
      %p223 = pneg %p62
      %p224 = pneg %p59
      %s225 = smul.u32 %s17, 4
      %s226 = ssub.s32 %s18, 1
      %p227 = scmp.gt.s32.totalorder %s226, 0
      %s228 = scalar_select %p227, %s226, 0
      %p229 = scmp.lt.s32.totalorder %s228, 3
      %s230 = scalar_select %p229, %s228, 3
      %s231 = sadd.s32 %s225, %s230
      %s232 = smul.u32 %s231, 2
      %s233 = sadd.s32 %s232, 1
      %p234 = scmp.lt.s32.totalorder %s233, 15
      %s235 = scalar_select %p234, %s233, 15
      %s236 = smul.addr %s235, 8
      %s237 = smul.addr %s236, 2
      %s238 = scalar_lea.vmem %s1, %s237
      %p239 = pneg %p106
      %p240 = pneg %p103
      %p241 = pneg %p134
      %p242 = pneg %p131
      %p243 = scmp.lt.s32.totalorder %s17, 1
      %s244 = scalar_select %p243, %s17, 1
      %p245 = scmp.lt.s32.totalorder %s18, 5
      %s246 = scalar_select %p245, %s18, 5
      %s247 = smul.addr %s246, 7
      %s248 = smul.addr %s244, 42
      %s249 = sadd.s32 %s247, %s248
      %s250 = smul.addr %s249, 4
      %s251 = scalar_lea.vmem %s2, %s250
      %s252 = smul.u32 %s17, 4
      %s253 = ssub.s32 %s18, 1
      %p254 = scmp.gt.s32.totalorder %s253, 0
      %s255 = scalar_select %p254, %s253, 0
      %p256 = scmp.lt.s32.totalorder %s255, 3
      %s257 = scalar_select %p256, %s255, 3
      %s258 = sadd.s32 %s252, %s257
      %s259 = smul.u32 %s258, 2
      %p260 = scmp.lt.s32.totalorder %s259, 15
      %s261 = scalar_select %p260, %s259, 15
      %s262 = smul.addr %s261, 8
      %s263 = smul.addr %s262, 2
      %s264 = scalar_lea.vmem %s0, %s263
      %s265 = smul.u32 %s17, 4
      %s266 = ssub.s32 %s18, 1
      %p267 = scmp.gt.s32.totalorder %s266, 0
      %s268 = scalar_select %p267, %s266, 0
      %p269 = scmp.lt.s32.totalorder %s268, 3
      %s270 = scalar_select %p269, %s268, 3
      %s271 = sadd.s32 %s265, %s270
      %s272 = smul.u32 %s271, 2
      %s273 = smul.u32 %s17, 4
      %s274 = ssub.s32 %s18, 1
      %p275 = scmp.gt.s32.totalorder %s274, 0
      %s276 = scalar_select %p275, %s274, 0
      %p277 = scmp.lt.s32.totalorder %s276, 3
      %s278 = scalar_select %p277, %s276, 3
      %s279 = sadd.s32 %s273, %s278
      %s280 = smul.u32 %s279, 2
      %s281 = sadd.s32 %s280, 1
      %p282 = scmp.lt.s32.totalorder %s281, 15
      %s283 = scalar_select %p282, %s281, 15
      %s284 = smul.addr %s283, 8
      %s285 = smul.addr %s284, 2
      %s286 = scalar_lea.vmem %s1, %s285
      %s287 = smul.u32 %s17, 4
      %s288 = ssub.s32 %s18, 1
      %p289 = scmp.gt.s32.totalorder %s288, 0
      %s290 = scalar_select %p289, %s288, 0
      %p291 = scmp.lt.s32.totalorder %s290, 3
      %s292 = scalar_select %p291, %s290, 3
      %s293 = sadd.s32 %s287, %s292
      %s294 = smul.u32 %s293, 2
      %s295 = sadd.s32 %s294, 1
      %p296 = scmp.lt.s32.totalorder %s17, 1
      %s297 = scalar_select %p296, %s17, 1
      %p298 = scmp.lt.s32.totalorder %s18, 5
      %s299 = scalar_select %p298, %s18, 5
      %s300 = smul.addr %s299, 7
      %s301 = smul.addr %s297, 42
      %s302 = sadd.s32 %s300, %s301
      %s303 = smul.addr %s302, 4
      %s304 = scalar_lea.vmem %s2, %s303
      %v307 = vld [vmem:[%s264] sm:$0x3]
      %v308 = vld [vmem:[%s264 + $0x2] sm:$0x3]
      %v309 = vld [vmem:[%s264 + $0x4] sm:$0x3]
      %v310 = vld [vmem:[%s264 + $0x6] sm:$0x3]
      %v311 = vld [vmem:[%s264 + $0x8] sm:$0x3]
      %v312 = vld [vmem:[%s264 + $0xa] sm:$0x3]
      %v313 = vld [vmem:[%s264 + $0xc] sm:$0x3]
      %v314 = vld [vmem:[%s264 + $0xe] sm:$0x3]
      %v315 = vld [vmem:[%s286] sm:$0x3]
      %v316 = vld [vmem:[%s286 + $0x2] sm:$0x3]
      %v317 = vld [vmem:[%s286 + $0x4] sm:$0x3]
      %v318 = vld [vmem:[%s286 + $0x6] sm:$0x3]
      %v319 = vld [vmem:[%s286 + $0x8] sm:$0x3]
      %v320 = vld [vmem:[%s286 + $0xa] sm:$0x3]
      %v321 = vld [vmem:[%s286 + $0xc] sm:$0x3]
      %v322 = vld [vmem:[%s286 + $0xe] sm:$0x3]
      %v323 = vmax.bf16 %v307, %v315
      %v324 = vmax.bf16 %v308, %v316
      %v325 = vmax.bf16 %v309, %v317
      %v326 = vmax.bf16 %v310, %v318
      %v327 = vmax.bf16 %v311, %v319
      %v328 = vmax.bf16 %v312, %v320
      %v329 = vmax.bf16 %v313, %v321
      %v330 = vmax.bf16 %v314, %v322
      %v331 = vmax.bf16 %v323, %v324
      %v332 = vmax.bf16 %v325, %v326
      %v333 = vmax.bf16 %v327, %v328
      %v334 = vmax.bf16 %v329, %v330
      %339 = vrot.lane.b32.xlu0 %v331, 124
      %v340 = vpop.permute.xlu0 %339
      %341 = vrot.lane.b32.xlu0 %v332, 124
      %v342 = vpop.permute.xlu0 %341
      %343 = vrot.lane.b32.xlu0 %v333, 124
      %v344 = vpop.permute.xlu0 %343
      %345 = vrot.lane.b32.xlu0 %v334, 124
      %v346 = vpop.permute.xlu0 %345
      %v351 = vmax.bf16 %v331, %v340
      %v352 = vmax.bf16 %v332, %v342
      %v353 = vmax.bf16 %v333, %v344
      %v354 = vmax.bf16 %v334, %v346
      %p355 = scmp.ge.s32.totalorder %s18, 1
      %p356 = scmp.le.s32.totalorder %s18, 4
      %p357 = pnand %p355, %p356
      %p358 = pneg %p357
      %s359 = scalar_select %p358, 1, 0
      %v360 = vstv %s359
      %vm361 = vcmp.eq.s32.totalorder %v360, 1
      %v362 = vsel %vm361, 1, 0
      %v363 = vpack.c.b16 %v362, %v362
      %vm364 = vcmp.ne.s16.totalorder %v363, 0
      %v365 = vsel %vm364, %v351, 0
      %v366 = vsel %vm364, %v352, 0
      %v367 = vsel %vm364, %v353, 0
      %v368 = vsel %vm364, %v354, 0
      %vm369 = vcmask 26624
      %370 = vst.msk [vmem:[%s304] sm:$0x7] %vm369, 0
      %371 = vst.msk [vmem:[%s304 + $0x4] sm:$0x7] %vm369, 0
      %372 = vst.msk [vmem:[%s304 + $0x8] sm:$0x7] %vm369, 0
      %373 = vst.msk [vmem:[%s304 + $0xc] sm:$0x7] %vm369, 0
      %374 = vst.msk [vmem:[%s304 + $0x10] sm:$0x7] %vm369, 0
      %375 = vst.msk [vmem:[%s304 + $0x14] sm:$0x7] %vm369, 0
      %376 = vst.msk [vmem:[%s304 + $0x18] sm:$0x7] %vm369, 0
      %v382 = vunpack.c.l.s4 1983009808
      %v383 = vunpack.c.0.s8 %v382
      %v384 = vlaneseq
      %v385 = vshrl.u32 %v384, 7
      %v386 = vsub.s32 %v383, %v385
      %v387 = vrot.slane %v365, %v386
      %v389 = vunpack.c.l.s4 1983009808
      %v390 = vunpack.c.0.s8 %v389
      %v391 = vlaneseq
      %v392 = vshrl.u32 %v391, 7
      %v393 = vsub.s32 %v390, %v392
      %v394 = vrot.slane %v366, %v393
      %v396 = vunpack.c.l.s4 1983009808
      %v397 = vunpack.c.0.s8 %v396
      %v398 = vlaneseq
      %v399 = vshrl.u32 %v398, 7
      %v400 = vsub.s32 %v397, %v399
      %v401 = vrot.slane %v367, %v400
      %v403 = vunpack.c.l.s4 1983009808
      %v404 = vunpack.c.0.s8 %v403
      %v405 = vlaneseq
      %v406 = vshrl.u32 %v405, 7
      %v407 = vsub.s32 %v404, %v406
      %v408 = vrot.slane %v368, %v407
      %v410 = vshrl.u32 %v387, 16
      %v412 = vrot.slane %v410, 7
      %v413 = vshll.u32 %v387, 16
      %v415 = vor.u32 %v412, %v413
      %v417 = vshrl.u32 %v394, 16
      %v419 = vrot.slane %v417, 7
      %v420 = vshll.u32 %v394, 16
      %v422 = vor.u32 %v419, %v420
      %v424 = vshrl.u32 %v401, 16
      %v426 = vrot.slane %v424, 7
      %v427 = vshll.u32 %v401, 16
      %v429 = vor.u32 %v426, %v427
      %v431 = vshrl.u32 %v408, 16
      %v433 = vrot.slane %v431, 7
      %v434 = vshll.u32 %v408, 16
      %v436 = vor.u32 %v433, %v434
      %s441 = scalar_lea.vmem %s304, 4
      %vm442 = vcmask 26624
      %vm443 = vsmask.f32 2306
      %vm444 = vmand %vm442, %vm443
      %v445 = vld [vmem:[%s441] sm:$0x7]
      %v446 = vsel %vm444, %v415, %v445
      %447 = vst [vmem:[%s441] sm:$0x7] %v446
      %v448 = vld [vmem:[%s441 + $0x4] sm:$0x7]
      %v449 = vsel %vm444, %v422, %v448
      %450 = vst [vmem:[%s441 + $0x4] sm:$0x7] %v449
      %v451 = vld [vmem:[%s441 + $0x8] sm:$0x7]
      %v452 = vsel %vm444, %v429, %v451
      %453 = vst [vmem:[%s441 + $0x8] sm:$0x7] %v452
      %v454 = vld [vmem:[%s441 + $0xc] sm:$0x7]
      %v455 = vsel %vm444, %v436, %v454
      %456 = vst [vmem:[%s441 + $0xc] sm:$0x7] %v455
      %p457 = scmp.lt.s32.totalorder %s17, 1
      %s458 = scalar_select %p457, %s17, 1
      %p459 = scmp.lt.s32.totalorder %s18, 5
      %s460 = scalar_select %p459, %s18, 5
      %s461 = smul.addr %s460, 7
      %s462 = smul.addr %s458, 42
      %s463 = sadd.s32 %s461, %s462
      %s464 = smul.addr %s463, 4
      %s465 = scalar_lea.vmem %s2, %s464
      // Predicated region
      $region29: #{send_down.5} parent=27 // pred_check
        %p466 = pneg %p131
      $region30: #{send_down.5} parent=27 // pred_check_branch
        %468 = sbr.rel (%p466) target = $region32
      $region31: #{send_down.5} parent=27 // pred_region
        _
      $region32: #{send_down.5} parent=27 // pred_fallthru
        _
    $region28: #{send_down.5} parent=5 // pred_fallthru
      _
    %p469 = scmp.le.s32.totalorder 2, %s8
    // Predicated region
    $region33: #{send_down.5} parent=5 // pred_check
      %p470 = pneg %p469
    $region34: #{send_down.5} parent=5 // pred_check_branch
      %472 = sbr.rel (%p470) target = $region36
    $region35: #{send_down.5} parent=5 // pred_region
      %s473 = ssub.s32 %s8, 2
      // Predicated region
      $region37: #{send_down.5} parent=35 // pred_check
        %p474 = pneg %p137
      $region38: #{send_down.5} parent=35 // pred_check_branch
        %476 = sbr.rel (%p474) target = $region40
      $region39: #{send_down.5} parent=35 // pred_region
        %p477 = scmp.lt.s32.totalorder %s19, 1
        %s478 = scalar_select %p477, %s19, 1
        %p479 = scmp.lt.s32.totalorder %s20, 5
        %s480 = scalar_select %p479, %s20, 5
        %s481 = smul.addr %s480, 7
        %s482 = smul.addr %s478, 42
        %s483 = sadd.s32 %s481, %s482
        %s484 = smul.addr %s483, 4
        %s485 = scalar_lea.vmem %s2, %s484
      $region40: #{send_down.5} parent=35 // pred_fallthru
        _
    $region36: #{send_down.5} parent=5 // pred_fallthru
      _
  $region6: #{send_down.5} parent=0 // loop_footer
    %s12 = sadd.s32 1, %s8
  $region7: #{send_down.5} parent=0 // loop_footer_branch
    %7 = sbr.rel target = $region3
  $region8: #{send_down.5} parent=0 // loop_exit
    _

// kernel: send_down.7
$region0: #{send_down.7}
  #allocation0 [shape = 'u32[]', space=smem, size = 0x4, offset = 0x4, fixed_abs, tag = 'smem constant byte address 0x4 - core index']
  #allocation1 [shape = 'u32[144,128]{1,0:T(1,128)}', space=vmem, size = 0x12000, scoped, tag = 'internal scratch']
  %s0 = inlined_call_operand.vmem [shape: bf16[2,4,7,6,8], index: 0, kind: input, shape index: {}]
  %s1 = inlined_call_operand.vmem [shape: f32[1,8], index: 1, kind: input, shape index: {}]
  %s2 = inlined_call_operand.vmem [shape: f32[1,8], index: 2, kind: input, shape index: {}]
  %s3 = inlined_call_operand.vmem [shape: bf16[2,6,7,6,8], index: 3, kind: output, shape index: {}]
  %s4 = sld [smem:[#allocation0]]
  $region45: #{send_down.7} parent=0
    _
  %s6 = ssub.s32 1, %s4
  %s7 = scalar_select 0, %s6, %s4
  loop: start=0, step=1, limit=14
  $region2: #{send_down.7} parent=0 // loop_pre_header
    _
  $region3: #{send_down.7} parent=0 // loop_header
    %s9 = sphi 0, %s13
    %p10 = scmp.ge.s32.totalorder %s9, 14
    %s16 = sphi 0, %s28
    %s17 = sphi 0, %s24
    %s18 = sphi 0, %s16
    %s19 = sphi 0, %s17
    %s20 = sphi 0, %s18
    %s21 = sphi 0, %s19
    %s43 = sphi 0, %s45
    %s46 = sphi 0, %s43
    %s47 = sphi 0, %s46
    %s63 = sphi 0, %s47
    %s67 = sphi 0, %s67
    %s69 = sphi 0, %s67
    %s70 = sphi 0, %s69
    %s84 = sphi 0, %s70
    %s88 = sphi 0, %s88
    %s90 = sphi 0, %s88
    %s91 = sphi 0, %s90
    %s105 = sphi 0, %s91
    %s113 = sphi 0, %s115
    %s116 = sphi 0, %s113
    %s117 = sphi 0, %s116
    %s133 = sphi 0, %s117
  $region4: #{send_down.7} parent=0 // loop_header_branch
    %12 = sbr.rel (%p10) target = $region8
  $region5: #{send_down.7} parent=0 // loop_body
    %s14 = ssub.s32 %s9, 1
    %s15 = ssub.s32 %s9, 2
    %s22 = sadd.s32 1, %s17
    %p23 = scmp.ge.s32.totalorder %s22, 6
    %s24 = scalar_select %p23, 0, %s22
    %s25 = sadd.s32 1, %s16
    %s26 = scalar_select %p23, %s25, %s16
    %p27 = scmp.ge.s32.totalorder %s26, 2
    %s28 = scalar_select %p27, 0, %s26
    %s29 = ssub.s32 %s17, 1
    %p30 = scmp.gt.s32.totalorder %s29, 0
    %s31 = scalar_select %p30, %s29, 0
    %p32 = scmp.lt.s32.totalorder %s31, 3
    %s33 = scalar_select %p32, %s31, 3
    %s34 = ssub.s32 %s24, 1
    %p35 = scmp.gt.s32.totalorder %s34, 0
    %s36 = scalar_select %p35, %s34, 0
    %p37 = scmp.lt.s32.totalorder %s36, 3
    %s38 = scalar_select %p37, %s36, 3
    %s39 = ssub.s32 %s16, %s28
    %s40 = ssub.s32 %s33, %s38
    %s41 = sor.u32 %s39, %s40
    %p42 = scmp.eq.s32.totalorder %s41, 0
    %s44 = sadd.s32 %s43, 1
    %s45 = scalar_select %p42, %s43, %s44
    %p48 = pneg %p42
    %p49 = scmp.eq.s32.totalorder %s9, 11
    %p50 = por %p48, %p49
    %p51 = scmp.ne.s32.totalorder %s43, %s46
    %p52 = scmp.eq.s32.totalorder %s9, 0
    %p53 = por %p51, %p52
    %p54 = scmp.ne.s32.totalorder %s43, %s46
    %p55 = scmp.eq.s32.totalorder %s14, 11
    %p56 = por %p54, %p55
    %p57 = scmp.ne.s32.totalorder %s46, %s47
    %p58 = scmp.eq.s32.totalorder %s14, 0
    %p59 = por %p57, %p58
    %p60 = scmp.ne.s32.totalorder %s46, %s47
    %p61 = scmp.eq.s32.totalorder %s15, 11
    %p62 = por %p60, %p61
    %p64 = scmp.ne.s32.totalorder %s47, %s63
    %p65 = scmp.eq.s32.totalorder %s15, 0
    %p66 = por %p64, %p65
    %s68 = sadd.s32 %s67, 1
    %p71 = scmp.eq.s32.totalorder %s9, 11
    %p72 = scmp.ne.s32.totalorder %s67, %s69
    %p73 = scmp.eq.s32.totalorder %s9, 0
    %p74 = por %p72, %p73
    %p75 = scmp.ne.s32.totalorder %s67, %s69
    %p76 = scmp.eq.s32.totalorder %s14, 11
    %p77 = por %p75, %p76
    %p78 = scmp.ne.s32.totalorder %s69, %s70
    %p79 = scmp.eq.s32.totalorder %s14, 0
    %p80 = por %p78, %p79
    %p81 = scmp.ne.s32.totalorder %s69, %s70
    %p82 = scmp.eq.s32.totalorder %s15, 11
    %p83 = por %p81, %p82
    %p85 = scmp.ne.s32.totalorder %s70, %s84
    %p86 = scmp.eq.s32.totalorder %s15, 0
    %p87 = por %p85, %p86
    %s89 = sadd.s32 %s88, 1
    %p92 = scmp.eq.s32.totalorder %s9, 11
    %p93 = scmp.ne.s32.totalorder %s88, %s90
    %p94 = scmp.eq.s32.totalorder %s9, 0
    %p95 = por %p93, %p94
    %p96 = scmp.ne.s32.totalorder %s88, %s90
    %p97 = scmp.eq.s32.totalorder %s14, 11
    %p98 = por %p96, %p97
    %p99 = scmp.ne.s32.totalorder %s90, %s91
    %p100 = scmp.eq.s32.totalorder %s14, 0
    %p101 = por %p99, %p100
    %p102 = scmp.ne.s32.totalorder %s90, %s91
    %p103 = scmp.eq.s32.totalorder %s15, 11
    %p104 = por %p102, %p103
    %p106 = scmp.ne.s32.totalorder %s91, %s105
    %p107 = scmp.eq.s32.totalorder %s15, 0
    %p108 = por %p106, %p107
    %s109 = ssub.s32 %s16, %s28
    %s110 = ssub.s32 %s17, %s24
    %s111 = sor.u32 %s109, %s110
    %p112 = scmp.eq.s32.totalorder %s111, 0
    %s114 = sadd.s32 %s113, 1
    %s115 = scalar_select %p112, %s113, %s114
    %p118 = pneg %p112
    %p119 = scmp.eq.s32.totalorder %s9, 11
    %p120 = por %p118, %p119
    %p121 = scmp.ne.s32.totalorder %s113, %s116
    %p122 = scmp.eq.s32.totalorder %s9, 0
    %p123 = por %p121, %p122
    %p124 = scmp.ne.s32.totalorder %s113, %s116
    %p125 = scmp.eq.s32.totalorder %s14, 11
    %p126 = por %p124, %p125
    %p127 = scmp.ne.s32.totalorder %s116, %s117
    %p128 = scmp.eq.s32.totalorder %s14, 0
    %p129 = por %p127, %p128
    %p130 = scmp.ne.s32.totalorder %s116, %s117
    %p131 = scmp.eq.s32.totalorder %s15, 11
    %p132 = por %p130, %p131
    %p134 = scmp.ne.s32.totalorder %s117, %s133
    %p135 = scmp.eq.s32.totalorder %s15, 0
    %p136 = por %p134, %p135
    %p137 = scmp.le.s32.totalorder 1, %s9
    %p138 = scmp.lt.s32.totalorder %s9, 13
    %p139 = pnand %p137, %p138
    %p140 = pneg %p139
    // Predicated region
    $region9: #{send_down.7} parent=5 // pred_check
      _
    $region10: #{send_down.7} parent=5 // pred_check_branch
      %142 = sbr.rel (%p139) target = $region12
    $region11: #{send_down.7} parent=5 // pred_region
      %s143 = ssub.s32 %s9, 1
      // Predicated region
      $region13: #{send_down.7} parent=11 // pred_check
        %p144 = pneg %p80
      $region14: #{send_down.7} parent=11 // pred_check_branch
        %146 = sbr.rel (%p144) target = $region16
      $region15: #{send_down.7} parent=11 // pred_region
        _
      $region16: #{send_down.7} parent=11 // pred_fallthru
        _
      // Predicated region
      $region17: #{send_down.7} parent=11 // pred_check
        %p147 = pneg %p101
      $region18: #{send_down.7} parent=11 // pred_check_branch
        %149 = sbr.rel (%p147) target = $region20
      $region19: #{send_down.7} parent=11 // pred_region
        _
      $region20: #{send_down.7} parent=11 // pred_fallthru
        _
    $region12: #{send_down.7} parent=5 // pred_fallthru
      _
    %p150 = scmp.lt.s32.totalorder %s9, 12
    // Predicated region
    $region21: #{send_down.7} parent=5 // pred_check
      %p151 = pneg %p150
    $region22: #{send_down.7} parent=5 // pred_check_branch
      %153 = sbr.rel (%p151) target = $region24
    $region23: #{send_down.7} parent=5 // pred_region
      // Predicated region
      $region25: #{send_down.7} parent=23 // pred_check
        %p154 = pneg %p53
      $region26: #{send_down.7} parent=23 // pred_check_branch
        %156 = sbr.rel (%p154) target = $region28
      $region27: #{send_down.7} parent=23 // pred_region
        %s157 = ssub.s32 %s17, 1
        %p158 = scmp.gt.s32.totalorder %s157, 0
        %s159 = scalar_select %p158, %s157, 0
        %p160 = scmp.lt.s32.totalorder %s159, 3
        %s161 = scalar_select %p160, %s159, 3
        %p162 = scmp.lt.s32.totalorder %s16, 1
        %s163 = scalar_select %p162, %s16, 1
        %p164 = scmp.lt.s32.totalorder %s161, 3
        %s165 = scalar_select %p164, %s161, 3
        %s166 = smul.addr %s165, 7
        %s167 = smul.addr %s163, 28
        %s168 = sadd.s32 %s166, %s167
        %s169 = smul.addr %s168, 4
        %s170 = scalar_lea.vmem %s0, %s169
        %s171 = ssub.s32 %s17, 1
        %p172 = scmp.gt.s32.totalorder %s171, 0
        %s173 = scalar_select %p172, %s171, 0
        %p174 = scmp.lt.s32.totalorder %s173, 3
        %s175 = scalar_select %p174, %s173, 3
      $region28: #{send_down.7} parent=23 // pred_fallthru
        _
    $region24: #{send_down.7} parent=5 // pred_fallthru
      _
    %p176 = scmp.le.s32.totalorder 1, %s9
    %p177 = scmp.lt.s32.totalorder %s9, 13
    %p178 = pnand %p176, %p177
    %p179 = pneg %p178
    // Predicated region
    $region29: #{send_down.7} parent=5 // pred_check
      _
    $region30: #{send_down.7} parent=5 // pred_check_branch
      %181 = sbr.rel (%p178) target = $region32
    $region31: #{send_down.7} parent=5 // pred_region
      %s182 = ssub.s32 %s9, 1
      %s183 = ssub.s32 %s19, 1
      %p184 = scmp.gt.s32.totalorder %s183, 0
      %s185 = scalar_select %p184, %s183, 0
      %p186 = scmp.lt.s32.totalorder %s185, 3
      %s187 = scalar_select %p186, %s185, 3
      %p188 = scmp.lt.s32.totalorder %s18, 1
      %s189 = scalar_select %p188, %s18, 1
      %p190 = scmp.lt.s32.totalorder %s187, 3
      %s191 = scalar_select %p190, %s187, 3
      %s192 = smul.addr %s191, 7
      %s193 = smul.addr %s189, 28
      %s194 = sadd.s32 %s192, %s193
      %s195 = smul.addr %s194, 4
      %s196 = scalar_lea.vmem %s0, %s195
      %p197 = pneg %p59
      %p198 = pneg %p56
      %p199 = pneg %p80
      %p200 = pneg %p77
      %p201 = pneg %p101
      %p202 = pneg %p98
      %p203 = pneg %p129
      %p204 = pneg %p126
      %p205 = scmp.lt.s32.totalorder %s18, 1
      %s206 = scalar_select %p205, %s18, 1
      %p207 = scmp.lt.s32.totalorder %s19, 5
      %s208 = scalar_select %p207, %s19, 5
      %s209 = smul.addr %s208, 7
      %s210 = smul.addr %s206, 42
      %s211 = sadd.s32 %s209, %s210
      %s212 = smul.addr %s211, 4
      %s213 = scalar_lea.vmem %s3, %s212
      %s214 = ssub.s32 %s19, 1
      %p215 = scmp.gt.s32.totalorder %s214, 0
      %s216 = scalar_select %p215, %s214, 0
      %p217 = scmp.lt.s32.totalorder %s216, 3
      %s218 = scalar_select %p217, %s216, 3
      %p219 = scmp.lt.s32.totalorder %s18, 1
      %s220 = scalar_select %p219, %s18, 1
      %p221 = scmp.lt.s32.totalorder %s218, 3
      %s222 = scalar_select %p221, %s218, 3
      %s223 = smul.addr %s222, 7
      %s224 = smul.addr %s220, 28
      %s225 = sadd.s32 %s223, %s224
      %s226 = smul.addr %s225, 4
      %s227 = scalar_lea.vmem %s0, %s226
      %s228 = ssub.s32 %s19, 1
      %p229 = scmp.gt.s32.totalorder %s228, 0
      %s230 = scalar_select %p229, %s228, 0
      %p231 = scmp.lt.s32.totalorder %s230, 3
      %s232 = scalar_select %p231, %s230, 3
      %p233 = scmp.lt.s32.totalorder %s18, 1
      %s234 = scalar_select %p233, %s18, 1
      %p235 = scmp.lt.s32.totalorder %s19, 5
      %s236 = scalar_select %p235, %s19, 5
      %s237 = smul.addr %s236, 7
      %s238 = smul.addr %s234, 42
      %s239 = sadd.s32 %s237, %s238
      %s240 = smul.addr %s239, 4
      %s241 = scalar_lea.vmem %s3, %s240
      %v243 = vld [vmem:[%s227] sm:$0x3]
      %v244 = vld [vmem:[%s227 + $0x4] sm:$0x3]
      %v245 = vld [vmem:[%s227 + $0x8] sm:$0x3]
      %v246 = vld [vmem:[%s227 + $0xc] sm:$0x3]
      %v247 = vunpack.c.l.bf16 %v243
      %v248 = vunpack.c.l.bf16 %v244
      %v249 = vunpack.c.l.bf16 %v245
      %v250 = vunpack.c.l.bf16 %v246
      %v251 = vld [vmem:[%s1] sm:$0x1]
      %v253 = vlaneseq
      %v254 = vshrl.u32 %v253, 7
      %v255 = vsub.s32 0, %v254
      %v256 = vrot.slane %v251, %v255
      %v258 = vmul.f32 %v247, %v256
      %v259 = vmul.f32 %v248, %v256
      %v260 = vmul.f32 %v249, %v256
      %v261 = vmul.f32 %v250, %v256
      %v262 = vld [vmem:[%s2] sm:$0x1]
      %v264 = vlaneseq
      %v265 = vshrl.u32 %v264, 7
      %v266 = vsub.s32 0, %v265
      %v267 = vrot.slane %v262, %v266
      %v269 = vadd.f32 %v258, %v267
      %v270 = vadd.f32 %v259, %v267
      %v271 = vadd.f32 %v260, %v267
      %v272 = vadd.f32 %v261, %v267
      %v273 = vmax.f32 %v269, 0.0
      %v274 = vmax.f32 %v270, 0.0
      %v275 = vmax.f32 %v271, 0.0
      %v276 = vmax.f32 %v272, 0.0
      %p277 = scmp.ge.s32.totalorder %s19, 1
      %p278 = scmp.le.s32.totalorder %s19, 4
      %p279 = pnand %p277, %p278
      %p280 = pneg %p279
      %s281 = scalar_select %p280, 1, 0
      %v282 = vstv %s281
      %vm283 = vcmp.eq.s32.totalorder %v282, 1
      %v284 = vsel %vm283, %v273, 0.0
      %v285 = vsel %vm283, %v274, 0.0
      %v286 = vsel %vm283, %v275, 0.0
      %v287 = vsel %vm283, %v276, 0.0
      %vm288 = vcmask 59392
      %289 = vst.msk [vmem:[%s241] sm:$0x7] %vm288, 0
      %290 = vst.msk [vmem:[%s241 + $0x4] sm:$0x7] %vm288, 0
      %291 = vst.msk [vmem:[%s241 + $0x8] sm:$0x7] %vm288, 0
      %292 = vst.msk [vmem:[%s241 + $0xc] sm:$0x7] %vm288, 0
      %293 = vst.msk [vmem:[%s241 + $0x10] sm:$0x7] %vm288, 0
      %294 = vst.msk [vmem:[%s241 + $0x14] sm:$0x7] %vm288, 0
      %295 = vst.msk [vmem:[%s241 + $0x18] sm:$0x7] %vm288, 0
      %v296 = vpack.c.bf16 %v284, %v284
      %v297 = vpack.c.bf16 %v285, %v285
      %v298 = vpack.c.bf16 %v286, %v286
      %v299 = vpack.c.bf16 %v287, %v287
      %v304 = vunpack.c.l.b16 %v296
      %v305 = vunpack.c.l.b16 %v297
      %v306 = vunpack.c.l.b16 %v298
      %v307 = vunpack.c.l.b16 %v299
      %v308 = vpack.c.b16 %v304, %v304
      %v309 = vpack.c.b16 %v305, %v305
      %v310 = vpack.c.b16 %v306, %v306
      %v311 = vpack.c.b16 %v307, %v307
      %v313 = vshrl.u32 %v308, 16
      %v315 = vrot.slane %v313, 7
      %v316 = vshll.u32 %v308, 16
      %v318 = vor.u32 %v315, %v316
      %v320 = vshrl.u32 %v309, 16
      %v322 = vrot.slane %v320, 7
      %v323 = vshll.u32 %v309, 16
      %v325 = vor.u32 %v322, %v323
      %v327 = vshrl.u32 %v310, 16
      %v329 = vrot.slane %v327, 7
      %v330 = vshll.u32 %v310, 16
      %v332 = vor.u32 %v329, %v330
      %v334 = vshrl.u32 %v311, 16
      %v336 = vrot.slane %v334, 7
      %v337 = vshll.u32 %v311, 16
      %v339 = vor.u32 %v336, %v337
      %s344 = scalar_lea.vmem %s241, 4
      %vm345 = vcmask 59392
      %vm346 = vsmask.f32 2306
      %vm347 = vmand %vm345, %vm346
      %v348 = vld [vmem:[%s344] sm:$0x7]
      %v349 = vsel %vm347, %v318, %v348
      %350 = vst [vmem:[%s344] sm:$0x7] %v349
      %v351 = vld [vmem:[%s344 + $0x4] sm:$0x7]
      %v352 = vsel %vm347, %v325, %v351
      %353 = vst [vmem:[%s344 + $0x4] sm:$0x7] %v352
      %v354 = vld [vmem:[%s344 + $0x8] sm:$0x7]
      %v355 = vsel %vm347, %v332, %v354
      %356 = vst [vmem:[%s344 + $0x8] sm:$0x7] %v355
      %v357 = vld [vmem:[%s344 + $0xc] sm:$0x7]
      %v358 = vsel %vm347, %v339, %v357
      %359 = vst [vmem:[%s344 + $0xc] sm:$0x7] %v358
      %p360 = scmp.lt.s32.totalorder %s18, 1
      %s361 = scalar_select %p360, %s18, 1
      %p362 = scmp.lt.s32.totalorder %s19, 5
      %s363 = scalar_select %p362, %s19, 5
      %s364 = smul.addr %s363, 7
      %s365 = smul.addr %s361, 42
      %s366 = sadd.s32 %s364, %s365
      %s367 = smul.addr %s366, 4
      %s368 = scalar_lea.vmem %s3, %s367
      // Predicated region
      $region33: #{send_down.7} parent=31 // pred_check
        %p369 = pneg %p126
      $region34: #{send_down.7} parent=31 // pred_check_branch
        %371 = sbr.rel (%p369) target = $region36
      $region35: #{send_down.7} parent=31 // pred_region
        _
      $region36: #{send_down.7} parent=31 // pred_fallthru
        _
    $region32: #{send_down.7} parent=5 // pred_fallthru
      _
    %p372 = scmp.le.s32.totalorder 2, %s9
    // Predicated region
    $region37: #{send_down.7} parent=5 // pred_check
      %p373 = pneg %p372
    $region38: #{send_down.7} parent=5 // pred_check_branch
      %375 = sbr.rel (%p373) target = $region40
    $region39: #{send_down.7} parent=5 // pred_region
      %s376 = ssub.s32 %s9, 2
      // Predicated region
      $region41: #{send_down.7} parent=39 // pred_check
        %p377 = pneg %p132
      $region42: #{send_down.7} parent=39 // pred_check_branch
        %379 = sbr.rel (%p377) target = $region44
      $region43: #{send_down.7} parent=39 // pred_region
        %p380 = scmp.lt.s32.totalorder %s20, 1
        %s381 = scalar_select %p380, %s20, 1
        %p382 = scmp.lt.s32.totalorder %s21, 5
        %s383 = scalar_select %p382, %s21, 5
        %s384 = smul.addr %s383, 7
        %s385 = smul.addr %s381, 42
        %s386 = sadd.s32 %s384, %s385
        %s387 = smul.addr %s386, 4
        %s388 = scalar_lea.vmem %s3, %s387
      $region44: #{send_down.7} parent=39 // pred_fallthru
        _
    $region40: #{send_down.7} parent=5 // pred_fallthru
      _
  $region6: #{send_down.7} parent=0 // loop_footer
    %s13 = sadd.s32 1, %s9
  $region7: #{send_down.7} parent=0 // loop_footer_branch
    %8 = sbr.rel target = $region3
  $region8: #{send_down.7} parent=0 // loop_exit
    _

// kernel: send_down.9
$region0: #{send_down.9}
  #allocation0 [shape = 'u32[]', space=smem, size = 0x4, offset = 0x4, fixed_abs, tag = 'smem constant byte address 0x4 - core index']
  #allocation1 [shape = 'u32[144,128]{1,0:T(1,128)}', space=vmem, size = 0x12000, scoped, tag = 'internal scratch']
  %s0 = inlined_call_operand.vmem [shape: bf16[2,4,7,6,8], index: 0, kind: input, shape index: {}]
  %s1 = inlined_call_operand.vmem [shape: f32[1,8], index: 1, kind: input, shape index: {}]
  %s2 = inlined_call_operand.vmem [shape: f32[1,8], index: 2, kind: input, shape index: {}]
  %s3 = inlined_call_operand.hbm [shape: f32[2,4,4,4,8], index: 3, kind: output, shape index: {}]
  %s4 = sld [smem:[#allocation0]]
  $region45: #{send_down.9} parent=0
    _
  %s6 = ssub.s32 1, %s4
  %s7 = scalar_select 0, %s6, %s4
  $region1: #{send_down.9} parent=0
    #allocation2 [shape = 'u8[65536]{0}', space=vmem, size = 0x10000, scoped, tag = 'output window, operand 0']
    #allocation3 [shape = 's32[2]{0}', space=sflag, size = 0x8, scoped, tag = 'scoped memory for send_down.9']
    %8 = vsyncpa [#allocation3], 0
    %s9 = scalar_lea.sflag [#allocation3], 1
    %10 = vsyncpa %s9, 0
    loop: start=0, step=1, limit=4
    $region2: #{send_down.9} parent=1 // loop_pre_header
      _
    $region3: #{send_down.9} parent=1 // loop_header
      %s12 = sphi 0, %s16
      %p13 = scmp.ge.s32.totalorder %s12, 4
      %s19 = sphi 0, %s31
      %s20 = sphi 0, %s27
      %s21 = sphi 0, %s19
      %s22 = sphi 0, %s20
      %s23 = sphi 0, %s21
      %s24 = sphi 0, %s22
      %s36 = sphi 0, %s38
      %s39 = sphi 0, %s36
      %s40 = sphi 0, %s39
      %s56 = sphi 0, %s40
      %s60 = sphi 0, %s60
      %s62 = sphi 0, %s60
      %s63 = sphi 0, %s62
      %s77 = sphi 0, %s63
      %s81 = sphi 0, %s81
      %s83 = sphi 0, %s81
      %s84 = sphi 0, %s83
      %s98 = sphi 0, %s84
      %s106 = sphi 0, %s108
      %s109 = sphi 0, %s106
      %s110 = sphi 0, %s109
      %s126 = sphi 0, %s110
    $region4: #{send_down.9} parent=1 // loop_header_branch
      %15 = sbr.rel (%p13) target = $region8
    $region5: #{send_down.9} parent=1 // loop_body
      %s17 = ssub.s32 %s12, 1
      %s18 = ssub.s32 %s12, 2
      %s25 = sadd.s32 1, %s20
      %p26 = scmp.ge.s32.totalorder %s25, 1
      %s27 = scalar_select %p26, 0, %s25
      %s28 = sadd.s32 1, %s19
      %s29 = scalar_select %p26, %s28, %s19
      %p30 = scmp.ge.s32.totalorder %s29, 2
      %s31 = scalar_select %p30, 0, %s29
      %s32 = ssub.s32 %s19, %s31
      %s33 = ssub.s32 %s20, %s27
      %s34 = sor.u32 %s32, %s33
      %p35 = scmp.eq.s32.totalorder %s34, 0
      %s37 = sadd.s32 %s36, 1
      %s38 = scalar_select %p35, %s36, %s37
      %p41 = pneg %p35
      %p42 = scmp.eq.s32.totalorder %s12, 1
      %p43 = por %p41, %p42
      %p44 = scmp.ne.s32.totalorder %s36, %s39
      %p45 = scmp.eq.s32.totalorder %s12, 0
      %p46 = por %p44, %p45
      %p47 = scmp.ne.s32.totalorder %s36, %s39
      %p48 = scmp.eq.s32.totalorder %s17, 1
      %p49 = por %p47, %p48
      %p50 = scmp.ne.s32.totalorder %s39, %s40
      %p51 = scmp.eq.s32.totalorder %s17, 0
      %p52 = por %p50, %p51
      %p53 = scmp.ne.s32.totalorder %s39, %s40
      %p54 = scmp.eq.s32.totalorder %s18, 1
      %p55 = por %p53, %p54
      %p57 = scmp.ne.s32.totalorder %s40, %s56
      %p58 = scmp.eq.s32.totalorder %s18, 0
      %p59 = por %p57, %p58
      %s61 = sadd.s32 %s60, 1
      %p64 = scmp.eq.s32.totalorder %s12, 1
      %p65 = scmp.ne.s32.totalorder %s60, %s62
      %p66 = scmp.eq.s32.totalorder %s12, 0
      %p67 = por %p65, %p66
      %p68 = scmp.ne.s32.totalorder %s60, %s62
      %p69 = scmp.eq.s32.totalorder %s17, 1
      %p70 = por %p68, %p69
      %p71 = scmp.ne.s32.totalorder %s62, %s63
      %p72 = scmp.eq.s32.totalorder %s17, 0
      %p73 = por %p71, %p72
      %p74 = scmp.ne.s32.totalorder %s62, %s63
      %p75 = scmp.eq.s32.totalorder %s18, 1
      %p76 = por %p74, %p75
      %p78 = scmp.ne.s32.totalorder %s63, %s77
      %p79 = scmp.eq.s32.totalorder %s18, 0
      %p80 = por %p78, %p79
      %s82 = sadd.s32 %s81, 1
      %p85 = scmp.eq.s32.totalorder %s12, 1
      %p86 = scmp.ne.s32.totalorder %s81, %s83
      %p87 = scmp.eq.s32.totalorder %s12, 0
      %p88 = por %p86, %p87
      %p89 = scmp.ne.s32.totalorder %s81, %s83
      %p90 = scmp.eq.s32.totalorder %s17, 1
      %p91 = por %p89, %p90
      %p92 = scmp.ne.s32.totalorder %s83, %s84
      %p93 = scmp.eq.s32.totalorder %s17, 0
      %p94 = por %p92, %p93
      %p95 = scmp.ne.s32.totalorder %s83, %s84
      %p96 = scmp.eq.s32.totalorder %s18, 1
      %p97 = por %p95, %p96
      %p99 = scmp.ne.s32.totalorder %s84, %s98
      %p100 = scmp.eq.s32.totalorder %s18, 0
      %p101 = por %p99, %p100
      %s102 = ssub.s32 %s19, %s31
      %s103 = ssub.s32 %s20, %s27
      %s104 = sor.u32 %s102, %s103
      %p105 = scmp.eq.s32.totalorder %s104, 0
      %s107 = sadd.s32 %s106, 1
      %s108 = scalar_select %p105, %s106, %s107
      %p111 = pneg %p105
      %p112 = scmp.eq.s32.totalorder %s12, 1
      %p113 = por %p111, %p112
      %p114 = scmp.ne.s32.totalorder %s106, %s109
      %p115 = scmp.eq.s32.totalorder %s12, 0
      %p116 = por %p114, %p115
      %p117 = scmp.ne.s32.totalorder %s106, %s109
      %p118 = scmp.eq.s32.totalorder %s17, 1
      %p119 = por %p117, %p118
      %p120 = scmp.ne.s32.totalorder %s109, %s110
      %p121 = scmp.eq.s32.totalorder %s17, 0
      %p122 = por %p120, %p121
      %p123 = scmp.ne.s32.totalorder %s109, %s110
      %p124 = scmp.eq.s32.totalorder %s18, 1
      %p125 = por %p123, %p124
      %p127 = scmp.ne.s32.totalorder %s110, %s126
      %p128 = scmp.eq.s32.totalorder %s18, 0
      %p129 = por %p127, %p128
      %p130 = scmp.le.s32.totalorder 1, %s12
      %p131 = scmp.lt.s32.totalorder %s12, 3
      %p132 = pnand %p130, %p131
      %p133 = pneg %p132
      // Predicated region
      $region9: #{send_down.9} parent=5 // pred_check
        _
      $region10: #{send_down.9} parent=5 // pred_check_branch
        %135 = sbr.rel (%p132) target = $region12
      $region11: #{send_down.9} parent=5 // pred_region
        %s136 = ssub.s32 %s12, 1
        // Predicated region
        $region13: #{send_down.9} parent=11 // pred_check
          %p137 = pneg %p73
        $region14: #{send_down.9} parent=11 // pred_check_branch
          %139 = sbr.rel (%p137) target = $region16
        $region15: #{send_down.9} parent=11 // pred_region
          _
        $region16: #{send_down.9} parent=11 // pred_fallthru
          _
        // Predicated region
        $region17: #{send_down.9} parent=11 // pred_check
          %p140 = pneg %p94
        $region18: #{send_down.9} parent=11 // pred_check_branch
          %142 = sbr.rel (%p140) target = $region20
        $region19: #{send_down.9} parent=11 // pred_region
          _
        $region20: #{send_down.9} parent=11 // pred_fallthru
          _
      $region12: #{send_down.9} parent=5 // pred_fallthru
        _
      %p143 = scmp.lt.s32.totalorder %s12, 2
      // Predicated region
      $region21: #{send_down.9} parent=5 // pred_check
        %p144 = pneg %p143
      $region22: #{send_down.9} parent=5 // pred_check_branch
        %146 = sbr.rel (%p144) target = $region24
      $region23: #{send_down.9} parent=5 // pred_region
        // Predicated region
        $region25: #{send_down.9} parent=23 // pred_check
          %p147 = pneg %p46
        $region26: #{send_down.9} parent=23 // pred_check_branch
          %149 = sbr.rel (%p147) target = $region28
        $region27: #{send_down.9} parent=23 // pred_region
          %s150 = smul.u32 4, %s20
          %p151 = scmp.lt.s32.totalorder %s19, 1
          %s152 = scalar_select %p151, %s19, 1
          %p153 = scmp.lt.s32.totalorder %s150, 3
          %s154 = scalar_select %p153, %s150, 3
          %s155 = smul.addr %s154, 7
          %s156 = smul.addr %s152, 28
          %s157 = sadd.s32 %s155, %s156
          %s158 = smul.addr %s157, 4
          %s159 = scalar_lea.vmem %s0, %s158
          %s160 = smul.u32 4, %s20
        $region28: #{send_down.9} parent=23 // pred_fallthru
          _
      $region24: #{send_down.9} parent=5 // pred_fallthru
        _
      %p161 = scmp.le.s32.totalorder 1, %s12
      %p162 = scmp.lt.s32.totalorder %s12, 3
      %p163 = pnand %p161, %p162
      %p164 = pneg %p163
      // Predicated region
      $region29: #{send_down.9} parent=5 // pred_check
        _
      $region30: #{send_down.9} parent=5 // pred_check_branch
        %166 = sbr.rel (%p163) target = $region32
      $region31: #{send_down.9} parent=5 // pred_region
        %s167 = ssub.s32 %s12, 1
        %s168 = smul.u32 4, %s22
        %p169 = scmp.lt.s32.totalorder %s21, 1
        %s170 = scalar_select %p169, %s21, 1
        %p171 = scmp.lt.s32.totalorder %s168, 3
        %s172 = scalar_select %p171, %s168, 3
        %s173 = smul.addr %s172, 7
        %s174 = smul.addr %s170, 28
        %s175 = sadd.s32 %s173, %s174
        %s176 = smul.addr %s175, 4
        %s177 = scalar_lea.vmem %s0, %s176
        %p178 = pneg %p52
        %p179 = pneg %p49
        %p180 = pneg %p73
        %p181 = pneg %p70
        %p182 = pneg %p94
        %p183 = pneg %p91
        %p184 = pneg %p122
        %p185 = pneg %p119
        %s186 = sand.u32 %s109, 1
        %s187 = scalar_lea.sflag [#allocation3], %s186
        %s188 = sand.u32 %s109, 1
        %s189 = smul.addr %s188, 64
        %s190 = scalar_lea.vmem [#allocation2], %s189
        %s191 = smul.u32 4, %s22
        %p192 = scmp.lt.s32.totalorder %s21, 1
        %s193 = scalar_select %p192, %s21, 1
        %p194 = scmp.lt.s32.totalorder %s191, 3
        %s195 = scalar_select %p194, %s191, 3
        %s196 = smul.addr %s195, 7
        %s197 = smul.addr %s193, 28
        %s198 = sadd.s32 %s196, %s197
        %s199 = smul.addr %s198, 4
        %s200 = scalar_lea.vmem %s0, %s199
        %s201 = smul.u32 4, %s22
        %s202 = smul.u32 4, %s22
        %v203 = vld [vmem:[%s200] sm:$0x3]
        %v204 = vld [vmem:[%s200 + $0x4] sm:$0x3]
        %v205 = vld [vmem:[%s200 + $0x8] sm:$0x3]
        %v206 = vld [vmem:[%s200 + $0xc] sm:$0x3]
        %v207 = vld [vmem:[%s200 + $0x1c] sm:$0x3]
        %v208 = vld [vmem:[%s200 + $0x20] sm:$0x3]
        %v209 = vld [vmem:[%s200 + $0x24] sm:$0x3]
        %v210 = vld [vmem:[%s200 + $0x28] sm:$0x3]
        %v211 = vld [vmem:[%s200 + $0x38] sm:$0x3]
        %v212 = vld [vmem:[%s200 + $0x3c] sm:$0x3]
        %v213 = vld [vmem:[%s200 + $0x40] sm:$0x3]
        %v214 = vld [vmem:[%s200 + $0x44] sm:$0x3]
        %v215 = vld [vmem:[%s200 + $0x54] sm:$0x3]
        %v216 = vld [vmem:[%s200 + $0x58] sm:$0x3]
        %v217 = vld [vmem:[%s200 + $0x5c] sm:$0x3]
        %v218 = vld [vmem:[%s200 + $0x60] sm:$0x3]
        %v219 = vunpack.c.l.bf16 %v203
        %v220 = vunpack.c.l.bf16 %v204
        %v221 = vunpack.c.l.bf16 %v205
        %v222 = vunpack.c.l.bf16 %v206
        %v223 = vunpack.c.l.bf16 %v207
        %v224 = vunpack.c.l.bf16 %v208
        %v225 = vunpack.c.l.bf16 %v209
        %v226 = vunpack.c.l.bf16 %v210
        %v227 = vunpack.c.l.bf16 %v211
        %v228 = vunpack.c.l.bf16 %v212
        %v229 = vunpack.c.l.bf16 %v213
        %v230 = vunpack.c.l.bf16 %v214
        %v231 = vunpack.c.l.bf16 %v215
        %v232 = vunpack.c.l.bf16 %v216
        %v233 = vunpack.c.l.bf16 %v217
        %v234 = vunpack.c.l.bf16 %v218
        %v235 = vld [vmem:[%s1] sm:$0x1]
        %v237 = vlaneseq
        %v238 = vshrl.u32 %v237, 7
        %v239 = vsub.s32 0, %v238
        %v240 = vrot.slane %v235, %v239
        %v242 = vmul.f32 %v219, %v240
        %v243 = vmul.f32 %v220, %v240
        %v244 = vmul.f32 %v221, %v240
        %v245 = vmul.f32 %v222, %v240
        %v246 = vmul.f32 %v223, %v240
        %v247 = vmul.f32 %v224, %v240
        %v248 = vmul.f32 %v225, %v240
        %v249 = vmul.f32 %v226, %v240
        %v250 = vmul.f32 %v227, %v240
        %v251 = vmul.f32 %v228, %v240
        %v252 = vmul.f32 %v229, %v240
        %v253 = vmul.f32 %v230, %v240
        %v254 = vmul.f32 %v231, %v240
        %v255 = vmul.f32 %v232, %v240
        %v256 = vmul.f32 %v233, %v240
        %v257 = vmul.f32 %v234, %v240
        %v258 = vld [vmem:[%s2] sm:$0x1]
        %v260 = vlaneseq
        %v261 = vshrl.u32 %v260, 7
        %v262 = vsub.s32 0, %v261
        %v263 = vrot.slane %v258, %v262
        %v265 = vadd.f32 %v242, %v263
        %v266 = vadd.f32 %v243, %v263
        %v267 = vadd.f32 %v244, %v263
        %v268 = vadd.f32 %v245, %v263
        %v269 = vadd.f32 %v246, %v263
        %v270 = vadd.f32 %v247, %v263
        %v271 = vadd.f32 %v248, %v263
        %v272 = vadd.f32 %v249, %v263
        %v273 = vadd.f32 %v250, %v263
        %v274 = vadd.f32 %v251, %v263
        %v275 = vadd.f32 %v252, %v263
        %v276 = vadd.f32 %v253, %v263
        %v277 = vadd.f32 %v254, %v263
        %v278 = vadd.f32 %v255, %v263
        %v279 = vadd.f32 %v256, %v263
        %v280 = vadd.f32 %v257, %v263
        %v281 = vmax.f32 %v265, 0.0
        %v282 = vmax.f32 %v266, 0.0
        %v283 = vmax.f32 %v267, 0.0
        %v284 = vmax.f32 %v268, 0.0
        %v285 = vmax.f32 %v269, 0.0
        %v286 = vmax.f32 %v270, 0.0
        %v287 = vmax.f32 %v271, 0.0
        %v288 = vmax.f32 %v272, 0.0
        %v289 = vmax.f32 %v273, 0.0
        %v290 = vmax.f32 %v274, 0.0
        %v291 = vmax.f32 %v275, 0.0
        %v292 = vmax.f32 %v276, 0.0
        %v293 = vmax.f32 %v277, 0.0
        %v294 = vmax.f32 %v278, 0.0
        %v295 = vmax.f32 %v279, 0.0
        %v296 = vmax.f32 %v280, 0.0
        %vm297 = vcmask 60416
        %298 = vst.msk [vmem:[%s190] sm:$0xf] %vm297, %v281
        %299 = vst.msk [vmem:[%s190 + $0x4] sm:$0xf] %vm297, %v282
        %300 = vst.msk [vmem:[%s190 + $0x8] sm:$0xf] %vm297, %v283
        %301 = vst.msk [vmem:[%s190 + $0xc] sm:$0xf] %vm297, %v284
        %302 = vst.msk [vmem:[%s190 + $0x10] sm:$0xf] %vm297, %v285
        %303 = vst.msk [vmem:[%s190 + $0x14] sm:$0xf] %vm297, %v286
        %304 = vst.msk [vmem:[%s190 + $0x18] sm:$0xf] %vm297, %v287
        %305 = vst.msk [vmem:[%s190 + $0x1c] sm:$0xf] %vm297, %v288
        %306 = vst.msk [vmem:[%s190 + $0x20] sm:$0xf] %vm297, %v289
        %307 = vst.msk [vmem:[%s190 + $0x24] sm:$0xf] %vm297, %v290
        %308 = vst.msk [vmem:[%s190 + $0x28] sm:$0xf] %vm297, %v291
        %309 = vst.msk [vmem:[%s190 + $0x2c] sm:$0xf] %vm297, %v292
        %310 = vst.msk [vmem:[%s190 + $0x30] sm:$0xf] %vm297, %v293
        %311 = vst.msk [vmem:[%s190 + $0x34] sm:$0xf] %vm297, %v294
        %312 = vst.msk [vmem:[%s190 + $0x38] sm:$0xf] %vm297, %v295
        %313 = vst.msk [vmem:[%s190 + $0x3c] sm:$0xf] %vm297, %v296
        %s314 = sand.u32 %s109, 1
        %s315 = scalar_lea.sflag [#allocation3], %s314
        %s316 = sand.u32 %s109, 1
        %s317 = smul.addr %s316, 64
        %s318 = scalar_lea.vmem [#allocation2], %s317
        // Predicated region
        $region33: #{send_down.9} parent=31 // pred_check
          %p319 = pneg %p119
        $region34: #{send_down.9} parent=31 // pred_check_branch
          %321 = sbr.rel (%p319) target = $region36
        $region35: #{send_down.9} parent=31 // pred_region
          %s322 = smul.u32 4, %s22
          %s324 = ssub.s32 1024, 1024
          %325 = vsyncadd %s315, %s324
          %s326 = smul.addr %s322, 4
          %s327 = smul.addr %s21, 16
          %s328 = sadd.s32 %s326, %s327
          %s329 = smul.addr %s328, 64
          %s330 = scalar_lea.hbm %s3, %s329
          %s331 = sshll.u32 %s318, 4
          %s332 = int_to_ptr.vmem [resolvable:$true] %s331
          %337 = dma.vmem_to_hbm [thread:$0]  %s332, 1024, %s330, %s315, 64, 64, 4
        $region36: #{send_down.9} parent=31 // pred_fallthru
          _
      $region32: #{send_down.9} parent=5 // pred_fallthru
        _
      %p338 = scmp.le.s32.totalorder 2, %s12
      // Predicated region
      $region37: #{send_down.9} parent=5 // pred_check
        %p339 = pneg %p338
      $region38: #{send_down.9} parent=5 // pred_check_branch
        %341 = sbr.rel (%p339) target = $region40
      $region39: #{send_down.9} parent=5 // pred_region
        %s342 = ssub.s32 %s12, 2
        // Predicated region
        $region41: #{send_down.9} parent=39 // pred_check
          %p343 = pneg %p125
        $region42: #{send_down.9} parent=39 // pred_check_branch
          %345 = sbr.rel (%p343) target = $region44
        $region43: #{send_down.9} parent=39 // pred_region
          %s346 = sand.u32 %s110, 1
          %s347 = scalar_lea.sflag [#allocation3], %s346
          %s348 = sand.u32 %s110, 1
          %s349 = smul.addr %s348, 64
          %s350 = scalar_lea.vmem [#allocation2], %s349
          %351 = dma.done %s347, 1024
        $region44: #{send_down.9} parent=39 // pred_fallthru
          _
      $region40: #{send_down.9} parent=5 // pred_fallthru
        _
    $region6: #{send_down.9} parent=1 // loop_footer
      %s16 = sadd.s32 1, %s12
    $region7: #{send_down.9} parent=1 // loop_footer_branch
      %11 = sbr.rel target = $region3
    $region8: #{send_down.9} parent=1 // loop_exit
      _
    %352 = vsyncpa [#allocation3], 1
    %s353 = scalar_lea.sflag [#allocation3], 1
    %354 = vsyncpa %s353, 1

// kernel: send_down.6
$region0: #{send_down.6}
  #allocation0 [shape = 'u32[]', space=smem, size = 0x4, offset = 0x4, fixed_abs, tag = 'smem constant byte address 0x4 - core index']
  #allocation1 [shape = 'u32[144,128]{1,0:T(1,128)}', space=vmem, size = 0x12000, scoped, tag = 'internal scratch']
  #allocation2 [shape = 'bf16[266,4]{1,0:T(8,128)(2,1)}', space=vmem, size = 0x11000, scoped, tag = 'scratch operand']
  %s0 = inlined_call_operand.vmem [shape: bf16[2,6,42,4], index: 0, kind: input, shape index: {}, may-alias: {0,1,2}]
  %s1 = inlined_call_operand.vmem [shape: bf16[2,6,42,4], index: 1, kind: input, shape index: {}, may-alias: {0,1,2}]
  %s2 = inlined_call_operand.vmem [shape: bf16[2,6,42,4], index: 2, kind: input, shape index: {}, may-alias: {0,1,2}]
  %s3 = inlined_call_operand.vmem [shape: bf16[108,8], index: 3, kind: input, shape index: {}]
  %s4 = inlined_call_operand.vmem [shape: f32[168,1], index: 4, kind: input, shape index: {}]
  %s5 = inlined_call_operand.vmem [shape: bf16[2,1,168,8], index: 5, kind: output, shape index: {0}]
  %s6 = inlined_call_operand.vmem [shape: f32[2,1,2,8], index: 6, kind: output, shape index: {1}]
  %7 = xla_tuple %s5, %s6
  %s8 = sld [smem:[#allocation0]]
  $region61: #{send_down.6} parent=0
    _
  %s10 = ssub.s32 1, %s8
  %s11 = scalar_select 0, %s10, %s8
  loop: start=0, step=1, limit=4
  $region2: #{send_down.6} parent=0 // loop_pre_header
    _
  $region3: #{send_down.6} parent=0 // loop_header
    %s13 = sphi 0, %s17
    %p14 = scmp.ge.s32.totalorder %s13, 4
    %s20 = sphi 0, %s32
    %s21 = sphi 0, %s28
    %s22 = sphi 0, %s20
    %s23 = sphi 0, %s21
    %s24 = sphi 0, %s22
    %s25 = sphi 0, %s23
    %s37 = sphi 0, %s39
    %s40 = sphi 0, %s37
    %s41 = sphi 0, %s40
    %s57 = sphi 0, %s41
    %s69 = sphi 0, %s71
    %s72 = sphi 0, %s69
    %s73 = sphi 0, %s72
    %s89 = sphi 0, %s73
    %s101 = sphi 0, %s103
    %s104 = sphi 0, %s101
    %s105 = sphi 0, %s104
    %s121 = sphi 0, %s105
    %s125 = sphi 0, %s125
    %s127 = sphi 0, %s125
    %s128 = sphi 0, %s127
    %s142 = sphi 0, %s128
    %s146 = sphi 0, %s146
    %s148 = sphi 0, %s146
    %s149 = sphi 0, %s148
    %s163 = sphi 0, %s149
    %s171 = sphi 0, %s173
    %s174 = sphi 0, %s171
    %s175 = sphi 0, %s174
    %s191 = sphi 0, %s175
    %s199 = sphi 0, %s201
    %s202 = sphi 0, %s199
    %s203 = sphi 0, %s202
    %s219 = sphi 0, %s203
  $region4: #{send_down.6} parent=0 // loop_header_branch
    %16 = sbr.rel (%p14) target = $region8
  $region5: #{send_down.6} parent=0 // loop_body
    %s18 = ssub.s32 %s13, 1
    %s19 = ssub.s32 %s13, 2
    %s26 = sadd.s32 1, %s21
    %p27 = scmp.ge.s32.totalorder %s26, 1
    %s28 = scalar_select %p27, 0, %s26
    %s29 = sadd.s32 1, %s20
    %s30 = scalar_select %p27, %s29, %s20
    %p31 = scmp.ge.s32.totalorder %s30, 2
    %s32 = scalar_select %p31, 0, %s30
    %s33 = ssub.s32 %s20, %s32
    %s34 = ssub.s32 %s21, %s28
    %s35 = sor.u32 %s33, %s34
    %p36 = scmp.eq.s32.totalorder %s35, 0
    %s38 = sadd.s32 %s37, 1
    %s39 = scalar_select %p36, %s37, %s38
    %p42 = pneg %p36
    %p43 = scmp.eq.s32.totalorder %s13, 1
    %p44 = por %p42, %p43
    %p45 = scmp.ne.s32.totalorder %s37, %s40
    %p46 = scmp.eq.s32.totalorder %s13, 0
    %p47 = por %p45, %p46
    %p48 = scmp.ne.s32.totalorder %s37, %s40
    %p49 = scmp.eq.s32.totalorder %s18, 1
    %p50 = por %p48, %p49
    %p51 = scmp.ne.s32.totalorder %s40, %s41
    %p52 = scmp.eq.s32.totalorder %s18, 0
    %p53 = por %p51, %p52
    %p54 = scmp.ne.s32.totalorder %s40, %s41
    %p55 = scmp.eq.s32.totalorder %s19, 1
    %p56 = por %p54, %p55
    %p58 = scmp.ne.s32.totalorder %s41, %s57
    %p59 = scmp.eq.s32.totalorder %s19, 0
    %p60 = por %p58, %p59
    %s61 = smul.u32 %s21, 4
    %s62 = sadd.s32 %s61, 4
    %s63 = smul.u32 %s28, 4
    %s64 = sadd.s32 %s63, 4
    %s65 = ssub.s32 %s20, %s32
    %s66 = ssub.s32 %s62, %s64
    %s67 = sor.u32 %s65, %s66
    %p68 = scmp.eq.s32.totalorder %s67, 0
    %s70 = sadd.s32 %s69, 1
    %s71 = scalar_select %p68, %s69, %s70
    %p74 = pneg %p68
    %p75 = scmp.eq.s32.totalorder %s13, 1
    %p76 = por %p74, %p75
    %p77 = scmp.ne.s32.totalorder %s69, %s72
    %p78 = scmp.eq.s32.totalorder %s13, 0
    %p79 = por %p77, %p78
    %p80 = scmp.ne.s32.totalorder %s69, %s72
    %p81 = scmp.eq.s32.totalorder %s18, 1
    %p82 = por %p80, %p81
    %p83 = scmp.ne.s32.totalorder %s72, %s73
    %p84 = scmp.eq.s32.totalorder %s18, 0
    %p85 = por %p83, %p84
    %p86 = scmp.ne.s32.totalorder %s72, %s73
    %p87 = scmp.eq.s32.totalorder %s19, 1
    %p88 = por %p86, %p87
    %p90 = scmp.ne.s32.totalorder %s73, %s89
    %p91 = scmp.eq.s32.totalorder %s19, 0
    %p92 = por %p90, %p91
    %s93 = smul.u32 %s21, 4
    %s94 = sadd.s32 %s93, 5
    %s95 = smul.u32 %s28, 4
    %s96 = sadd.s32 %s95, 5
    %s97 = ssub.s32 %s20, %s32
    %s98 = ssub.s32 %s94, %s96
    %s99 = sor.u32 %s97, %s98
    %p100 = scmp.eq.s32.totalorder %s99, 0
    %s102 = sadd.s32 %s101, 1
    %s103 = scalar_select %p100, %s101, %s102
    %p106 = pneg %p100
    %p107 = scmp.eq.s32.totalorder %s13, 1
    %p108 = por %p106, %p107
    %p109 = scmp.ne.s32.totalorder %s101, %s104
    %p110 = scmp.eq.s32.totalorder %s13, 0
    %p111 = por %p109, %p110
    %p112 = scmp.ne.s32.totalorder %s101, %s104
    %p113 = scmp.eq.s32.totalorder %s18, 1
    %p114 = por %p112, %p113
    %p115 = scmp.ne.s32.totalorder %s104, %s105
    %p116 = scmp.eq.s32.totalorder %s18, 0
    %p117 = por %p115, %p116
    %p118 = scmp.ne.s32.totalorder %s104, %s105
    %p119 = scmp.eq.s32.totalorder %s19, 1
    %p120 = por %p118, %p119
    %p122 = scmp.ne.s32.totalorder %s105, %s121
    %p123 = scmp.eq.s32.totalorder %s19, 0
    %p124 = por %p122, %p123
    %s126 = sadd.s32 %s125, 1
    %p129 = scmp.eq.s32.totalorder %s13, 1
    %p130 = scmp.ne.s32.totalorder %s125, %s127
    %p131 = scmp.eq.s32.totalorder %s13, 0
    %p132 = por %p130, %p131
    %p133 = scmp.ne.s32.totalorder %s125, %s127
    %p134 = scmp.eq.s32.totalorder %s18, 1
    %p135 = por %p133, %p134
    %p136 = scmp.ne.s32.totalorder %s127, %s128
    %p137 = scmp.eq.s32.totalorder %s18, 0
    %p138 = por %p136, %p137
    %p139 = scmp.ne.s32.totalorder %s127, %s128
    %p140 = scmp.eq.s32.totalorder %s19, 1
    %p141 = por %p139, %p140
    %p143 = scmp.ne.s32.totalorder %s128, %s142
    %p144 = scmp.eq.s32.totalorder %s19, 0
    %p145 = por %p143, %p144
    %s147 = sadd.s32 %s146, 1
    %p150 = scmp.eq.s32.totalorder %s13, 1
    %p151 = scmp.ne.s32.totalorder %s146, %s148
    %p152 = scmp.eq.s32.totalorder %s13, 0
    %p153 = por %p151, %p152
    %p154 = scmp.ne.s32.totalorder %s146, %s148
    %p155 = scmp.eq.s32.totalorder %s18, 1
    %p156 = por %p154, %p155
    %p157 = scmp.ne.s32.totalorder %s148, %s149
    %p158 = scmp.eq.s32.totalorder %s18, 0
    %p159 = por %p157, %p158
    %p160 = scmp.ne.s32.totalorder %s148, %s149
    %p161 = scmp.eq.s32.totalorder %s19, 1
    %p162 = por %p160, %p161
    %p164 = scmp.ne.s32.totalorder %s149, %s163
    %p165 = scmp.eq.s32.totalorder %s19, 0
    %p166 = por %p164, %p165
    %s167 = ssub.s32 %s20, %s32
    %s168 = ssub.s32 %s21, %s28
    %s169 = sor.u32 %s167, %s168
    %p170 = scmp.eq.s32.totalorder %s169, 0
    %s172 = sadd.s32 %s171, 1
    %s173 = scalar_select %p170, %s171, %s172
    %p176 = pneg %p170
    %p177 = scmp.eq.s32.totalorder %s13, 1
    %p178 = por %p176, %p177
    %p179 = scmp.ne.s32.totalorder %s171, %s174
    %p180 = scmp.eq.s32.totalorder %s13, 0
    %p181 = por %p179, %p180
    %p182 = scmp.ne.s32.totalorder %s171, %s174
    %p183 = scmp.eq.s32.totalorder %s18, 1
    %p184 = por %p182, %p183
    %p185 = scmp.ne.s32.totalorder %s174, %s175
    %p186 = scmp.eq.s32.totalorder %s18, 0
    %p187 = por %p185, %p186
    %p188 = scmp.ne.s32.totalorder %s174, %s175
    %p189 = scmp.eq.s32.totalorder %s19, 1
    %p190 = por %p188, %p189
    %p192 = scmp.ne.s32.totalorder %s175, %s191
    %p193 = scmp.eq.s32.totalorder %s19, 0
    %p194 = por %p192, %p193
    %s195 = ssub.s32 %s20, %s32
    %s196 = ssub.s32 %s21, %s28
    %s197 = sor.u32 %s195, %s196
    %p198 = scmp.eq.s32.totalorder %s197, 0
    %s200 = sadd.s32 %s199, 1
    %s201 = scalar_select %p198, %s199, %s200
    %p204 = pneg %p198
    %p205 = scmp.eq.s32.totalorder %s13, 1
    %p206 = por %p204, %p205
    %p207 = scmp.ne.s32.totalorder %s199, %s202
    %p208 = scmp.eq.s32.totalorder %s13, 0
    %p209 = por %p207, %p208
    %p210 = scmp.ne.s32.totalorder %s199, %s202
    %p211 = scmp.eq.s32.totalorder %s18, 1
    %p212 = por %p210, %p211
    %p213 = scmp.ne.s32.totalorder %s202, %s203
    %p214 = scmp.eq.s32.totalorder %s18, 0
    %p215 = por %p213, %p214
    %p216 = scmp.ne.s32.totalorder %s202, %s203
    %p217 = scmp.eq.s32.totalorder %s19, 1
    %p218 = por %p216, %p217
    %p220 = scmp.ne.s32.totalorder %s203, %s219
    %p221 = scmp.eq.s32.totalorder %s19, 0
    %p222 = por %p220, %p221
    %p223 = scmp.le.s32.totalorder 1, %s13
    %p224 = scmp.lt.s32.totalorder %s13, 3
    %p225 = pnand %p223, %p224
    %p226 = pneg %p225
    // Predicated region
    $region9: #{send_down.6} parent=5 // pred_check
      _
    $region10: #{send_down.6} parent=5 // pred_check_branch
      %228 = sbr.rel (%p225) target = $region12
    $region11: #{send_down.6} parent=5 // pred_region
      %s229 = ssub.s32 %s13, 1
      // Predicated region
      $region13: #{send_down.6} parent=11 // pred_check
        %p230 = pneg %p138
      $region14: #{send_down.6} parent=11 // pred_check_branch
        %232 = sbr.rel (%p230) target = $region16
      $region15: #{send_down.6} parent=11 // pred_region
        _
      $region16: #{send_down.6} parent=11 // pred_fallthru
        _
      // Predicated region
      $region17: #{send_down.6} parent=11 // pred_check
        %p233 = pneg %p159
      $region18: #{send_down.6} parent=11 // pred_check_branch
        %235 = sbr.rel (%p233) target = $region20
      $region19: #{send_down.6} parent=11 // pred_region
        _
      $region20: #{send_down.6} parent=11 // pred_fallthru
        _
    $region12: #{send_down.6} parent=5 // pred_fallthru
      _
    %p236 = scmp.lt.s32.totalorder %s13, 2
    // Predicated region
    $region21: #{send_down.6} parent=5 // pred_check
      %p237 = pneg %p236
    $region22: #{send_down.6} parent=5 // pred_check_branch
      %239 = sbr.rel (%p237) target = $region24
    $region23: #{send_down.6} parent=5 // pred_region
      // Predicated region
      $region25: #{send_down.6} parent=23 // pred_check
        %p240 = pneg %p47
      $region26: #{send_down.6} parent=23 // pred_check_branch
        %242 = sbr.rel (%p240) target = $region28
      $region27: #{send_down.6} parent=23 // pred_region
        %s243 = smul.u32 4, %s21
        %s244 = ssub.s32 6, %s243
        %p245 = scmp.lt.s32.totalorder %s244, 4
        %s246 = scalar_select %p245, %s244, 4
        %s247 = smul.u32 64, %s246
        %s248 = smul.u32 %s247, 6
        %p249 = scmp.lt.s32.totalorder %s20, 1
        %s250 = scalar_select %p249, %s20, 1
        %p251 = scmp.lt.s32.totalorder %s243, 5
        %s252 = scalar_select %p251, %s243, 5
        %s253 = smul.addr %s252, 6
        %s254 = smul.addr %s250, 36
        %s255 = sadd.s32 %s253, %s254
        %s256 = smul.addr %s255, 4
        %s257 = scalar_lea.vmem %s0, %s256
        %s258 = smul.u32 4, %s21
        %s259 = ssub.s32 6, %s258
        %p260 = scmp.lt.s32.totalorder %s259, 4
        %s261 = scalar_select %p260, %s259, 4
        %s262 = smul.u32 64, %s261
        %s263 = smul.u32 %s262, 6
      $region28: #{send_down.6} parent=23 // pred_fallthru
        _
      // Predicated region
      $region29: #{send_down.6} parent=23 // pred_check
        %p264 = pneg %p79
      $region30: #{send_down.6} parent=23 // pred_check_branch
        %266 = sbr.rel (%p264) target = $region32
      $region31: #{send_down.6} parent=23 // pred_region
        %s267 = smul.u32 %s21, 4
        %s268 = sadd.s32 %s267, 4
        %p269 = scmp.lt.s32.totalorder %s20, 1
        %s270 = scalar_select %p269, %s20, 1
        %p271 = scmp.lt.s32.totalorder %s268, 5
        %s272 = scalar_select %p271, %s268, 5
        %s273 = smul.addr %s272, 6
        %s274 = smul.addr %s270, 36
        %s275 = sadd.s32 %s273, %s274
        %s276 = smul.addr %s275, 4
        %s277 = scalar_lea.vmem %s1, %s276
        %s278 = smul.u32 %s21, 4
        %s279 = sadd.s32 %s278, 4
      $region32: #{send_down.6} parent=23 // pred_fallthru
        _
      // Predicated region
      $region33: #{send_down.6} parent=23 // pred_check
        %p280 = pneg %p111
      $region34: #{send_down.6} parent=23 // pred_check_branch
        %282 = sbr.rel (%p280) target = $region36
      $region35: #{send_down.6} parent=23 // pred_region
        %s283 = smul.u32 %s21, 4
        %s284 = sadd.s32 %s283, 5
        %p285 = scmp.lt.s32.totalorder %s20, 1
        %s286 = scalar_select %p285, %s20, 1
        %p287 = scmp.lt.s32.totalorder %s284, 5
        %s288 = scalar_select %p287, %s284, 5
        %s289 = smul.addr %s288, 6
        %s290 = smul.addr %s286, 36
        %s291 = sadd.s32 %s289, %s290
        %s292 = smul.addr %s291, 4
        %s293 = scalar_lea.vmem %s2, %s292
        %s294 = smul.u32 %s21, 4
        %s295 = sadd.s32 %s294, 5
      $region36: #{send_down.6} parent=23 // pred_fallthru
        _
    $region24: #{send_down.6} parent=5 // pred_fallthru
      _
    %p296 = scmp.le.s32.totalorder 1, %s13
    %p297 = scmp.lt.s32.totalorder %s13, 3
    %p298 = pnand %p296, %p297
    %p299 = pneg %p298
    // Predicated region
    $region37: #{send_down.6} parent=5 // pred_check
      _
    $region38: #{send_down.6} parent=5 // pred_check_branch
      %301 = sbr.rel (%p298) target = $region40
    $region39: #{send_down.6} parent=5 // pred_region
      %s302 = ssub.s32 %s13, 1
      %s303 = smul.u32 4, %s23
      %s304 = ssub.s32 6, %s303
      %p305 = scmp.lt.s32.totalorder %s304, 4
      %s306 = scalar_select %p305, %s304, 4
      %s307 = smul.u32 64, %s306
      %s308 = smul.u32 %s307, 6
      %p309 = scmp.lt.s32.totalorder %s22, 1
      %s310 = scalar_select %p309, %s22, 1
      %p311 = scmp.lt.s32.totalorder %s303, 5
      %s312 = scalar_select %p311, %s303, 5
      %s313 = smul.addr %s312, 6
      %s314 = smul.addr %s310, 36
      %s315 = sadd.s32 %s313, %s314
      %s316 = smul.addr %s315, 4
      %s317 = scalar_lea.vmem %s0, %s316
      %p318 = pneg %p53
      %p319 = pneg %p50
      %s320 = smul.u32 %s23, 4
      %s321 = sadd.s32 %s320, 4
      %p322 = scmp.lt.s32.totalorder %s22, 1
      %s323 = scalar_select %p322, %s22, 1
      %p324 = scmp.lt.s32.totalorder %s321, 5
      %s325 = scalar_select %p324, %s321, 5
      %s326 = smul.addr %s325, 6
      %s327 = smul.addr %s323, 36
      %s328 = sadd.s32 %s326, %s327
      %s329 = smul.addr %s328, 4
      %s330 = scalar_lea.vmem %s1, %s329
      %p331 = pneg %p85
      %p332 = pneg %p82
      %s333 = smul.u32 %s23, 4
      %s334 = sadd.s32 %s333, 5
      %p335 = scmp.lt.s32.totalorder %s22, 1
      %s336 = scalar_select %p335, %s22, 1
      %p337 = scmp.lt.s32.totalorder %s334, 5
      %s338 = scalar_select %p337, %s334, 5
      %s339 = smul.addr %s338, 6
      %s340 = smul.addr %s336, 36
      %s341 = sadd.s32 %s339, %s340
      %s342 = smul.addr %s341, 4
      %s343 = scalar_lea.vmem %s2, %s342
      %p344 = pneg %p117
      %p345 = pneg %p114
      %p346 = pneg %p138
      %p347 = pneg %p135
      %p348 = pneg %p159
      %p349 = pneg %p156
      %p350 = pneg %p187
      %p351 = pneg %p184
      %p352 = scmp.lt.s32.totalorder %s22, 1
      %s353 = scalar_select %p352, %s22, 1
      %p354 = scmp.lt.s32.totalorder %s23, 0
      %s355 = scalar_select %p354, %s23, 0
      %s356 = smul.addr %s355, 21
      %s357 = smul.addr %s353, 21
      %s358 = sadd.s32 %s356, %s357
      %s359 = smul.addr %s358, 4
      %s360 = scalar_lea.vmem %s5, %s359
      %p361 = pneg %p215
      %p362 = pneg %p212
      %p363 = scmp.lt.s32.totalorder %s22, 1
      %s364 = scalar_select %p363, %s22, 1
      %p365 = scmp.lt.s32.totalorder %s23, 0
      %s366 = scalar_select %p365, %s23, 0
      %s367 = sadd.s32 %s366, %s364
      %s368 = smul.addr %s367, 2
      %s369 = scalar_lea.vmem %s6, %s368
      %s370 = smul.u32 4, %s23
      %s371 = ssub.s32 6, %s370
      %p372 = scmp.lt.s32.totalorder %s371, 4
      %s373 = scalar_select %p372, %s371, 4
      %s374 = smul.u32 64, %s373
      %s375 = smul.u32 %s374, 6
      %p376 = scmp.lt.s32.totalorder %s22, 1
      %s377 = scalar_select %p376, %s22, 1
      %p378 = scmp.lt.s32.totalorder %s370, 5
      %s379 = scalar_select %p378, %s370, 5
      %s380 = smul.addr %s379, 6
      %s381 = smul.addr %s377, 36
      %s382 = sadd.s32 %s380, %s381
      %s383 = smul.addr %s382, 4
      %s384 = scalar_lea.vmem %s0, %s383
      %s385 = smul.u32 4, %s23
      %s386 = ssub.s32 6, %s385
      %p387 = scmp.lt.s32.totalorder %s386, 4
      %s388 = scalar_select %p387, %s386, 4
      %s389 = smul.u32 64, %s388
      %s390 = smul.u32 %s389, 6
      %s391 = smul.u32 %s23, 4
      %s392 = sadd.s32 %s391, 4
      %p393 = scmp.lt.s32.totalorder %s22, 1
      %s394 = scalar_select %p393, %s22, 1
      %p395 = scmp.lt.s32.totalorder %s392, 5
      %s396 = scalar_select %p395, %s392, 5
      %s397 = smul.addr %s396, 6
      %s398 = smul.addr %s394, 36
      %s399 = sadd.s32 %s397, %s398
      %s400 = smul.addr %s399, 4
      %s401 = scalar_lea.vmem %s1, %s400
      %s402 = smul.u32 %s23, 4
      %s403 = sadd.s32 %s402, 4
      %s404 = smul.u32 %s23, 4
      %s405 = sadd.s32 %s404, 5
      %p406 = scmp.lt.s32.totalorder %s22, 1
      %s407 = scalar_select %p406, %s22, 1
      %p408 = scmp.lt.s32.totalorder %s405, 5
      %s409 = scalar_select %p408, %s405, 5
      %s410 = smul.addr %s409, 6
      %s411 = smul.addr %s407, 36
      %s412 = sadd.s32 %s410, %s411
      %s413 = smul.addr %s412, 4
      %s414 = scalar_lea.vmem %s2, %s413
      %s415 = smul.u32 %s23, 4
      %s416 = sadd.s32 %s415, 5
      %p417 = scmp.lt.s32.totalorder %s22, 1
      %s418 = scalar_select %p417, %s22, 1
      %p419 = scmp.lt.s32.totalorder %s23, 0
      %s420 = scalar_select %p419, %s23, 0
      %s421 = smul.addr %s420, 21
      %s422 = smul.addr %s418, 21
      %s423 = sadd.s32 %s421, %s422
      %s424 = smul.addr %s423, 4
      %s425 = scalar_lea.vmem %s5, %s424
      %p426 = scmp.lt.s32.totalorder %s22, 1
      %s427 = scalar_select %p426, %s22, 1
      %p428 = scmp.lt.s32.totalorder %s23, 0
      %s429 = scalar_select %p428, %s23, 0
      %s430 = sadd.s32 %s429, %s427
      %s431 = smul.addr %s430, 2
      %s432 = scalar_lea.vmem %s6, %s431
      %v434 = vld [vmem:[%s384] sm:$0xf]
      %v435 = vld [vmem:[%s384 + $0x4] sm:$0xf]
      %v436 = vld [vmem:[%s384 + $0x8] sm:$0xf]
      %v437 = vld [vmem:[%s384 + $0xc] sm:$0xf]
      %v438 = vld [vmem:[%s384 + $0x10] sm:$0xf]
      %v439 = vld [vmem:[%s384 + $0x14] sm:$0x1]
      %vm440 = vcmask 27648
      %441 = vst.msk [vmem:[#allocation2] sm:$0xf] %vm440, %v434
      %442 = vst.msk [vmem:[#allocation2 + $0x4] sm:$0xf] %vm440, %v435
      %443 = vst.msk [vmem:[#allocation2 + $0x8] sm:$0xf] %vm440, %v436
      %444 = vst.msk [vmem:[#allocation2 + $0xc] sm:$0xf] %vm440, %v437
      %445 = vst.msk [vmem:[#allocation2 + $0x10] sm:$0xf] %vm440, %v438
      %vm446 = vcmask 24576
      %447 = vst.msk [vmem:[#allocation2 + $0x14] sm:$0x1] %vm446, %v439
      %s448 = scalar_lea.vmem %s384, 24
      %v449 = vld [vmem:[%s448] sm:$0xf]
      %v450 = vld [vmem:[%s448 + $0x4] sm:$0xf]
      %v451 = vld [vmem:[%s448 + $0x8] sm:$0xf]
      %v452 = vld [vmem:[%s448 + $0xc] sm:$0xf]
      %v453 = vld [vmem:[%s448 + $0x10] sm:$0xf]
      %v454 = vld [vmem:[%s448 + $0x14] sm:$0x1]
      %vm461 = vcmask 1040384
      %vm462 = vcmask 1044484
      %vm463 = vmor %vm461, %vm462
      %v464 = vrot.slane %v449, 7
      %v465 = vrot.slane %v464, 4
      %v466 = vrot.slane %v450, 7
      %v467 = vsel %vm463, %v465, %v466
      %v468 = vrot.slane %v466, 4
      %v469 = vrot.slane %v451, 7
      %v470 = vsel %vm463, %v468, %v469
      %v471 = vrot.slane %v469, 4
      %v472 = vrot.slane %v452, 7
      %v473 = vsel %vm463, %v471, %v472
      %v474 = vrot.slane %v472, 4
      %v475 = vrot.slane %v453, 7
      %v476 = vsel %vm463, %v474, %v475
      %v477 = vrot.slane %v475, 4
      %v478 = vrot.slane %v454, 7
      %v479 = vsel %vm463, %v477, %v478
      %vm486 = vcmask 27649
      %487 = vst.msk [vmem:[#allocation2 + $0x14] sm:$0xe] %vm486, %v464
      %488 = vst.msk [vmem:[#allocation2 + $0x18] sm:$0xf] %vm440, %v467
      %489 = vst.msk [vmem:[#allocation2 + $0x1c] sm:$0xf] %vm440, %v470
      %490 = vst.msk [vmem:[#allocation2 + $0x20] sm:$0xf] %vm440, %v473
      %491 = vst.msk [vmem:[#allocation2 + $0x24] sm:$0xf] %vm440, %v476
      %vm492 = vcmask 25600
      %493 = vst.msk [vmem:[#allocation2 + $0x28] sm:$0x3] %vm492, %v479
      %s494 = scalar_lea.vmem %s384, 48
      %v495 = vld [vmem:[%s494] sm:$0xf]
      %v496 = vld [vmem:[%s494 + $0x4] sm:$0xf]
      %v497 = vld [vmem:[%s494 + $0x8] sm:$0xf]
      %v498 = vld [vmem:[%s494 + $0xc] sm:$0xf]
      %v499 = vld [vmem:[%s494 + $0x10] sm:$0xf]
      %v500 = vld [vmem:[%s494 + $0x14] sm:$0x1]
      %vm507 = vcmask 1041408
      %vm508 = vcmask 1045508
      %vm509 = vmor %vm507, %vm508
      %v510 = vrot.slane %v495, 6
      %v511 = vrot.slane %v510, 4
      %v512 = vrot.slane %v496, 6
      %v513 = vsel %vm509, %v511, %v512
      %v514 = vrot.slane %v512, 4
      %v515 = vrot.slane %v497, 6
      %v516 = vsel %vm509, %v514, %v515
      %v517 = vrot.slane %v515, 4
      %v518 = vrot.slane %v498, 6
      %v519 = vsel %vm509, %v517, %v518
      %v520 = vrot.slane %v518, 4
      %v521 = vrot.slane %v499, 6
      %v522 = vsel %vm509, %v520, %v521
      %v523 = vrot.slane %v521, 4
      %v524 = vrot.slane %v500, 6
      %v525 = vsel %vm509, %v523, %v524
      %vm532 = vcmask 27650
      %533 = vst.msk [vmem:[#allocation2 + $0x28] sm:$0xc] %vm532, %v510
      %534 = vst.msk [vmem:[#allocation2 + $0x2c] sm:$0xf] %vm440, %v513
      %535 = vst.msk [vmem:[#allocation2 + $0x30] sm:$0xf] %vm440, %v516
      %536 = vst.msk [vmem:[#allocation2 + $0x34] sm:$0xf] %vm440, %v519
      %537 = vst.msk [vmem:[#allocation2 + $0x38] sm:$0xf] %vm440, %v522
      %vm538 = vcmask 26624
      %539 = vst.msk [vmem:[#allocation2 + $0x3c] sm:$0x7] %vm538, %v525
      %s540 = scalar_lea.vmem %s384, 72
      %v541 = vld [vmem:[%s540] sm:$0xf]
      %v542 = vld [vmem:[%s540 + $0x4] sm:$0xf]
      %v543 = vld [vmem:[%s540 + $0x8] sm:$0xf]
      %v544 = vld [vmem:[%s540 + $0xc] sm:$0xf]
      %v545 = vld [vmem:[%s540 + $0x10] sm:$0xf]
      %v546 = vld [vmem:[%s540 + $0x14] sm:$0x1]
      %vm553 = vcmask 1042432
      %vm554 = vcmask 1046532
      %vm555 = vmor %vm553, %vm554
      %v556 = vrot.slane %v541, 5
      %v557 = vrot.slane %v556, 4
      %v558 = vrot.slane %v542, 5
      %v559 = vsel %vm555, %v557, %v558
      %v560 = vrot.slane %v558, 4
      %v561 = vrot.slane %v543, 5
      %v562 = vsel %vm555, %v560, %v561
      %v563 = vrot.slane %v561, 4
      %v564 = vrot.slane %v544, 5
      %v565 = vsel %vm555, %v563, %v564
      %v566 = vrot.slane %v564, 4
      %v567 = vrot.slane %v545, 5
      %v568 = vsel %vm555, %v566, %v567
      %v569 = vrot.slane %v567, 4
      %v570 = vrot.slane %v546, 5
      %v571 = vsel %vm555, %v569, %v570
      %vm578 = vcmask 27651
      %579 = vst.msk [vmem:[#allocation2 + $0x3c] sm:$0x8] %vm578, %v556
      %580 = vst.msk [vmem:[#allocation2 + $0x40] sm:$0xf] %vm440, %v559
      %581 = vst.msk [vmem:[#allocation2 + $0x44] sm:$0xf] %vm440, %v562
      %582 = vst.msk [vmem:[#allocation2 + $0x48] sm:$0xf] %vm440, %v565
      %583 = vst.msk [vmem:[#allocation2 + $0x4c] sm:$0xf] %vm440, %v568
      %584 = vst.msk [vmem:[#allocation2 + $0x50] sm:$0xf] %vm440, %v571
      %v585 = vld [vmem:[%s401] sm:$0xf]
      %v586 = vld [vmem:[%s401 + $0x4] sm:$0xf]
      %v587 = vld [vmem:[%s401 + $0x8] sm:$0xf]
      %v588 = vld [vmem:[%s401 + $0xc] sm:$0xf]
      %v589 = vld [vmem:[%s401 + $0x10] sm:$0xf]
      %v590 = vld [vmem:[%s401 + $0x14] sm:$0x1]
      %591 = vst.msk [vmem:[#allocation2 + $0x54] sm:$0xf] %vm440, %v585
      %592 = vst.msk [vmem:[#allocation2 + $0x58] sm:$0xf] %vm440, %v586
      %593 = vst.msk [vmem:[#allocation2 + $0x5c] sm:$0xf] %vm440, %v587
      %594 = vst.msk [vmem:[#allocation2 + $0x60] sm:$0xf] %vm440, %v588
      %595 = vst.msk [vmem:[#allocation2 + $0x64] sm:$0xf] %vm440, %v589
      %596 = vst.msk [vmem:[#allocation2 + $0x68] sm:$0x1] %vm446, %v590
      %v597 = vld [vmem:[%s414] sm:$0xf]
      %v598 = vld [vmem:[%s414 + $0x4] sm:$0xf]
      %v599 = vld [vmem:[%s414 + $0x8] sm:$0xf]
      %v600 = vld [vmem:[%s414 + $0xc] sm:$0xf]
      %v601 = vld [vmem:[%s414 + $0x10] sm:$0xf]
      %v602 = vld [vmem:[%s414 + $0x14] sm:$0x1]
      %v609 = vrot.slane %v597, 7
      %v610 = vrot.slane %v609, 4
      %v611 = vrot.slane %v598, 7
      %v612 = vsel %vm463, %v610, %v611
      %v613 = vrot.slane %v611, 4
      %v614 = vrot.slane %v599, 7
      %v615 = vsel %vm463, %v613, %v614
      %v616 = vrot.slane %v614, 4
      %v617 = vrot.slane %v600, 7
      %v618 = vsel %vm463, %v616, %v617
      %v619 = vrot.slane %v617, 4
      %v620 = vrot.slane %v601, 7
      %v621 = vsel %vm463, %v619, %v620
      %v622 = vrot.slane %v620, 4
      %v623 = vrot.slane %v602, 7
      %v624 = vsel %vm463, %v622, %v623
      %631 = vst.msk [vmem:[#allocation2 + $0x68] sm:$0xe] %vm486, %v609
      %632 = vst.msk [vmem:[#allocation2 + $0x6c] sm:$0xf] %vm440, %v612
      %633 = vst.msk [vmem:[#allocation2 + $0x70] sm:$0xf] %vm440, %v615
      %634 = vst.msk [vmem:[#allocation2 + $0x74] sm:$0xf] %vm440, %v618
      %635 = vst.msk [vmem:[#allocation2 + $0x78] sm:$0xf] %vm440, %v621
      %636 = vst.msk [vmem:[#allocation2 + $0x7c] sm:$0x3] %vm492, %v624
      %637 = vst.msk [vmem:[#allocation2 + $0x7c] sm:$0xc] %vm532, 0
      %638 = vst.msk [vmem:[#allocation2 + $0x80] sm:$0xf] %vm440, 0
      %639 = vst.msk [vmem:[#allocation2 + $0x84] sm:$0x1] %vm446, 0
      %v640 = vld [vmem:[#allocation2] sm:$0xf]
      %v641 = vld [vmem:[#allocation2 + $0x4] sm:$0xf]
      %v642 = vld [vmem:[#allocation2 + $0x8] sm:$0xf]
      %v643 = vld [vmem:[#allocation2 + $0xc] sm:$0xf]
      %v644 = vld [vmem:[#allocation2 + $0x10] sm:$0xf]
      %v645 = vld [vmem:[#allocation2 + $0x14] sm:$0xf]
      %v646 = vld [vmem:[#allocation2 + $0x18] sm:$0xf]
      %v647 = vld [vmem:[#allocation2 + $0x1c] sm:$0xf]
      %v648 = vld [vmem:[#allocation2 + $0x20] sm:$0xf]
      %v649 = vld [vmem:[#allocation2 + $0x24] sm:$0xf]
      %v650 = vld [vmem:[#allocation2 + $0x28] sm:$0xf]
      %v651 = vld [vmem:[#allocation2 + $0x2c] sm:$0xf]
      %v652 = vld [vmem:[#allocation2 + $0x30] sm:$0xf]
      %v653 = vld [vmem:[#allocation2 + $0x34] sm:$0xf]
      %v654 = vld [vmem:[#allocation2 + $0x38] sm:$0xf]
      %v655 = vld [vmem:[#allocation2 + $0x3c] sm:$0xf]
      %v656 = vld [vmem:[#allocation2 + $0x40] sm:$0xf]
      %v657 = vld [vmem:[#allocation2 + $0x44] sm:$0xf]
      %v658 = vld [vmem:[#allocation2 + $0x48] sm:$0xf]
      %v659 = vld [vmem:[#allocation2 + $0x4c] sm:$0xf]
      %v660 = vld [vmem:[#allocation2 + $0x50] sm:$0xf]
      %v661 = vld [vmem:[#allocation2 + $0x54] sm:$0x1]
      %v662 = vld [vmem:[#allocation2] sm:$0xe]
      %v663 = vld [vmem:[#allocation2] sm:$0x8]
      %v664 = vld [vmem:[#allocation2 + $0x54] sm:$0x7]
      %v665 = vld [vmem:[#allocation2 + $0x54] sm:$0xf]
      %v666 = vld [vmem:[#allocation2 + $0x4] sm:$0xc]
      %v667 = vld [vmem:[#allocation2 + $0x58] sm:$0x3]
      %v668 = vld [vmem:[#allocation2 + $0x58] sm:$0x7]
      %v669 = vld [vmem:[#allocation2 + $0x4] sm:$0x8]
      %v670 = vld [vmem:[#allocation2 + $0x14] sm:$0xe]
      %v671 = vld [vmem:[#allocation2 + $0x58] sm:$0xf]
      %v672 = vld [vmem:[#allocation2 + $0x5c] sm:$0xf]
      %v673 = vld [vmem:[#allocation2 + $0x60] sm:$0xf]
      %v674 = vld [vmem:[#allocation2 + $0x64] sm:$0xf]
      %v675 = vld [vmem:[#allocation2 + $0x68] sm:$0x1]
      %v676 = vld [vmem:[#allocation2 + $0x68] sm:$0x3]
      %v677 = vld [vmem:[#allocation2 + $0x14] sm:$0xc]
      %v678 = vld [vmem:[#allocation2 + $0x68] sm:$0xf]
      %v679 = vld [vmem:[#allocation2 + $0x6c] sm:$0x1]
      %v680 = vld [vmem:[#allocation2 + $0x18] sm:$0xe]
      %v681 = vld [vmem:[#allocation2 + $0x18] sm:$0x8]
      %v682 = vld [vmem:[#allocation2 + $0x6c] sm:$0x7]
      %v683 = vld [vmem:[#allocation2 + $0x6c] sm:$0xf]
      %v684 = vld [vmem:[#allocation2 + $0x28] sm:$0xc]
      %v685 = vld [vmem:[#allocation2 + $0x70] sm:$0xf]
      %v686 = vld [vmem:[#allocation2 + $0x74] sm:$0xf]
      %v687 = vld [vmem:[#allocation2 + $0x78] sm:$0xf]
      %v688 = vld [vmem:[#allocation2 + $0x7c] sm:$0x3]
      %v689 = vld [vmem:[#allocation2 + $0x7c] sm:$0x7]
      %v690 = vld [vmem:[#allocation2 + $0x28] sm:$0x8]
      %v691 = vld [vmem:[#allocation2 + $0x2c] sm:$0xe]
      %v692 = vld [vmem:[#allocation2 + $0x7c] sm:$0xf]
      %v693 = vld [vmem:[#allocation2 + $0x80] sm:$0x1]
      %v694 = vld [vmem:[#allocation2 + $0x80] sm:$0x3]
      %v695 = vld [vmem:[#allocation2 + $0x2c] sm:$0xc]
      %v696 = vld [vmem:[#allocation2 + $0x80] sm:$0xf]
      %v697 = vld [vmem:[#allocation2 + $0x84] sm:$0x1]
      %v698 = vld [vmem:[#allocation2 + $0x30] sm:$0xe]
      %v720 = vunpack.c.l.b16 %v640
      %v721 = vunpack.c.l.b16 %v641
      %v722 = vunpack.c.l.b16 %v642
      %v723 = vunpack.c.l.b16 %v643
      %v724 = vunpack.c.l.b16 %v644
      %v725 = vunpack.c.l.b16 %v645
      %v726 = vunpack.c.l.b16 %v646
      %v727 = vunpack.c.l.b16 %v647
      %v728 = vunpack.c.l.b16 %v648
      %v729 = vunpack.c.l.b16 %v649
      %v730 = vunpack.c.l.b16 %v650
      %v731 = vunpack.c.l.b16 %v651
      %v732 = vunpack.c.l.b16 %v652
      %v733 = vunpack.c.l.b16 %v653
      %v734 = vunpack.c.l.b16 %v654
      %v735 = vunpack.c.l.b16 %v655
      %v736 = vunpack.c.l.b16 %v656
      %v737 = vunpack.c.l.b16 %v657
      %v738 = vunpack.c.l.b16 %v658
      %v739 = vunpack.c.l.b16 %v659
      %v740 = vunpack.c.l.b16 %v660
      %v741 = vpack.c.b16 %v721, %v720
      %v742 = vpack.c.b16 %v723, %v722
      %v743 = vpack.c.b16 %v725, %v724
      %v744 = vpack.c.b16 %v727, %v726
      %v745 = vpack.c.b16 %v729, %v728
      %v746 = vpack.c.b16 %v731, %v730
      %v747 = vpack.c.b16 %v733, %v732
      %v748 = vpack.c.b16 %v735, %v734
      %v749 = vpack.c.b16 %v737, %v736
      %v750 = vpack.c.b16 %v739, %v738
      %v751 = vpack.c.b16 %v740, %v740
      %v753 = vunpack.c.l.b16 %v661
      %v754 = vpack.c.b16 %v753, %v740
      %vm755 = vsmask.f32 7424
      %v757 = vshrl.u32 %v741, 16
      %v759 = vshll.u32 %v741, 16
      %v761 = vrot.slane %v759, 1
      %v762 = vor.u32 %v757, %v761
      %v764 = vshll.u32 %v742, 16
      %v766 = vrot.slane %v764, 1
      %v767 = vsel %vm755, %v762, %v766
      %v768 = vshrl.u32 %v742, 16
      %v770 = vor.u32 %v768, %v766
      %v772 = vshll.u32 %v743, 16
      %v774 = vrot.slane %v772, 1
      %v775 = vsel %vm755, %v770, %v774
      %v776 = vshrl.u32 %v743, 16
      %v778 = vor.u32 %v776, %v774
      %v780 = vshll.u32 %v744, 16
      %v782 = vrot.slane %v780, 1
      %v783 = vsel %vm755, %v778, %v782
      %v784 = vshrl.u32 %v744, 16
      %v786 = vor.u32 %v784, %v782
      %v788 = vshll.u32 %v745, 16
      %v790 = vrot.slane %v788, 1
      %v791 = vsel %vm755, %v786, %v790
      %v792 = vshrl.u32 %v745, 16
      %v794 = vor.u32 %v792, %v790
      %v796 = vshll.u32 %v746, 16
      %v798 = vrot.slane %v796, 1
      %v799 = vsel %vm755, %v794, %v798
      %v800 = vshrl.u32 %v746, 16
      %v802 = vor.u32 %v800, %v798
      %v804 = vshll.u32 %v747, 16
      %v806 = vrot.slane %v804, 1
      %v807 = vsel %vm755, %v802, %v806
      %v808 = vshrl.u32 %v747, 16
      %v810 = vor.u32 %v808, %v806
      %v812 = vshll.u32 %v748, 16
      %v814 = vrot.slane %v812, 1
      %v815 = vsel %vm755, %v810, %v814
      %v816 = vshrl.u32 %v748, 16
      %v818 = vor.u32 %v816, %v814
      %v820 = vshll.u32 %v749, 16
      %v822 = vrot.slane %v820, 1
      %v823 = vsel %vm755, %v818, %v822
      %v824 = vshrl.u32 %v749, 16
      %v826 = vor.u32 %v824, %v822
      %v828 = vshll.u32 %v750, 16
      %v830 = vrot.slane %v828, 1
      %v831 = vsel %vm755, %v826, %v830
      %v832 = vshrl.u32 %v750, 16
      %v834 = vor.u32 %v832, %v830
      %v836 = vshll.u32 %v754, 16
      %v838 = vrot.slane %v836, 1
      %v839 = vsel %vm755, %v834, %v838
      %v840 = vshrl.u32 %v754, 16
      %v842 = vor.u32 %v840, %v838
      %843 = vrot.lane.b32.xlu0 %v767, 4
      %v844 = vpop.permute.xlu0 %843
      %845 = vrot.lane.b32.xlu0 %v775, 4
      %v846 = vpop.permute.xlu0 %845
      %847 = vrot.lane.b32.xlu0 %v783, 4
      %v848 = vpop.permute.xlu0 %847
      %849 = vrot.lane.b32.xlu0 %v791, 4
      %v850 = vpop.permute.xlu0 %849
      %851 = vrot.lane.b32.xlu0 %v799, 4
      %v852 = vpop.permute.xlu0 %851
      %853 = vrot.lane.b32.xlu0 %v807, 4
      %v854 = vpop.permute.xlu0 %853
      %855 = vrot.lane.b32.xlu0 %v815, 4
      %v856 = vpop.permute.xlu0 %855
      %857 = vrot.lane.b32.xlu0 %v823, 4
      %v858 = vpop.permute.xlu0 %857
      %859 = vrot.lane.b32.xlu0 %v831, 4
      %v860 = vpop.permute.xlu0 %859
      %861 = vrot.lane.b32.xlu0 %v839, 4
      %v862 = vpop.permute.xlu0 %861
      %863 = vrot.lane.b32.xlu0 %v842, 4
      %v864 = vpop.permute.xlu0 %863
      %v866 = vunpack.c.l.b16 %v662
      %v867 = vpack.c.b16 %v721, %v866
      %vm868 = vcmask 1046528
      %v869 = vrot.slane %v867, 1
      %v870 = vrot.slane %v742, 1
      %v871 = vsel %vm868, %v869, %v870
      %v872 = vrot.slane %v743, 1
      %v873 = vsel %vm868, %v870, %v872
      %v874 = vrot.slane %v744, 1
      %v875 = vsel %vm868, %v872, %v874
      %v876 = vrot.slane %v745, 1
      %v877 = vsel %vm868, %v874, %v876
      %v878 = vrot.slane %v746, 1
      %v879 = vsel %vm868, %v876, %v878
      %v880 = vrot.slane %v747, 1
      %v881 = vsel %vm868, %v878, %v880
      %v882 = vrot.slane %v748, 1
      %v883 = vsel %vm868, %v880, %v882
      %v884 = vrot.slane %v749, 1
      %v885 = vsel %vm868, %v882, %v884
      %v886 = vrot.slane %v750, 1
      %v887 = vsel %vm868, %v884, %v886
      %v888 = vrot.slane %v754, 1
      %v889 = vsel %vm868, %v886, %v888
      %890 = vrot.lane.b32.xlu0 %v871, 8
      %v891 = vpop.permute.xlu0 %890
      %892 = vrot.lane.b32.xlu0 %v873, 8
      %v893 = vpop.permute.xlu0 %892
      %894 = vrot.lane.b32.xlu0 %v875, 8
      %v895 = vpop.permute.xlu0 %894
      %896 = vrot.lane.b32.xlu0 %v877, 8
      %v897 = vpop.permute.xlu0 %896
      %898 = vrot.lane.b32.xlu0 %v879, 8
      %v899 = vpop.permute.xlu0 %898
      %900 = vrot.lane.b32.xlu0 %v881, 8
      %v901 = vpop.permute.xlu0 %900
      %902 = vrot.lane.b32.xlu0 %v883, 8
      %v903 = vpop.permute.xlu0 %902
      %904 = vrot.lane.b32.xlu0 %v885, 8
      %v905 = vpop.permute.xlu0 %904
      %906 = vrot.lane.b32.xlu0 %v887, 8
      %v907 = vpop.permute.xlu0 %906
      %908 = vrot.lane.b32.xlu0 %v889, 8
      %v909 = vpop.permute.xlu0 %908
      %910 = vrot.lane.b32.xlu0 %v888, 8
      %v911 = vpop.permute.xlu0 %910
      %v914 = vunpack.c.l.b16 %v663
      %v915 = vunpack.c.l.b16 %v664
      %v916 = vpack.c.b16 %v721, %v914
      %v917 = vpack.c.b16 %v915, %v740
      %vm918 = vcmask 1044480
      %v919 = vrot.slane %v916, 3
      %v920 = vrot.slane %v742, 3
      %v921 = vsel %vm918, %v919, %v920
      %v922 = vrot.slane %v743, 3
      %v923 = vsel %vm918, %v920, %v922
      %v924 = vrot.slane %v744, 3
      %v925 = vsel %vm918, %v922, %v924
      %v926 = vrot.slane %v745, 3
      %v927 = vsel %vm918, %v924, %v926
      %v928 = vrot.slane %v746, 3
      %v929 = vsel %vm918, %v926, %v928
      %v930 = vrot.slane %v747, 3
      %v931 = vsel %vm918, %v928, %v930
      %v932 = vrot.slane %v748, 3
      %v933 = vsel %vm918, %v930, %v932
      %v934 = vrot.slane %v749, 3
      %v935 = vsel %vm918, %v932, %v934
      %v936 = vrot.slane %v750, 3
      %v937 = vsel %vm918, %v934, %v936
      %v938 = vrot.slane %v917, 3
      %v939 = vsel %vm918, %v936, %v938
      %940 = vrot.lane.b32.xlu0 %v921, 12
      %v941 = vpop.permute.xlu0 %940
      %942 = vrot.lane.b32.xlu0 %v923, 12
      %v943 = vpop.permute.xlu0 %942
      %944 = vrot.lane.b32.xlu0 %v925, 12
      %v945 = vpop.permute.xlu0 %944
      %946 = vrot.lane.b32.xlu0 %v927, 12
      %v947 = vpop.permute.xlu0 %946
      %948 = vrot.lane.b32.xlu0 %v929, 12
      %v949 = vpop.permute.xlu0 %948
      %950 = vrot.lane.b32.xlu0 %v931, 12
      %v951 = vpop.permute.xlu0 %950
      %952 = vrot.lane.b32.xlu0 %v933, 12
      %v953 = vpop.permute.xlu0 %952
      %954 = vrot.lane.b32.xlu0 %v935, 12
      %v955 = vpop.permute.xlu0 %954
      %956 = vrot.lane.b32.xlu0 %v937, 12
      %v957 = vpop.permute.xlu0 %956
      %958 = vrot.lane.b32.xlu0 %v939, 12
      %v959 = vpop.permute.xlu0 %958
      %960 = vrot.lane.b32.xlu0 %v938, 12
      %v961 = vpop.permute.xlu0 %960
      %v963 = vunpack.c.l.b16 %v665
      %v964 = vpack.c.b16 %v963, %v740
      %vm965 = vsmask.f32 4352
      %v967 = vshrl.u32 %v916, 16
      %v969 = vrot.slane %v967, 3
      %v970 = vshll.u32 %v916, 16
      %v972 = vrot.slane %v970, 4
      %v973 = vor.u32 %v969, %v972
      %v974 = vrot.slane %v768, 3
      %v975 = vrot.slane %v764, 4
      %v976 = vor.u32 %v974, %v975
      %v977 = vsel %vm965, %v973, %v976
      %v978 = vrot.slane %v776, 3
      %v979 = vrot.slane %v772, 4
      %v980 = vor.u32 %v978, %v979
      %v981 = vsel %vm965, %v976, %v980
      %v982 = vrot.slane %v784, 3
      %v983 = vrot.slane %v780, 4
      %v984 = vor.u32 %v982, %v983
      %v985 = vsel %vm965, %v980, %v984
      %v986 = vrot.slane %v792, 3
      %v987 = vrot.slane %v788, 4
      %v988 = vor.u32 %v986, %v987
      %v989 = vsel %vm965, %v984, %v988
      %v990 = vrot.slane %v800, 3
      %v991 = vrot.slane %v796, 4
      %v992 = vor.u32 %v990, %v991
      %v993 = vsel %vm965, %v988, %v992
      %v994 = vrot.slane %v808, 3
      %v995 = vrot.slane %v804, 4
      %v996 = vor.u32 %v994, %v995
      %v997 = vsel %vm965, %v992, %v996
      %v998 = vrot.slane %v816, 3
      %v999 = vrot.slane %v812, 4
      %v1000 = vor.u32 %v998, %v999
      %v1001 = vsel %vm965, %v996, %v1000
      %v1002 = vrot.slane %v824, 3
      %v1003 = vrot.slane %v820, 4
      %v1004 = vor.u32 %v1002, %v1003
      %v1005 = vsel %vm965, %v1000, %v1004
      %v1006 = vrot.slane %v832, 3
      %v1007 = vrot.slane %v828, 4
      %v1008 = vor.u32 %v1006, %v1007
      %v1009 = vsel %vm965, %v1004, %v1008
      %v1011 = vshrl.u32 %v964, 16
      %v1013 = vrot.slane %v1011, 3
      %v1014 = vshll.u32 %v964, 16
      %v1016 = vrot.slane %v1014, 4
      %v1017 = vor.u32 %v1013, %v1016
      %v1018 = vsel %vm965, %v1008, %v1017
      %1019 = vrot.lane.b32.xlu0 %v977, 16
      %v1020 = vpop.permute.xlu0 %1019
      %1021 = vrot.lane.b32.xlu0 %v981, 16
      %v1022 = vpop.permute.xlu0 %1021
      %1023 = vrot.lane.b32.xlu0 %v985, 16
      %v1024 = vpop.permute.xlu0 %1023
      %1025 = vrot.lane.b32.xlu0 %v989, 16
      %v1026 = vpop.permute.xlu0 %1025
      %1027 = vrot.lane.b32.xlu0 %v993, 16
      %v1028 = vpop.permute.xlu0 %1027
      %1029 = vrot.lane.b32.xlu0 %v997, 16
      %v1030 = vpop.permute.xlu0 %1029
      %1031 = vrot.lane.b32.xlu0 %v1001, 16
      %v1032 = vpop.permute.xlu0 %1031
      %1033 = vrot.lane.b32.xlu0 %v1005, 16
      %v1034 = vpop.permute.xlu0 %1033
      %1035 = vrot.lane.b32.xlu0 %v1009, 16
      %v1036 = vpop.permute.xlu0 %1035
      %1037 = vrot.lane.b32.xlu0 %v1018, 16
      %v1038 = vpop.permute.xlu0 %1037
      %1039 = vrot.lane.b32.xlu0 %v1017, 16
      %v1040 = vpop.permute.xlu0 %1039
      %v1041 = vpack.c.b16 %v722, %v721
      %v1042 = vpack.c.b16 %v724, %v723
      %v1043 = vpack.c.b16 %v726, %v725
      %v1044 = vpack.c.b16 %v728, %v727
      %v1045 = vpack.c.b16 %v730, %v729
      %v1046 = vpack.c.b16 %v732, %v731
      %v1047 = vpack.c.b16 %v734, %v733
      %v1048 = vpack.c.b16 %v736, %v735
      %v1049 = vpack.c.b16 %v738, %v737
      %v1050 = vpack.c.b16 %v740, %v739
      %v1051 = vpack.c.b16 %v963, %v963
      %1052 = vrot.lane.b32.xlu0 %v1041, 20
      %v1053 = vpop.permute.xlu0 %1052
      %1054 = vrot.lane.b32.xlu0 %v1042, 20
      %v1055 = vpop.permute.xlu0 %1054
      %1056 = vrot.lane.b32.xlu0 %v1043, 20
      %v1057 = vpop.permute.xlu0 %1056
      %1058 = vrot.lane.b32.xlu0 %v1044, 20
      %v1059 = vpop.permute.xlu0 %1058
      %1060 = vrot.lane.b32.xlu0 %v1045, 20
      %v1061 = vpop.permute.xlu0 %1060
      %1062 = vrot.lane.b32.xlu0 %v1046, 20
      %v1063 = vpop.permute.xlu0 %1062
      %1064 = vrot.lane.b32.xlu0 %v1047, 20
      %v1065 = vpop.permute.xlu0 %1064
      %1066 = vrot.lane.b32.xlu0 %v1048, 20
      %v1067 = vpop.permute.xlu0 %1066
      %1068 = vrot.lane.b32.xlu0 %v1049, 20
      %v1069 = vpop.permute.xlu0 %1068
      %1070 = vrot.lane.b32.xlu0 %v1050, 20
      %v1071 = vpop.permute.xlu0 %1070
      %1072 = vrot.lane.b32.xlu0 %v1051, 20
      %v1073 = vpop.permute.xlu0 %1072
      %v1076 = vunpack.c.l.b16 %v666
      %v1077 = vunpack.c.l.b16 %v667
      %v1078 = vpack.c.b16 %v722, %v1076
      %v1079 = vpack.c.b16 %v1077, %v963
      %vm1080 = vcmask 1045504
      %v1081 = vrot.slane %v1078, 2
      %v1082 = vrot.slane %v1042, 2
      %v1083 = vsel %vm1080, %v1081, %v1082
      %v1084 = vrot.slane %v1043, 2
      %v1085 = vsel %vm1080, %v1082, %v1084
      %v1086 = vrot.slane %v1044, 2
      %v1087 = vsel %vm1080, %v1084, %v1086
      %v1088 = vrot.slane %v1045, 2
      %v1089 = vsel %vm1080, %v1086, %v1088
      %v1090 = vrot.slane %v1046, 2
      %v1091 = vsel %vm1080, %v1088, %v1090
      %v1092 = vrot.slane %v1047, 2
      %v1093 = vsel %vm1080, %v1090, %v1092
      %v1094 = vrot.slane %v1048, 2
      %v1095 = vsel %vm1080, %v1092, %v1094
      %v1096 = vrot.slane %v1049, 2
      %v1097 = vsel %vm1080, %v1094, %v1096
      %v1098 = vrot.slane %v1050, 2
      %v1099 = vsel %vm1080, %v1096, %v1098
      %v1100 = vrot.slane %v1079, 2
      %v1101 = vsel %vm1080, %v1098, %v1100
      %1102 = vrot.lane.b32.xlu0 %v1083, 24
      %v1103 = vpop.permute.xlu0 %1102
      %1104 = vrot.lane.b32.xlu0 %v1085, 24
      %v1105 = vpop.permute.xlu0 %1104
      %1106 = vrot.lane.b32.xlu0 %v1087, 24
      %v1107 = vpop.permute.xlu0 %1106
      %1108 = vrot.lane.b32.xlu0 %v1089, 24
      %v1109 = vpop.permute.xlu0 %1108
      %1110 = vrot.lane.b32.xlu0 %v1091, 24
      %v1111 = vpop.permute.xlu0 %1110
      %1112 = vrot.lane.b32.xlu0 %v1093, 24
      %v1113 = vpop.permute.xlu0 %1112
      %1114 = vrot.lane.b32.xlu0 %v1095, 24
      %v1115 = vpop.permute.xlu0 %1114
      %1116 = vrot.lane.b32.xlu0 %v1097, 24
      %v1117 = vpop.permute.xlu0 %1116
      %1118 = vrot.lane.b32.xlu0 %v1099, 24
      %v1119 = vpop.permute.xlu0 %1118
      %1120 = vrot.lane.b32.xlu0 %v1101, 24
      %v1121 = vpop.permute.xlu0 %1120
      %1122 = vrot.lane.b32.xlu0 %v1100, 24
      %v1123 = vpop.permute.xlu0 %1122
      %v1125 = vunpack.c.l.b16 %v668
      %v1126 = vpack.c.b16 %v1125, %v963
      %vm1127 = vsmask.f32 5376
      %v1129 = vshrl.u32 %v1078, 16
      %v1131 = vrot.slane %v1129, 2
      %v1132 = vshll.u32 %v1078, 16
      %v1134 = vrot.slane %v1132, 3
      %v1135 = vor.u32 %v1131, %v1134
      %v1137 = vshrl.u32 %v1042, 16
      %v1139 = vrot.slane %v1137, 2
      %v1140 = vshll.u32 %v1042, 16
      %v1142 = vrot.slane %v1140, 3
      %v1143 = vor.u32 %v1139, %v1142
      %v1144 = vsel %vm1127, %v1135, %v1143
      %v1146 = vshrl.u32 %v1043, 16
      %v1148 = vrot.slane %v1146, 2
      %v1149 = vshll.u32 %v1043, 16
      %v1151 = vrot.slane %v1149, 3
      %v1152 = vor.u32 %v1148, %v1151
      %v1153 = vsel %vm1127, %v1143, %v1152
      %v1155 = vshrl.u32 %v1044, 16
      %v1157 = vrot.slane %v1155, 2
      %v1158 = vshll.u32 %v1044, 16
      %v1160 = vrot.slane %v1158, 3
      %v1161 = vor.u32 %v1157, %v1160
      %v1162 = vsel %vm1127, %v1152, %v1161
      %v1164 = vshrl.u32 %v1045, 16
      %v1166 = vrot.slane %v1164, 2
      %v1167 = vshll.u32 %v1045, 16
      %v1169 = vrot.slane %v1167, 3
      %v1170 = vor.u32 %v1166, %v1169
      %v1171 = vsel %vm1127, %v1161, %v1170
      %v1173 = vshrl.u32 %v1046, 16
      %v1175 = vrot.slane %v1173, 2
      %v1176 = vshll.u32 %v1046, 16
      %v1178 = vrot.slane %v1176, 3
      %v1179 = vor.u32 %v1175, %v1178
      %v1180 = vsel %vm1127, %v1170, %v1179
      %v1182 = vshrl.u32 %v1047, 16
      %v1184 = vrot.slane %v1182, 2
      %v1185 = vshll.u32 %v1047, 16
      %v1187 = vrot.slane %v1185, 3
      %v1188 = vor.u32 %v1184, %v1187
      %v1189 = vsel %vm1127, %v1179, %v1188
      %v1191 = vshrl.u32 %v1048, 16
      %v1193 = vrot.slane %v1191, 2
      %v1194 = vshll.u32 %v1048, 16
      %v1196 = vrot.slane %v1194, 3
      %v1197 = vor.u32 %v1193, %v1196
      %v1198 = vsel %vm1127, %v1188, %v1197
      %v1200 = vshrl.u32 %v1049, 16
      %v1202 = vrot.slane %v1200, 2
      %v1203 = vshll.u32 %v1049, 16
      %v1205 = vrot.slane %v1203, 3
      %v1206 = vor.u32 %v1202, %v1205
      %v1207 = vsel %vm1127, %v1197, %v1206
      %v1209 = vshrl.u32 %v1050, 16
      %v1211 = vrot.slane %v1209, 2
      %v1212 = vshll.u32 %v1050, 16
      %v1214 = vrot.slane %v1212, 3
      %v1215 = vor.u32 %v1211, %v1214
      %v1216 = vsel %vm1127, %v1206, %v1215
      %v1218 = vshrl.u32 %v1126, 16
      %v1220 = vrot.slane %v1218, 2
      %v1221 = vshll.u32 %v1126, 16
      %v1223 = vrot.slane %v1221, 3
      %v1224 = vor.u32 %v1220, %v1223
      %v1225 = vsel %vm1127, %v1215, %v1224
      %1226 = vrot.lane.b32.xlu0 %v1144, 28
      %v1227 = vpop.permute.xlu0 %1226
      %1228 = vrot.lane.b32.xlu0 %v1153, 28
      %v1229 = vpop.permute.xlu0 %1228
      %1230 = vrot.lane.b32.xlu0 %v1162, 28
      %v1231 = vpop.permute.xlu0 %1230
      %1232 = vrot.lane.b32.xlu0 %v1171, 28
      %v1233 = vpop.permute.xlu0 %1232
      %1234 = vrot.lane.b32.xlu0 %v1180, 28
      %v1235 = vpop.permute.xlu0 %1234
      %1236 = vrot.lane.b32.xlu0 %v1189, 28
      %v1237 = vpop.permute.xlu0 %1236
      %1238 = vrot.lane.b32.xlu0 %v1198, 28
      %v1239 = vpop.permute.xlu0 %1238
      %1240 = vrot.lane.b32.xlu0 %v1207, 28
      %v1241 = vpop.permute.xlu0 %1240
      %1242 = vrot.lane.b32.xlu0 %v1216, 28
      %v1243 = vpop.permute.xlu0 %1242
      %1244 = vrot.lane.b32.xlu0 %v1225, 28
      %v1245 = vpop.permute.xlu0 %1244
      %1246 = vrot.lane.b32.xlu0 %v1224, 28
      %v1247 = vpop.permute.xlu0 %1246
      %v1249 = vunpack.c.l.b16 %v669
      %v1250 = vpack.c.b16 %v722, %v1249
      %v1251 = vrot.slane %v1250, 3
      %v1252 = vrot.slane %v1042, 3
      %v1253 = vsel %vm918, %v1251, %v1252
      %v1254 = vrot.slane %v1043, 3
      %v1255 = vsel %vm918, %v1252, %v1254
      %v1256 = vrot.slane %v1044, 3
      %v1257 = vsel %vm918, %v1254, %v1256
      %v1258 = vrot.slane %v1045, 3
      %v1259 = vsel %vm918, %v1256, %v1258
      %v1260 = vrot.slane %v1046, 3
      %v1261 = vsel %vm918, %v1258, %v1260
      %v1262 = vrot.slane %v1047, 3
      %v1263 = vsel %vm918, %v1260, %v1262
      %v1264 = vrot.slane %v1048, 3
      %v1265 = vsel %vm918, %v1262, %v1264
      %v1266 = vrot.slane %v1049, 3
      %v1267 = vsel %vm918, %v1264, %v1266
      %v1268 = vrot.slane %v1050, 3
      %v1269 = vsel %vm918, %v1266, %v1268
      %v1270 = vrot.slane %v1126, 3
      %v1271 = vsel %vm918, %v1268, %v1270
      %1272 = vrot.lane.b32.xlu0 %v1253, 32
      %v1273 = vpop.permute.xlu0 %1272
      %1274 = vrot.lane.b32.xlu0 %v1255, 32
      %v1275 = vpop.permute.xlu0 %1274
      %1276 = vrot.lane.b32.xlu0 %v1257, 32
      %v1277 = vpop.permute.xlu0 %1276
      %1278 = vrot.lane.b32.xlu0 %v1259, 32
      %v1279 = vpop.permute.xlu0 %1278
      %1280 = vrot.lane.b32.xlu0 %v1261, 32
      %v1281 = vpop.permute.xlu0 %1280
      %1282 = vrot.lane.b32.xlu0 %v1263, 32
      %v1283 = vpop.permute.xlu0 %1282
      %1284 = vrot.lane.b32.xlu0 %v1265, 32
      %v1285 = vpop.permute.xlu0 %1284
      %1286 = vrot.lane.b32.xlu0 %v1267, 32
      %v1287 = vpop.permute.xlu0 %1286
      %1288 = vrot.lane.b32.xlu0 %v1269, 32
      %v1289 = vpop.permute.xlu0 %1288
      %1290 = vrot.lane.b32.xlu0 %v1271, 32
      %v1291 = vpop.permute.xlu0 %1290
      %1292 = vrot.lane.b32.xlu0 %v1270, 32
      %v1293 = vpop.permute.xlu0 %1292
      %v1300 = vunpack.c.l.b16 %v670
      %v1301 = vunpack.c.l.b16 %v671
      %v1302 = vunpack.c.l.b16 %v672
      %v1303 = vunpack.c.l.b16 %v673
      %v1304 = vunpack.c.l.b16 %v674
      %v1305 = vunpack.c.l.b16 %v675
      %v1306 = vpack.c.b16 %v726, %v1300
      %v1307 = vpack.c.b16 %v1301, %v963
      %v1308 = vpack.c.b16 %v1303, %v1302
      %v1309 = vpack.c.b16 %v1305, %v1304
      %v1310 = vrot.slane %v1306, 1
      %v1311 = vrot.slane %v1044, 1
      %v1312 = vsel %vm868, %v1310, %v1311
      %v1313 = vrot.slane %v1045, 1
      %v1314 = vsel %vm868, %v1311, %v1313
      %v1315 = vrot.slane %v1046, 1
      %v1316 = vsel %vm868, %v1313, %v1315
      %v1317 = vrot.slane %v1047, 1
      %v1318 = vsel %vm868, %v1315, %v1317
      %v1319 = vrot.slane %v1048, 1
      %v1320 = vsel %vm868, %v1317, %v1319
      %v1321 = vrot.slane %v1049, 1
      %v1322 = vsel %vm868, %v1319, %v1321
      %v1323 = vrot.slane %v1050, 1
      %v1324 = vsel %vm868, %v1321, %v1323
      %v1325 = vrot.slane %v1307, 1
      %v1326 = vsel %vm868, %v1323, %v1325
      %v1327 = vrot.slane %v1308, 1
      %v1328 = vsel %vm868, %v1325, %v1327
      %v1329 = vrot.slane %v1309, 1
      %v1330 = vsel %vm868, %v1327, %v1329
      %1331 = vrot.lane.b32.xlu0 %v1312, 36
      %v1332 = vpop.permute.xlu0 %1331
      %1333 = vrot.lane.b32.xlu0 %v1314, 36
      %v1334 = vpop.permute.xlu0 %1333
      %1335 = vrot.lane.b32.xlu0 %v1316, 36
      %v1336 = vpop.permute.xlu0 %1335
      %1337 = vrot.lane.b32.xlu0 %v1318, 36
      %v1338 = vpop.permute.xlu0 %1337
      %1339 = vrot.lane.b32.xlu0 %v1320, 36
      %v1340 = vpop.permute.xlu0 %1339
      %1341 = vrot.lane.b32.xlu0 %v1322, 36
      %v1342 = vpop.permute.xlu0 %1341
      %1343 = vrot.lane.b32.xlu0 %v1324, 36
      %v1344 = vpop.permute.xlu0 %1343
      %1345 = vrot.lane.b32.xlu0 %v1326, 36
      %v1346 = vpop.permute.xlu0 %1345
      %1347 = vrot.lane.b32.xlu0 %v1328, 36
      %v1348 = vpop.permute.xlu0 %1347
      %1349 = vrot.lane.b32.xlu0 %v1330, 36
      %v1350 = vpop.permute.xlu0 %1349
      %1351 = vrot.lane.b32.xlu0 %v1329, 36
      %v1352 = vpop.permute.xlu0 %1351
      %v1354 = vunpack.c.l.b16 %v676
      %v1355 = vpack.c.b16 %v1354, %v1304
      %vm1356 = vsmask.f32 6400
      %v1358 = vshrl.u32 %v1306, 16
      %v1360 = vrot.slane %v1358, 1
      %v1361 = vshll.u32 %v1306, 16
      %v1363 = vrot.slane %v1361, 2
      %v1364 = vor.u32 %v1360, %v1363
      %v1365 = vrot.slane %v1155, 1
      %v1366 = vrot.slane %v1158, 2
      %v1367 = vor.u32 %v1365, %v1366
      %v1368 = vsel %vm1356, %v1364, %v1367
      %v1369 = vrot.slane %v1164, 1
      %v1370 = vrot.slane %v1167, 2
      %v1371 = vor.u32 %v1369, %v1370
      %v1372 = vsel %vm1356, %v1367, %v1371
      %v1373 = vrot.slane %v1173, 1
      %v1374 = vrot.slane %v1176, 2
      %v1375 = vor.u32 %v1373, %v1374
      %v1376 = vsel %vm1356, %v1371, %v1375
      %v1377 = vrot.slane %v1182, 1
      %v1378 = vrot.slane %v1185, 2
      %v1379 = vor.u32 %v1377, %v1378
      %v1380 = vsel %vm1356, %v1375, %v1379
      %v1381 = vrot.slane %v1191, 1
      %v1382 = vrot.slane %v1194, 2
      %v1383 = vor.u32 %v1381, %v1382
      %v1384 = vsel %vm1356, %v1379, %v1383
      %v1385 = vrot.slane %v1200, 1
      %v1386 = vrot.slane %v1203, 2
      %v1387 = vor.u32 %v1385, %v1386
      %v1388 = vsel %vm1356, %v1383, %v1387
      %v1389 = vrot.slane %v1209, 1
      %v1390 = vrot.slane %v1212, 2
      %v1391 = vor.u32 %v1389, %v1390
      %v1392 = vsel %vm1356, %v1387, %v1391
      %v1394 = vshrl.u32 %v1307, 16
      %v1396 = vrot.slane %v1394, 1
      %v1397 = vshll.u32 %v1307, 16
      %v1399 = vrot.slane %v1397, 2
      %v1400 = vor.u32 %v1396, %v1399
      %v1401 = vsel %vm1356, %v1391, %v1400
      %v1403 = vshrl.u32 %v1308, 16
      %v1405 = vrot.slane %v1403, 1
      %v1406 = vshll.u32 %v1308, 16
      %v1408 = vrot.slane %v1406, 2
      %v1409 = vor.u32 %v1405, %v1408
      %v1410 = vsel %vm1356, %v1400, %v1409
      %v1412 = vshrl.u32 %v1355, 16
      %v1414 = vrot.slane %v1412, 1
      %v1415 = vshll.u32 %v1355, 16
      %v1417 = vrot.slane %v1415, 2
      %v1418 = vor.u32 %v1414, %v1417
      %v1419 = vsel %vm1356, %v1409, %v1418
      %1420 = vrot.lane.b32.xlu0 %v1368, 40
      %v1421 = vpop.permute.xlu0 %1420
      %1422 = vrot.lane.b32.xlu0 %v1372, 40
      %v1423 = vpop.permute.xlu0 %1422
      %1424 = vrot.lane.b32.xlu0 %v1376, 40
      %v1425 = vpop.permute.xlu0 %1424
      %1426 = vrot.lane.b32.xlu0 %v1380, 40
      %v1427 = vpop.permute.xlu0 %1426
      %1428 = vrot.lane.b32.xlu0 %v1384, 40
      %v1429 = vpop.permute.xlu0 %1428
      %1430 = vrot.lane.b32.xlu0 %v1388, 40
      %v1431 = vpop.permute.xlu0 %1430
      %1432 = vrot.lane.b32.xlu0 %v1392, 40
      %v1433 = vpop.permute.xlu0 %1432
      %1434 = vrot.lane.b32.xlu0 %v1401, 40
      %v1435 = vpop.permute.xlu0 %1434
      %1436 = vrot.lane.b32.xlu0 %v1410, 40
      %v1437 = vpop.permute.xlu0 %1436
      %1438 = vrot.lane.b32.xlu0 %v1419, 40
      %v1439 = vpop.permute.xlu0 %1438
      %1440 = vrot.lane.b32.xlu0 %v1418, 40
      %v1441 = vpop.permute.xlu0 %1440
      %v1443 = vunpack.c.l.b16 %v677
      %v1444 = vpack.c.b16 %v726, %v1443
      %v1445 = vrot.slane %v1444, 2
      %v1446 = vsel %vm1080, %v1445, %v1086
      %v1447 = vrot.slane %v1307, 2
      %v1448 = vsel %vm1080, %v1098, %v1447
      %v1449 = vrot.slane %v1308, 2
      %v1450 = vsel %vm1080, %v1447, %v1449
      %v1451 = vrot.slane %v1355, 2
      %v1452 = vsel %vm1080, %v1449, %v1451
      %1453 = vrot.lane.b32.xlu0 %v1446, 44
      %v1454 = vpop.permute.xlu0 %1453
      %1455 = vrot.lane.b32.xlu0 %v1089, 44
      %v1456 = vpop.permute.xlu0 %1455
      %1457 = vrot.lane.b32.xlu0 %v1091, 44
      %v1458 = vpop.permute.xlu0 %1457
      %1459 = vrot.lane.b32.xlu0 %v1093, 44
      %v1460 = vpop.permute.xlu0 %1459
      %1461 = vrot.lane.b32.xlu0 %v1095, 44
      %v1462 = vpop.permute.xlu0 %1461
      %1463 = vrot.lane.b32.xlu0 %v1097, 44
      %v1464 = vpop.permute.xlu0 %1463
      %1465 = vrot.lane.b32.xlu0 %v1099, 44
      %v1466 = vpop.permute.xlu0 %1465
      %1467 = vrot.lane.b32.xlu0 %v1448, 44
      %v1468 = vpop.permute.xlu0 %1467
      %1469 = vrot.lane.b32.xlu0 %v1450, 44
      %v1470 = vpop.permute.xlu0 %1469
      %1471 = vrot.lane.b32.xlu0 %v1452, 44
      %v1472 = vpop.permute.xlu0 %1471
      %1473 = vrot.lane.b32.xlu0 %v1451, 44
      %v1474 = vpop.permute.xlu0 %1473
      %v1476 = vunpack.c.l.b16 %v678
      %v1477 = vpack.c.b16 %v1302, %v1301
      %v1478 = vpack.c.b16 %v1304, %v1303
      %v1479 = vpack.c.b16 %v1476, %v1476
      %1480 = vrot.lane.b32.xlu0 %v744, 48
      %v1481 = vpop.permute.xlu0 %1480
      %1482 = vrot.lane.b32.xlu0 %v745, 48
      %v1483 = vpop.permute.xlu0 %1482
      %1484 = vrot.lane.b32.xlu0 %v746, 48
      %v1485 = vpop.permute.xlu0 %1484
      %1486 = vrot.lane.b32.xlu0 %v747, 48
      %v1487 = vpop.permute.xlu0 %1486
      %1488 = vrot.lane.b32.xlu0 %v748, 48
      %v1489 = vpop.permute.xlu0 %1488
      %1490 = vrot.lane.b32.xlu0 %v749, 48
      %v1491 = vpop.permute.xlu0 %1490
      %1492 = vrot.lane.b32.xlu0 %v750, 48
      %v1493 = vpop.permute.xlu0 %1492
      %1494 = vrot.lane.b32.xlu0 %v964, 48
      %v1495 = vpop.permute.xlu0 %1494
      %1496 = vrot.lane.b32.xlu0 %v1477, 48
      %v1497 = vpop.permute.xlu0 %1496
      %1498 = vrot.lane.b32.xlu0 %v1478, 48
      %v1499 = vpop.permute.xlu0 %1498
      %1500 = vrot.lane.b32.xlu0 %v1479, 48
      %v1501 = vpop.permute.xlu0 %1500
      %v1503 = vunpack.c.l.b16 %v679
      %v1504 = vpack.c.b16 %v1503, %v1476
      %v1505 = vrot.slane %v1014, 1
      %v1506 = vsel %vm755, %v834, %v1505
      %v1507 = vor.u32 %v1011, %v1505
      %v1509 = vshll.u32 %v1477, 16
      %v1511 = vrot.slane %v1509, 1
      %v1512 = vsel %vm755, %v1507, %v1511
      %v1513 = vshrl.u32 %v1477, 16
      %v1515 = vor.u32 %v1513, %v1511
      %v1517 = vshll.u32 %v1478, 16
      %v1519 = vrot.slane %v1517, 1
      %v1520 = vsel %vm755, %v1515, %v1519
      %v1521 = vshrl.u32 %v1478, 16
      %v1523 = vor.u32 %v1521, %v1519
      %v1525 = vshll.u32 %v1504, 16
      %v1527 = vrot.slane %v1525, 1
      %v1528 = vsel %vm755, %v1523, %v1527
      %v1529 = vshrl.u32 %v1504, 16
      %v1531 = vor.u32 %v1529, %v1527
      %1532 = vrot.lane.b32.xlu0 %v791, 52
      %v1533 = vpop.permute.xlu0 %1532
      %1534 = vrot.lane.b32.xlu0 %v799, 52
      %v1535 = vpop.permute.xlu0 %1534
      %1536 = vrot.lane.b32.xlu0 %v807, 52
      %v1537 = vpop.permute.xlu0 %1536
      %1538 = vrot.lane.b32.xlu0 %v815, 52
      %v1539 = vpop.permute.xlu0 %1538
      %1540 = vrot.lane.b32.xlu0 %v823, 52
      %v1541 = vpop.permute.xlu0 %1540
      %1542 = vrot.lane.b32.xlu0 %v831, 52
      %v1543 = vpop.permute.xlu0 %1542
      %1544 = vrot.lane.b32.xlu0 %v1506, 52
      %v1545 = vpop.permute.xlu0 %1544
      %1546 = vrot.lane.b32.xlu0 %v1512, 52
      %v1547 = vpop.permute.xlu0 %1546
      %1548 = vrot.lane.b32.xlu0 %v1520, 52
      %v1549 = vpop.permute.xlu0 %1548
      %1550 = vrot.lane.b32.xlu0 %v1528, 52
      %v1551 = vpop.permute.xlu0 %1550
      %1552 = vrot.lane.b32.xlu0 %v1531, 52
      %v1553 = vpop.permute.xlu0 %1552
      %v1555 = vunpack.c.l.b16 %v680
      %v1556 = vpack.c.b16 %v727, %v1555
      %v1557 = vrot.slane %v1556, 1
      %v1558 = vsel %vm868, %v1557, %v876
      %v1559 = vrot.slane %v964, 1
      %v1560 = vsel %vm868, %v886, %v1559
      %v1561 = vrot.slane %v1477, 1
      %v1562 = vsel %vm868, %v1559, %v1561
      %v1563 = vrot.slane %v1478, 1
      %v1564 = vsel %vm868, %v1561, %v1563
      %v1565 = vrot.slane %v1504, 1
      %v1566 = vsel %vm868, %v1563, %v1565
      %1567 = vrot.lane.b32.xlu0 %v1558, 56
      %v1568 = vpop.permute.xlu0 %1567
      %1569 = vrot.lane.b32.xlu0 %v879, 56
      %v1570 = vpop.permute.xlu0 %1569
      %1571 = vrot.lane.b32.xlu0 %v881, 56
      %v1572 = vpop.permute.xlu0 %1571
      %1573 = vrot.lane.b32.xlu0 %v883, 56
      %v1574 = vpop.permute.xlu0 %1573
      %1575 = vrot.lane.b32.xlu0 %v885, 56
      %v1576 = vpop.permute.xlu0 %1575
      %1577 = vrot.lane.b32.xlu0 %v887, 56
      %v1578 = vpop.permute.xlu0 %1577
      %1579 = vrot.lane.b32.xlu0 %v1560, 56
      %v1580 = vpop.permute.xlu0 %1579
      %1581 = vrot.lane.b32.xlu0 %v1562, 56
      %v1582 = vpop.permute.xlu0 %1581
      %1583 = vrot.lane.b32.xlu0 %v1564, 56
      %v1584 = vpop.permute.xlu0 %1583
      %1585 = vrot.lane.b32.xlu0 %v1566, 56
      %v1586 = vpop.permute.xlu0 %1585
      %1587 = vrot.lane.b32.xlu0 %v1565, 56
      %v1588 = vpop.permute.xlu0 %1587
      %v1591 = vunpack.c.l.b16 %v681
      %v1592 = vunpack.c.l.b16 %v682
      %v1593 = vpack.c.b16 %v727, %v1591
      %v1594 = vpack.c.b16 %v1592, %v1476
      %v1595 = vrot.slane %v1593, 3
      %v1596 = vsel %vm918, %v1595, %v926
      %v1597 = vrot.slane %v964, 3
      %v1598 = vsel %vm918, %v936, %v1597
      %v1599 = vrot.slane %v1477, 3
      %v1600 = vsel %vm918, %v1597, %v1599
      %v1601 = vrot.slane %v1478, 3
      %v1602 = vsel %vm918, %v1599, %v1601
      %v1603 = vrot.slane %v1594, 3
      %v1604 = vsel %vm918, %v1601, %v1603
      %1605 = vrot.lane.b32.xlu0 %v1596, 60
      %v1606 = vpop.permute.xlu0 %1605
      %1607 = vrot.lane.b32.xlu0 %v929, 60
      %v1608 = vpop.permute.xlu0 %1607
      %1609 = vrot.lane.b32.xlu0 %v931, 60
      %v1610 = vpop.permute.xlu0 %1609
      %1611 = vrot.lane.b32.xlu0 %v933, 60
      %v1612 = vpop.permute.xlu0 %1611
      %1613 = vrot.lane.b32.xlu0 %v935, 60
      %v1614 = vpop.permute.xlu0 %1613
      %1615 = vrot.lane.b32.xlu0 %v937, 60
      %v1616 = vpop.permute.xlu0 %1615
      %1617 = vrot.lane.b32.xlu0 %v1598, 60
      %v1618 = vpop.permute.xlu0 %1617
      %1619 = vrot.lane.b32.xlu0 %v1600, 60
      %v1620 = vpop.permute.xlu0 %1619
      %1621 = vrot.lane.b32.xlu0 %v1602, 60
      %v1622 = vpop.permute.xlu0 %1621
      %1623 = vrot.lane.b32.xlu0 %v1604, 60
      %v1624 = vpop.permute.xlu0 %1623
      %1625 = vrot.lane.b32.xlu0 %v1603, 60
      %v1626 = vpop.permute.xlu0 %1625
      %vm1627 = vcmask 31744
      %v1629 = vsel %vm1627, %v741, %v844
      %v1631 = vsel %vm1627, %v742, %v846
      %v1633 = vsel %vm1627, %v743, %v848
      %v1635 = vsel %vm1627, %v744, %v850
      %v1637 = vsel %vm1627, %v745, %v852
      %v1639 = vsel %vm1627, %v746, %v854
      %v1641 = vsel %vm1627, %v747, %v856
      %v1643 = vsel %vm1627, %v748, %v858
      %v1645 = vsel %vm1627, %v749, %v860
      %v1647 = vsel %vm1627, %v750, %v862
      %v1650 = vsel %vm1627, %v751, %v864
      %vm1651 = vcmask 64512
      %v1653 = vsel %vm1651, %v1629, %v891
      %v1655 = vsel %vm1651, %v1631, %v893
      %v1657 = vsel %vm1651, %v1633, %v895
      %v1659 = vsel %vm1651, %v1635, %v897
      %v1661 = vsel %vm1651, %v1637, %v899
      %v1663 = vsel %vm1651, %v1639, %v901
      %v1665 = vsel %vm1651, %v1641, %v903
      %v1667 = vsel %vm1651, %v1643, %v905
      %v1669 = vsel %vm1651, %v1645, %v907
      %v1671 = vsel %vm1651, %v1647, %v909
      %v1673 = vsel %vm1651, %v1650, %v911
      %vm1674 = vcmask 97280
      %v1676 = vsel %vm1674, %v1653, %v941
      %v1678 = vsel %vm1674, %v1655, %v943
      %v1680 = vsel %vm1674, %v1657, %v945
      %v1682 = vsel %vm1674, %v1659, %v947
      %v1684 = vsel %vm1674, %v1661, %v949
      %v1686 = vsel %vm1674, %v1663, %v951
      %v1688 = vsel %vm1674, %v1665, %v953
      %v1690 = vsel %vm1674, %v1667, %v955
      %v1692 = vsel %vm1674, %v1669, %v957
      %v1694 = vsel %vm1674, %v1671, %v959
      %v1696 = vsel %vm1674, %v1673, %v961
      %vm1697 = vcmask 130048
      %v1699 = vsel %vm1697, %v1676, %v1020
      %v1701 = vsel %vm1697, %v1678, %v1022
      %v1703 = vsel %vm1697, %v1680, %v1024
      %v1705 = vsel %vm1697, %v1682, %v1026
      %v1707 = vsel %vm1697, %v1684, %v1028
      %v1709 = vsel %vm1697, %v1686, %v1030
      %v1711 = vsel %vm1697, %v1688, %v1032
      %v1713 = vsel %vm1697, %v1690, %v1034
      %v1715 = vsel %vm1697, %v1692, %v1036
      %v1717 = vsel %vm1697, %v1694, %v1038
      %v1719 = vsel %vm1697, %v1696, %v1040
      %vm1720 = vcmask 162816
      %v1722 = vsel %vm1720, %v1699, %v1053
      %v1724 = vsel %vm1720, %v1701, %v1055
      %v1726 = vsel %vm1720, %v1703, %v1057
      %v1728 = vsel %vm1720, %v1705, %v1059
      %v1730 = vsel %vm1720, %v1707, %v1061
      %v1732 = vsel %vm1720, %v1709, %v1063
      %v1734 = vsel %vm1720, %v1711, %v1065
      %v1736 = vsel %vm1720, %v1713, %v1067
      %v1738 = vsel %vm1720, %v1715, %v1069
      %v1740 = vsel %vm1720, %v1717, %v1071
      %v1742 = vsel %vm1720, %v1719, %v1073
      %vm1743 = vcmask 195584
      %v1745 = vsel %vm1743, %v1722, %v1103
      %v1747 = vsel %vm1743, %v1724, %v1105
      %v1749 = vsel %vm1743, %v1726, %v1107
      %v1751 = vsel %vm1743, %v1728, %v1109
      %v1753 = vsel %vm1743, %v1730, %v1111
      %v1755 = vsel %vm1743, %v1732, %v1113
      %v1757 = vsel %vm1743, %v1734, %v1115
      %v1759 = vsel %vm1743, %v1736, %v1117
      %v1761 = vsel %vm1743, %v1738, %v1119
      %v1763 = vsel %vm1743, %v1740, %v1121
      %v1765 = vsel %vm1743, %v1742, %v1123
      %vm1766 = vcmask 228352
      %v1768 = vsel %vm1766, %v1745, %v1227
      %v1770 = vsel %vm1766, %v1747, %v1229
      %v1772 = vsel %vm1766, %v1749, %v1231
      %v1774 = vsel %vm1766, %v1751, %v1233
      %v1776 = vsel %vm1766, %v1753, %v1235
      %v1778 = vsel %vm1766, %v1755, %v1237
      %v1780 = vsel %vm1766, %v1757, %v1239
      %v1782 = vsel %vm1766, %v1759, %v1241
      %v1784 = vsel %vm1766, %v1761, %v1243
      %v1786 = vsel %vm1766, %v1763, %v1245
      %v1788 = vsel %vm1766, %v1765, %v1247
      %vm1789 = vcmask 261120
      %v1791 = vsel %vm1789, %v1768, %v1273
      %v1793 = vsel %vm1789, %v1770, %v1275
      %v1795 = vsel %vm1789, %v1772, %v1277
      %v1797 = vsel %vm1789, %v1774, %v1279
      %v1799 = vsel %vm1789, %v1776, %v1281
      %v1801 = vsel %vm1789, %v1778, %v1283
      %v1803 = vsel %vm1789, %v1780, %v1285
      %v1805 = vsel %vm1789, %v1782, %v1287
      %v1807 = vsel %vm1789, %v1784, %v1289
      %v1809 = vsel %vm1789, %v1786, %v1291
      %v1811 = vsel %vm1789, %v1788, %v1293
      %vm1812 = vcmask 293888
      %v1814 = vsel %vm1812, %v1791, %v1332
      %v1816 = vsel %vm1812, %v1793, %v1334
      %v1818 = vsel %vm1812, %v1795, %v1336
      %v1820 = vsel %vm1812, %v1797, %v1338
      %v1822 = vsel %vm1812, %v1799, %v1340
      %v1824 = vsel %vm1812, %v1801, %v1342
      %v1826 = vsel %vm1812, %v1803, %v1344
      %v1828 = vsel %vm1812, %v1805, %v1346
      %v1830 = vsel %vm1812, %v1807, %v1348
      %v1832 = vsel %vm1812, %v1809, %v1350
      %v1834 = vsel %vm1812, %v1811, %v1352
      %vm1835 = vcmask 326656
      %v1837 = vsel %vm1835, %v1814, %v1421
      %v1839 = vsel %vm1835, %v1816, %v1423
      %v1841 = vsel %vm1835, %v1818, %v1425
      %v1843 = vsel %vm1835, %v1820, %v1427
      %v1845 = vsel %vm1835, %v1822, %v1429
      %v1847 = vsel %vm1835, %v1824, %v1431
      %v1849 = vsel %vm1835, %v1826, %v1433
      %v1851 = vsel %vm1835, %v1828, %v1435
      %v1853 = vsel %vm1835, %v1830, %v1437
      %v1855 = vsel %vm1835, %v1832, %v1439
      %v1857 = vsel %vm1835, %v1834, %v1441
      %vm1858 = vcmask 359424
      %v1860 = vsel %vm1858, %v1837, %v1454
      %v1862 = vsel %vm1858, %v1839, %v1456
      %v1864 = vsel %vm1858, %v1841, %v1458
      %v1866 = vsel %vm1858, %v1843, %v1460
      %v1868 = vsel %vm1858, %v1845, %v1462
      %v1870 = vsel %vm1858, %v1847, %v1464
      %v1872 = vsel %vm1858, %v1849, %v1466
      %v1874 = vsel %vm1858, %v1851, %v1468
      %v1876 = vsel %vm1858, %v1853, %v1470
      %v1878 = vsel %vm1858, %v1855, %v1472
      %v1880 = vsel %vm1858, %v1857, %v1474
      %vm1881 = vcmask 392192
      %v1883 = vsel %vm1881, %v1860, %v1481
      %v1885 = vsel %vm1881, %v1862, %v1483
      %v1887 = vsel %vm1881, %v1864, %v1485
      %v1889 = vsel %vm1881, %v1866, %v1487
      %v1891 = vsel %vm1881, %v1868, %v1489
      %v1893 = vsel %vm1881, %v1870, %v1491
      %v1895 = vsel %vm1881, %v1872, %v1493
      %v1897 = vsel %vm1881, %v1874, %v1495
      %v1899 = vsel %vm1881, %v1876, %v1497
      %v1901 = vsel %vm1881, %v1878, %v1499
      %v1903 = vsel %vm1881, %v1880, %v1501
      %vm1904 = vcmask 424960
      %v1906 = vsel %vm1904, %v1883, %v1533
      %v1908 = vsel %vm1904, %v1885, %v1535
      %v1910 = vsel %vm1904, %v1887, %v1537
      %v1912 = vsel %vm1904, %v1889, %v1539
      %v1914 = vsel %vm1904, %v1891, %v1541
      %v1916 = vsel %vm1904, %v1893, %v1543
      %v1918 = vsel %vm1904, %v1895, %v1545
      %v1920 = vsel %vm1904, %v1897, %v1547
      %v1922 = vsel %vm1904, %v1899, %v1549
      %v1924 = vsel %vm1904, %v1901, %v1551
      %v1926 = vsel %vm1904, %v1903, %v1553
      %vm1927 = vcmask 457728
      %v1929 = vsel %vm1927, %v1906, %v1568
      %v1931 = vsel %vm1927, %v1908, %v1570
      %v1933 = vsel %vm1927, %v1910, %v1572
      %v1935 = vsel %vm1927, %v1912, %v1574
      %v1937 = vsel %vm1927, %v1914, %v1576
      %v1939 = vsel %vm1927, %v1916, %v1578
      %v1941 = vsel %vm1927, %v1918, %v1580
      %v1943 = vsel %vm1927, %v1920, %v1582
      %v1945 = vsel %vm1927, %v1922, %v1584
      %v1947 = vsel %vm1927, %v1924, %v1586
      %v1949 = vsel %vm1927, %v1926, %v1588
      %vm1950 = vcmask 490496
      %v1952 = vsel %vm1950, %v1929, %v1606
      %v1954 = vsel %vm1950, %v1931, %v1608
      %v1956 = vsel %vm1950, %v1933, %v1610
      %v1958 = vsel %vm1950, %v1935, %v1612
      %v1960 = vsel %vm1950, %v1937, %v1614
      %v1962 = vsel %vm1950, %v1939, %v1616
      %v1964 = vsel %vm1950, %v1941, %v1618
      %v1966 = vsel %vm1950, %v1943, %v1620
      %v1968 = vsel %vm1950, %v1945, %v1622
      %v1970 = vsel %vm1950, %v1947, %v1624
      %v1972 = vsel %vm1950, %v1949, %v1626
      %v1974 = vunpack.c.l.b16 %v683
      %v1975 = vpack.c.b16 %v1974, %v1476
      %v1976 = vpack.c.b16 %v1476, %v1304
      %v1977 = vpack.c.b16 %v1974, %v1974
      %vm1978 = vsmask.f32 3328
      %v1979 = vrot.slane %v1155, 4
      %v1980 = vrot.slane %v1158, 5
      %v1981 = vor.u32 %v1979, %v1980
      %v1982 = vrot.slane %v1164, 4
      %v1983 = vrot.slane %v1167, 5
      %v1984 = vor.u32 %v1982, %v1983
      %v1985 = vsel %vm1978, %v1981, %v1984
      %v1986 = vrot.slane %v1173, 4
      %v1987 = vrot.slane %v1176, 5
      %v1988 = vor.u32 %v1986, %v1987
      %v1989 = vsel %vm1978, %v1984, %v1988
      %v1990 = vrot.slane %v1182, 4
      %v1991 = vrot.slane %v1185, 5
      %v1992 = vor.u32 %v1990, %v1991
      %v1993 = vsel %vm1978, %v1988, %v1992
      %v1994 = vrot.slane %v1191, 4
      %v1995 = vrot.slane %v1194, 5
      %v1996 = vor.u32 %v1994, %v1995
      %v1997 = vsel %vm1978, %v1992, %v1996
      %v1998 = vrot.slane %v1200, 4
      %v1999 = vrot.slane %v1203, 5
      %v2000 = vor.u32 %v1998, %v1999
      %v2001 = vsel %vm1978, %v1996, %v2000
      %v2002 = vrot.slane %v1209, 4
      %v2003 = vrot.slane %v1212, 5
      %v2004 = vor.u32 %v2002, %v2003
      %v2005 = vsel %vm1978, %v2000, %v2004
      %v2006 = vrot.slane %v1394, 4
      %v2007 = vrot.slane %v1397, 5
      %v2008 = vor.u32 %v2006, %v2007
      %v2009 = vsel %vm1978, %v2004, %v2008
      %v2010 = vrot.slane %v1403, 4
      %v2011 = vrot.slane %v1406, 5
      %v2012 = vor.u32 %v2010, %v2011
      %v2013 = vsel %vm1978, %v2008, %v2012
      %v2015 = vshrl.u32 %v1976, 16
      %v2017 = vrot.slane %v2015, 4
      %v2018 = vshll.u32 %v1976, 16
      %v2020 = vrot.slane %v2018, 5
      %v2021 = vor.u32 %v2017, %v2020
      %v2022 = vsel %vm1978, %v2012, %v2021
      %v2024 = vshrl.u32 %v1977, 16
      %v2026 = vrot.slane %v2024, 4
      %v2027 = vshll.u32 %v1977, 16
      %v2029 = vrot.slane %v2027, 5
      %v2030 = vor.u32 %v2026, %v2029
      %v2031 = vsel %vm1978, %v2021, %v2030
      %2032 = vrot.lane.b32.xlu0 %v1981, 4
      %v2033 = vpop.permute.xlu0 %2032
      %2034 = vrot.lane.b32.xlu0 %v1985, 4
      %v2035 = vpop.permute.xlu0 %2034
      %2036 = vrot.lane.b32.xlu0 %v1989, 4
      %v2037 = vpop.permute.xlu0 %2036
      %2038 = vrot.lane.b32.xlu0 %v1993, 4
      %v2039 = vpop.permute.xlu0 %2038
      %2040 = vrot.lane.b32.xlu0 %v1997, 4
      %v2041 = vpop.permute.xlu0 %2040
      %2042 = vrot.lane.b32.xlu0 %v2001, 4
      %v2043 = vpop.permute.xlu0 %2042
      %2044 = vrot.lane.b32.xlu0 %v2005, 4
      %v2045 = vpop.permute.xlu0 %2044
      %2046 = vrot.lane.b32.xlu0 %v2009, 4
      %v2047 = vpop.permute.xlu0 %2046
      %2048 = vrot.lane.b32.xlu0 %v2013, 4
      %v2049 = vpop.permute.xlu0 %2048
      %2050 = vrot.lane.b32.xlu0 %v2022, 4
      %v2051 = vpop.permute.xlu0 %2050
      %2052 = vrot.lane.b32.xlu0 %v2031, 4
      %v2053 = vpop.permute.xlu0 %2052
      %v2059 = vunpack.c.l.b16 %v684
      %v2060 = vunpack.c.l.b16 %v685
      %v2061 = vunpack.c.l.b16 %v686
      %v2062 = vunpack.c.l.b16 %v687
      %v2063 = vunpack.c.l.b16 %v688
      %v2064 = vpack.c.b16 %v731, %v2059
      %v2065 = vpack.c.b16 %v2061, %v2060
      %v2066 = vpack.c.b16 %v2063, %v2062
      %vm2067 = vsmask.f32 1280
      %v2069 = vshrl.u32 %v2064, 16
      %v2071 = vrot.slane %v2069, 6
      %v2072 = vshll.u32 %v2064, 16
      %v2074 = vrot.slane %v2072, 7
      %v2075 = vor.u32 %v2071, %v2074
      %v2076 = vrot.slane %v808, 6
      %v2077 = vrot.slane %v804, 7
      %v2078 = vor.u32 %v2076, %v2077
      %v2079 = vsel %vm2067, %v2075, %v2078
      %v2080 = vrot.slane %v816, 6
      %v2081 = vrot.slane %v812, 7
      %v2082 = vor.u32 %v2080, %v2081
      %v2083 = vsel %vm2067, %v2078, %v2082
      %v2084 = vrot.slane %v824, 6
      %v2085 = vrot.slane %v820, 7
      %v2086 = vor.u32 %v2084, %v2085
      %v2087 = vsel %vm2067, %v2082, %v2086
      %v2088 = vrot.slane %v832, 6
      %v2089 = vrot.slane %v828, 7
      %v2090 = vor.u32 %v2088, %v2089
      %v2091 = vsel %vm2067, %v2086, %v2090
      %v2092 = vrot.slane %v1011, 6
      %v2093 = vrot.slane %v1014, 7
      %v2094 = vor.u32 %v2092, %v2093
      %v2095 = vsel %vm2067, %v2090, %v2094
      %v2096 = vrot.slane %v1513, 6
      %v2097 = vrot.slane %v1509, 7
      %v2098 = vor.u32 %v2096, %v2097
      %v2099 = vsel %vm2067, %v2094, %v2098
      %v2100 = vrot.slane %v1521, 6
      %v2101 = vrot.slane %v1517, 7
      %v2102 = vor.u32 %v2100, %v2101
      %v2103 = vsel %vm2067, %v2098, %v2102
      %v2105 = vshrl.u32 %v1975, 16
      %v2107 = vrot.slane %v2105, 6
      %v2108 = vshll.u32 %v1975, 16
      %v2110 = vrot.slane %v2108, 7
      %v2111 = vor.u32 %v2107, %v2110
      %v2112 = vsel %vm2067, %v2102, %v2111
      %v2114 = vshrl.u32 %v2065, 16
      %v2116 = vrot.slane %v2114, 6
      %v2117 = vshll.u32 %v2065, 16
      %v2119 = vrot.slane %v2117, 7
      %v2120 = vor.u32 %v2116, %v2119
      %v2121 = vsel %vm2067, %v2111, %v2120
      %v2123 = vshrl.u32 %v2066, 16
      %v2125 = vrot.slane %v2123, 6
      %v2126 = vshll.u32 %v2066, 16
      %v2128 = vrot.slane %v2126, 7
      %v2129 = vor.u32 %v2125, %v2128
      %v2130 = vsel %vm2067, %v2120, %v2129
      %2131 = vrot.lane.b32.xlu0 %v2075, 8
      %v2132 = vpop.permute.xlu0 %2131
      %2133 = vrot.lane.b32.xlu0 %v2079, 8
      %v2134 = vpop.permute.xlu0 %2133
      %2135 = vrot.lane.b32.xlu0 %v2083, 8
      %v2136 = vpop.permute.xlu0 %2135
      %2137 = vrot.lane.b32.xlu0 %v2087, 8
      %v2138 = vpop.permute.xlu0 %2137
      %2139 = vrot.lane.b32.xlu0 %v2091, 8
      %v2140 = vpop.permute.xlu0 %2139
      %2141 = vrot.lane.b32.xlu0 %v2095, 8
      %v2142 = vpop.permute.xlu0 %2141
      %2143 = vrot.lane.b32.xlu0 %v2099, 8
      %v2144 = vpop.permute.xlu0 %2143
      %2145 = vrot.lane.b32.xlu0 %v2103, 8
      %v2146 = vpop.permute.xlu0 %2145
      %2147 = vrot.lane.b32.xlu0 %v2112, 8
      %v2148 = vpop.permute.xlu0 %2147
      %2149 = vrot.lane.b32.xlu0 %v2121, 8
      %v2150 = vpop.permute.xlu0 %2149
      %2151 = vrot.lane.b32.xlu0 %v2130, 8
      %v2152 = vpop.permute.xlu0 %2151
      %v2154 = vunpack.c.l.b16 %v689
      %v2155 = vpack.c.b16 %v2154, %v2062
      %v2156 = vrot.slane %v2064, 7
      %v2157 = vrot.slane %v747, 7
      %v2158 = vsel %vm461, %v2156, %v2157
      %v2159 = vrot.slane %v748, 7
      %v2160 = vsel %vm461, %v2157, %v2159
      %v2161 = vrot.slane %v749, 7
      %v2162 = vsel %vm461, %v2159, %v2161
      %v2163 = vrot.slane %v750, 7
      %v2164 = vsel %vm461, %v2161, %v2163
      %v2165 = vrot.slane %v964, 7
      %v2166 = vsel %vm461, %v2163, %v2165
      %v2167 = vrot.slane %v1477, 7
      %v2168 = vsel %vm461, %v2165, %v2167
      %v2169 = vrot.slane %v1478, 7
      %v2170 = vsel %vm461, %v2167, %v2169
      %v2171 = vrot.slane %v1975, 7
      %v2172 = vsel %vm461, %v2169, %v2171
      %v2173 = vrot.slane %v2065, 7
      %v2174 = vsel %vm461, %v2171, %v2173
      %v2175 = vrot.slane %v2155, 7
      %v2176 = vsel %vm461, %v2173, %v2175
      %2177 = vrot.lane.b32.xlu0 %v2156, 12
      %v2178 = vpop.permute.xlu0 %2177
      %2179 = vrot.lane.b32.xlu0 %v2158, 12
      %v2180 = vpop.permute.xlu0 %2179
      %2181 = vrot.lane.b32.xlu0 %v2160, 12
      %v2182 = vpop.permute.xlu0 %2181
      %2183 = vrot.lane.b32.xlu0 %v2162, 12
      %v2184 = vpop.permute.xlu0 %2183
      %2185 = vrot.lane.b32.xlu0 %v2164, 12
      %v2186 = vpop.permute.xlu0 %2185
      %2187 = vrot.lane.b32.xlu0 %v2166, 12
      %v2188 = vpop.permute.xlu0 %2187
      %2189 = vrot.lane.b32.xlu0 %v2168, 12
      %v2190 = vpop.permute.xlu0 %2189
      %2191 = vrot.lane.b32.xlu0 %v2170, 12
      %v2192 = vpop.permute.xlu0 %2191
      %2193 = vrot.lane.b32.xlu0 %v2172, 12
      %v2194 = vpop.permute.xlu0 %2193
      %2195 = vrot.lane.b32.xlu0 %v2174, 12
      %v2196 = vpop.permute.xlu0 %2195
      %2197 = vrot.lane.b32.xlu0 %v2176, 12
      %v2198 = vpop.permute.xlu0 %2197
      %v2200 = vunpack.c.l.b16 %v690
      %v2201 = vpack.c.b16 %v731, %v2200
      %vm2202 = vsmask.f32 256
      %v2204 = vshrl.u32 %v2201, 16
      %v2206 = vrot.slane %v2204, 7
      %v2207 = vshll.u32 %v2201, 16
      %v2209 = vor.u32 %v2206, %v2207
      %v2210 = vrot.slane %v808, 7
      %v2211 = vor.u32 %v2210, %v804
      %v2212 = vsel %vm2202, %v2206, %v2211
      %v2213 = vrot.slane %v816, 7
      %v2214 = vor.u32 %v2213, %v812
      %v2215 = vsel %vm2202, %v2210, %v2214
      %v2216 = vrot.slane %v824, 7
      %v2217 = vor.u32 %v2216, %v820
      %v2218 = vsel %vm2202, %v2213, %v2217
      %v2219 = vrot.slane %v832, 7
      %v2220 = vor.u32 %v2219, %v828
      %v2221 = vsel %vm2202, %v2216, %v2220
      %v2222 = vrot.slane %v1011, 7
      %v2223 = vor.u32 %v2222, %v1014
      %v2224 = vsel %vm2202, %v2219, %v2223
      %v2225 = vrot.slane %v1513, 7
      %v2226 = vor.u32 %v2225, %v1509
      %v2227 = vsel %vm2202, %v2222, %v2226
      %v2228 = vrot.slane %v1521, 7
      %v2229 = vor.u32 %v2228, %v1517
      %v2230 = vsel %vm2202, %v2225, %v2229
      %v2231 = vrot.slane %v2105, 7
      %v2232 = vor.u32 %v2231, %v2108
      %v2233 = vsel %vm2202, %v2228, %v2232
      %v2234 = vrot.slane %v2114, 7
      %v2235 = vor.u32 %v2234, %v2117
      %v2236 = vsel %vm2202, %v2231, %v2235
      %v2238 = vshrl.u32 %v2155, 16
      %v2240 = vrot.slane %v2238, 7
      %v2241 = vshll.u32 %v2155, 16
      %v2243 = vor.u32 %v2240, %v2241
      %v2244 = vsel %vm2202, %v2234, %v2243
      %2245 = vrot.lane.b32.xlu0 %v2209, 16
      %v2246 = vpop.permute.xlu0 %2245
      %2247 = vrot.lane.b32.xlu0 %v2212, 16
      %v2248 = vpop.permute.xlu0 %2247
      %2249 = vrot.lane.b32.xlu0 %v2215, 16
      %v2250 = vpop.permute.xlu0 %2249
      %2251 = vrot.lane.b32.xlu0 %v2218, 16
      %v2252 = vpop.permute.xlu0 %2251
      %2253 = vrot.lane.b32.xlu0 %v2221, 16
      %v2254 = vpop.permute.xlu0 %2253
      %2255 = vrot.lane.b32.xlu0 %v2224, 16
      %v2256 = vpop.permute.xlu0 %2255
      %2257 = vrot.lane.b32.xlu0 %v2227, 16
      %v2258 = vpop.permute.xlu0 %2257
      %2259 = vrot.lane.b32.xlu0 %v2230, 16
      %v2260 = vpop.permute.xlu0 %2259
      %2261 = vrot.lane.b32.xlu0 %v2233, 16
      %v2262 = vpop.permute.xlu0 %2261
      %2263 = vrot.lane.b32.xlu0 %v2236, 16
      %v2264 = vpop.permute.xlu0 %2263
      %2265 = vrot.lane.b32.xlu0 %v2244, 16
      %v2266 = vpop.permute.xlu0 %2265
      %v2270 = vunpack.c.l.b16 %v691
      %v2271 = vunpack.c.l.b16 %v692
      %v2272 = vunpack.c.l.b16 %v693
      %v2273 = vpack.c.b16 %v732, %v2270
      %v2274 = vpack.c.b16 %v2060, %v1974
      %v2275 = vpack.c.b16 %v2062, %v2061
      %v2276 = vpack.c.b16 %v2272, %v2271
      %vm2277 = vsmask.f32 2304
      %v2279 = vshrl.u32 %v2273, 16
      %v2281 = vrot.slane %v2279, 5
      %v2282 = vshll.u32 %v2273, 16
      %v2284 = vrot.slane %v2282, 6
      %v2285 = vor.u32 %v2281, %v2284
      %v2286 = vrot.slane %v1182, 5
      %v2287 = vrot.slane %v1185, 6
      %v2288 = vor.u32 %v2286, %v2287
      %v2289 = vsel %vm2277, %v2285, %v2288
      %v2290 = vrot.slane %v1191, 5
      %v2291 = vrot.slane %v1194, 6
      %v2292 = vor.u32 %v2290, %v2291
      %v2293 = vsel %vm2277, %v2288, %v2292
      %v2294 = vrot.slane %v1200, 5
      %v2295 = vrot.slane %v1203, 6
      %v2296 = vor.u32 %v2294, %v2295
      %v2297 = vsel %vm2277, %v2292, %v2296
      %v2298 = vrot.slane %v1209, 5
      %v2299 = vrot.slane %v1212, 6
      %v2300 = vor.u32 %v2298, %v2299
      %v2301 = vsel %vm2277, %v2296, %v2300
      %v2302 = vrot.slane %v1394, 5
      %v2303 = vrot.slane %v1397, 6
      %v2304 = vor.u32 %v2302, %v2303
      %v2305 = vsel %vm2277, %v2300, %v2304
      %v2306 = vrot.slane %v1403, 5
      %v2307 = vrot.slane %v1406, 6
      %v2308 = vor.u32 %v2306, %v2307
      %v2309 = vsel %vm2277, %v2304, %v2308
      %v2310 = vrot.slane %v2015, 5
      %v2311 = vrot.slane %v2018, 6
      %v2312 = vor.u32 %v2310, %v2311
      %v2313 = vsel %vm2277, %v2308, %v2312
      %v2315 = vshrl.u32 %v2274, 16
      %v2317 = vrot.slane %v2315, 5
      %v2318 = vshll.u32 %v2274, 16
      %v2320 = vrot.slane %v2318, 6
      %v2321 = vor.u32 %v2317, %v2320
      %v2322 = vsel %vm2277, %v2312, %v2321
      %v2324 = vshrl.u32 %v2275, 16
      %v2326 = vrot.slane %v2324, 5
      %v2327 = vshll.u32 %v2275, 16
      %v2329 = vrot.slane %v2327, 6
      %v2330 = vor.u32 %v2326, %v2329
      %v2331 = vsel %vm2277, %v2321, %v2330
      %v2333 = vshrl.u32 %v2276, 16
      %v2335 = vrot.slane %v2333, 5
      %v2336 = vshll.u32 %v2276, 16
      %v2338 = vrot.slane %v2336, 6
      %v2339 = vor.u32 %v2335, %v2338
      %v2340 = vsel %vm2277, %v2330, %v2339
      %2341 = vrot.lane.b32.xlu0 %v2285, 20
      %v2342 = vpop.permute.xlu0 %2341
      %2343 = vrot.lane.b32.xlu0 %v2289, 20
      %v2344 = vpop.permute.xlu0 %2343
      %2345 = vrot.lane.b32.xlu0 %v2293, 20
      %v2346 = vpop.permute.xlu0 %2345
      %2347 = vrot.lane.b32.xlu0 %v2297, 20
      %v2348 = vpop.permute.xlu0 %2347
      %2349 = vrot.lane.b32.xlu0 %v2301, 20
      %v2350 = vpop.permute.xlu0 %2349
      %2351 = vrot.lane.b32.xlu0 %v2305, 20
      %v2352 = vpop.permute.xlu0 %2351
      %2353 = vrot.lane.b32.xlu0 %v2309, 20
      %v2354 = vpop.permute.xlu0 %2353
      %2355 = vrot.lane.b32.xlu0 %v2313, 20
      %v2356 = vpop.permute.xlu0 %2355
      %2357 = vrot.lane.b32.xlu0 %v2322, 20
      %v2358 = vpop.permute.xlu0 %2357
      %2359 = vrot.lane.b32.xlu0 %v2331, 20
      %v2360 = vpop.permute.xlu0 %2359
      %2361 = vrot.lane.b32.xlu0 %v2340, 20
      %v2362 = vpop.permute.xlu0 %2361
      %v2364 = vunpack.c.l.b16 %v694
      %v2365 = vpack.c.b16 %v2364, %v2271
      %v2366 = vrot.slane %v2273, 6
      %v2367 = vrot.slane %v1047, 6
      %v2368 = vsel %vm507, %v2366, %v2367
      %v2369 = vrot.slane %v1048, 6
      %v2370 = vsel %vm507, %v2367, %v2369
      %v2371 = vrot.slane %v1049, 6
      %v2372 = vsel %vm507, %v2369, %v2371
      %v2373 = vrot.slane %v1050, 6
      %v2374 = vsel %vm507, %v2371, %v2373
      %v2375 = vrot.slane %v1307, 6
      %v2376 = vsel %vm507, %v2373, %v2375
      %v2377 = vrot.slane %v1308, 6
      %v2378 = vsel %vm507, %v2375, %v2377
      %v2379 = vrot.slane %v1976, 6
      %v2380 = vsel %vm507, %v2377, %v2379
      %v2381 = vrot.slane %v2274, 6
      %v2382 = vsel %vm507, %v2379, %v2381
      %v2383 = vrot.slane %v2275, 6
      %v2384 = vsel %vm507, %v2381, %v2383
      %v2385 = vrot.slane %v2365, 6
      %v2386 = vsel %vm507, %v2383, %v2385
      %2387 = vrot.lane.b32.xlu0 %v2366, 24
      %v2388 = vpop.permute.xlu0 %2387
      %2389 = vrot.lane.b32.xlu0 %v2368, 24
      %v2390 = vpop.permute.xlu0 %2389
      %2391 = vrot.lane.b32.xlu0 %v2370, 24
      %v2392 = vpop.permute.xlu0 %2391
      %2393 = vrot.lane.b32.xlu0 %v2372, 24
      %v2394 = vpop.permute.xlu0 %2393
      %2395 = vrot.lane.b32.xlu0 %v2374, 24
      %v2396 = vpop.permute.xlu0 %2395
      %2397 = vrot.lane.b32.xlu0 %v2376, 24
      %v2398 = vpop.permute.xlu0 %2397
      %2399 = vrot.lane.b32.xlu0 %v2378, 24
      %v2400 = vpop.permute.xlu0 %2399
      %2401 = vrot.lane.b32.xlu0 %v2380, 24
      %v2402 = vpop.permute.xlu0 %2401
      %2403 = vrot.lane.b32.xlu0 %v2382, 24
      %v2404 = vpop.permute.xlu0 %2403
      %2405 = vrot.lane.b32.xlu0 %v2384, 24
      %v2406 = vpop.permute.xlu0 %2405
      %2407 = vrot.lane.b32.xlu0 %v2386, 24
      %v2408 = vpop.permute.xlu0 %2407
      %v2410 = vunpack.c.l.b16 %v695
      %v2411 = vpack.c.b16 %v732, %v2410
      %v2413 = vshrl.u32 %v2411, 16
      %v2415 = vrot.slane %v2413, 6
      %v2416 = vshll.u32 %v2411, 16
      %v2418 = vrot.slane %v2416, 7
      %v2419 = vor.u32 %v2415, %v2418
      %v2420 = vrot.slane %v1182, 6
      %v2421 = vrot.slane %v1185, 7
      %v2422 = vor.u32 %v2420, %v2421
      %v2423 = vsel %vm2067, %v2419, %v2422
      %v2424 = vrot.slane %v1191, 6
      %v2425 = vrot.slane %v1194, 7
      %v2426 = vor.u32 %v2424, %v2425
      %v2427 = vsel %vm2067, %v2422, %v2426
      %v2428 = vrot.slane %v1200, 6
      %v2429 = vrot.slane %v1203, 7
      %v2430 = vor.u32 %v2428, %v2429
      %v2431 = vsel %vm2067, %v2426, %v2430
      %v2432 = vrot.slane %v1209, 6
      %v2433 = vrot.slane %v1212, 7
      %v2434 = vor.u32 %v2432, %v2433
      %v2435 = vsel %vm2067, %v2430, %v2434
      %v2436 = vrot.slane %v1394, 6
      %v2437 = vrot.slane %v1397, 7
      %v2438 = vor.u32 %v2436, %v2437
      %v2439 = vsel %vm2067, %v2434, %v2438
      %v2440 = vrot.slane %v1403, 6
      %v2441 = vrot.slane %v1406, 7
      %v2442 = vor.u32 %v2440, %v2441
      %v2443 = vsel %vm2067, %v2438, %v2442
      %v2444 = vrot.slane %v2015, 6
      %v2445 = vrot.slane %v2018, 7
      %v2446 = vor.u32 %v2444, %v2445
      %v2447 = vsel %vm2067, %v2442, %v2446
      %v2448 = vrot.slane %v2315, 6
      %v2449 = vrot.slane %v2318, 7
      %v2450 = vor.u32 %v2448, %v2449
      %v2451 = vsel %vm2067, %v2446, %v2450
      %v2452 = vrot.slane %v2324, 6
      %v2453 = vrot.slane %v2327, 7
      %v2454 = vor.u32 %v2452, %v2453
      %v2455 = vsel %vm2067, %v2450, %v2454
      %v2457 = vshrl.u32 %v2365, 16
      %v2459 = vrot.slane %v2457, 6
      %v2460 = vshll.u32 %v2365, 16
      %v2462 = vrot.slane %v2460, 7
      %v2463 = vor.u32 %v2459, %v2462
      %v2464 = vsel %vm2067, %v2454, %v2463
      %2465 = vrot.lane.b32.xlu0 %v2419, 28
      %v2466 = vpop.permute.xlu0 %2465
      %2467 = vrot.lane.b32.xlu0 %v2423, 28
      %v2468 = vpop.permute.xlu0 %2467
      %2469 = vrot.lane.b32.xlu0 %v2427, 28
      %v2470 = vpop.permute.xlu0 %2469
      %2471 = vrot.lane.b32.xlu0 %v2431, 28
      %v2472 = vpop.permute.xlu0 %2471
      %2473 = vrot.lane.b32.xlu0 %v2435, 28
      %v2474 = vpop.permute.xlu0 %2473
      %2475 = vrot.lane.b32.xlu0 %v2439, 28
      %v2476 = vpop.permute.xlu0 %2475
      %2477 = vrot.lane.b32.xlu0 %v2443, 28
      %v2478 = vpop.permute.xlu0 %2477
      %2479 = vrot.lane.b32.xlu0 %v2447, 28
      %v2480 = vpop.permute.xlu0 %2479
      %2481 = vrot.lane.b32.xlu0 %v2451, 28
      %v2482 = vpop.permute.xlu0 %2481
      %2483 = vrot.lane.b32.xlu0 %v2455, 28
      %v2484 = vpop.permute.xlu0 %2483
      %2485 = vrot.lane.b32.xlu0 %v2464, 28
      %v2486 = vpop.permute.xlu0 %2485
      %v2488 = vunpack.c.l.b16 %v696
      %v2489 = vpack.c.b16 %v2271, %v2062
      %v2490 = vpack.c.b16 %v2488, %v2488
      %v2491 = vrot.slane %v808, 4
      %v2492 = vrot.slane %v804, 5
      %v2493 = vor.u32 %v2491, %v2492
      %v2494 = vrot.slane %v816, 4
      %v2495 = vrot.slane %v812, 5
      %v2496 = vor.u32 %v2494, %v2495
      %v2497 = vsel %vm1978, %v2493, %v2496
      %v2498 = vrot.slane %v824, 4
      %v2499 = vrot.slane %v820, 5
      %v2500 = vor.u32 %v2498, %v2499
      %v2501 = vsel %vm1978, %v2496, %v2500
      %v2502 = vrot.slane %v832, 4
      %v2503 = vrot.slane %v828, 5
      %v2504 = vor.u32 %v2502, %v2503
      %v2505 = vsel %vm1978, %v2500, %v2504
      %v2506 = vrot.slane %v1011, 4
      %v2507 = vrot.slane %v1014, 5
      %v2508 = vor.u32 %v2506, %v2507
      %v2509 = vsel %vm1978, %v2504, %v2508
      %v2510 = vrot.slane %v1513, 4
      %v2511 = vrot.slane %v1509, 5
      %v2512 = vor.u32 %v2510, %v2511
      %v2513 = vsel %vm1978, %v2508, %v2512
      %v2514 = vrot.slane %v1521, 4
      %v2515 = vrot.slane %v1517, 5
      %v2516 = vor.u32 %v2514, %v2515
      %v2517 = vsel %vm1978, %v2512, %v2516
      %v2518 = vrot.slane %v2105, 4
      %v2519 = vrot.slane %v2108, 5
      %v2520 = vor.u32 %v2518, %v2519
      %v2521 = vsel %vm1978, %v2516, %v2520
      %v2522 = vrot.slane %v2114, 4
      %v2523 = vrot.slane %v2117, 5
      %v2524 = vor.u32 %v2522, %v2523
      %v2525 = vsel %vm1978, %v2520, %v2524
      %v2527 = vshrl.u32 %v2489, 16
      %v2529 = vrot.slane %v2527, 4
      %v2530 = vshll.u32 %v2489, 16
      %v2532 = vrot.slane %v2530, 5
      %v2533 = vor.u32 %v2529, %v2532
      %v2534 = vsel %vm1978, %v2524, %v2533
      %v2536 = vshrl.u32 %v2490, 16
      %v2538 = vrot.slane %v2536, 4
      %v2539 = vshll.u32 %v2490, 16
      %v2541 = vrot.slane %v2539, 5
      %v2542 = vor.u32 %v2538, %v2541
      %v2543 = vsel %vm1978, %v2533, %v2542
      %2544 = vrot.lane.b32.xlu0 %v2493, 32
      %v2545 = vpop.permute.xlu0 %2544
      %2546 = vrot.lane.b32.xlu0 %v2497, 32
      %v2547 = vpop.permute.xlu0 %2546
      %2548 = vrot.lane.b32.xlu0 %v2501, 32
      %v2549 = vpop.permute.xlu0 %2548
      %2550 = vrot.lane.b32.xlu0 %v2505, 32
      %v2551 = vpop.permute.xlu0 %2550
      %2552 = vrot.lane.b32.xlu0 %v2509, 32
      %v2553 = vpop.permute.xlu0 %2552
      %2554 = vrot.lane.b32.xlu0 %v2513, 32
      %v2555 = vpop.permute.xlu0 %2554
      %2556 = vrot.lane.b32.xlu0 %v2517, 32
      %v2557 = vpop.permute.xlu0 %2556
      %2558 = vrot.lane.b32.xlu0 %v2521, 32
      %v2559 = vpop.permute.xlu0 %2558
      %2560 = vrot.lane.b32.xlu0 %v2525, 32
      %v2561 = vpop.permute.xlu0 %2560
      %2562 = vrot.lane.b32.xlu0 %v2534, 32
      %v2563 = vpop.permute.xlu0 %2562
      %2564 = vrot.lane.b32.xlu0 %v2543, 32
      %v2565 = vpop.permute.xlu0 %2564
      %v2567 = vunpack.c.l.b16 %v697
      %v2568 = vpack.c.b16 %v2567, %v2488
      %v2569 = vrot.slane %v747, 5
      %v2570 = vrot.slane %v748, 5
      %v2571 = vsel %vm553, %v2569, %v2570
      %v2572 = vrot.slane %v749, 5
      %v2573 = vsel %vm553, %v2570, %v2572
      %v2574 = vrot.slane %v750, 5
      %v2575 = vsel %vm553, %v2572, %v2574
      %v2576 = vrot.slane %v964, 5
      %v2577 = vsel %vm553, %v2574, %v2576
      %v2578 = vrot.slane %v1477, 5
      %v2579 = vsel %vm553, %v2576, %v2578
      %v2580 = vrot.slane %v1478, 5
      %v2581 = vsel %vm553, %v2578, %v2580
      %v2582 = vrot.slane %v1975, 5
      %v2583 = vsel %vm553, %v2580, %v2582
      %v2584 = vrot.slane %v2065, 5
      %v2585 = vsel %vm553, %v2582, %v2584
      %v2586 = vrot.slane %v2489, 5
      %v2587 = vsel %vm553, %v2584, %v2586
      %v2588 = vrot.slane %v2568, 5
      %v2589 = vsel %vm553, %v2586, %v2588
      %2590 = vrot.lane.b32.xlu0 %v2569, 36
      %v2591 = vpop.permute.xlu0 %2590
      %2592 = vrot.lane.b32.xlu0 %v2571, 36
      %v2593 = vpop.permute.xlu0 %2592
      %2594 = vrot.lane.b32.xlu0 %v2573, 36
      %v2595 = vpop.permute.xlu0 %2594
      %2596 = vrot.lane.b32.xlu0 %v2575, 36
      %v2597 = vpop.permute.xlu0 %2596
      %2598 = vrot.lane.b32.xlu0 %v2577, 36
      %v2599 = vpop.permute.xlu0 %2598
      %2600 = vrot.lane.b32.xlu0 %v2579, 36
      %v2601 = vpop.permute.xlu0 %2600
      %2602 = vrot.lane.b32.xlu0 %v2581, 36
      %v2603 = vpop.permute.xlu0 %2602
      %2604 = vrot.lane.b32.xlu0 %v2583, 36
      %v2605 = vpop.permute.xlu0 %2604
      %2606 = vrot.lane.b32.xlu0 %v2585, 36
      %v2607 = vpop.permute.xlu0 %2606
      %2608 = vrot.lane.b32.xlu0 %v2587, 36
      %v2609 = vpop.permute.xlu0 %2608
      %2610 = vrot.lane.b32.xlu0 %v2589, 36
      %v2611 = vpop.permute.xlu0 %2610
      %v2613 = vunpack.c.l.b16 %v698
      %v2614 = vpack.c.b16 %v733, %v2613
      %v2616 = vshrl.u32 %v2614, 16
      %v2618 = vrot.slane %v2616, 5
      %v2619 = vshll.u32 %v2614, 16
      %v2621 = vrot.slane %v2619, 6
      %v2622 = vor.u32 %v2618, %v2621
      %v2623 = vrot.slane %v816, 5
      %v2624 = vrot.slane %v812, 6
      %v2625 = vor.u32 %v2623, %v2624
      %v2626 = vsel %vm2277, %v2622, %v2625
      %v2627 = vrot.slane %v824, 5
      %v2628 = vrot.slane %v820, 6
      %v2629 = vor.u32 %v2627, %v2628
      %v2630 = vsel %vm2277, %v2625, %v2629
      %v2631 = vrot.slane %v832, 5
      %v2632 = vrot.slane %v828, 6
      %v2633 = vor.u32 %v2631, %v2632
      %v2634 = vsel %vm2277, %v2629, %v2633
      %v2635 = vrot.slane %v1011, 5
      %v2636 = vrot.slane %v1014, 6
      %v2637 = vor.u32 %v2635, %v2636
      %v2638 = vsel %vm2277, %v2633, %v2637
      %v2639 = vrot.slane %v1513, 5
      %v2640 = vrot.slane %v1509, 6
      %v2641 = vor.u32 %v2639, %v2640
      %v2642 = vsel %vm2277, %v2637, %v2641
      %v2643 = vrot.slane %v1521, 5
      %v2644 = vrot.slane %v1517, 6
      %v2645 = vor.u32 %v2643, %v2644
      %v2646 = vsel %vm2277, %v2641, %v2645
      %v2647 = vrot.slane %v2105, 5
      %v2648 = vrot.slane %v2108, 6
      %v2649 = vor.u32 %v2647, %v2648
      %v2650 = vsel %vm2277, %v2645, %v2649
      %v2651 = vrot.slane %v2114, 5
      %v2652 = vrot.slane %v2117, 6
      %v2653 = vor.u32 %v2651, %v2652
      %v2654 = vsel %vm2277, %v2649, %v2653
      %v2655 = vrot.slane %v2527, 5
      %v2656 = vrot.slane %v2530, 6
      %v2657 = vor.u32 %v2655, %v2656
      %v2658 = vsel %vm2277, %v2653, %v2657
      %v2660 = vshrl.u32 %v2568, 16
      %v2662 = vrot.slane %v2660, 5
      %v2663 = vshll.u32 %v2568, 16
      %v2665 = vrot.slane %v2663, 6
      %v2666 = vor.u32 %v2662, %v2665
      %v2667 = vsel %vm2277, %v2657, %v2666
      %2668 = vrot.lane.b32.xlu0 %v2622, 40
      %v2669 = vpop.permute.xlu0 %2668
      %2670 = vrot.lane.b32.xlu0 %v2626, 40
      %v2671 = vpop.permute.xlu0 %2670
      %2672 = vrot.lane.b32.xlu0 %v2630, 40
      %v2673 = vpop.permute.xlu0 %2672
      %2674 = vrot.lane.b32.xlu0 %v2634, 40
      %v2675 = vpop.permute.xlu0 %2674
      %2676 = vrot.lane.b32.xlu0 %v2638, 40
      %v2677 = vpop.permute.xlu0 %2676
      %2678 = vrot.lane.b32.xlu0 %v2642, 40
      %v2679 = vpop.permute.xlu0 %2678
      %2680 = vrot.lane.b32.xlu0 %v2646, 40
      %v2681 = vpop.permute.xlu0 %2680
      %2682 = vrot.lane.b32.xlu0 %v2650, 40
      %v2683 = vpop.permute.xlu0 %2682
      %2684 = vrot.lane.b32.xlu0 %v2654, 40
      %v2685 = vpop.permute.xlu0 %2684
      %2686 = vrot.lane.b32.xlu0 %v2658, 40
      %v2687 = vpop.permute.xlu0 %2686
      %2688 = vrot.lane.b32.xlu0 %v2667, 40
      %v2689 = vpop.permute.xlu0 %2688
      %v2692 = vsel %vm1627, %v1593, %v2033
      %v2694 = vsel %vm1627, %v745, %v2035
      %v2696 = vsel %vm1627, %v746, %v2037
      %v2698 = vsel %vm1627, %v747, %v2039
      %v2700 = vsel %vm1627, %v748, %v2041
      %v2702 = vsel %vm1627, %v749, %v2043
      %v2704 = vsel %vm1627, %v750, %v2045
      %v2706 = vsel %vm1627, %v964, %v2047
      %v2708 = vsel %vm1627, %v1477, %v2049
      %v2710 = vsel %vm1627, %v1478, %v2051
      %v2712 = vsel %vm1627, %v1975, %v2053
      %v2714 = vsel %vm1651, %v2692, %v2132
      %v2716 = vsel %vm1651, %v2694, %v2134
      %v2718 = vsel %vm1651, %v2696, %v2136
      %v2720 = vsel %vm1651, %v2698, %v2138
      %v2722 = vsel %vm1651, %v2700, %v2140
      %v2724 = vsel %vm1651, %v2702, %v2142
      %v2726 = vsel %vm1651, %v2704, %v2144
      %v2728 = vsel %vm1651, %v2706, %v2146
      %v2730 = vsel %vm1651, %v2708, %v2148
      %v2732 = vsel %vm1651, %v2710, %v2150
      %v2734 = vsel %vm1651, %v2712, %v2152
      %v2736 = vsel %vm1674, %v2714, %v2178
      %v2738 = vsel %vm1674, %v2716, %v2180
      %v2740 = vsel %vm1674, %v2718, %v2182
      %v2742 = vsel %vm1674, %v2720, %v2184
      %v2744 = vsel %vm1674, %v2722, %v2186
      %v2746 = vsel %vm1674, %v2724, %v2188
      %v2748 = vsel %vm1674, %v2726, %v2190
      %v2750 = vsel %vm1674, %v2728, %v2192
      %v2752 = vsel %vm1674, %v2730, %v2194
      %v2754 = vsel %vm1674, %v2732, %v2196
      %v2756 = vsel %vm1674, %v2734, %v2198
      %v2758 = vsel %vm1697, %v2736, %v2246
      %v2760 = vsel %vm1697, %v2738, %v2248
      %v2762 = vsel %vm1697, %v2740, %v2250
      %v2764 = vsel %vm1697, %v2742, %v2252
      %v2766 = vsel %vm1697, %v2744, %v2254
      %v2768 = vsel %vm1697, %v2746, %v2256
      %v2770 = vsel %vm1697, %v2748, %v2258
      %v2772 = vsel %vm1697, %v2750, %v2260
      %v2774 = vsel %vm1697, %v2752, %v2262
      %v2776 = vsel %vm1697, %v2754, %v2264
      %v2778 = vsel %vm1697, %v2756, %v2266
      %v2780 = vsel %vm1720, %v2758, %v2342
      %v2782 = vsel %vm1720, %v2760, %v2344
      %v2784 = vsel %vm1720, %v2762, %v2346
      %v2786 = vsel %vm1720, %v2764, %v2348
      %v2788 = vsel %vm1720, %v2766, %v2350
      %v2790 = vsel %vm1720, %v2768, %v2352
      %v2792 = vsel %vm1720, %v2770, %v2354
      %v2794 = vsel %vm1720, %v2772, %v2356
      %v2796 = vsel %vm1720, %v2774, %v2358
      %v2798 = vsel %vm1720, %v2776, %v2360
      %v2800 = vsel %vm1720, %v2778, %v2362
      %v2802 = vsel %vm1743, %v2780, %v2388
      %v2804 = vsel %vm1743, %v2782, %v2390
      %v2806 = vsel %vm1743, %v2784, %v2392
      %v2808 = vsel %vm1743, %v2786, %v2394
      %v2810 = vsel %vm1743, %v2788, %v2396
      %v2812 = vsel %vm1743, %v2790, %v2398
      %v2814 = vsel %vm1743, %v2792, %v2400
      %v2816 = vsel %vm1743, %v2794, %v2402
      %v2818 = vsel %vm1743, %v2796, %v2404
      %v2820 = vsel %vm1743, %v2798, %v2406
      %v2822 = vsel %vm1743, %v2800, %v2408
      %v2824 = vsel %vm1766, %v2802, %v2466
      %v2826 = vsel %vm1766, %v2804, %v2468
      %v2828 = vsel %vm1766, %v2806, %v2470
      %v2830 = vsel %vm1766, %v2808, %v2472
      %v2832 = vsel %vm1766, %v2810, %v2474
      %v2834 = vsel %vm1766, %v2812, %v2476
      %v2836 = vsel %vm1766, %v2814, %v2478
      %v2838 = vsel %vm1766, %v2816, %v2480
      %v2840 = vsel %vm1766, %v2818, %v2482
      %v2842 = vsel %vm1766, %v2820, %v2484
      %v2844 = vsel %vm1766, %v2822, %v2486
      %v2846 = vsel %vm1789, %v2824, %v2545
      %v2848 = vsel %vm1789, %v2826, %v2547
      %v2850 = vsel %vm1789, %v2828, %v2549
      %v2852 = vsel %vm1789, %v2830, %v2551
      %v2854 = vsel %vm1789, %v2832, %v2553
      %v2856 = vsel %vm1789, %v2834, %v2555
      %v2858 = vsel %vm1789, %v2836, %v2557
      %v2860 = vsel %vm1789, %v2838, %v2559
      %v2862 = vsel %vm1789, %v2840, %v2561
      %v2864 = vsel %vm1789, %v2842, %v2563
      %v2866 = vsel %vm1789, %v2844, %v2565
      %v2868 = vsel %vm1812, %v2846, %v2591
      %v2870 = vsel %vm1812, %v2848, %v2593
      %v2872 = vsel %vm1812, %v2850, %v2595
      %v2874 = vsel %vm1812, %v2852, %v2597
      %v2876 = vsel %vm1812, %v2854, %v2599
      %v2878 = vsel %vm1812, %v2856, %v2601
      %v2880 = vsel %vm1812, %v2858, %v2603
      %v2882 = vsel %vm1812, %v2860, %v2605
      %v2884 = vsel %vm1812, %v2862, %v2607
      %v2886 = vsel %vm1812, %v2864, %v2609
      %v2888 = vsel %vm1812, %v2866, %v2611
      %v2890 = vsel %vm1835, %v2868, %v2669
      %v2892 = vsel %vm1835, %v2870, %v2671
      %v2894 = vsel %vm1835, %v2872, %v2673
      %v2896 = vsel %vm1835, %v2874, %v2675
      %v2898 = vsel %vm1835, %v2876, %v2677
      %v2900 = vsel %vm1835, %v2878, %v2679
      %v2902 = vsel %vm1835, %v2880, %v2681
      %v2904 = vsel %vm1835, %v2882, %v2683
      %v2906 = vsel %vm1835, %v2884, %v2685
      %v2908 = vsel %vm1835, %v2886, %v2687
      %v2910 = vsel %vm1835, %v2888, %v2689
      %v2911 = vshrl.u32 %v2890, 16
      %v2913 = vrot.slane %v2911, 3
      %v2914 = vshll.u32 %v2890, 16
      %v2916 = vrot.slane %v2914, 4
      %v2917 = vor.u32 %v2913, %v2916
      %v2918 = vshrl.u32 %v2892, 16
      %v2920 = vrot.slane %v2918, 3
      %v2921 = vshll.u32 %v2892, 16
      %v2923 = vrot.slane %v2921, 4
      %v2924 = vor.u32 %v2920, %v2923
      %v2925 = vsel %vm965, %v2917, %v2924
      %v2926 = vshrl.u32 %v2894, 16
      %v2928 = vrot.slane %v2926, 3
      %v2929 = vshll.u32 %v2894, 16
      %v2931 = vrot.slane %v2929, 4
      %v2932 = vor.u32 %v2928, %v2931
      %v2933 = vsel %vm965, %v2924, %v2932
      %v2934 = vshrl.u32 %v2896, 16
      %v2936 = vrot.slane %v2934, 3
      %v2937 = vshll.u32 %v2896, 16
      %v2939 = vrot.slane %v2937, 4
      %v2940 = vor.u32 %v2936, %v2939
      %v2941 = vsel %vm965, %v2932, %v2940
      %v2942 = vshrl.u32 %v2898, 16
      %v2944 = vrot.slane %v2942, 3
      %v2945 = vshll.u32 %v2898, 16
      %v2947 = vrot.slane %v2945, 4
      %v2948 = vor.u32 %v2944, %v2947
      %v2949 = vsel %vm965, %v2940, %v2948
      %v2950 = vshrl.u32 %v2900, 16
      %v2952 = vrot.slane %v2950, 3
      %v2953 = vshll.u32 %v2900, 16
      %v2955 = vrot.slane %v2953, 4
      %v2956 = vor.u32 %v2952, %v2955
      %v2957 = vsel %vm965, %v2948, %v2956
      %v2958 = vshrl.u32 %v2902, 16
      %v2960 = vrot.slane %v2958, 3
      %v2961 = vshll.u32 %v2902, 16
      %v2963 = vrot.slane %v2961, 4
      %v2964 = vor.u32 %v2960, %v2963
      %v2965 = vsel %vm965, %v2956, %v2964
      %v2966 = vshrl.u32 %v2904, 16
      %v2968 = vrot.slane %v2966, 3
      %v2969 = vshll.u32 %v2904, 16
      %v2971 = vrot.slane %v2969, 4
      %v2972 = vor.u32 %v2968, %v2971
      %v2973 = vsel %vm965, %v2964, %v2972
      %v2974 = vshrl.u32 %v2906, 16
      %v2976 = vrot.slane %v2974, 3
      %v2977 = vshll.u32 %v2906, 16
      %v2979 = vrot.slane %v2977, 4
      %v2980 = vor.u32 %v2976, %v2979
      %v2981 = vsel %vm965, %v2972, %v2980
      %v2982 = vshrl.u32 %v2908, 16
      %v2984 = vrot.slane %v2982, 3
      %v2985 = vshll.u32 %v2908, 16
      %v2987 = vrot.slane %v2985, 4
      %v2988 = vor.u32 %v2984, %v2987
      %v2989 = vsel %vm965, %v2980, %v2988
      %v2990 = vshrl.u32 %v2910, 16
      %v2992 = vrot.slane %v2990, 3
      %v2993 = vshll.u32 %v2910, 16
      %v2995 = vrot.slane %v2993, 4
      %v2996 = vor.u32 %v2992, %v2995
      %v2997 = vsel %vm965, %v2988, %v2996
      %2998 = vrot.lane.b32.xlu0 %v2925, 64
      %v2999 = vpop.permute.xlu0 %2998
      %3000 = vrot.lane.b32.xlu0 %v2933, 64
      %v3001 = vpop.permute.xlu0 %3000
      %3002 = vrot.lane.b32.xlu0 %v2941, 64
      %v3003 = vpop.permute.xlu0 %3002
      %3004 = vrot.lane.b32.xlu0 %v2949, 64
      %v3005 = vpop.permute.xlu0 %3004
      %3006 = vrot.lane.b32.xlu0 %v2957, 64
      %v3007 = vpop.permute.xlu0 %3006
      %3008 = vrot.lane.b32.xlu0 %v2965, 64
      %v3009 = vpop.permute.xlu0 %3008
      %3010 = vrot.lane.b32.xlu0 %v2973, 64
      %v3011 = vpop.permute.xlu0 %3010
      %3012 = vrot.lane.b32.xlu0 %v2981, 64
      %v3013 = vpop.permute.xlu0 %3012
      %3014 = vrot.lane.b32.xlu0 %v2989, 64
      %v3015 = vpop.permute.xlu0 %3014
      %3016 = vrot.lane.b32.xlu0 %v2997, 64
      %v3017 = vpop.permute.xlu0 %3016
      %3018 = vrot.lane.b32.xlu0 %v2996, 64
      %v3019 = vpop.permute.xlu0 %3018
      %vm3020 = vcmask 523264
      %v3022 = vsel %vm3020, %v1952, %v2999
      %v3024 = vsel %vm3020, %v1954, %v3001
      %v3026 = vsel %vm3020, %v1956, %v3003
      %v3028 = vsel %vm3020, %v1958, %v3005
      %v3030 = vsel %vm3020, %v1960, %v3007
      %v3032 = vsel %vm3020, %v1962, %v3009
      %v3034 = vsel %vm3020, %v1964, %v3011
      %v3036 = vsel %vm3020, %v1966, %v3013
      %v3038 = vsel %vm3020, %v1968, %v3015
      %v3040 = vsel %vm3020, %v1970, %v3017
      %v3042 = vsel %vm3020, %v1972, %v3019
      %v3043 = vld [vmem:[%s3] sm:$0xf]
      %v3044 = vld [vmem:[%s3 + $0x4] sm:$0xf]
      %v3045 = vld [vmem:[%s3 + $0x8] sm:$0xf]
      %v3046 = vld [vmem:[%s3 + $0xc] sm:$0xf]
      %v3047 = vld [vmem:[%s3 + $0x10] sm:$0xf]
      %v3048 = vld [vmem:[%s3 + $0x14] sm:$0xf]
      %v3049 = vld [vmem:[%s3 + $0x18] sm:$0xf]
      %v3050 = vld [vmem:[%s3 + $0x1c] sm:$0xf]
      %v3051 = vld [vmem:[%s3 + $0x20] sm:$0xf]
      %v3052 = vld [vmem:[%s3 + $0x24] sm:$0xf]
      %v3053 = vld [vmem:[%s3 + $0x28] sm:$0xf]
      %v3054 = vld [vmem:[%s3 + $0x2c] sm:$0xf]
      %v3055 = vld [vmem:[%s3 + $0x30] sm:$0xf]
      %v3056 = vld [vmem:[%s3 + $0x34] sm:$0x3]
      %v3071 = vunpack.c.l.b16 %v3043
      %v3072 = vunpack.c.l.b16 %v3044
      %v3073 = vunpack.c.l.b16 %v3045
      %v3074 = vunpack.c.l.b16 %v3046
      %v3075 = vunpack.c.l.b16 %v3047
      %v3076 = vunpack.c.l.b16 %v3048
      %v3077 = vunpack.c.l.b16 %v3049
      %v3078 = vunpack.c.l.b16 %v3050
      %v3079 = vunpack.c.l.b16 %v3051
      %v3080 = vunpack.c.l.b16 %v3052
      %v3081 = vunpack.c.l.b16 %v3053
      %v3082 = vunpack.c.l.b16 %v3054
      %v3083 = vunpack.c.l.b16 %v3055
      %v3084 = vunpack.c.l.b16 %v3056
      %v3085 = vpack.c.b16 %v3072, %v3071
      %v3086 = vpack.c.b16 %v3074, %v3073
      %v3087 = vpack.c.b16 %v3076, %v3075
      %v3088 = vpack.c.b16 %v3078, %v3077
      %v3089 = vpack.c.b16 %v3080, %v3079
      %v3090 = vpack.c.b16 %v3082, %v3081
      %v3091 = vpack.c.b16 %v3084, %v3083
      %vm3098 = vcmask 883712
      %v3099 = vsel %vm3098, %v3022, 0
      %v3101 = vsel %vm3098, %v3024, 0
      %v3103 = vsel %vm3098, %v3026, 0
      %v3105 = vsel %vm3098, %v3028, 0
      %v3107 = vsel %vm3098, %v3030, 0
      %v3109 = vsel %vm3098, %v3032, 0
      %v3111 = vsel %vm3098, %v3034, 0
      %v3113 = vsel %vm3098, %v3036, 0
      %v3115 = vsel %vm3098, %v3038, 0
      %v3117 = vsel %vm3098, %v3040, 0
      %v3119 = vsel %vm3098, %v3042, 0
      %vm3121 = vcmask 1045504
      %v3123 = vsel %vm3121, %v3091, 0
      %3125 = vmatprep.subr.bf16.mxu0 0
      %3126 = vmatpush1.bf16.msra.mxu0 0
      %3127 = vmatprep.subr.bf16.mxu0 0
      %3128 = vmatpush1.bf16.msra.mxu0 %v3123
      %3129 = vmatprep.subr.bf16.mxu0 0
      %3130 = vmatpush1.bf16.msra.mxu0 %v3090
      %3131 = vmatprep.subr.bf16.mxu0 0
      %3132 = vmatpush1.bf16.msra.mxu0 %v3089
      %3133 = vmatprep.subr.bf16.mxu0 0
      %3134 = vmatpush1.bf16.msra.mxu0 %v3088
      %3135 = vmatprep.subr.bf16.mxu0 0
      %3136 = vmatpush1.bf16.msra.mxu0 %v3087
      %3137 = vmatprep.subr.bf16.mxu0 0
      %3138 = vmatpush1.bf16.msra.mxu0 %v3086
      %3139 = vmatprep.subr.bf16.mxu0 0
      %3140 = vmatpush1.bf16.msra.mxu0 %v3085
      %3141 = vmatprep.subr.bf16.mxu0 0
      %3142 = vmatpush2.bf16.msra.mxu0 0
      %3143 = vmatprep.subr.bf16.mxu0 0
      %3144 = vmatpush2.bf16.msra.mxu0 0
      %3145 = vmatprep.subr.bf16.mxu0 0
      %3146 = vmatpush2.bf16.msra.mxu0 0
      %3147 = vmatprep.subr.bf16.mxu0 0
      %3148 = vmatpush2.bf16.msra.mxu0 0
      %3149 = vmatprep.subr.bf16.mxu0 0
      %3150 = vmatpush2.bf16.msra.mxu0 0
      %3151 = vmatprep.subr.bf16.mxu0 0
      %3152 = vmatpush2.bf16.msra.mxu0 0
      %3153 = vmatprep.subr.bf16.mxu0 0
      %3154 = vmatpush2.bf16.msra.mxu0 0
      %3155 = vmatprep.subr.bf16.mxu0 0
      %3156 = vmatpush2.bf16.msra.mxu0 0
      %3157 = vmatprep.mubr.bf16.mxu0 0
      %3158 = vmatmul.mubr.bf16.gmra.mxu0 %v3099
      %v3159 = vpop.f32.mrf.mxu0
      %v3160 = vadd.f32 0.0, %v3159
      %v3161 = vpop.f32.mrf.mxu0
      %v3162 = vpop.f32.mrf.mxu0
      %v3163 = vadd.f32 0.0, %v3162
      %v3164 = vpop.f32.mrf.mxu0
      %3165 = vmatprep.mubr.bf16.mxu0 0
      %3166 = vmatmul.mubr.bf16.gmra.mxu0 %v3101
      %v3167 = vpop.f32.mrf.mxu0
      %v3168 = vadd.f32 0.0, %v3167
      %v3169 = vpop.f32.mrf.mxu0
      %v3170 = vpop.f32.mrf.mxu0
      %v3171 = vadd.f32 0.0, %v3170
      %v3172 = vpop.f32.mrf.mxu0
      %3173 = vmatprep.mubr.bf16.mxu0 0
      %3174 = vmatmul.mubr.bf16.gmra.mxu0 %v3103
      %v3175 = vpop.f32.mrf.mxu0
      %v3176 = vadd.f32 0.0, %v3175
      %v3177 = vpop.f32.mrf.mxu0
      %v3178 = vpop.f32.mrf.mxu0
      %v3179 = vadd.f32 0.0, %v3178
      %v3180 = vpop.f32.mrf.mxu0
      %3181 = vmatprep.mubr.bf16.mxu0 0
      %3182 = vmatmul.mubr.bf16.gmra.mxu0 %v3105
      %v3183 = vpop.f32.mrf.mxu0
      %v3184 = vadd.f32 0.0, %v3183
      %v3185 = vpop.f32.mrf.mxu0
      %v3186 = vpop.f32.mrf.mxu0
      %v3187 = vadd.f32 0.0, %v3186
      %v3188 = vpop.f32.mrf.mxu0
      %3189 = vmatprep.mubr.bf16.mxu0 0
      %3190 = vmatmul.mubr.bf16.gmra.mxu0 %v3107
      %v3191 = vpop.f32.mrf.mxu0
      %v3192 = vadd.f32 0.0, %v3191
      %v3193 = vpop.f32.mrf.mxu0
      %v3194 = vpop.f32.mrf.mxu0
      %v3195 = vadd.f32 0.0, %v3194
      %v3196 = vpop.f32.mrf.mxu0
      %3197 = vmatprep.mubr.bf16.mxu0 0
      %3198 = vmatmul.mubr.bf16.gmra.mxu0 %v3109
      %v3199 = vpop.f32.mrf.mxu0
      %v3200 = vadd.f32 0.0, %v3199
      %v3201 = vpop.f32.mrf.mxu0
      %v3202 = vpop.f32.mrf.mxu0
      %v3203 = vadd.f32 0.0, %v3202
      %v3204 = vpop.f32.mrf.mxu0
      %3205 = vmatprep.mubr.bf16.mxu0 0
      %3206 = vmatmul.mubr.bf16.gmra.mxu0 %v3111
      %v3207 = vpop.f32.mrf.mxu0
      %v3208 = vadd.f32 0.0, %v3207
      %v3209 = vpop.f32.mrf.mxu0
      %v3210 = vpop.f32.mrf.mxu0
      %v3211 = vadd.f32 0.0, %v3210
      %v3212 = vpop.f32.mrf.mxu0
      %3213 = vmatprep.mubr.bf16.mxu0 0
      %3214 = vmatmul.mubr.bf16.gmra.mxu0 %v3113
      %v3215 = vpop.f32.mrf.mxu0
      %v3216 = vadd.f32 0.0, %v3215
      %v3217 = vpop.f32.mrf.mxu0
      %v3218 = vpop.f32.mrf.mxu0
      %v3219 = vadd.f32 0.0, %v3218
      %v3220 = vpop.f32.mrf.mxu0
      %3221 = vmatprep.mubr.bf16.mxu0 0
      %3222 = vmatmul.mubr.bf16.gmra.mxu0 %v3115
      %v3223 = vpop.f32.mrf.mxu0
      %v3224 = vadd.f32 0.0, %v3223
      %v3225 = vpop.f32.mrf.mxu0
      %v3226 = vpop.f32.mrf.mxu0
      %v3227 = vadd.f32 0.0, %v3226
      %v3228 = vpop.f32.mrf.mxu0
      %3229 = vmatprep.mubr.bf16.mxu0 0
      %3230 = vmatmul.mubr.bf16.gmra.mxu0 %v3117
      %v3231 = vpop.f32.mrf.mxu0
      %v3232 = vadd.f32 0.0, %v3231
      %v3233 = vpop.f32.mrf.mxu0
      %v3234 = vpop.f32.mrf.mxu0
      %v3235 = vadd.f32 0.0, %v3234
      %v3236 = vpop.f32.mrf.mxu0
      %3237 = vmatprep.mubr.bf16.mxu0 0
      %3238 = vmatmul.mubr.bf16.gmra.mxu0 %v3119
      %v3239 = vpop.f32.mrf.mxu0
      %v3240 = vadd.f32 0.0, %v3239
      %v3241 = vpop.f32.mrf.mxu0
      %v3242 = vpop.f32.mrf.mxu0
      %v3243 = vpop.f32.mrf.mxu0
      %3244 = vdwg.mxu0
      %v3245 = vpack.c.bf16 %v3163, %v3160
      %v3246 = vpack.c.bf16 %v3171, %v3168
      %v3247 = vpack.c.bf16 %v3179, %v3176
      %v3248 = vpack.c.bf16 %v3187, %v3184
      %v3249 = vpack.c.bf16 %v3195, %v3192
      %v3250 = vpack.c.bf16 %v3203, %v3200
      %v3251 = vpack.c.bf16 %v3211, %v3208
      %v3252 = vpack.c.bf16 %v3219, %v3216
      %v3253 = vpack.c.bf16 %v3227, %v3224
      %v3254 = vpack.c.bf16 %v3235, %v3232
      %v3255 = vpack.c.bf16 %v3240, %v3240
      %v3267 = vunpack.c.l.b16 %v3245
      %v3268 = vunpack.c.h.b16 %v3245
      %v3269 = vunpack.c.l.b16 %v3246
      %v3270 = vunpack.c.h.b16 %v3246
      %v3271 = vunpack.c.l.b16 %v3247
      %v3272 = vunpack.c.h.b16 %v3247
      %v3273 = vunpack.c.l.b16 %v3248
      %v3274 = vunpack.c.h.b16 %v3248
      %v3275 = vunpack.c.l.b16 %v3249
      %v3276 = vunpack.c.h.b16 %v3249
      %v3277 = vunpack.c.l.b16 %v3250
      %v3278 = vunpack.c.h.b16 %v3250
      %v3279 = vunpack.c.l.b16 %v3251
      %v3280 = vunpack.c.h.b16 %v3251
      %v3281 = vunpack.c.l.b16 %v3252
      %v3282 = vunpack.c.h.b16 %v3252
      %v3283 = vunpack.c.l.b16 %v3253
      %v3284 = vunpack.c.h.b16 %v3253
      %v3285 = vunpack.c.l.b16 %v3254
      %v3286 = vunpack.c.h.b16 %v3254
      %v3287 = vunpack.c.l.b16 %v3255
      %v3288 = vpack.c.b16 %v3267, %v3267
      %v3289 = vpack.c.b16 %v3268, %v3268
      %v3290 = vpack.c.b16 %v3269, %v3269
      %v3291 = vpack.c.b16 %v3270, %v3270
      %v3292 = vpack.c.b16 %v3271, %v3271
      %v3293 = vpack.c.b16 %v3272, %v3272
      %v3294 = vpack.c.b16 %v3273, %v3273
      %v3295 = vpack.c.b16 %v3274, %v3274
      %v3296 = vpack.c.b16 %v3275, %v3275
      %v3297 = vpack.c.b16 %v3276, %v3276
      %v3298 = vpack.c.b16 %v3277, %v3277
      %v3299 = vpack.c.b16 %v3278, %v3278
      %v3300 = vpack.c.b16 %v3279, %v3279
      %v3301 = vpack.c.b16 %v3280, %v3280
      %v3302 = vpack.c.b16 %v3281, %v3281
      %v3303 = vpack.c.b16 %v3282, %v3282
      %v3304 = vpack.c.b16 %v3283, %v3283
      %v3305 = vpack.c.b16 %v3284, %v3284
      %v3306 = vpack.c.b16 %v3285, %v3285
      %v3307 = vpack.c.b16 %v3286, %v3286
      %v3308 = vpack.c.b16 %v3287, %v3287
      %vm3330 = vcmask 60416
      %3331 = vst.msk [vmem:[%s425] sm:$0xf] %vm3330, %v3288
      %3332 = vst.msk [vmem:[%s425 + $0x4] sm:$0xf] %vm3330, %v3289
      %3333 = vst.msk [vmem:[%s425 + $0x8] sm:$0xf] %vm3330, %v3290
      %3334 = vst.msk [vmem:[%s425 + $0xc] sm:$0xf] %vm3330, %v3291
      %3335 = vst.msk [vmem:[%s425 + $0x10] sm:$0xf] %vm3330, %v3292
      %3336 = vst.msk [vmem:[%s425 + $0x14] sm:$0xf] %vm3330, %v3293
      %3337 = vst.msk [vmem:[%s425 + $0x18] sm:$0xf] %vm3330, %v3294
      %3338 = vst.msk [vmem:[%s425 + $0x1c] sm:$0xf] %vm3330, %v3295
      %3339 = vst.msk [vmem:[%s425 + $0x20] sm:$0xf] %vm3330, %v3296
      %3340 = vst.msk [vmem:[%s425 + $0x24] sm:$0xf] %vm3330, %v3297
      %3341 = vst.msk [vmem:[%s425 + $0x28] sm:$0xf] %vm3330, %v3298
      %3342 = vst.msk [vmem:[%s425 + $0x2c] sm:$0xf] %vm3330, %v3299
      %3343 = vst.msk [vmem:[%s425 + $0x30] sm:$0xf] %vm3330, %v3300
      %3344 = vst.msk [vmem:[%s425 + $0x34] sm:$0xf] %vm3330, %v3301
      %3345 = vst.msk [vmem:[%s425 + $0x38] sm:$0xf] %vm3330, %v3302
      %3346 = vst.msk [vmem:[%s425 + $0x3c] sm:$0xf] %vm3330, %v3303
      %3347 = vst.msk [vmem:[%s425 + $0x40] sm:$0xf] %vm3330, %v3304
      %3348 = vst.msk [vmem:[%s425 + $0x44] sm:$0xf] %vm3330, %v3305
      %3349 = vst.msk [vmem:[%s425 + $0x48] sm:$0xf] %vm3330, %v3306
      %3350 = vst.msk [vmem:[%s425 + $0x4c] sm:$0xf] %vm3330, %v3307
      %3351 = vst.msk [vmem:[%s425 + $0x50] sm:$0xf] %vm3330, %v3308
      %v3352 = vld [vmem:[%s4] sm:$0xff]
      %v3353 = vld [vmem:[%s4 + $0x8] sm:$0xff]
      %v3354 = vld [vmem:[%s4 + $0x10] sm:$0xff]
      %v3355 = vld [vmem:[%s4 + $0x18] sm:$0xff]
      %v3356 = vld [vmem:[%s4 + $0x20] sm:$0xff]
      %v3357 = vld [vmem:[%s4 + $0x28] sm:$0xff]
      %v3358 = vld [vmem:[%s4 + $0x30] sm:$0xff]
      %v3359 = vld [vmem:[%s4 + $0x38] sm:$0xff]
      %v3360 = vld [vmem:[%s4 + $0x40] sm:$0xff]
      %v3361 = vld [vmem:[%s4 + $0x48] sm:$0xff]
      %v3362 = vld [vmem:[%s4 + $0x50] sm:$0xff]
      %v3363 = vld [vmem:[%s4 + $0x58] sm:$0xff]
      %v3364 = vld [vmem:[%s4 + $0x60] sm:$0xff]
      %v3365 = vld [vmem:[%s4 + $0x68] sm:$0xff]
      %v3366 = vld [vmem:[%s4 + $0x70] sm:$0xff]
      %v3367 = vld [vmem:[%s4 + $0x78] sm:$0xff]
      %v3368 = vld [vmem:[%s4 + $0x80] sm:$0xff]
      %v3369 = vld [vmem:[%s4 + $0x88] sm:$0xff]
      %v3370 = vld [vmem:[%s4 + $0x90] sm:$0xff]
      %v3371 = vld [vmem:[%s4 + $0x98] sm:$0xff]
      %v3372 = vld [vmem:[%s4 + $0xa0] sm:$0xff]
      %3374 = vset.pattern.permute.xlu0 0
      %3375 = vperm.xlu0 %3374, %v3352
      %v3376 = vpop.permute.xlu0 %3375
      %3379 = vset.pattern.permute.xlu0 0
      %3380 = vperm.xlu0 %3379, %v3353
      %v3381 = vpop.permute.xlu0 %3380
      %3384 = vset.pattern.permute.xlu0 0
      %3385 = vperm.xlu0 %3384, %v3354
      %v3386 = vpop.permute.xlu0 %3385
      %3389 = vset.pattern.permute.xlu0 0
      %3390 = vperm.xlu0 %3389, %v3355
      %v3391 = vpop.permute.xlu0 %3390
      %3394 = vset.pattern.permute.xlu0 0
      %3395 = vperm.xlu0 %3394, %v3356
      %v3396 = vpop.permute.xlu0 %3395
      %3399 = vset.pattern.permute.xlu0 0
      %3400 = vperm.xlu0 %3399, %v3357
      %v3401 = vpop.permute.xlu0 %3400
      %3404 = vset.pattern.permute.xlu0 0
      %3405 = vperm.xlu0 %3404, %v3358
      %v3406 = vpop.permute.xlu0 %3405
      %3409 = vset.pattern.permute.xlu0 0
      %3410 = vperm.xlu0 %3409, %v3359
      %v3411 = vpop.permute.xlu0 %3410
      %3414 = vset.pattern.permute.xlu0 0
      %3415 = vperm.xlu0 %3414, %v3360
      %v3416 = vpop.permute.xlu0 %3415
      %3419 = vset.pattern.permute.xlu0 0
      %3420 = vperm.xlu0 %3419, %v3361
      %v3421 = vpop.permute.xlu0 %3420
      %3424 = vset.pattern.permute.xlu0 0
      %3425 = vperm.xlu0 %3424, %v3362
      %v3426 = vpop.permute.xlu0 %3425
      %3429 = vset.pattern.permute.xlu0 0
      %3430 = vperm.xlu0 %3429, %v3363
      %v3431 = vpop.permute.xlu0 %3430
      %3434 = vset.pattern.permute.xlu0 0
      %3435 = vperm.xlu0 %3434, %v3364
      %v3436 = vpop.permute.xlu0 %3435
      %3439 = vset.pattern.permute.xlu0 0
      %3440 = vperm.xlu0 %3439, %v3365
      %v3441 = vpop.permute.xlu0 %3440
      %3444 = vset.pattern.permute.xlu0 0
      %3445 = vperm.xlu0 %3444, %v3366
      %v3446 = vpop.permute.xlu0 %3445
      %3449 = vset.pattern.permute.xlu0 0
      %3450 = vperm.xlu0 %3449, %v3367
      %v3451 = vpop.permute.xlu0 %3450
      %3454 = vset.pattern.permute.xlu0 0
      %3455 = vperm.xlu0 %3454, %v3368
      %v3456 = vpop.permute.xlu0 %3455
      %3459 = vset.pattern.permute.xlu0 0
      %3460 = vperm.xlu0 %3459, %v3369
      %v3461 = vpop.permute.xlu0 %3460
      %3464 = vset.pattern.permute.xlu0 0
      %3465 = vperm.xlu0 %3464, %v3370
      %v3466 = vpop.permute.xlu0 %3465
      %3469 = vset.pattern.permute.xlu0 0
      %3470 = vperm.xlu0 %3469, %v3371
      %v3471 = vpop.permute.xlu0 %3470
      %3474 = vset.pattern.permute.xlu0 0
      %3475 = vperm.xlu0 %3474, %v3372
      %v3476 = vpop.permute.xlu0 %3475
      %v3478 = vmul.f32 %v3160, %v3376
      %v3479 = vmul.f32 %v3163, %v3381
      %v3480 = vmul.f32 %v3168, %v3386
      %v3481 = vmul.f32 %v3171, %v3391
      %v3482 = vmul.f32 %v3176, %v3396
      %v3483 = vmul.f32 %v3179, %v3401
      %v3484 = vmul.f32 %v3184, %v3406
      %v3485 = vmul.f32 %v3187, %v3411
      %v3486 = vmul.f32 %v3192, %v3416
      %v3487 = vmul.f32 %v3195, %v3421
      %v3488 = vmul.f32 %v3200, %v3426
      %v3489 = vmul.f32 %v3203, %v3431
      %v3490 = vmul.f32 %v3208, %v3436
      %v3491 = vmul.f32 %v3211, %v3441
      %v3492 = vmul.f32 %v3216, %v3446
      %v3493 = vmul.f32 %v3219, %v3451
      %v3494 = vmul.f32 %v3224, %v3456
      %v3495 = vmul.f32 %v3227, %v3461
      %v3496 = vmul.f32 %v3232, %v3466
      %v3497 = vmul.f32 %v3235, %v3471
      %v3498 = vmul.f32 %v3240, %v3476
      %v3499 = vsel %vm1651, %v3478, 0.0
      %v3500 = vsel %vm1651, %v3479, 0.0
      %v3501 = vadd.f32 %v3499, %v3500
      %v3502 = vsel %vm1651, %v3480, 0.0
      %v3503 = vadd.f32 %v3501, %v3502
      %v3504 = vsel %vm1651, %v3481, 0.0
      %v3505 = vadd.f32 %v3503, %v3504
      %v3506 = vsel %vm1651, %v3482, 0.0
      %v3507 = vadd.f32 %v3505, %v3506
      %v3508 = vsel %vm1651, %v3483, 0.0
      %v3509 = vadd.f32 %v3507, %v3508
      %v3510 = vsel %vm1651, %v3484, 0.0
      %v3511 = vadd.f32 %v3509, %v3510
      %v3512 = vsel %vm1651, %v3485, 0.0
      %v3513 = vadd.f32 %v3511, %v3512
      %v3514 = vsel %vm1651, %v3486, 0.0
      %v3515 = vadd.f32 %v3513, %v3514
      %v3516 = vsel %vm1651, %v3487, 0.0
      %v3517 = vadd.f32 %v3515, %v3516
      %v3518 = vsel %vm1651, %v3488, 0.0
      %v3519 = vadd.f32 %v3517, %v3518
      %v3520 = vsel %vm1651, %v3489, 0.0
      %v3521 = vadd.f32 %v3519, %v3520
      %v3522 = vsel %vm1651, %v3490, 0.0
      %v3523 = vadd.f32 %v3521, %v3522
      %v3524 = vsel %vm1651, %v3491, 0.0
      %v3525 = vadd.f32 %v3523, %v3524
      %v3526 = vsel %vm1651, %v3492, 0.0
      %v3527 = vadd.f32 %v3525, %v3526
      %v3528 = vsel %vm1651, %v3493, 0.0
      %v3529 = vadd.f32 %v3527, %v3528
      %v3530 = vsel %vm1651, %v3494, 0.0
      %v3531 = vadd.f32 %v3529, %v3530
      %v3532 = vsel %vm1651, %v3495, 0.0
      %v3533 = vadd.f32 %v3531, %v3532
      %v3534 = vsel %vm1651, %v3496, 0.0
      %v3535 = vadd.f32 %v3533, %v3534
      %v3536 = vsel %vm1651, %v3497, 0.0
      %v3537 = vadd.f32 %v3535, %v3536
      %v3538 = vsel %vm1651, %v3498, 0.0
      %v3539 = vadd.f32 %v3537, %v3538
      %v3540 = vrot.slane %v3539, 4
      %v3541 = vadd.f32 %v3539, %v3540
      %v3542 = vrot.slane %v3541, 2
      %v3543 = vadd.f32 %v3541, %v3542
      %v3544 = vrot.slane %v3543, 1
      %v3545 = vadd.f32 %v3543, %v3544
      %vm3546 = vcmask 57344
      %3547 = vst.msk [vmem:[%s432] sm:$0x1] %vm3546, %v3545
      %v3548 = vmul.f32 %v3478, %v3160
      %v3549 = vmul.f32 %v3479, %v3163
      %v3550 = vmul.f32 %v3480, %v3168
      %v3551 = vmul.f32 %v3481, %v3171
      %v3552 = vmul.f32 %v3482, %v3176
      %v3553 = vmul.f32 %v3483, %v3179
      %v3554 = vmul.f32 %v3484, %v3184
      %v3555 = vmul.f32 %v3485, %v3187
      %v3556 = vmul.f32 %v3486, %v3192
      %v3557 = vmul.f32 %v3487, %v3195
      %v3558 = vmul.f32 %v3488, %v3200
      %v3559 = vmul.f32 %v3489, %v3203
      %v3560 = vmul.f32 %v3490, %v3208
      %v3561 = vmul.f32 %v3491, %v3211
      %v3562 = vmul.f32 %v3492, %v3216
      %v3563 = vmul.f32 %v3493, %v3219
      %v3564 = vmul.f32 %v3494, %v3224
      %v3565 = vmul.f32 %v3495, %v3227
      %v3566 = vmul.f32 %v3496, %v3232
      %v3567 = vmul.f32 %v3497, %v3235
      %v3568 = vmul.f32 %v3498, %v3240
      %v3569 = vsel %vm1651, %v3548, 0.0
      %v3570 = vsel %vm1651, %v3549, 0.0
      %v3571 = vadd.f32 %v3569, %v3570
      %v3572 = vsel %vm1651, %v3550, 0.0
      %v3573 = vadd.f32 %v3571, %v3572
      %v3574 = vsel %vm1651, %v3551, 0.0
      %v3575 = vadd.f32 %v3573, %v3574
      %v3576 = vsel %vm1651, %v3552, 0.0
      %v3577 = vadd.f32 %v3575, %v3576
      %v3578 = vsel %vm1651, %v3553, 0.0
      %v3579 = vadd.f32 %v3577, %v3578
      %v3580 = vsel %vm1651, %v3554, 0.0
      %v3581 = vadd.f32 %v3579, %v3580
      %v3582 = vsel %vm1651, %v3555, 0.0
      %v3583 = vadd.f32 %v3581, %v3582
      %v3584 = vsel %vm1651, %v3556, 0.0
      %v3585 = vadd.f32 %v3583, %v3584
      %v3586 = vsel %vm1651, %v3557, 0.0
      %v3587 = vadd.f32 %v3585, %v3586
      %v3588 = vsel %vm1651, %v3558, 0.0
      %v3589 = vadd.f32 %v3587, %v3588
      %v3590 = vsel %vm1651, %v3559, 0.0
      %v3591 = vadd.f32 %v3589, %v3590
      %v3592 = vsel %vm1651, %v3560, 0.0
      %v3593 = vadd.f32 %v3591, %v3592
      %v3594 = vsel %vm1651, %v3561, 0.0
      %v3595 = vadd.f32 %v3593, %v3594
      %v3596 = vsel %vm1651, %v3562, 0.0
      %v3597 = vadd.f32 %v3595, %v3596
      %v3598 = vsel %vm1651, %v3563, 0.0
      %v3599 = vadd.f32 %v3597, %v3598
      %v3600 = vsel %vm1651, %v3564, 0.0
      %v3601 = vadd.f32 %v3599, %v3600
      %v3602 = vsel %vm1651, %v3565, 0.0
      %v3603 = vadd.f32 %v3601, %v3602
      %v3604 = vsel %vm1651, %v3566, 0.0
      %v3605 = vadd.f32 %v3603, %v3604
      %v3606 = vsel %vm1651, %v3567, 0.0
      %v3607 = vadd.f32 %v3605, %v3606
      %v3608 = vsel %vm1651, %v3568, 0.0
      %v3609 = vadd.f32 %v3607, %v3608
      %v3610 = vrot.slane %v3609, 4
      %v3611 = vadd.f32 %v3609, %v3610
      %v3612 = vrot.slane %v3611, 2
      %v3613 = vadd.f32 %v3611, %v3612
      %v3614 = vrot.slane %v3613, 1
      %v3615 = vadd.f32 %v3613, %v3614
      %3616 = vst.msk [vmem:[%s432 + $0x1] sm:$0x1] %vm3546, %v3615
      %p3617 = scmp.lt.s32.totalorder %s22, 1
      %s3618 = scalar_select %p3617, %s22, 1
      %p3619 = scmp.lt.s32.totalorder %s23, 0
      %s3620 = scalar_select %p3619, %s23, 0
      %s3621 = smul.addr %s3620, 21
      %s3622 = smul.addr %s3618, 21
      %s3623 = sadd.s32 %s3621, %s3622
      %s3624 = smul.addr %s3623, 4
      %s3625 = scalar_lea.vmem %s5, %s3624
      %p3626 = scmp.lt.s32.totalorder %s22, 1
      %s3627 = scalar_select %p3626, %s22, 1
      %p3628 = scmp.lt.s32.totalorder %s23, 0
      %s3629 = scalar_select %p3628, %s23, 0
      %s3630 = sadd.s32 %s3629, %s3627
      %s3631 = smul.addr %s3630, 2
      %s3632 = scalar_lea.vmem %s6, %s3631
      // Predicated region
      $region41: #{send_down.6} parent=39 // pred_check
        %p3633 = pneg %p184
      $region42: #{send_down.6} parent=39 // pred_check_branch
        %3635 = sbr.rel (%p3633) target = $region44
      $region43: #{send_down.6} parent=39 // pred_region
        _
      $region44: #{send_down.6} parent=39 // pred_fallthru
        _
      // Predicated region
      $region45: #{send_down.6} parent=39 // pred_check
        %p3636 = pneg %p212
      $region46: #{send_down.6} parent=39 // pred_check_branch
        %3638 = sbr.rel (%p3636) target = $region48
      $region47: #{send_down.6} parent=39 // pred_region
        _
      $region48: #{send_down.6} parent=39 // pred_fallthru
        _
    $region40: #{send_down.6} parent=5 // pred_fallthru
      _
    %p3639 = scmp.le.s32.totalorder 2, %s13
    // Predicated region
    $region49: #{send_down.6} parent=5 // pred_check
      %p3640 = pneg %p3639
    $region50: #{send_down.6} parent=5 // pred_check_branch
      %3642 = sbr.rel (%p3640) target = $region52
    $region51: #{send_down.6} parent=5 // pred_region
      %s3643 = ssub.s32 %s13, 2
      // Predicated region
      $region53: #{send_down.6} parent=51 // pred_check
        %p3644 = pneg %p190
      $region54: #{send_down.6} parent=51 // pred_check_branch
        %3646 = sbr.rel (%p3644) target = $region56
      $region55: #{send_down.6} parent=51 // pred_region
        %p3647 = scmp.lt.s32.totalorder %s24, 1
        %s3648 = scalar_select %p3647, %s24, 1
        %p3649 = scmp.lt.s32.totalorder %s25, 0
        %s3650 = scalar_select %p3649, %s25, 0
        %s3651 = smul.addr %s3650, 21
        %s3652 = smul.addr %s3648, 21
        %s3653 = sadd.s32 %s3651, %s3652
        %s3654 = smul.addr %s3653, 4
        %s3655 = scalar_lea.vmem %s5, %s3654
      $region56: #{send_down.6} parent=51 // pred_fallthru
        _
      // Predicated region
      $region57: #{send_down.6} parent=51 // pred_check
        %p3656 = pneg %p218
      $region58: #{send_down.6} parent=51 // pred_check_branch
        %3658 = sbr.rel (%p3656) target = $region60
      $region59: #{send_down.6} parent=51 // pred_region
        %p3659 = scmp.lt.s32.totalorder %s24, 1
        %s3660 = scalar_select %p3659, %s24, 1
        %p3661 = scmp.lt.s32.totalorder %s25, 0
        %s3662 = scalar_select %p3661, %s25, 0
        %s3663 = sadd.s32 %s3662, %s3660
        %s3664 = smul.addr %s3663, 2
        %s3665 = scalar_lea.vmem %s6, %s3664
      $region60: #{send_down.6} parent=51 // pred_fallthru
        _
    $region52: #{send_down.6} parent=5 // pred_fallthru
      _
  $region6: #{send_down.6} parent=0 // loop_footer
    %s17 = sadd.s32 1, %s13
  $region7: #{send_down.6} parent=0 // loop_footer_branch
    %12 = sbr.rel target = $region3
  $region8: #{send_down.6} parent=0 // loop_exit
    _

// kernel: send_down.8
$region0: #{send_down.8}
  #allocation0 [shape = 'u32[]', space=smem, size = 0x4, offset = 0x4, fixed_abs, tag = 'smem constant byte address 0x4 - core index']
  #allocation1 [shape = 'u32[144,128]{1,0:T(1,128)}', space=vmem, size = 0x12000, scoped, tag = 'internal scratch']
  #allocation2 [shape = 'bf16[266,8]{1,0:T(8,128)(2,1)}', space=vmem, size = 0x11000, scoped, tag = 'scratch operand']
  %s0 = inlined_call_operand.vmem [shape: bf16[2,6,42,8], index: 0, kind: input, shape index: {}, may-alias: {0,1,2}]
  %s1 = inlined_call_operand.vmem [shape: bf16[2,6,42,8], index: 1, kind: input, shape index: {}, may-alias: {0,1,2}]
  %s2 = inlined_call_operand.vmem [shape: bf16[2,6,42,8], index: 2, kind: input, shape index: {}, may-alias: {0,1,2}]
  %s3 = inlined_call_operand.vmem [shape: bf16[216,8], index: 3, kind: input, shape index: {}]
  %s4 = inlined_call_operand.vmem [shape: f32[168,1], index: 4, kind: input, shape index: {}]
  %s5 = inlined_call_operand.vmem [shape: bf16[2,1,168,8], index: 5, kind: output, shape index: {0}]
  %s6 = inlined_call_operand.vmem [shape: f32[2,1,2,8], index: 6, kind: output, shape index: {1}]
  %7 = xla_tuple %s5, %s6
  %s8 = sld [smem:[#allocation0]]
  $region61: #{send_down.8} parent=0
    _
  %s10 = ssub.s32 1, %s8
  %s11 = scalar_select 0, %s10, %s8
  loop: start=0, step=1, limit=4
  $region2: #{send_down.8} parent=0 // loop_pre_header
    _
  $region3: #{send_down.8} parent=0 // loop_header
    %s13 = sphi 0, %s17
    %p14 = scmp.ge.s32.totalorder %s13, 4
    %s20 = sphi 0, %s32
    %s21 = sphi 0, %s28
    %s22 = sphi 0, %s20
    %s23 = sphi 0, %s21
    %s24 = sphi 0, %s22
    %s25 = sphi 0, %s23
    %s37 = sphi 0, %s39
    %s40 = sphi 0, %s37
    %s41 = sphi 0, %s40
    %s57 = sphi 0, %s41
    %s69 = sphi 0, %s71
    %s72 = sphi 0, %s69
    %s73 = sphi 0, %s72
    %s89 = sphi 0, %s73
    %s101 = sphi 0, %s103
    %s104 = sphi 0, %s101
    %s105 = sphi 0, %s104
    %s121 = sphi 0, %s105
    %s125 = sphi 0, %s125
    %s127 = sphi 0, %s125
    %s128 = sphi 0, %s127
    %s142 = sphi 0, %s128
    %s146 = sphi 0, %s146
    %s148 = sphi 0, %s146
    %s149 = sphi 0, %s148
    %s163 = sphi 0, %s149
    %s171 = sphi 0, %s173
    %s174 = sphi 0, %s171
    %s175 = sphi 0, %s174
    %s191 = sphi 0, %s175
    %s199 = sphi 0, %s201
    %s202 = sphi 0, %s199
    %s203 = sphi 0, %s202
    %s219 = sphi 0, %s203
  $region4: #{send_down.8} parent=0 // loop_header_branch
    %16 = sbr.rel (%p14) target = $region8
  $region5: #{send_down.8} parent=0 // loop_body
    %s18 = ssub.s32 %s13, 1
    %s19 = ssub.s32 %s13, 2
    %s26 = sadd.s32 1, %s21
    %p27 = scmp.ge.s32.totalorder %s26, 1
    %s28 = scalar_select %p27, 0, %s26
    %s29 = sadd.s32 1, %s20
    %s30 = scalar_select %p27, %s29, %s20
    %p31 = scmp.ge.s32.totalorder %s30, 2
    %s32 = scalar_select %p31, 0, %s30
    %s33 = ssub.s32 %s20, %s32
    %s34 = ssub.s32 %s21, %s28
    %s35 = sor.u32 %s33, %s34
    %p36 = scmp.eq.s32.totalorder %s35, 0
    %s38 = sadd.s32 %s37, 1
    %s39 = scalar_select %p36, %s37, %s38
    %p42 = pneg %p36
    %p43 = scmp.eq.s32.totalorder %s13, 1
    %p44 = por %p42, %p43
    %p45 = scmp.ne.s32.totalorder %s37, %s40
    %p46 = scmp.eq.s32.totalorder %s13, 0
    %p47 = por %p45, %p46
    %p48 = scmp.ne.s32.totalorder %s37, %s40
    %p49 = scmp.eq.s32.totalorder %s18, 1
    %p50 = por %p48, %p49
    %p51 = scmp.ne.s32.totalorder %s40, %s41
    %p52 = scmp.eq.s32.totalorder %s18, 0
    %p53 = por %p51, %p52
    %p54 = scmp.ne.s32.totalorder %s40, %s41
    %p55 = scmp.eq.s32.totalorder %s19, 1
    %p56 = por %p54, %p55
    %p58 = scmp.ne.s32.totalorder %s41, %s57
    %p59 = scmp.eq.s32.totalorder %s19, 0
    %p60 = por %p58, %p59
    %s61 = smul.u32 %s21, 4
    %s62 = sadd.s32 %s61, 4
    %s63 = smul.u32 %s28, 4
    %s64 = sadd.s32 %s63, 4
    %s65 = ssub.s32 %s20, %s32
    %s66 = ssub.s32 %s62, %s64
    %s67 = sor.u32 %s65, %s66
    %p68 = scmp.eq.s32.totalorder %s67, 0
    %s70 = sadd.s32 %s69, 1
    %s71 = scalar_select %p68, %s69, %s70
    %p74 = pneg %p68
    %p75 = scmp.eq.s32.totalorder %s13, 1
    %p76 = por %p74, %p75
    %p77 = scmp.ne.s32.totalorder %s69, %s72
    %p78 = scmp.eq.s32.totalorder %s13, 0
    %p79 = por %p77, %p78
    %p80 = scmp.ne.s32.totalorder %s69, %s72
    %p81 = scmp.eq.s32.totalorder %s18, 1
    %p82 = por %p80, %p81
    %p83 = scmp.ne.s32.totalorder %s72, %s73
    %p84 = scmp.eq.s32.totalorder %s18, 0
    %p85 = por %p83, %p84
    %p86 = scmp.ne.s32.totalorder %s72, %s73
    %p87 = scmp.eq.s32.totalorder %s19, 1
    %p88 = por %p86, %p87
    %p90 = scmp.ne.s32.totalorder %s73, %s89
    %p91 = scmp.eq.s32.totalorder %s19, 0
    %p92 = por %p90, %p91
    %s93 = smul.u32 %s21, 4
    %s94 = sadd.s32 %s93, 5
    %s95 = smul.u32 %s28, 4
    %s96 = sadd.s32 %s95, 5
    %s97 = ssub.s32 %s20, %s32
    %s98 = ssub.s32 %s94, %s96
    %s99 = sor.u32 %s97, %s98
    %p100 = scmp.eq.s32.totalorder %s99, 0
    %s102 = sadd.s32 %s101, 1
    %s103 = scalar_select %p100, %s101, %s102
    %p106 = pneg %p100
    %p107 = scmp.eq.s32.totalorder %s13, 1
    %p108 = por %p106, %p107
    %p109 = scmp.ne.s32.totalorder %s101, %s104
    %p110 = scmp.eq.s32.totalorder %s13, 0
    %p111 = por %p109, %p110
    %p112 = scmp.ne.s32.totalorder %s101, %s104
    %p113 = scmp.eq.s32.totalorder %s18, 1
    %p114 = por %p112, %p113
    %p115 = scmp.ne.s32.totalorder %s104, %s105
    %p116 = scmp.eq.s32.totalorder %s18, 0
    %p117 = por %p115, %p116
    %p118 = scmp.ne.s32.totalorder %s104, %s105
    %p119 = scmp.eq.s32.totalorder %s19, 1
    %p120 = por %p118, %p119
    %p122 = scmp.ne.s32.totalorder %s105, %s121
    %p123 = scmp.eq.s32.totalorder %s19, 0
    %p124 = por %p122, %p123
    %s126 = sadd.s32 %s125, 1
    %p129 = scmp.eq.s32.totalorder %s13, 1
    %p130 = scmp.ne.s32.totalorder %s125, %s127
    %p131 = scmp.eq.s32.totalorder %s13, 0
    %p132 = por %p130, %p131
    %p133 = scmp.ne.s32.totalorder %s125, %s127
    %p134 = scmp.eq.s32.totalorder %s18, 1
    %p135 = por %p133, %p134
    %p136 = scmp.ne.s32.totalorder %s127, %s128
    %p137 = scmp.eq.s32.totalorder %s18, 0
    %p138 = por %p136, %p137
    %p139 = scmp.ne.s32.totalorder %s127, %s128
    %p140 = scmp.eq.s32.totalorder %s19, 1
    %p141 = por %p139, %p140
    %p143 = scmp.ne.s32.totalorder %s128, %s142
    %p144 = scmp.eq.s32.totalorder %s19, 0
    %p145 = por %p143, %p144
    %s147 = sadd.s32 %s146, 1
    %p150 = scmp.eq.s32.totalorder %s13, 1
    %p151 = scmp.ne.s32.totalorder %s146, %s148
    %p152 = scmp.eq.s32.totalorder %s13, 0
    %p153 = por %p151, %p152
    %p154 = scmp.ne.s32.totalorder %s146, %s148
    %p155 = scmp.eq.s32.totalorder %s18, 1
    %p156 = por %p154, %p155
    %p157 = scmp.ne.s32.totalorder %s148, %s149
    %p158 = scmp.eq.s32.totalorder %s18, 0
    %p159 = por %p157, %p158
    %p160 = scmp.ne.s32.totalorder %s148, %s149
    %p161 = scmp.eq.s32.totalorder %s19, 1
    %p162 = por %p160, %p161
    %p164 = scmp.ne.s32.totalorder %s149, %s163
    %p165 = scmp.eq.s32.totalorder %s19, 0
    %p166 = por %p164, %p165
    %s167 = ssub.s32 %s20, %s32
    %s168 = ssub.s32 %s21, %s28
    %s169 = sor.u32 %s167, %s168
    %p170 = scmp.eq.s32.totalorder %s169, 0
    %s172 = sadd.s32 %s171, 1
    %s173 = scalar_select %p170, %s171, %s172
    %p176 = pneg %p170
    %p177 = scmp.eq.s32.totalorder %s13, 1
    %p178 = por %p176, %p177
    %p179 = scmp.ne.s32.totalorder %s171, %s174
    %p180 = scmp.eq.s32.totalorder %s13, 0
    %p181 = por %p179, %p180
    %p182 = scmp.ne.s32.totalorder %s171, %s174
    %p183 = scmp.eq.s32.totalorder %s18, 1
    %p184 = por %p182, %p183
    %p185 = scmp.ne.s32.totalorder %s174, %s175
    %p186 = scmp.eq.s32.totalorder %s18, 0
    %p187 = por %p185, %p186
    %p188 = scmp.ne.s32.totalorder %s174, %s175
    %p189 = scmp.eq.s32.totalorder %s19, 1
    %p190 = por %p188, %p189
    %p192 = scmp.ne.s32.totalorder %s175, %s191
    %p193 = scmp.eq.s32.totalorder %s19, 0
    %p194 = por %p192, %p193
    %s195 = ssub.s32 %s20, %s32
    %s196 = ssub.s32 %s21, %s28
    %s197 = sor.u32 %s195, %s196
    %p198 = scmp.eq.s32.totalorder %s197, 0
    %s200 = sadd.s32 %s199, 1
    %s201 = scalar_select %p198, %s199, %s200
    %p204 = pneg %p198
    %p205 = scmp.eq.s32.totalorder %s13, 1
    %p206 = por %p204, %p205
    %p207 = scmp.ne.s32.totalorder %s199, %s202
    %p208 = scmp.eq.s32.totalorder %s13, 0
    %p209 = por %p207, %p208
    %p210 = scmp.ne.s32.totalorder %s199, %s202
    %p211 = scmp.eq.s32.totalorder %s18, 1
    %p212 = por %p210, %p211
    %p213 = scmp.ne.s32.totalorder %s202, %s203
    %p214 = scmp.eq.s32.totalorder %s18, 0
    %p215 = por %p213, %p214
    %p216 = scmp.ne.s32.totalorder %s202, %s203
    %p217 = scmp.eq.s32.totalorder %s19, 1
    %p218 = por %p216, %p217
    %p220 = scmp.ne.s32.totalorder %s203, %s219
    %p221 = scmp.eq.s32.totalorder %s19, 0
    %p222 = por %p220, %p221
    %p223 = scmp.le.s32.totalorder 1, %s13
    %p224 = scmp.lt.s32.totalorder %s13, 3
    %p225 = pnand %p223, %p224
    %p226 = pneg %p225
    // Predicated region
    $region9: #{send_down.8} parent=5 // pred_check
      _
    $region10: #{send_down.8} parent=5 // pred_check_branch
      %228 = sbr.rel (%p225) target = $region12
    $region11: #{send_down.8} parent=5 // pred_region
      %s229 = ssub.s32 %s13, 1
      // Predicated region
      $region13: #{send_down.8} parent=11 // pred_check
        %p230 = pneg %p138
      $region14: #{send_down.8} parent=11 // pred_check_branch
        %232 = sbr.rel (%p230) target = $region16
      $region15: #{send_down.8} parent=11 // pred_region
        _
      $region16: #{send_down.8} parent=11 // pred_fallthru
        _
      // Predicated region
      $region17: #{send_down.8} parent=11 // pred_check
        %p233 = pneg %p159
      $region18: #{send_down.8} parent=11 // pred_check_branch
        %235 = sbr.rel (%p233) target = $region20
      $region19: #{send_down.8} parent=11 // pred_region
        _
      $region20: #{send_down.8} parent=11 // pred_fallthru
        _
    $region12: #{send_down.8} parent=5 // pred_fallthru
      _
    %p236 = scmp.lt.s32.totalorder %s13, 2
    // Predicated region
    $region21: #{send_down.8} parent=5 // pred_check
      %p237 = pneg %p236
    $region22: #{send_down.8} parent=5 // pred_check_branch
      %239 = sbr.rel (%p237) target = $region24
    $region23: #{send_down.8} parent=5 // pred_region
      // Predicated region
      $region25: #{send_down.8} parent=23 // pred_check
        %p240 = pneg %p47
      $region26: #{send_down.8} parent=23 // pred_check_branch
        %242 = sbr.rel (%p240) target = $region28
      $region27: #{send_down.8} parent=23 // pred_region
        %s243 = smul.u32 4, %s21
        %s244 = ssub.s32 6, %s243
        %p245 = scmp.lt.s32.totalorder %s244, 4
        %s246 = scalar_select %p245, %s244, 4
        %s247 = smul.u32 64, %s246
        %s248 = smul.u32 %s247, 6
        %p249 = scmp.lt.s32.totalorder %s20, 1
        %s250 = scalar_select %p249, %s20, 1
        %p251 = scmp.lt.s32.totalorder %s243, 5
        %s252 = scalar_select %p251, %s243, 5
        %s253 = smul.addr %s252, 6
        %s254 = smul.addr %s250, 36
        %s255 = sadd.s32 %s253, %s254
        %s256 = smul.addr %s255, 4
        %s257 = scalar_lea.vmem %s0, %s256
        %s258 = smul.u32 4, %s21
        %s259 = ssub.s32 6, %s258
        %p260 = scmp.lt.s32.totalorder %s259, 4
        %s261 = scalar_select %p260, %s259, 4
        %s262 = smul.u32 64, %s261
        %s263 = smul.u32 %s262, 6
      $region28: #{send_down.8} parent=23 // pred_fallthru
        _
      // Predicated region
      $region29: #{send_down.8} parent=23 // pred_check
        %p264 = pneg %p79
      $region30: #{send_down.8} parent=23 // pred_check_branch
        %266 = sbr.rel (%p264) target = $region32
      $region31: #{send_down.8} parent=23 // pred_region
        %s267 = smul.u32 %s21, 4
        %s268 = sadd.s32 %s267, 4
        %p269 = scmp.lt.s32.totalorder %s20, 1
        %s270 = scalar_select %p269, %s20, 1
        %p271 = scmp.lt.s32.totalorder %s268, 5
        %s272 = scalar_select %p271, %s268, 5
        %s273 = smul.addr %s272, 6
        %s274 = smul.addr %s270, 36
        %s275 = sadd.s32 %s273, %s274
        %s276 = smul.addr %s275, 4
        %s277 = scalar_lea.vmem %s1, %s276
        %s278 = smul.u32 %s21, 4
        %s279 = sadd.s32 %s278, 4
      $region32: #{send_down.8} parent=23 // pred_fallthru
        _
      // Predicated region
      $region33: #{send_down.8} parent=23 // pred_check
        %p280 = pneg %p111
      $region34: #{send_down.8} parent=23 // pred_check_branch
        %282 = sbr.rel (%p280) target = $region36
      $region35: #{send_down.8} parent=23 // pred_region
        %s283 = smul.u32 %s21, 4
        %s284 = sadd.s32 %s283, 5
        %p285 = scmp.lt.s32.totalorder %s20, 1
        %s286 = scalar_select %p285, %s20, 1
        %p287 = scmp.lt.s32.totalorder %s284, 5
        %s288 = scalar_select %p287, %s284, 5
        %s289 = smul.addr %s288, 6
        %s290 = smul.addr %s286, 36
        %s291 = sadd.s32 %s289, %s290
        %s292 = smul.addr %s291, 4
        %s293 = scalar_lea.vmem %s2, %s292
        %s294 = smul.u32 %s21, 4
        %s295 = sadd.s32 %s294, 5
      $region36: #{send_down.8} parent=23 // pred_fallthru
        _
    $region24: #{send_down.8} parent=5 // pred_fallthru
      _
    %p296 = scmp.le.s32.totalorder 1, %s13
    %p297 = scmp.lt.s32.totalorder %s13, 3
    %p298 = pnand %p296, %p297
    %p299 = pneg %p298
    // Predicated region
    $region37: #{send_down.8} parent=5 // pred_check
      _
    $region38: #{send_down.8} parent=5 // pred_check_branch
      %301 = sbr.rel (%p298) target = $region40
    $region39: #{send_down.8} parent=5 // pred_region
      %s302 = ssub.s32 %s13, 1
      %s303 = smul.u32 4, %s23
      %s304 = ssub.s32 6, %s303
      %p305 = scmp.lt.s32.totalorder %s304, 4
      %s306 = scalar_select %p305, %s304, 4
      %s307 = smul.u32 64, %s306
      %s308 = smul.u32 %s307, 6
      %p309 = scmp.lt.s32.totalorder %s22, 1
      %s310 = scalar_select %p309, %s22, 1
      %p311 = scmp.lt.s32.totalorder %s303, 5
      %s312 = scalar_select %p311, %s303, 5
      %s313 = smul.addr %s312, 6
      %s314 = smul.addr %s310, 36
      %s315 = sadd.s32 %s313, %s314
      %s316 = smul.addr %s315, 4
      %s317 = scalar_lea.vmem %s0, %s316
      %p318 = pneg %p53
      %p319 = pneg %p50
      %s320 = smul.u32 %s23, 4
      %s321 = sadd.s32 %s320, 4
      %p322 = scmp.lt.s32.totalorder %s22, 1
      %s323 = scalar_select %p322, %s22, 1
      %p324 = scmp.lt.s32.totalorder %s321, 5
      %s325 = scalar_select %p324, %s321, 5
      %s326 = smul.addr %s325, 6
      %s327 = smul.addr %s323, 36
      %s328 = sadd.s32 %s326, %s327
      %s329 = smul.addr %s328, 4
      %s330 = scalar_lea.vmem %s1, %s329
      %p331 = pneg %p85
      %p332 = pneg %p82
      %s333 = smul.u32 %s23, 4
      %s334 = sadd.s32 %s333, 5
      %p335 = scmp.lt.s32.totalorder %s22, 1
      %s336 = scalar_select %p335, %s22, 1
      %p337 = scmp.lt.s32.totalorder %s334, 5
      %s338 = scalar_select %p337, %s334, 5
      %s339 = smul.addr %s338, 6
      %s340 = smul.addr %s336, 36
      %s341 = sadd.s32 %s339, %s340
      %s342 = smul.addr %s341, 4
      %s343 = scalar_lea.vmem %s2, %s342
      %p344 = pneg %p117
      %p345 = pneg %p114
      %p346 = pneg %p138
      %p347 = pneg %p135
      %p348 = pneg %p159
      %p349 = pneg %p156
      %p350 = pneg %p187
      %p351 = pneg %p184
      %p352 = scmp.lt.s32.totalorder %s22, 1
      %s353 = scalar_select %p352, %s22, 1
      %p354 = scmp.lt.s32.totalorder %s23, 0
      %s355 = scalar_select %p354, %s23, 0
      %s356 = smul.addr %s355, 21
      %s357 = smul.addr %s353, 21
      %s358 = sadd.s32 %s356, %s357
      %s359 = smul.addr %s358, 4
      %s360 = scalar_lea.vmem %s5, %s359
      %p361 = pneg %p215
      %p362 = pneg %p212
      %p363 = scmp.lt.s32.totalorder %s22, 1
      %s364 = scalar_select %p363, %s22, 1
      %p365 = scmp.lt.s32.totalorder %s23, 0
      %s366 = scalar_select %p365, %s23, 0
      %s367 = sadd.s32 %s366, %s364
      %s368 = smul.addr %s367, 2
      %s369 = scalar_lea.vmem %s6, %s368
      %s370 = smul.u32 4, %s23
      %s371 = ssub.s32 6, %s370
      %p372 = scmp.lt.s32.totalorder %s371, 4
      %s373 = scalar_select %p372, %s371, 4
      %s374 = smul.u32 64, %s373
      %s375 = smul.u32 %s374, 6
      %p376 = scmp.lt.s32.totalorder %s22, 1
      %s377 = scalar_select %p376, %s22, 1
      %p378 = scmp.lt.s32.totalorder %s370, 5
      %s379 = scalar_select %p378, %s370, 5
      %s380 = smul.addr %s379, 6
      %s381 = smul.addr %s377, 36
      %s382 = sadd.s32 %s380, %s381
      %s383 = smul.addr %s382, 4
      %s384 = scalar_lea.vmem %s0, %s383
      %s385 = smul.u32 4, %s23
      %s386 = ssub.s32 6, %s385
      %p387 = scmp.lt.s32.totalorder %s386, 4
      %s388 = scalar_select %p387, %s386, 4
      %s389 = smul.u32 64, %s388
      %s390 = smul.u32 %s389, 6
      %s391 = smul.u32 %s23, 4
      %s392 = sadd.s32 %s391, 4
      %p393 = scmp.lt.s32.totalorder %s22, 1
      %s394 = scalar_select %p393, %s22, 1
      %p395 = scmp.lt.s32.totalorder %s392, 5
      %s396 = scalar_select %p395, %s392, 5
      %s397 = smul.addr %s396, 6
      %s398 = smul.addr %s394, 36
      %s399 = sadd.s32 %s397, %s398
      %s400 = smul.addr %s399, 4
      %s401 = scalar_lea.vmem %s1, %s400
      %s402 = smul.u32 %s23, 4
      %s403 = sadd.s32 %s402, 4
      %s404 = smul.u32 %s23, 4
      %s405 = sadd.s32 %s404, 5
      %p406 = scmp.lt.s32.totalorder %s22, 1
      %s407 = scalar_select %p406, %s22, 1
      %p408 = scmp.lt.s32.totalorder %s405, 5
      %s409 = scalar_select %p408, %s405, 5
      %s410 = smul.addr %s409, 6
      %s411 = smul.addr %s407, 36
      %s412 = sadd.s32 %s410, %s411
      %s413 = smul.addr %s412, 4
      %s414 = scalar_lea.vmem %s2, %s413
      %s415 = smul.u32 %s23, 4
      %s416 = sadd.s32 %s415, 5
      %p417 = scmp.lt.s32.totalorder %s22, 1
      %s418 = scalar_select %p417, %s22, 1
      %p419 = scmp.lt.s32.totalorder %s23, 0
      %s420 = scalar_select %p419, %s23, 0
      %s421 = smul.addr %s420, 21
      %s422 = smul.addr %s418, 21
      %s423 = sadd.s32 %s421, %s422
      %s424 = smul.addr %s423, 4
      %s425 = scalar_lea.vmem %s5, %s424
      %p426 = scmp.lt.s32.totalorder %s22, 1
      %s427 = scalar_select %p426, %s22, 1
      %p428 = scmp.lt.s32.totalorder %s23, 0
      %s429 = scalar_select %p428, %s23, 0
      %s430 = sadd.s32 %s429, %s427
      %s431 = smul.addr %s430, 2
      %s432 = scalar_lea.vmem %s6, %s431
      %v434 = vld [vmem:[%s384] sm:$0xf]
      %v435 = vld [vmem:[%s384 + $0x4] sm:$0xf]
      %v436 = vld [vmem:[%s384 + $0x8] sm:$0xf]
      %v437 = vld [vmem:[%s384 + $0xc] sm:$0xf]
      %v438 = vld [vmem:[%s384 + $0x10] sm:$0xf]
      %v439 = vld [vmem:[%s384 + $0x14] sm:$0x1]
      %vm440 = vcmask 60416
      %441 = vst.msk [vmem:[#allocation2] sm:$0xf] %vm440, %v434
      %442 = vst.msk [vmem:[#allocation2 + $0x4] sm:$0xf] %vm440, %v435
      %443 = vst.msk [vmem:[#allocation2 + $0x8] sm:$0xf] %vm440, %v436
      %444 = vst.msk [vmem:[#allocation2 + $0xc] sm:$0xf] %vm440, %v437
      %445 = vst.msk [vmem:[#allocation2 + $0x10] sm:$0xf] %vm440, %v438
      %vm446 = vcmask 57344
      %447 = vst.msk [vmem:[#allocation2 + $0x14] sm:$0x1] %vm446, %v439
      %s448 = scalar_lea.vmem %s384, 24
      %v449 = vld [vmem:[%s448] sm:$0xf]
      %v450 = vld [vmem:[%s448 + $0x4] sm:$0xf]
      %v451 = vld [vmem:[%s448 + $0x8] sm:$0xf]
      %v452 = vld [vmem:[%s448 + $0xc] sm:$0xf]
      %v453 = vld [vmem:[%s448 + $0x10] sm:$0xf]
      %v454 = vld [vmem:[%s448 + $0x14] sm:$0x1]
      %vm461 = vcmask 1040384
      %vm462 = vcmask 1044484
      %vm463 = vmor %vm461, %vm462
      %v464 = vrot.slane %v449, 7
      %v465 = vrot.slane %v464, 4
      %v466 = vrot.slane %v450, 7
      %v467 = vsel %vm463, %v465, %v466
      %v468 = vrot.slane %v466, 4
      %v469 = vrot.slane %v451, 7
      %v470 = vsel %vm463, %v468, %v469
      %v471 = vrot.slane %v469, 4
      %v472 = vrot.slane %v452, 7
      %v473 = vsel %vm463, %v471, %v472
      %v474 = vrot.slane %v472, 4
      %v475 = vrot.slane %v453, 7
      %v476 = vsel %vm463, %v474, %v475
      %v477 = vrot.slane %v475, 4
      %v478 = vrot.slane %v454, 7
      %v479 = vsel %vm463, %v477, %v478
      %vm486 = vcmask 60417
      %487 = vst.msk [vmem:[#allocation2 + $0x14] sm:$0xe] %vm486, %v464
      %488 = vst.msk [vmem:[#allocation2 + $0x18] sm:$0xf] %vm440, %v467
      %489 = vst.msk [vmem:[#allocation2 + $0x1c] sm:$0xf] %vm440, %v470
      %490 = vst.msk [vmem:[#allocation2 + $0x20] sm:$0xf] %vm440, %v473
      %491 = vst.msk [vmem:[#allocation2 + $0x24] sm:$0xf] %vm440, %v476
      %vm492 = vcmask 58368
      %493 = vst.msk [vmem:[#allocation2 + $0x28] sm:$0x3] %vm492, %v479
      %s494 = scalar_lea.vmem %s384, 48
      %v495 = vld [vmem:[%s494] sm:$0xf]
      %v496 = vld [vmem:[%s494 + $0x4] sm:$0xf]
      %v497 = vld [vmem:[%s494 + $0x8] sm:$0xf]
      %v498 = vld [vmem:[%s494 + $0xc] sm:$0xf]
      %v499 = vld [vmem:[%s494 + $0x10] sm:$0xf]
      %v500 = vld [vmem:[%s494 + $0x14] sm:$0x1]
      %vm507 = vcmask 1041408
      %vm508 = vcmask 1045508
      %vm509 = vmor %vm507, %vm508
      %v510 = vrot.slane %v495, 6
      %v511 = vrot.slane %v510, 4
      %v512 = vrot.slane %v496, 6
      %v513 = vsel %vm509, %v511, %v512
      %v514 = vrot.slane %v512, 4
      %v515 = vrot.slane %v497, 6
      %v516 = vsel %vm509, %v514, %v515
      %v517 = vrot.slane %v515, 4
      %v518 = vrot.slane %v498, 6
      %v519 = vsel %vm509, %v517, %v518
      %v520 = vrot.slane %v518, 4
      %v521 = vrot.slane %v499, 6
      %v522 = vsel %vm509, %v520, %v521
      %v523 = vrot.slane %v521, 4
      %v524 = vrot.slane %v500, 6
      %v525 = vsel %vm509, %v523, %v524
      %vm532 = vcmask 60418
      %533 = vst.msk [vmem:[#allocation2 + $0x28] sm:$0xc] %vm532, %v510
      %534 = vst.msk [vmem:[#allocation2 + $0x2c] sm:$0xf] %vm440, %v513
      %535 = vst.msk [vmem:[#allocation2 + $0x30] sm:$0xf] %vm440, %v516
      %536 = vst.msk [vmem:[#allocation2 + $0x34] sm:$0xf] %vm440, %v519
      %537 = vst.msk [vmem:[#allocation2 + $0x38] sm:$0xf] %vm440, %v522
      %vm538 = vcmask 59392
      %539 = vst.msk [vmem:[#allocation2 + $0x3c] sm:$0x7] %vm538, %v525
      %s540 = scalar_lea.vmem %s384, 72
      %v541 = vld [vmem:[%s540] sm:$0xf]
      %v542 = vld [vmem:[%s540 + $0x4] sm:$0xf]
      %v543 = vld [vmem:[%s540 + $0x8] sm:$0xf]
      %v544 = vld [vmem:[%s540 + $0xc] sm:$0xf]
      %v545 = vld [vmem:[%s540 + $0x10] sm:$0xf]
      %v546 = vld [vmem:[%s540 + $0x14] sm:$0x1]
      %vm553 = vcmask 1042432
      %vm554 = vcmask 1046532
      %vm555 = vmor %vm553, %vm554
      %v556 = vrot.slane %v541, 5
      %v557 = vrot.slane %v556, 4
      %v558 = vrot.slane %v542, 5
      %v559 = vsel %vm555, %v557, %v558
      %v560 = vrot.slane %v558, 4
      %v561 = vrot.slane %v543, 5
      %v562 = vsel %vm555, %v560, %v561
      %v563 = vrot.slane %v561, 4
      %v564 = vrot.slane %v544, 5
      %v565 = vsel %vm555, %v563, %v564
      %v566 = vrot.slane %v564, 4
      %v567 = vrot.slane %v545, 5
      %v568 = vsel %vm555, %v566, %v567
      %v569 = vrot.slane %v567, 4
      %v570 = vrot.slane %v546, 5
      %v571 = vsel %vm555, %v569, %v570
      %vm578 = vcmask 60419
      %579 = vst.msk [vmem:[#allocation2 + $0x3c] sm:$0x8] %vm578, %v556
      %580 = vst.msk [vmem:[#allocation2 + $0x40] sm:$0xf] %vm440, %v559
      %581 = vst.msk [vmem:[#allocation2 + $0x44] sm:$0xf] %vm440, %v562
      %582 = vst.msk [vmem:[#allocation2 + $0x48] sm:$0xf] %vm440, %v565
      %583 = vst.msk [vmem:[#allocation2 + $0x4c] sm:$0xf] %vm440, %v568
      %584 = vst.msk [vmem:[#allocation2 + $0x50] sm:$0xf] %vm440, %v571
      %v585 = vld [vmem:[%s401] sm:$0xf]
      %v586 = vld [vmem:[%s401 + $0x4] sm:$0xf]
      %v587 = vld [vmem:[%s401 + $0x8] sm:$0xf]
      %v588 = vld [vmem:[%s401 + $0xc] sm:$0xf]
      %v589 = vld [vmem:[%s401 + $0x10] sm:$0xf]
      %v590 = vld [vmem:[%s401 + $0x14] sm:$0x1]
      %591 = vst.msk [vmem:[#allocation2 + $0x54] sm:$0xf] %vm440, %v585
      %592 = vst.msk [vmem:[#allocation2 + $0x58] sm:$0xf] %vm440, %v586
      %593 = vst.msk [vmem:[#allocation2 + $0x5c] sm:$0xf] %vm440, %v587
      %594 = vst.msk [vmem:[#allocation2 + $0x60] sm:$0xf] %vm440, %v588
      %595 = vst.msk [vmem:[#allocation2 + $0x64] sm:$0xf] %vm440, %v589
      %596 = vst.msk [vmem:[#allocation2 + $0x68] sm:$0x1] %vm446, %v590
      %v597 = vld [vmem:[%s414] sm:$0xf]
      %v598 = vld [vmem:[%s414 + $0x4] sm:$0xf]
      %v599 = vld [vmem:[%s414 + $0x8] sm:$0xf]
      %v600 = vld [vmem:[%s414 + $0xc] sm:$0xf]
      %v601 = vld [vmem:[%s414 + $0x10] sm:$0xf]
      %v602 = vld [vmem:[%s414 + $0x14] sm:$0x1]
      %v609 = vrot.slane %v597, 7
      %v610 = vrot.slane %v609, 4
      %v611 = vrot.slane %v598, 7
      %v612 = vsel %vm463, %v610, %v611
      %v613 = vrot.slane %v611, 4
      %v614 = vrot.slane %v599, 7
      %v615 = vsel %vm463, %v613, %v614
      %v616 = vrot.slane %v614, 4
      %v617 = vrot.slane %v600, 7
      %v618 = vsel %vm463, %v616, %v617
      %v619 = vrot.slane %v617, 4
      %v620 = vrot.slane %v601, 7
      %v621 = vsel %vm463, %v619, %v620
      %v622 = vrot.slane %v620, 4
      %v623 = vrot.slane %v602, 7
      %v624 = vsel %vm463, %v622, %v623
      %631 = vst.msk [vmem:[#allocation2 + $0x68] sm:$0xe] %vm486, %v609
      %632 = vst.msk [vmem:[#allocation2 + $0x6c] sm:$0xf] %vm440, %v612
      %633 = vst.msk [vmem:[#allocation2 + $0x70] sm:$0xf] %vm440, %v615
      %634 = vst.msk [vmem:[#allocation2 + $0x74] sm:$0xf] %vm440, %v618
      %635 = vst.msk [vmem:[#allocation2 + $0x78] sm:$0xf] %vm440, %v621
      %636 = vst.msk [vmem:[#allocation2 + $0x7c] sm:$0x3] %vm492, %v624
      %637 = vst.msk [vmem:[#allocation2 + $0x7c] sm:$0xc] %vm532, 0
      %638 = vst.msk [vmem:[#allocation2 + $0x80] sm:$0xf] %vm440, 0
      %639 = vst.msk [vmem:[#allocation2 + $0x84] sm:$0x1] %vm446, 0
      %v640 = vld [vmem:[#allocation2] sm:$0xf]
      %v641 = vld [vmem:[#allocation2 + $0x4] sm:$0xf]
      %v642 = vld [vmem:[#allocation2 + $0x8] sm:$0xf]
      %v643 = vld [vmem:[#allocation2 + $0xc] sm:$0xf]
      %v644 = vld [vmem:[#allocation2 + $0x10] sm:$0xf]
      %v645 = vld [vmem:[#allocation2 + $0x14] sm:$0xf]
      %v646 = vld [vmem:[#allocation2 + $0x18] sm:$0xf]
      %v647 = vld [vmem:[#allocation2 + $0x1c] sm:$0xf]
      %v648 = vld [vmem:[#allocation2 + $0x20] sm:$0xf]
      %v649 = vld [vmem:[#allocation2 + $0x24] sm:$0xf]
      %v650 = vld [vmem:[#allocation2 + $0x28] sm:$0xf]
      %v651 = vld [vmem:[#allocation2 + $0x2c] sm:$0xf]
      %v652 = vld [vmem:[#allocation2 + $0x30] sm:$0xf]
      %v653 = vld [vmem:[#allocation2 + $0x34] sm:$0xf]
      %v654 = vld [vmem:[#allocation2 + $0x38] sm:$0xf]
      %v655 = vld [vmem:[#allocation2 + $0x3c] sm:$0xf]
      %v656 = vld [vmem:[#allocation2 + $0x40] sm:$0xf]
      %v657 = vld [vmem:[#allocation2 + $0x44] sm:$0xf]
      %v658 = vld [vmem:[#allocation2 + $0x48] sm:$0xf]
      %v659 = vld [vmem:[#allocation2 + $0x4c] sm:$0xf]
      %v660 = vld [vmem:[#allocation2 + $0x50] sm:$0xf]
      %v661 = vld [vmem:[#allocation2 + $0x54] sm:$0x1]
      %v662 = vld [vmem:[#allocation2] sm:$0xe]
      %v663 = vld [vmem:[#allocation2] sm:$0x8]
      %v664 = vld [vmem:[#allocation2 + $0x54] sm:$0x7]
      %v665 = vld [vmem:[#allocation2 + $0x54] sm:$0xf]
      %v666 = vld [vmem:[#allocation2 + $0x4] sm:$0xc]
      %v667 = vld [vmem:[#allocation2 + $0x58] sm:$0x3]
      %v668 = vld [vmem:[#allocation2 + $0x58] sm:$0x7]
      %v669 = vld [vmem:[#allocation2 + $0x4] sm:$0x8]
      %v670 = vld [vmem:[#allocation2 + $0x14] sm:$0xe]
      %v671 = vld [vmem:[#allocation2 + $0x58] sm:$0xf]
      %v672 = vld [vmem:[#allocation2 + $0x5c] sm:$0xf]
      %v673 = vld [vmem:[#allocation2 + $0x60] sm:$0xf]
      %v674 = vld [vmem:[#allocation2 + $0x64] sm:$0xf]
      %v675 = vld [vmem:[#allocation2 + $0x68] sm:$0x1]
      %v676 = vld [vmem:[#allocation2 + $0x68] sm:$0x3]
      %v677 = vld [vmem:[#allocation2 + $0x14] sm:$0xc]
      %v678 = vld [vmem:[#allocation2 + $0x68] sm:$0xf]
      %v679 = vld [vmem:[#allocation2 + $0x6c] sm:$0x1]
      %v680 = vld [vmem:[#allocation2 + $0x18] sm:$0xe]
      %v681 = vld [vmem:[#allocation2 + $0x18] sm:$0x8]
      %v682 = vld [vmem:[#allocation2 + $0x6c] sm:$0x7]
      %v683 = vld [vmem:[#allocation2 + $0x6c] sm:$0xf]
      %v684 = vld [vmem:[#allocation2 + $0x28] sm:$0xc]
      %v685 = vld [vmem:[#allocation2 + $0x70] sm:$0xf]
      %v686 = vld [vmem:[#allocation2 + $0x74] sm:$0xf]
      %v687 = vld [vmem:[#allocation2 + $0x78] sm:$0xf]
      %v688 = vld [vmem:[#allocation2 + $0x7c] sm:$0x3]
      %v689 = vld [vmem:[#allocation2 + $0x7c] sm:$0x7]
      %v690 = vld [vmem:[#allocation2 + $0x28] sm:$0x8]
      %v691 = vld [vmem:[#allocation2 + $0x2c] sm:$0xe]
      %v692 = vld [vmem:[#allocation2 + $0x7c] sm:$0xf]
      %v693 = vld [vmem:[#allocation2 + $0x80] sm:$0x1]
      %v694 = vld [vmem:[#allocation2 + $0x80] sm:$0x3]
      %v695 = vld [vmem:[#allocation2 + $0x2c] sm:$0xc]
      %v696 = vld [vmem:[#allocation2 + $0x80] sm:$0xf]
      %v697 = vld [vmem:[#allocation2 + $0x84] sm:$0x1]
      %v698 = vld [vmem:[#allocation2 + $0x30] sm:$0xe]
      %v720 = vunpack.c.l.b16 %v640
      %v721 = vunpack.c.l.b16 %v641
      %v722 = vunpack.c.l.b16 %v642
      %v723 = vunpack.c.l.b16 %v643
      %v724 = vunpack.c.l.b16 %v644
      %v725 = vunpack.c.l.b16 %v645
      %v726 = vunpack.c.l.b16 %v646
      %v727 = vunpack.c.l.b16 %v647
      %v728 = vunpack.c.l.b16 %v648
      %v729 = vunpack.c.l.b16 %v649
      %v730 = vunpack.c.l.b16 %v650
      %v731 = vunpack.c.l.b16 %v651
      %v732 = vunpack.c.l.b16 %v652
      %v733 = vunpack.c.l.b16 %v653
      %v734 = vunpack.c.l.b16 %v654
      %v735 = vunpack.c.l.b16 %v655
      %v736 = vunpack.c.l.b16 %v656
      %v737 = vunpack.c.l.b16 %v657
      %v738 = vunpack.c.l.b16 %v658
      %v739 = vunpack.c.l.b16 %v659
      %v740 = vunpack.c.l.b16 %v660
      %v741 = vpack.c.b16 %v721, %v720
      %v742 = vpack.c.b16 %v723, %v722
      %v743 = vpack.c.b16 %v725, %v724
      %v744 = vpack.c.b16 %v727, %v726
      %v745 = vpack.c.b16 %v729, %v728
      %v746 = vpack.c.b16 %v731, %v730
      %v747 = vpack.c.b16 %v733, %v732
      %v748 = vpack.c.b16 %v735, %v734
      %v749 = vpack.c.b16 %v737, %v736
      %v750 = vpack.c.b16 %v739, %v738
      %v751 = vpack.c.b16 %v740, %v740
      %v753 = vunpack.c.l.b16 %v661
      %v754 = vpack.c.b16 %v753, %v740
      %vm755 = vsmask.f32 7424
      %v757 = vshrl.u32 %v741, 16
      %v759 = vshll.u32 %v741, 16
      %v761 = vrot.slane %v759, 1
      %v762 = vor.u32 %v757, %v761
      %v764 = vshll.u32 %v742, 16
      %v766 = vrot.slane %v764, 1
      %v767 = vsel %vm755, %v762, %v766
      %v768 = vshrl.u32 %v742, 16
      %v770 = vor.u32 %v768, %v766
      %v772 = vshll.u32 %v743, 16
      %v774 = vrot.slane %v772, 1
      %v775 = vsel %vm755, %v770, %v774
      %v776 = vshrl.u32 %v743, 16
      %v778 = vor.u32 %v776, %v774
      %v780 = vshll.u32 %v744, 16
      %v782 = vrot.slane %v780, 1
      %v783 = vsel %vm755, %v778, %v782
      %v784 = vshrl.u32 %v744, 16
      %v786 = vor.u32 %v784, %v782
      %v788 = vshll.u32 %v745, 16
      %v790 = vrot.slane %v788, 1
      %v791 = vsel %vm755, %v786, %v790
      %v792 = vshrl.u32 %v745, 16
      %v794 = vor.u32 %v792, %v790
      %v796 = vshll.u32 %v746, 16
      %v798 = vrot.slane %v796, 1
      %v799 = vsel %vm755, %v794, %v798
      %v800 = vshrl.u32 %v746, 16
      %v802 = vor.u32 %v800, %v798
      %v804 = vshll.u32 %v747, 16
      %v806 = vrot.slane %v804, 1
      %v807 = vsel %vm755, %v802, %v806
      %v808 = vshrl.u32 %v747, 16
      %v810 = vor.u32 %v808, %v806
      %v812 = vshll.u32 %v748, 16
      %v814 = vrot.slane %v812, 1
      %v815 = vsel %vm755, %v810, %v814
      %v816 = vshrl.u32 %v748, 16
      %v818 = vor.u32 %v816, %v814
      %v820 = vshll.u32 %v749, 16
      %v822 = vrot.slane %v820, 1
      %v823 = vsel %vm755, %v818, %v822
      %v824 = vshrl.u32 %v749, 16
      %v826 = vor.u32 %v824, %v822
      %v828 = vshll.u32 %v750, 16
      %v830 = vrot.slane %v828, 1
      %v831 = vsel %vm755, %v826, %v830
      %v832 = vshrl.u32 %v750, 16
      %v834 = vor.u32 %v832, %v830
      %v836 = vshll.u32 %v754, 16
      %v838 = vrot.slane %v836, 1
      %v839 = vsel %vm755, %v834, %v838
      %v840 = vshrl.u32 %v754, 16
      %v842 = vor.u32 %v840, %v838
      %843 = vrot.lane.b32.xlu0 %v767, 8
      %v844 = vpop.permute.xlu0 %843
      %845 = vrot.lane.b32.xlu0 %v775, 8
      %v846 = vpop.permute.xlu0 %845
      %847 = vrot.lane.b32.xlu0 %v783, 8
      %v848 = vpop.permute.xlu0 %847
      %849 = vrot.lane.b32.xlu0 %v791, 8
      %v850 = vpop.permute.xlu0 %849
      %851 = vrot.lane.b32.xlu0 %v799, 8
      %v852 = vpop.permute.xlu0 %851
      %853 = vrot.lane.b32.xlu0 %v807, 8
      %v854 = vpop.permute.xlu0 %853
      %855 = vrot.lane.b32.xlu0 %v815, 8
      %v856 = vpop.permute.xlu0 %855
      %857 = vrot.lane.b32.xlu0 %v823, 8
      %v858 = vpop.permute.xlu0 %857
      %859 = vrot.lane.b32.xlu0 %v831, 8
      %v860 = vpop.permute.xlu0 %859
      %861 = vrot.lane.b32.xlu0 %v839, 8
      %v862 = vpop.permute.xlu0 %861
      %863 = vrot.lane.b32.xlu0 %v842, 8
      %v864 = vpop.permute.xlu0 %863
      %v866 = vunpack.c.l.b16 %v662
      %v867 = vpack.c.b16 %v721, %v866
      %vm868 = vcmask 1046528
      %v869 = vrot.slane %v867, 1
      %v870 = vrot.slane %v742, 1
      %v871 = vsel %vm868, %v869, %v870
      %v872 = vrot.slane %v743, 1
      %v873 = vsel %vm868, %v870, %v872
      %v874 = vrot.slane %v744, 1
      %v875 = vsel %vm868, %v872, %v874
      %v876 = vrot.slane %v745, 1
      %v877 = vsel %vm868, %v874, %v876
      %v878 = vrot.slane %v746, 1
      %v879 = vsel %vm868, %v876, %v878
      %v880 = vrot.slane %v747, 1
      %v881 = vsel %vm868, %v878, %v880
      %v882 = vrot.slane %v748, 1
      %v883 = vsel %vm868, %v880, %v882
      %v884 = vrot.slane %v749, 1
      %v885 = vsel %vm868, %v882, %v884
      %v886 = vrot.slane %v750, 1
      %v887 = vsel %vm868, %v884, %v886
      %v888 = vrot.slane %v754, 1
      %v889 = vsel %vm868, %v886, %v888
      %890 = vrot.lane.b32.xlu0 %v871, 16
      %v891 = vpop.permute.xlu0 %890
      %892 = vrot.lane.b32.xlu0 %v873, 16
      %v893 = vpop.permute.xlu0 %892
      %894 = vrot.lane.b32.xlu0 %v875, 16
      %v895 = vpop.permute.xlu0 %894
      %896 = vrot.lane.b32.xlu0 %v877, 16
      %v897 = vpop.permute.xlu0 %896
      %898 = vrot.lane.b32.xlu0 %v879, 16
      %v899 = vpop.permute.xlu0 %898
      %900 = vrot.lane.b32.xlu0 %v881, 16
      %v901 = vpop.permute.xlu0 %900
      %902 = vrot.lane.b32.xlu0 %v883, 16
      %v903 = vpop.permute.xlu0 %902
      %904 = vrot.lane.b32.xlu0 %v885, 16
      %v905 = vpop.permute.xlu0 %904
      %906 = vrot.lane.b32.xlu0 %v887, 16
      %v907 = vpop.permute.xlu0 %906
      %908 = vrot.lane.b32.xlu0 %v889, 16
      %v909 = vpop.permute.xlu0 %908
      %910 = vrot.lane.b32.xlu0 %v888, 16
      %v911 = vpop.permute.xlu0 %910
      %v914 = vunpack.c.l.b16 %v663
      %v915 = vunpack.c.l.b16 %v664
      %v916 = vpack.c.b16 %v721, %v914
      %v917 = vpack.c.b16 %v915, %v740
      %vm918 = vcmask 1044480
      %v919 = vrot.slane %v916, 3
      %v920 = vrot.slane %v742, 3
      %v921 = vsel %vm918, %v919, %v920
      %v922 = vrot.slane %v743, 3
      %v923 = vsel %vm918, %v920, %v922
      %v924 = vrot.slane %v744, 3
      %v925 = vsel %vm918, %v922, %v924
      %v926 = vrot.slane %v745, 3
      %v927 = vsel %vm918, %v924, %v926
      %v928 = vrot.slane %v746, 3
      %v929 = vsel %vm918, %v926, %v928
      %v930 = vrot.slane %v747, 3
      %v931 = vsel %vm918, %v928, %v930
      %v932 = vrot.slane %v748, 3
      %v933 = vsel %vm918, %v930, %v932
      %v934 = vrot.slane %v749, 3
      %v935 = vsel %vm918, %v932, %v934
      %v936 = vrot.slane %v750, 3
      %v937 = vsel %vm918, %v934, %v936
      %v938 = vrot.slane %v917, 3
      %v939 = vsel %vm918, %v936, %v938
      %940 = vrot.lane.b32.xlu0 %v921, 24
      %v941 = vpop.permute.xlu0 %940
      %942 = vrot.lane.b32.xlu0 %v923, 24
      %v943 = vpop.permute.xlu0 %942
      %944 = vrot.lane.b32.xlu0 %v925, 24
      %v945 = vpop.permute.xlu0 %944
      %946 = vrot.lane.b32.xlu0 %v927, 24
      %v947 = vpop.permute.xlu0 %946
      %948 = vrot.lane.b32.xlu0 %v929, 24
      %v949 = vpop.permute.xlu0 %948
      %950 = vrot.lane.b32.xlu0 %v931, 24
      %v951 = vpop.permute.xlu0 %950
      %952 = vrot.lane.b32.xlu0 %v933, 24
      %v953 = vpop.permute.xlu0 %952
      %954 = vrot.lane.b32.xlu0 %v935, 24
      %v955 = vpop.permute.xlu0 %954
      %956 = vrot.lane.b32.xlu0 %v937, 24
      %v957 = vpop.permute.xlu0 %956
      %958 = vrot.lane.b32.xlu0 %v939, 24
      %v959 = vpop.permute.xlu0 %958
      %960 = vrot.lane.b32.xlu0 %v938, 24
      %v961 = vpop.permute.xlu0 %960
      %v963 = vunpack.c.l.b16 %v665
      %v964 = vpack.c.b16 %v963, %v740
      %vm965 = vsmask.f32 4352
      %v967 = vshrl.u32 %v916, 16
      %v969 = vrot.slane %v967, 3
      %v970 = vshll.u32 %v916, 16
      %v972 = vrot.slane %v970, 4
      %v973 = vor.u32 %v969, %v972
      %v974 = vrot.slane %v768, 3
      %v975 = vrot.slane %v764, 4
      %v976 = vor.u32 %v974, %v975
      %v977 = vsel %vm965, %v973, %v976
      %v978 = vrot.slane %v776, 3
      %v979 = vrot.slane %v772, 4
      %v980 = vor.u32 %v978, %v979
      %v981 = vsel %vm965, %v976, %v980
      %v982 = vrot.slane %v784, 3
      %v983 = vrot.slane %v780, 4
      %v984 = vor.u32 %v982, %v983
      %v985 = vsel %vm965, %v980, %v984
      %v986 = vrot.slane %v792, 3
      %v987 = vrot.slane %v788, 4
      %v988 = vor.u32 %v986, %v987
      %v989 = vsel %vm965, %v984, %v988
      %v990 = vrot.slane %v800, 3
      %v991 = vrot.slane %v796, 4
      %v992 = vor.u32 %v990, %v991
      %v993 = vsel %vm965, %v988, %v992
      %v994 = vrot.slane %v808, 3
      %v995 = vrot.slane %v804, 4
      %v996 = vor.u32 %v994, %v995
      %v997 = vsel %vm965, %v992, %v996
      %v998 = vrot.slane %v816, 3
      %v999 = vrot.slane %v812, 4
      %v1000 = vor.u32 %v998, %v999
      %v1001 = vsel %vm965, %v996, %v1000
      %v1002 = vrot.slane %v824, 3
      %v1003 = vrot.slane %v820, 4
      %v1004 = vor.u32 %v1002, %v1003
      %v1005 = vsel %vm965, %v1000, %v1004
      %v1006 = vrot.slane %v832, 3
      %v1007 = vrot.slane %v828, 4
      %v1008 = vor.u32 %v1006, %v1007
      %v1009 = vsel %vm965, %v1004, %v1008
      %v1011 = vshrl.u32 %v964, 16
      %v1013 = vrot.slane %v1011, 3
      %v1014 = vshll.u32 %v964, 16
      %v1016 = vrot.slane %v1014, 4
      %v1017 = vor.u32 %v1013, %v1016
      %v1018 = vsel %vm965, %v1008, %v1017
      %1019 = vrot.lane.b32.xlu0 %v977, 32
      %v1020 = vpop.permute.xlu0 %1019
      %1021 = vrot.lane.b32.xlu0 %v981, 32
      %v1022 = vpop.permute.xlu0 %1021
      %1023 = vrot.lane.b32.xlu0 %v985, 32
      %v1024 = vpop.permute.xlu0 %1023
      %1025 = vrot.lane.b32.xlu0 %v989, 32
      %v1026 = vpop.permute.xlu0 %1025
      %1027 = vrot.lane.b32.xlu0 %v993, 32
      %v1028 = vpop.permute.xlu0 %1027
      %1029 = vrot.lane.b32.xlu0 %v997, 32
      %v1030 = vpop.permute.xlu0 %1029
      %1031 = vrot.lane.b32.xlu0 %v1001, 32
      %v1032 = vpop.permute.xlu0 %1031
      %1033 = vrot.lane.b32.xlu0 %v1005, 32
      %v1034 = vpop.permute.xlu0 %1033
      %1035 = vrot.lane.b32.xlu0 %v1009, 32
      %v1036 = vpop.permute.xlu0 %1035
      %1037 = vrot.lane.b32.xlu0 %v1018, 32
      %v1038 = vpop.permute.xlu0 %1037
      %1039 = vrot.lane.b32.xlu0 %v1017, 32
      %v1040 = vpop.permute.xlu0 %1039
      %v1041 = vpack.c.b16 %v722, %v721
      %v1042 = vpack.c.b16 %v724, %v723
      %v1043 = vpack.c.b16 %v726, %v725
      %v1044 = vpack.c.b16 %v728, %v727
      %v1045 = vpack.c.b16 %v730, %v729
      %v1046 = vpack.c.b16 %v732, %v731
      %v1047 = vpack.c.b16 %v734, %v733
      %v1048 = vpack.c.b16 %v736, %v735
      %v1049 = vpack.c.b16 %v738, %v737
      %v1050 = vpack.c.b16 %v740, %v739
      %v1051 = vpack.c.b16 %v963, %v963
      %1052 = vrot.lane.b32.xlu0 %v1041, 40
      %v1053 = vpop.permute.xlu0 %1052
      %1054 = vrot.lane.b32.xlu0 %v1042, 40
      %v1055 = vpop.permute.xlu0 %1054
      %1056 = vrot.lane.b32.xlu0 %v1043, 40
      %v1057 = vpop.permute.xlu0 %1056
      %1058 = vrot.lane.b32.xlu0 %v1044, 40
      %v1059 = vpop.permute.xlu0 %1058
      %1060 = vrot.lane.b32.xlu0 %v1045, 40
      %v1061 = vpop.permute.xlu0 %1060
      %1062 = vrot.lane.b32.xlu0 %v1046, 40
      %v1063 = vpop.permute.xlu0 %1062
      %1064 = vrot.lane.b32.xlu0 %v1047, 40
      %v1065 = vpop.permute.xlu0 %1064
      %1066 = vrot.lane.b32.xlu0 %v1048, 40
      %v1067 = vpop.permute.xlu0 %1066
      %1068 = vrot.lane.b32.xlu0 %v1049, 40
      %v1069 = vpop.permute.xlu0 %1068
      %1070 = vrot.lane.b32.xlu0 %v1050, 40
      %v1071 = vpop.permute.xlu0 %1070
      %1072 = vrot.lane.b32.xlu0 %v1051, 40
      %v1073 = vpop.permute.xlu0 %1072
      %v1076 = vunpack.c.l.b16 %v666
      %v1077 = vunpack.c.l.b16 %v667
      %v1078 = vpack.c.b16 %v722, %v1076
      %v1079 = vpack.c.b16 %v1077, %v963
      %vm1080 = vcmask 1045504
      %v1081 = vrot.slane %v1078, 2
      %v1082 = vrot.slane %v1042, 2
      %v1083 = vsel %vm1080, %v1081, %v1082
      %v1084 = vrot.slane %v1043, 2
      %v1085 = vsel %vm1080, %v1082, %v1084
      %v1086 = vrot.slane %v1044, 2
      %v1087 = vsel %vm1080, %v1084, %v1086
      %v1088 = vrot.slane %v1045, 2
      %v1089 = vsel %vm1080, %v1086, %v1088
      %v1090 = vrot.slane %v1046, 2
      %v1091 = vsel %vm1080, %v1088, %v1090
      %v1092 = vrot.slane %v1047, 2
      %v1093 = vsel %vm1080, %v1090, %v1092
      %v1094 = vrot.slane %v1048, 2
      %v1095 = vsel %vm1080, %v1092, %v1094
      %v1096 = vrot.slane %v1049, 2
      %v1097 = vsel %vm1080, %v1094, %v1096
      %v1098 = vrot.slane %v1050, 2
      %v1099 = vsel %vm1080, %v1096, %v1098
      %v1100 = vrot.slane %v1079, 2
      %v1101 = vsel %vm1080, %v1098, %v1100
      %1102 = vrot.lane.b32.xlu0 %v1083, 48
      %v1103 = vpop.permute.xlu0 %1102
      %1104 = vrot.lane.b32.xlu0 %v1085, 48
      %v1105 = vpop.permute.xlu0 %1104
      %1106 = vrot.lane.b32.xlu0 %v1087, 48
      %v1107 = vpop.permute.xlu0 %1106
      %1108 = vrot.lane.b32.xlu0 %v1089, 48
      %v1109 = vpop.permute.xlu0 %1108
      %1110 = vrot.lane.b32.xlu0 %v1091, 48
      %v1111 = vpop.permute.xlu0 %1110
      %1112 = vrot.lane.b32.xlu0 %v1093, 48
      %v1113 = vpop.permute.xlu0 %1112
      %1114 = vrot.lane.b32.xlu0 %v1095, 48
      %v1115 = vpop.permute.xlu0 %1114
      %1116 = vrot.lane.b32.xlu0 %v1097, 48
      %v1117 = vpop.permute.xlu0 %1116
      %1118 = vrot.lane.b32.xlu0 %v1099, 48
      %v1119 = vpop.permute.xlu0 %1118
      %1120 = vrot.lane.b32.xlu0 %v1101, 48
      %v1121 = vpop.permute.xlu0 %1120
      %1122 = vrot.lane.b32.xlu0 %v1100, 48
      %v1123 = vpop.permute.xlu0 %1122
      %v1125 = vunpack.c.l.b16 %v668
      %v1126 = vpack.c.b16 %v1125, %v963
      %vm1127 = vsmask.f32 5376
      %v1129 = vshrl.u32 %v1078, 16
      %v1131 = vrot.slane %v1129, 2
      %v1132 = vshll.u32 %v1078, 16
      %v1134 = vrot.slane %v1132, 3
      %v1135 = vor.u32 %v1131, %v1134
      %v1137 = vshrl.u32 %v1042, 16
      %v1139 = vrot.slane %v1137, 2
      %v1140 = vshll.u32 %v1042, 16
      %v1142 = vrot.slane %v1140, 3
      %v1143 = vor.u32 %v1139, %v1142
      %v1144 = vsel %vm1127, %v1135, %v1143
      %v1146 = vshrl.u32 %v1043, 16
      %v1148 = vrot.slane %v1146, 2
      %v1149 = vshll.u32 %v1043, 16
      %v1151 = vrot.slane %v1149, 3
      %v1152 = vor.u32 %v1148, %v1151
      %v1153 = vsel %vm1127, %v1143, %v1152
      %v1155 = vshrl.u32 %v1044, 16
      %v1157 = vrot.slane %v1155, 2
      %v1158 = vshll.u32 %v1044, 16
      %v1160 = vrot.slane %v1158, 3
      %v1161 = vor.u32 %v1157, %v1160
      %v1162 = vsel %vm1127, %v1152, %v1161
      %v1164 = vshrl.u32 %v1045, 16
      %v1166 = vrot.slane %v1164, 2
      %v1167 = vshll.u32 %v1045, 16
      %v1169 = vrot.slane %v1167, 3
      %v1170 = vor.u32 %v1166, %v1169
      %v1171 = vsel %vm1127, %v1161, %v1170
      %v1173 = vshrl.u32 %v1046, 16
      %v1175 = vrot.slane %v1173, 2
      %v1176 = vshll.u32 %v1046, 16
      %v1178 = vrot.slane %v1176, 3
      %v1179 = vor.u32 %v1175, %v1178
      %v1180 = vsel %vm1127, %v1170, %v1179
      %v1182 = vshrl.u32 %v1047, 16
      %v1184 = vrot.slane %v1182, 2
      %v1185 = vshll.u32 %v1047, 16
      %v1187 = vrot.slane %v1185, 3
      %v1188 = vor.u32 %v1184, %v1187
      %v1189 = vsel %vm1127, %v1179, %v1188
      %v1191 = vshrl.u32 %v1048, 16
      %v1193 = vrot.slane %v1191, 2
      %v1194 = vshll.u32 %v1048, 16
      %v1196 = vrot.slane %v1194, 3
      %v1197 = vor.u32 %v1193, %v1196
      %v1198 = vsel %vm1127, %v1188, %v1197
      %v1200 = vshrl.u32 %v1049, 16
      %v1202 = vrot.slane %v1200, 2
      %v1203 = vshll.u32 %v1049, 16
      %v1205 = vrot.slane %v1203, 3
      %v1206 = vor.u32 %v1202, %v1205
      %v1207 = vsel %vm1127, %v1197, %v1206
      %v1209 = vshrl.u32 %v1050, 16
      %v1211 = vrot.slane %v1209, 2
      %v1212 = vshll.u32 %v1050, 16
      %v1214 = vrot.slane %v1212, 3
      %v1215 = vor.u32 %v1211, %v1214
      %v1216 = vsel %vm1127, %v1206, %v1215
      %v1218 = vshrl.u32 %v1126, 16
      %v1220 = vrot.slane %v1218, 2
      %v1221 = vshll.u32 %v1126, 16
      %v1223 = vrot.slane %v1221, 3
      %v1224 = vor.u32 %v1220, %v1223
      %v1225 = vsel %vm1127, %v1215, %v1224
      %1226 = vrot.lane.b32.xlu0 %v1144, 56
      %v1227 = vpop.permute.xlu0 %1226
      %1228 = vrot.lane.b32.xlu0 %v1153, 56
      %v1229 = vpop.permute.xlu0 %1228
      %1230 = vrot.lane.b32.xlu0 %v1162, 56
      %v1231 = vpop.permute.xlu0 %1230
      %1232 = vrot.lane.b32.xlu0 %v1171, 56
      %v1233 = vpop.permute.xlu0 %1232
      %1234 = vrot.lane.b32.xlu0 %v1180, 56
      %v1235 = vpop.permute.xlu0 %1234
      %1236 = vrot.lane.b32.xlu0 %v1189, 56
      %v1237 = vpop.permute.xlu0 %1236
      %1238 = vrot.lane.b32.xlu0 %v1198, 56
      %v1239 = vpop.permute.xlu0 %1238
      %1240 = vrot.lane.b32.xlu0 %v1207, 56
      %v1241 = vpop.permute.xlu0 %1240
      %1242 = vrot.lane.b32.xlu0 %v1216, 56
      %v1243 = vpop.permute.xlu0 %1242
      %1244 = vrot.lane.b32.xlu0 %v1225, 56
      %v1245 = vpop.permute.xlu0 %1244
      %1246 = vrot.lane.b32.xlu0 %v1224, 56
      %v1247 = vpop.permute.xlu0 %1246
      %v1249 = vunpack.c.l.b16 %v669
      %v1250 = vpack.c.b16 %v722, %v1249
      %v1251 = vrot.slane %v1250, 3
      %v1252 = vrot.slane %v1042, 3
      %v1253 = vsel %vm918, %v1251, %v1252
      %v1254 = vrot.slane %v1043, 3
      %v1255 = vsel %vm918, %v1252, %v1254
      %v1256 = vrot.slane %v1044, 3
      %v1257 = vsel %vm918, %v1254, %v1256
      %v1258 = vrot.slane %v1045, 3
      %v1259 = vsel %vm918, %v1256, %v1258
      %v1260 = vrot.slane %v1046, 3
      %v1261 = vsel %vm918, %v1258, %v1260
      %v1262 = vrot.slane %v1047, 3
      %v1263 = vsel %vm918, %v1260, %v1262
      %v1264 = vrot.slane %v1048, 3
      %v1265 = vsel %vm918, %v1262, %v1264
      %v1266 = vrot.slane %v1049, 3
      %v1267 = vsel %vm918, %v1264, %v1266
      %v1268 = vrot.slane %v1050, 3
      %v1269 = vsel %vm918, %v1266, %v1268
      %v1270 = vrot.slane %v1126, 3
      %v1271 = vsel %vm918, %v1268, %v1270
      %1272 = vrot.lane.b32.xlu0 %v1253, 64
      %v1273 = vpop.permute.xlu0 %1272
      %1274 = vrot.lane.b32.xlu0 %v1255, 64
      %v1275 = vpop.permute.xlu0 %1274
      %1276 = vrot.lane.b32.xlu0 %v1257, 64
      %v1277 = vpop.permute.xlu0 %1276
      %1278 = vrot.lane.b32.xlu0 %v1259, 64
      %v1279 = vpop.permute.xlu0 %1278
      %1280 = vrot.lane.b32.xlu0 %v1261, 64
      %v1281 = vpop.permute.xlu0 %1280
      %1282 = vrot.lane.b32.xlu0 %v1263, 64
      %v1283 = vpop.permute.xlu0 %1282
      %1284 = vrot.lane.b32.xlu0 %v1265, 64
      %v1285 = vpop.permute.xlu0 %1284
      %1286 = vrot.lane.b32.xlu0 %v1267, 64
      %v1287 = vpop.permute.xlu0 %1286
      %1288 = vrot.lane.b32.xlu0 %v1269, 64
      %v1289 = vpop.permute.xlu0 %1288
      %1290 = vrot.lane.b32.xlu0 %v1271, 64
      %v1291 = vpop.permute.xlu0 %1290
      %1292 = vrot.lane.b32.xlu0 %v1270, 64
      %v1293 = vpop.permute.xlu0 %1292
      %v1300 = vunpack.c.l.b16 %v670
      %v1301 = vunpack.c.l.b16 %v671
      %v1302 = vunpack.c.l.b16 %v672
      %v1303 = vunpack.c.l.b16 %v673
      %v1304 = vunpack.c.l.b16 %v674
      %v1305 = vunpack.c.l.b16 %v675
      %v1306 = vpack.c.b16 %v726, %v1300
      %v1307 = vpack.c.b16 %v1301, %v963
      %v1308 = vpack.c.b16 %v1303, %v1302
      %v1309 = vpack.c.b16 %v1305, %v1304
      %v1310 = vrot.slane %v1306, 1
      %v1311 = vrot.slane %v1044, 1
      %v1312 = vsel %vm868, %v1310, %v1311
      %v1313 = vrot.slane %v1045, 1
      %v1314 = vsel %vm868, %v1311, %v1313
      %v1315 = vrot.slane %v1046, 1
      %v1316 = vsel %vm868, %v1313, %v1315
      %v1317 = vrot.slane %v1047, 1
      %v1318 = vsel %vm868, %v1315, %v1317
      %v1319 = vrot.slane %v1048, 1
      %v1320 = vsel %vm868, %v1317, %v1319
      %v1321 = vrot.slane %v1049, 1
      %v1322 = vsel %vm868, %v1319, %v1321
      %v1323 = vrot.slane %v1050, 1
      %v1324 = vsel %vm868, %v1321, %v1323
      %v1325 = vrot.slane %v1307, 1
      %v1326 = vsel %vm868, %v1323, %v1325
      %v1327 = vrot.slane %v1308, 1
      %v1328 = vsel %vm868, %v1325, %v1327
      %v1329 = vrot.slane %v1309, 1
      %v1330 = vsel %vm868, %v1327, %v1329
      %1331 = vrot.lane.b32.xlu0 %v1312, 72
      %v1332 = vpop.permute.xlu0 %1331
      %1333 = vrot.lane.b32.xlu0 %v1314, 72
      %v1334 = vpop.permute.xlu0 %1333
      %1335 = vrot.lane.b32.xlu0 %v1316, 72
      %v1336 = vpop.permute.xlu0 %1335
      %1337 = vrot.lane.b32.xlu0 %v1318, 72
      %v1338 = vpop.permute.xlu0 %1337
      %1339 = vrot.lane.b32.xlu0 %v1320, 72
      %v1340 = vpop.permute.xlu0 %1339
      %1341 = vrot.lane.b32.xlu0 %v1322, 72
      %v1342 = vpop.permute.xlu0 %1341
      %1343 = vrot.lane.b32.xlu0 %v1324, 72
      %v1344 = vpop.permute.xlu0 %1343
      %1345 = vrot.lane.b32.xlu0 %v1326, 72
      %v1346 = vpop.permute.xlu0 %1345
      %1347 = vrot.lane.b32.xlu0 %v1328, 72
      %v1348 = vpop.permute.xlu0 %1347
      %1349 = vrot.lane.b32.xlu0 %v1330, 72
      %v1350 = vpop.permute.xlu0 %1349
      %1351 = vrot.lane.b32.xlu0 %v1329, 72
      %v1352 = vpop.permute.xlu0 %1351
      %v1354 = vunpack.c.l.b16 %v676
      %v1355 = vpack.c.b16 %v1354, %v1304
      %vm1356 = vsmask.f32 6400
      %v1358 = vshrl.u32 %v1306, 16
      %v1360 = vrot.slane %v1358, 1
      %v1361 = vshll.u32 %v1306, 16
      %v1363 = vrot.slane %v1361, 2
      %v1364 = vor.u32 %v1360, %v1363
      %v1365 = vrot.slane %v1155, 1
      %v1366 = vrot.slane %v1158, 2
      %v1367 = vor.u32 %v1365, %v1366
      %v1368 = vsel %vm1356, %v1364, %v1367
      %v1369 = vrot.slane %v1164, 1
      %v1370 = vrot.slane %v1167, 2
      %v1371 = vor.u32 %v1369, %v1370
      %v1372 = vsel %vm1356, %v1367, %v1371
      %v1373 = vrot.slane %v1173, 1
      %v1374 = vrot.slane %v1176, 2
      %v1375 = vor.u32 %v1373, %v1374
      %v1376 = vsel %vm1356, %v1371, %v1375
      %v1377 = vrot.slane %v1182, 1
      %v1378 = vrot.slane %v1185, 2
      %v1379 = vor.u32 %v1377, %v1378
      %v1380 = vsel %vm1356, %v1375, %v1379
      %v1381 = vrot.slane %v1191, 1
      %v1382 = vrot.slane %v1194, 2
      %v1383 = vor.u32 %v1381, %v1382
      %v1384 = vsel %vm1356, %v1379, %v1383
      %v1385 = vrot.slane %v1200, 1
      %v1386 = vrot.slane %v1203, 2
      %v1387 = vor.u32 %v1385, %v1386
      %v1388 = vsel %vm1356, %v1383, %v1387
      %v1389 = vrot.slane %v1209, 1
      %v1390 = vrot.slane %v1212, 2
      %v1391 = vor.u32 %v1389, %v1390
      %v1392 = vsel %vm1356, %v1387, %v1391
      %v1394 = vshrl.u32 %v1307, 16
      %v1396 = vrot.slane %v1394, 1
      %v1397 = vshll.u32 %v1307, 16
      %v1399 = vrot.slane %v1397, 2
      %v1400 = vor.u32 %v1396, %v1399
      %v1401 = vsel %vm1356, %v1391, %v1400
      %v1403 = vshrl.u32 %v1308, 16
      %v1405 = vrot.slane %v1403, 1
      %v1406 = vshll.u32 %v1308, 16
      %v1408 = vrot.slane %v1406, 2
      %v1409 = vor.u32 %v1405, %v1408
      %v1410 = vsel %vm1356, %v1400, %v1409
      %v1412 = vshrl.u32 %v1355, 16
      %v1414 = vrot.slane %v1412, 1
      %v1415 = vshll.u32 %v1355, 16
      %v1417 = vrot.slane %v1415, 2
      %v1418 = vor.u32 %v1414, %v1417
      %v1419 = vsel %vm1356, %v1409, %v1418
      %1420 = vrot.lane.b32.xlu0 %v1368, 80
      %v1421 = vpop.permute.xlu0 %1420
      %1422 = vrot.lane.b32.xlu0 %v1372, 80
      %v1423 = vpop.permute.xlu0 %1422
      %1424 = vrot.lane.b32.xlu0 %v1376, 80
      %v1425 = vpop.permute.xlu0 %1424
      %1426 = vrot.lane.b32.xlu0 %v1380, 80
      %v1427 = vpop.permute.xlu0 %1426
      %1428 = vrot.lane.b32.xlu0 %v1384, 80
      %v1429 = vpop.permute.xlu0 %1428
      %1430 = vrot.lane.b32.xlu0 %v1388, 80
      %v1431 = vpop.permute.xlu0 %1430
      %1432 = vrot.lane.b32.xlu0 %v1392, 80
      %v1433 = vpop.permute.xlu0 %1432
      %1434 = vrot.lane.b32.xlu0 %v1401, 80
      %v1435 = vpop.permute.xlu0 %1434
      %1436 = vrot.lane.b32.xlu0 %v1410, 80
      %v1437 = vpop.permute.xlu0 %1436
      %1438 = vrot.lane.b32.xlu0 %v1419, 80
      %v1439 = vpop.permute.xlu0 %1438
      %1440 = vrot.lane.b32.xlu0 %v1418, 80
      %v1441 = vpop.permute.xlu0 %1440
      %v1443 = vunpack.c.l.b16 %v677
      %v1444 = vpack.c.b16 %v726, %v1443
      %v1445 = vrot.slane %v1444, 2
      %v1446 = vsel %vm1080, %v1445, %v1086
      %v1447 = vrot.slane %v1307, 2
      %v1448 = vsel %vm1080, %v1098, %v1447
      %v1449 = vrot.slane %v1308, 2
      %v1450 = vsel %vm1080, %v1447, %v1449
      %v1451 = vrot.slane %v1355, 2
      %v1452 = vsel %vm1080, %v1449, %v1451
      %1453 = vrot.lane.b32.xlu0 %v1446, 88
      %v1454 = vpop.permute.xlu0 %1453
      %1455 = vrot.lane.b32.xlu0 %v1089, 88
      %v1456 = vpop.permute.xlu0 %1455
      %1457 = vrot.lane.b32.xlu0 %v1091, 88
      %v1458 = vpop.permute.xlu0 %1457
      %1459 = vrot.lane.b32.xlu0 %v1093, 88
      %v1460 = vpop.permute.xlu0 %1459
      %1461 = vrot.lane.b32.xlu0 %v1095, 88
      %v1462 = vpop.permute.xlu0 %1461
      %1463 = vrot.lane.b32.xlu0 %v1097, 88
      %v1464 = vpop.permute.xlu0 %1463
      %1465 = vrot.lane.b32.xlu0 %v1099, 88
      %v1466 = vpop.permute.xlu0 %1465
      %1467 = vrot.lane.b32.xlu0 %v1448, 88
      %v1468 = vpop.permute.xlu0 %1467
      %1469 = vrot.lane.b32.xlu0 %v1450, 88
      %v1470 = vpop.permute.xlu0 %1469
      %1471 = vrot.lane.b32.xlu0 %v1452, 88
      %v1472 = vpop.permute.xlu0 %1471
      %1473 = vrot.lane.b32.xlu0 %v1451, 88
      %v1474 = vpop.permute.xlu0 %1473
      %v1476 = vunpack.c.l.b16 %v678
      %v1477 = vpack.c.b16 %v1302, %v1301
      %v1478 = vpack.c.b16 %v1304, %v1303
      %v1479 = vpack.c.b16 %v1476, %v1476
      %1480 = vrot.lane.b32.xlu0 %v744, 96
      %v1481 = vpop.permute.xlu0 %1480
      %1482 = vrot.lane.b32.xlu0 %v745, 96
      %v1483 = vpop.permute.xlu0 %1482
      %1484 = vrot.lane.b32.xlu0 %v746, 96
      %v1485 = vpop.permute.xlu0 %1484
      %1486 = vrot.lane.b32.xlu0 %v747, 96
      %v1487 = vpop.permute.xlu0 %1486
      %1488 = vrot.lane.b32.xlu0 %v748, 96
      %v1489 = vpop.permute.xlu0 %1488
      %1490 = vrot.lane.b32.xlu0 %v749, 96
      %v1491 = vpop.permute.xlu0 %1490
      %1492 = vrot.lane.b32.xlu0 %v750, 96
      %v1493 = vpop.permute.xlu0 %1492
      %1494 = vrot.lane.b32.xlu0 %v964, 96
      %v1495 = vpop.permute.xlu0 %1494
      %1496 = vrot.lane.b32.xlu0 %v1477, 96
      %v1497 = vpop.permute.xlu0 %1496
      %1498 = vrot.lane.b32.xlu0 %v1478, 96
      %v1499 = vpop.permute.xlu0 %1498
      %1500 = vrot.lane.b32.xlu0 %v1479, 96
      %v1501 = vpop.permute.xlu0 %1500
      %v1503 = vunpack.c.l.b16 %v679
      %v1504 = vpack.c.b16 %v1503, %v1476
      %v1505 = vrot.slane %v1014, 1
      %v1506 = vsel %vm755, %v834, %v1505
      %v1507 = vor.u32 %v1011, %v1505
      %v1509 = vshll.u32 %v1477, 16
      %v1511 = vrot.slane %v1509, 1
      %v1512 = vsel %vm755, %v1507, %v1511
      %v1513 = vshrl.u32 %v1477, 16
      %v1515 = vor.u32 %v1513, %v1511
      %v1517 = vshll.u32 %v1478, 16
      %v1519 = vrot.slane %v1517, 1
      %v1520 = vsel %vm755, %v1515, %v1519
      %v1521 = vshrl.u32 %v1478, 16
      %v1523 = vor.u32 %v1521, %v1519
      %v1525 = vshll.u32 %v1504, 16
      %v1527 = vrot.slane %v1525, 1
      %v1528 = vsel %vm755, %v1523, %v1527
      %v1529 = vshrl.u32 %v1504, 16
      %v1531 = vor.u32 %v1529, %v1527
      %1532 = vrot.lane.b32.xlu0 %v791, 104
      %v1533 = vpop.permute.xlu0 %1532
      %1534 = vrot.lane.b32.xlu0 %v799, 104
      %v1535 = vpop.permute.xlu0 %1534
      %1536 = vrot.lane.b32.xlu0 %v807, 104
      %v1537 = vpop.permute.xlu0 %1536
      %1538 = vrot.lane.b32.xlu0 %v815, 104
      %v1539 = vpop.permute.xlu0 %1538
      %1540 = vrot.lane.b32.xlu0 %v823, 104
      %v1541 = vpop.permute.xlu0 %1540
      %1542 = vrot.lane.b32.xlu0 %v831, 104
      %v1543 = vpop.permute.xlu0 %1542
      %1544 = vrot.lane.b32.xlu0 %v1506, 104
      %v1545 = vpop.permute.xlu0 %1544
      %1546 = vrot.lane.b32.xlu0 %v1512, 104
      %v1547 = vpop.permute.xlu0 %1546
      %1548 = vrot.lane.b32.xlu0 %v1520, 104
      %v1549 = vpop.permute.xlu0 %1548
      %1550 = vrot.lane.b32.xlu0 %v1528, 104
      %v1551 = vpop.permute.xlu0 %1550
      %1552 = vrot.lane.b32.xlu0 %v1531, 104
      %v1553 = vpop.permute.xlu0 %1552
      %v1555 = vunpack.c.l.b16 %v680
      %v1556 = vpack.c.b16 %v727, %v1555
      %v1557 = vrot.slane %v1556, 1
      %v1558 = vsel %vm868, %v1557, %v876
      %v1559 = vrot.slane %v964, 1
      %v1560 = vsel %vm868, %v886, %v1559
      %v1561 = vrot.slane %v1477, 1
      %v1562 = vsel %vm868, %v1559, %v1561
      %v1563 = vrot.slane %v1478, 1
      %v1564 = vsel %vm868, %v1561, %v1563
      %v1565 = vrot.slane %v1504, 1
      %v1566 = vsel %vm868, %v1563, %v1565
      %1567 = vrot.lane.b32.xlu0 %v1558, 112
      %v1568 = vpop.permute.xlu0 %1567
      %1569 = vrot.lane.b32.xlu0 %v879, 112
      %v1570 = vpop.permute.xlu0 %1569
      %1571 = vrot.lane.b32.xlu0 %v881, 112
      %v1572 = vpop.permute.xlu0 %1571
      %1573 = vrot.lane.b32.xlu0 %v883, 112
      %v1574 = vpop.permute.xlu0 %1573
      %1575 = vrot.lane.b32.xlu0 %v885, 112
      %v1576 = vpop.permute.xlu0 %1575
      %1577 = vrot.lane.b32.xlu0 %v887, 112
      %v1578 = vpop.permute.xlu0 %1577
      %1579 = vrot.lane.b32.xlu0 %v1560, 112
      %v1580 = vpop.permute.xlu0 %1579
      %1581 = vrot.lane.b32.xlu0 %v1562, 112
      %v1582 = vpop.permute.xlu0 %1581
      %1583 = vrot.lane.b32.xlu0 %v1564, 112
      %v1584 = vpop.permute.xlu0 %1583
      %1585 = vrot.lane.b32.xlu0 %v1566, 112
      %v1586 = vpop.permute.xlu0 %1585
      %1587 = vrot.lane.b32.xlu0 %v1565, 112
      %v1588 = vpop.permute.xlu0 %1587
      %v1591 = vunpack.c.l.b16 %v681
      %v1592 = vunpack.c.l.b16 %v682
      %v1593 = vpack.c.b16 %v727, %v1591
      %v1594 = vpack.c.b16 %v1592, %v1476
      %v1595 = vrot.slane %v1593, 3
      %v1596 = vsel %vm918, %v1595, %v926
      %v1597 = vrot.slane %v964, 3
      %v1598 = vsel %vm918, %v936, %v1597
      %v1599 = vrot.slane %v1477, 3
      %v1600 = vsel %vm918, %v1597, %v1599
      %v1601 = vrot.slane %v1478, 3
      %v1602 = vsel %vm918, %v1599, %v1601
      %v1603 = vrot.slane %v1594, 3
      %v1604 = vsel %vm918, %v1601, %v1603
      %1605 = vrot.lane.b32.xlu0 %v1596, 120
      %v1606 = vpop.permute.xlu0 %1605
      %1607 = vrot.lane.b32.xlu0 %v929, 120
      %v1608 = vpop.permute.xlu0 %1607
      %1609 = vrot.lane.b32.xlu0 %v931, 120
      %v1610 = vpop.permute.xlu0 %1609
      %1611 = vrot.lane.b32.xlu0 %v933, 120
      %v1612 = vpop.permute.xlu0 %1611
      %1613 = vrot.lane.b32.xlu0 %v935, 120
      %v1614 = vpop.permute.xlu0 %1613
      %1615 = vrot.lane.b32.xlu0 %v937, 120
      %v1616 = vpop.permute.xlu0 %1615
      %1617 = vrot.lane.b32.xlu0 %v1598, 120
      %v1618 = vpop.permute.xlu0 %1617
      %1619 = vrot.lane.b32.xlu0 %v1600, 120
      %v1620 = vpop.permute.xlu0 %1619
      %1621 = vrot.lane.b32.xlu0 %v1602, 120
      %v1622 = vpop.permute.xlu0 %1621
      %1623 = vrot.lane.b32.xlu0 %v1604, 120
      %v1624 = vpop.permute.xlu0 %1623
      %1625 = vrot.lane.b32.xlu0 %v1603, 120
      %v1626 = vpop.permute.xlu0 %1625
      %vm1627 = vcmask 64512
      %v1629 = vsel %vm1627, %v741, %v844
      %v1631 = vsel %vm1627, %v742, %v846
      %v1633 = vsel %vm1627, %v743, %v848
      %v1635 = vsel %vm1627, %v744, %v850
      %v1637 = vsel %vm1627, %v745, %v852
      %v1639 = vsel %vm1627, %v746, %v854
      %v1641 = vsel %vm1627, %v747, %v856
      %v1643 = vsel %vm1627, %v748, %v858
      %v1645 = vsel %vm1627, %v749, %v860
      %v1647 = vsel %vm1627, %v750, %v862
      %v1650 = vsel %vm1627, %v751, %v864
      %vm1651 = vcmask 130048
      %v1653 = vsel %vm1651, %v1629, %v891
      %v1655 = vsel %vm1651, %v1631, %v893
      %v1657 = vsel %vm1651, %v1633, %v895
      %v1659 = vsel %vm1651, %v1635, %v897
      %v1661 = vsel %vm1651, %v1637, %v899
      %v1663 = vsel %vm1651, %v1639, %v901
      %v1665 = vsel %vm1651, %v1641, %v903
      %v1667 = vsel %vm1651, %v1643, %v905
      %v1669 = vsel %vm1651, %v1645, %v907
      %v1671 = vsel %vm1651, %v1647, %v909
      %v1673 = vsel %vm1651, %v1650, %v911
      %vm1674 = vcmask 195584
      %v1676 = vsel %vm1674, %v1653, %v941
      %v1678 = vsel %vm1674, %v1655, %v943
      %v1680 = vsel %vm1674, %v1657, %v945
      %v1682 = vsel %vm1674, %v1659, %v947
      %v1684 = vsel %vm1674, %v1661, %v949
      %v1686 = vsel %vm1674, %v1663, %v951
      %v1688 = vsel %vm1674, %v1665, %v953
      %v1690 = vsel %vm1674, %v1667, %v955
      %v1692 = vsel %vm1674, %v1669, %v957
      %v1694 = vsel %vm1674, %v1671, %v959
      %v1696 = vsel %vm1674, %v1673, %v961
      %vm1697 = vcmask 261120
      %v1699 = vsel %vm1697, %v1676, %v1020
      %v1701 = vsel %vm1697, %v1678, %v1022
      %v1703 = vsel %vm1697, %v1680, %v1024
      %v1705 = vsel %vm1697, %v1682, %v1026
      %v1707 = vsel %vm1697, %v1684, %v1028
      %v1709 = vsel %vm1697, %v1686, %v1030
      %v1711 = vsel %vm1697, %v1688, %v1032
      %v1713 = vsel %vm1697, %v1690, %v1034
      %v1715 = vsel %vm1697, %v1692, %v1036
      %v1717 = vsel %vm1697, %v1694, %v1038
      %v1719 = vsel %vm1697, %v1696, %v1040
      %vm1720 = vcmask 326656
      %v1722 = vsel %vm1720, %v1699, %v1053
      %v1724 = vsel %vm1720, %v1701, %v1055
      %v1726 = vsel %vm1720, %v1703, %v1057
      %v1728 = vsel %vm1720, %v1705, %v1059
      %v1730 = vsel %vm1720, %v1707, %v1061
      %v1732 = vsel %vm1720, %v1709, %v1063
      %v1734 = vsel %vm1720, %v1711, %v1065
      %v1736 = vsel %vm1720, %v1713, %v1067
      %v1738 = vsel %vm1720, %v1715, %v1069
      %v1740 = vsel %vm1720, %v1717, %v1071
      %v1742 = vsel %vm1720, %v1719, %v1073
      %vm1743 = vcmask 392192
      %v1745 = vsel %vm1743, %v1722, %v1103
      %v1747 = vsel %vm1743, %v1724, %v1105
      %v1749 = vsel %vm1743, %v1726, %v1107
      %v1751 = vsel %vm1743, %v1728, %v1109
      %v1753 = vsel %vm1743, %v1730, %v1111
      %v1755 = vsel %vm1743, %v1732, %v1113
      %v1757 = vsel %vm1743, %v1734, %v1115
      %v1759 = vsel %vm1743, %v1736, %v1117
      %v1761 = vsel %vm1743, %v1738, %v1119
      %v1763 = vsel %vm1743, %v1740, %v1121
      %v1765 = vsel %vm1743, %v1742, %v1123
      %vm1766 = vcmask 457728
      %v1768 = vsel %vm1766, %v1745, %v1227
      %v1770 = vsel %vm1766, %v1747, %v1229
      %v1772 = vsel %vm1766, %v1749, %v1231
      %v1774 = vsel %vm1766, %v1751, %v1233
      %v1776 = vsel %vm1766, %v1753, %v1235
      %v1778 = vsel %vm1766, %v1755, %v1237
      %v1780 = vsel %vm1766, %v1757, %v1239
      %v1782 = vsel %vm1766, %v1759, %v1241
      %v1784 = vsel %vm1766, %v1761, %v1243
      %v1786 = vsel %vm1766, %v1763, %v1245
      %v1788 = vsel %vm1766, %v1765, %v1247
      %vm1789 = vcmask 523264
      %v1791 = vsel %vm1789, %v1768, %v1273
      %v1793 = vsel %vm1789, %v1770, %v1275
      %v1795 = vsel %vm1789, %v1772, %v1277
      %v1797 = vsel %vm1789, %v1774, %v1279
      %v1799 = vsel %vm1789, %v1776, %v1281
      %v1801 = vsel %vm1789, %v1778, %v1283
      %v1803 = vsel %vm1789, %v1780, %v1285
      %v1805 = vsel %vm1789, %v1782, %v1287
      %v1807 = vsel %vm1789, %v1784, %v1289
      %v1809 = vsel %vm1789, %v1786, %v1291
      %v1811 = vsel %vm1789, %v1788, %v1293
      %vm1812 = vcmask 588800
      %v1814 = vsel %vm1812, %v1791, %v1332
      %v1816 = vsel %vm1812, %v1793, %v1334
      %v1818 = vsel %vm1812, %v1795, %v1336
      %v1820 = vsel %vm1812, %v1797, %v1338
      %v1822 = vsel %vm1812, %v1799, %v1340
      %v1824 = vsel %vm1812, %v1801, %v1342
      %v1826 = vsel %vm1812, %v1803, %v1344
      %v1828 = vsel %vm1812, %v1805, %v1346
      %v1830 = vsel %vm1812, %v1807, %v1348
      %v1832 = vsel %vm1812, %v1809, %v1350
      %v1834 = vsel %vm1812, %v1811, %v1352
      %vm1835 = vcmask 654336
      %v1837 = vsel %vm1835, %v1814, %v1421
      %v1839 = vsel %vm1835, %v1816, %v1423
      %v1841 = vsel %vm1835, %v1818, %v1425
      %v1843 = vsel %vm1835, %v1820, %v1427
      %v1845 = vsel %vm1835, %v1822, %v1429
      %v1847 = vsel %vm1835, %v1824, %v1431
      %v1849 = vsel %vm1835, %v1826, %v1433
      %v1851 = vsel %vm1835, %v1828, %v1435
      %v1853 = vsel %vm1835, %v1830, %v1437
      %v1855 = vsel %vm1835, %v1832, %v1439
      %v1857 = vsel %vm1835, %v1834, %v1441
      %vm1858 = vcmask 719872
      %v1860 = vsel %vm1858, %v1837, %v1454
      %v1862 = vsel %vm1858, %v1839, %v1456
      %v1864 = vsel %vm1858, %v1841, %v1458
      %v1866 = vsel %vm1858, %v1843, %v1460
      %v1868 = vsel %vm1858, %v1845, %v1462
      %v1870 = vsel %vm1858, %v1847, %v1464
      %v1872 = vsel %vm1858, %v1849, %v1466
      %v1874 = vsel %vm1858, %v1851, %v1468
      %v1876 = vsel %vm1858, %v1853, %v1470
      %v1878 = vsel %vm1858, %v1855, %v1472
      %v1880 = vsel %vm1858, %v1857, %v1474
      %vm1881 = vcmask 785408
      %v1883 = vsel %vm1881, %v1860, %v1481
      %v1885 = vsel %vm1881, %v1862, %v1483
      %v1887 = vsel %vm1881, %v1864, %v1485
      %v1889 = vsel %vm1881, %v1866, %v1487
      %v1891 = vsel %vm1881, %v1868, %v1489
      %v1893 = vsel %vm1881, %v1870, %v1491
      %v1895 = vsel %vm1881, %v1872, %v1493
      %v1897 = vsel %vm1881, %v1874, %v1495
      %v1899 = vsel %vm1881, %v1876, %v1497
      %v1901 = vsel %vm1881, %v1878, %v1499
      %v1903 = vsel %vm1881, %v1880, %v1501
      %vm1904 = vcmask 850944
      %v1906 = vsel %vm1904, %v1883, %v1533
      %v1908 = vsel %vm1904, %v1885, %v1535
      %v1910 = vsel %vm1904, %v1887, %v1537
      %v1912 = vsel %vm1904, %v1889, %v1539
      %v1914 = vsel %vm1904, %v1891, %v1541
      %v1916 = vsel %vm1904, %v1893, %v1543
      %v1918 = vsel %vm1904, %v1895, %v1545
      %v1920 = vsel %vm1904, %v1897, %v1547
      %v1922 = vsel %vm1904, %v1899, %v1549
      %v1924 = vsel %vm1904, %v1901, %v1551
      %v1926 = vsel %vm1904, %v1903, %v1553
      %vm1927 = vcmask 916480
      %v1929 = vsel %vm1927, %v1906, %v1568
      %v1931 = vsel %vm1927, %v1908, %v1570
      %v1933 = vsel %vm1927, %v1910, %v1572
      %v1935 = vsel %vm1927, %v1912, %v1574
      %v1937 = vsel %vm1927, %v1914, %v1576
      %v1939 = vsel %vm1927, %v1916, %v1578
      %v1941 = vsel %vm1927, %v1918, %v1580
      %v1943 = vsel %vm1927, %v1920, %v1582
      %v1945 = vsel %vm1927, %v1922, %v1584
      %v1947 = vsel %vm1927, %v1924, %v1586
      %v1949 = vsel %vm1927, %v1926, %v1588
      %vm1950 = vcmask 982016
      %v1952 = vsel %vm1950, %v1929, %v1606
      %v1955 = vsel %vm1950, %v1931, %v1608
      %v1958 = vsel %vm1950, %v1933, %v1610
      %v1961 = vsel %vm1950, %v1935, %v1612
      %v1964 = vsel %vm1950, %v1937, %v1614
      %v1967 = vsel %vm1950, %v1939, %v1616
      %v1970 = vsel %vm1950, %v1941, %v1618
      %v1973 = vsel %vm1950, %v1943, %v1620
      %v1976 = vsel %vm1950, %v1945, %v1622
      %v1979 = vsel %vm1950, %v1947, %v1624
      %v1982 = vsel %vm1950, %v1949, %v1626
      %v1985 = vunpack.c.l.b16 %v683
      %v1986 = vpack.c.b16 %v1985, %v1476
      %v1987 = vpack.c.b16 %v1476, %v1304
      %v1988 = vpack.c.b16 %v1985, %v1985
      %vm1989 = vsmask.f32 3328
      %v1990 = vrot.slane %v1155, 4
      %v1991 = vrot.slane %v1158, 5
      %v1992 = vor.u32 %v1990, %v1991
      %v1993 = vrot.slane %v1164, 4
      %v1994 = vrot.slane %v1167, 5
      %v1995 = vor.u32 %v1993, %v1994
      %v1996 = vsel %vm1989, %v1992, %v1995
      %v1997 = vrot.slane %v1173, 4
      %v1998 = vrot.slane %v1176, 5
      %v1999 = vor.u32 %v1997, %v1998
      %v2000 = vsel %vm1989, %v1995, %v1999
      %v2001 = vrot.slane %v1182, 4
      %v2002 = vrot.slane %v1185, 5
      %v2003 = vor.u32 %v2001, %v2002
      %v2004 = vsel %vm1989, %v1999, %v2003
      %v2005 = vrot.slane %v1191, 4
      %v2006 = vrot.slane %v1194, 5
      %v2007 = vor.u32 %v2005, %v2006
      %v2008 = vsel %vm1989, %v2003, %v2007
      %v2009 = vrot.slane %v1200, 4
      %v2010 = vrot.slane %v1203, 5
      %v2011 = vor.u32 %v2009, %v2010
      %v2012 = vsel %vm1989, %v2007, %v2011
      %v2013 = vrot.slane %v1209, 4
      %v2014 = vrot.slane %v1212, 5
      %v2015 = vor.u32 %v2013, %v2014
      %v2016 = vsel %vm1989, %v2011, %v2015
      %v2017 = vrot.slane %v1394, 4
      %v2018 = vrot.slane %v1397, 5
      %v2019 = vor.u32 %v2017, %v2018
      %v2020 = vsel %vm1989, %v2015, %v2019
      %v2021 = vrot.slane %v1403, 4
      %v2022 = vrot.slane %v1406, 5
      %v2023 = vor.u32 %v2021, %v2022
      %v2024 = vsel %vm1989, %v2019, %v2023
      %v2026 = vshrl.u32 %v1987, 16
      %v2028 = vrot.slane %v2026, 4
      %v2029 = vshll.u32 %v1987, 16
      %v2031 = vrot.slane %v2029, 5
      %v2032 = vor.u32 %v2028, %v2031
      %v2033 = vsel %vm1989, %v2023, %v2032
      %v2035 = vshrl.u32 %v1988, 16
      %v2037 = vrot.slane %v2035, 4
      %v2038 = vshll.u32 %v1988, 16
      %v2040 = vrot.slane %v2038, 5
      %v2041 = vor.u32 %v2037, %v2040
      %v2042 = vsel %vm1989, %v2032, %v2041
      %2043 = vrot.lane.b32.xlu0 %v1992, 8
      %v2044 = vpop.permute.xlu0 %2043
      %2045 = vrot.lane.b32.xlu0 %v1996, 8
      %v2046 = vpop.permute.xlu0 %2045
      %2047 = vrot.lane.b32.xlu0 %v2000, 8
      %v2048 = vpop.permute.xlu0 %2047
      %2049 = vrot.lane.b32.xlu0 %v2004, 8
      %v2050 = vpop.permute.xlu0 %2049
      %2051 = vrot.lane.b32.xlu0 %v2008, 8
      %v2052 = vpop.permute.xlu0 %2051
      %2053 = vrot.lane.b32.xlu0 %v2012, 8
      %v2054 = vpop.permute.xlu0 %2053
      %2055 = vrot.lane.b32.xlu0 %v2016, 8
      %v2056 = vpop.permute.xlu0 %2055
      %2057 = vrot.lane.b32.xlu0 %v2020, 8
      %v2058 = vpop.permute.xlu0 %2057
      %2059 = vrot.lane.b32.xlu0 %v2024, 8
      %v2060 = vpop.permute.xlu0 %2059
      %2061 = vrot.lane.b32.xlu0 %v2033, 8
      %v2062 = vpop.permute.xlu0 %2061
      %2063 = vrot.lane.b32.xlu0 %v2042, 8
      %v2064 = vpop.permute.xlu0 %2063
      %v2070 = vunpack.c.l.b16 %v684
      %v2071 = vunpack.c.l.b16 %v685
      %v2072 = vunpack.c.l.b16 %v686
      %v2073 = vunpack.c.l.b16 %v687
      %v2074 = vunpack.c.l.b16 %v688
      %v2075 = vpack.c.b16 %v731, %v2070
      %v2076 = vpack.c.b16 %v2072, %v2071
      %v2077 = vpack.c.b16 %v2074, %v2073
      %vm2078 = vsmask.f32 1280
      %v2080 = vshrl.u32 %v2075, 16
      %v2082 = vrot.slane %v2080, 6
      %v2083 = vshll.u32 %v2075, 16
      %v2085 = vrot.slane %v2083, 7
      %v2086 = vor.u32 %v2082, %v2085
      %v2087 = vrot.slane %v808, 6
      %v2088 = vrot.slane %v804, 7
      %v2089 = vor.u32 %v2087, %v2088
      %v2090 = vsel %vm2078, %v2086, %v2089
      %v2091 = vrot.slane %v816, 6
      %v2092 = vrot.slane %v812, 7
      %v2093 = vor.u32 %v2091, %v2092
      %v2094 = vsel %vm2078, %v2089, %v2093
      %v2095 = vrot.slane %v824, 6
      %v2096 = vrot.slane %v820, 7
      %v2097 = vor.u32 %v2095, %v2096
      %v2098 = vsel %vm2078, %v2093, %v2097
      %v2099 = vrot.slane %v832, 6
      %v2100 = vrot.slane %v828, 7
      %v2101 = vor.u32 %v2099, %v2100
      %v2102 = vsel %vm2078, %v2097, %v2101
      %v2103 = vrot.slane %v1011, 6
      %v2104 = vrot.slane %v1014, 7
      %v2105 = vor.u32 %v2103, %v2104
      %v2106 = vsel %vm2078, %v2101, %v2105
      %v2107 = vrot.slane %v1513, 6
      %v2108 = vrot.slane %v1509, 7
      %v2109 = vor.u32 %v2107, %v2108
      %v2110 = vsel %vm2078, %v2105, %v2109
      %v2111 = vrot.slane %v1521, 6
      %v2112 = vrot.slane %v1517, 7
      %v2113 = vor.u32 %v2111, %v2112
      %v2114 = vsel %vm2078, %v2109, %v2113
      %v2116 = vshrl.u32 %v1986, 16
      %v2118 = vrot.slane %v2116, 6
      %v2119 = vshll.u32 %v1986, 16
      %v2121 = vrot.slane %v2119, 7
      %v2122 = vor.u32 %v2118, %v2121
      %v2123 = vsel %vm2078, %v2113, %v2122
      %v2125 = vshrl.u32 %v2076, 16
      %v2127 = vrot.slane %v2125, 6
      %v2128 = vshll.u32 %v2076, 16
      %v2130 = vrot.slane %v2128, 7
      %v2131 = vor.u32 %v2127, %v2130
      %v2132 = vsel %vm2078, %v2122, %v2131
      %v2134 = vshrl.u32 %v2077, 16
      %v2136 = vrot.slane %v2134, 6
      %v2137 = vshll.u32 %v2077, 16
      %v2139 = vrot.slane %v2137, 7
      %v2140 = vor.u32 %v2136, %v2139
      %v2141 = vsel %vm2078, %v2131, %v2140
      %2142 = vrot.lane.b32.xlu0 %v2086, 16
      %v2143 = vpop.permute.xlu0 %2142
      %2144 = vrot.lane.b32.xlu0 %v2090, 16
      %v2145 = vpop.permute.xlu0 %2144
      %2146 = vrot.lane.b32.xlu0 %v2094, 16
      %v2147 = vpop.permute.xlu0 %2146
      %2148 = vrot.lane.b32.xlu0 %v2098, 16
      %v2149 = vpop.permute.xlu0 %2148
      %2150 = vrot.lane.b32.xlu0 %v2102, 16
      %v2151 = vpop.permute.xlu0 %2150
      %2152 = vrot.lane.b32.xlu0 %v2106, 16
      %v2153 = vpop.permute.xlu0 %2152
      %2154 = vrot.lane.b32.xlu0 %v2110, 16
      %v2155 = vpop.permute.xlu0 %2154
      %2156 = vrot.lane.b32.xlu0 %v2114, 16
      %v2157 = vpop.permute.xlu0 %2156
      %2158 = vrot.lane.b32.xlu0 %v2123, 16
      %v2159 = vpop.permute.xlu0 %2158
      %2160 = vrot.lane.b32.xlu0 %v2132, 16
      %v2161 = vpop.permute.xlu0 %2160
      %2162 = vrot.lane.b32.xlu0 %v2141, 16
      %v2163 = vpop.permute.xlu0 %2162
      %v2165 = vunpack.c.l.b16 %v689
      %v2166 = vpack.c.b16 %v2165, %v2073
      %v2167 = vrot.slane %v2075, 7
      %v2168 = vrot.slane %v747, 7
      %v2169 = vsel %vm461, %v2167, %v2168
      %v2170 = vrot.slane %v748, 7
      %v2171 = vsel %vm461, %v2168, %v2170
      %v2172 = vrot.slane %v749, 7
      %v2173 = vsel %vm461, %v2170, %v2172
      %v2174 = vrot.slane %v750, 7
      %v2175 = vsel %vm461, %v2172, %v2174
      %v2176 = vrot.slane %v964, 7
      %v2177 = vsel %vm461, %v2174, %v2176
      %v2178 = vrot.slane %v1477, 7
      %v2179 = vsel %vm461, %v2176, %v2178
      %v2180 = vrot.slane %v1478, 7
      %v2181 = vsel %vm461, %v2178, %v2180
      %v2182 = vrot.slane %v1986, 7
      %v2183 = vsel %vm461, %v2180, %v2182
      %v2184 = vrot.slane %v2076, 7
      %v2185 = vsel %vm461, %v2182, %v2184
      %v2186 = vrot.slane %v2166, 7
      %v2187 = vsel %vm461, %v2184, %v2186
      %2188 = vrot.lane.b32.xlu0 %v2167, 24
      %v2189 = vpop.permute.xlu0 %2188
      %2190 = vrot.lane.b32.xlu0 %v2169, 24
      %v2191 = vpop.permute.xlu0 %2190
      %2192 = vrot.lane.b32.xlu0 %v2171, 24
      %v2193 = vpop.permute.xlu0 %2192
      %2194 = vrot.lane.b32.xlu0 %v2173, 24
      %v2195 = vpop.permute.xlu0 %2194
      %2196 = vrot.lane.b32.xlu0 %v2175, 24
      %v2197 = vpop.permute.xlu0 %2196
      %2198 = vrot.lane.b32.xlu0 %v2177, 24
      %v2199 = vpop.permute.xlu0 %2198
      %2200 = vrot.lane.b32.xlu0 %v2179, 24
      %v2201 = vpop.permute.xlu0 %2200
      %2202 = vrot.lane.b32.xlu0 %v2181, 24
      %v2203 = vpop.permute.xlu0 %2202
      %2204 = vrot.lane.b32.xlu0 %v2183, 24
      %v2205 = vpop.permute.xlu0 %2204
      %2206 = vrot.lane.b32.xlu0 %v2185, 24
      %v2207 = vpop.permute.xlu0 %2206
      %2208 = vrot.lane.b32.xlu0 %v2187, 24
      %v2209 = vpop.permute.xlu0 %2208
      %v2211 = vunpack.c.l.b16 %v690
      %v2212 = vpack.c.b16 %v731, %v2211
      %vm2213 = vsmask.f32 256
      %v2215 = vshrl.u32 %v2212, 16
      %v2217 = vrot.slane %v2215, 7
      %v2218 = vshll.u32 %v2212, 16
      %v2220 = vor.u32 %v2217, %v2218
      %v2221 = vrot.slane %v808, 7
      %v2222 = vor.u32 %v2221, %v804
      %v2223 = vsel %vm2213, %v2217, %v2222
      %v2224 = vrot.slane %v816, 7
      %v2225 = vor.u32 %v2224, %v812
      %v2226 = vsel %vm2213, %v2221, %v2225
      %v2227 = vrot.slane %v824, 7
      %v2228 = vor.u32 %v2227, %v820
      %v2229 = vsel %vm2213, %v2224, %v2228
      %v2230 = vrot.slane %v832, 7
      %v2231 = vor.u32 %v2230, %v828
      %v2232 = vsel %vm2213, %v2227, %v2231
      %v2233 = vrot.slane %v1011, 7
      %v2234 = vor.u32 %v2233, %v1014
      %v2235 = vsel %vm2213, %v2230, %v2234
      %v2236 = vrot.slane %v1513, 7
      %v2237 = vor.u32 %v2236, %v1509
      %v2238 = vsel %vm2213, %v2233, %v2237
      %v2239 = vrot.slane %v1521, 7
      %v2240 = vor.u32 %v2239, %v1517
      %v2241 = vsel %vm2213, %v2236, %v2240
      %v2242 = vrot.slane %v2116, 7
      %v2243 = vor.u32 %v2242, %v2119
      %v2244 = vsel %vm2213, %v2239, %v2243
      %v2245 = vrot.slane %v2125, 7
      %v2246 = vor.u32 %v2245, %v2128
      %v2247 = vsel %vm2213, %v2242, %v2246
      %v2249 = vshrl.u32 %v2166, 16
      %v2251 = vrot.slane %v2249, 7
      %v2252 = vshll.u32 %v2166, 16
      %v2254 = vor.u32 %v2251, %v2252
      %v2255 = vsel %vm2213, %v2245, %v2254
      %2256 = vrot.lane.b32.xlu0 %v2220, 32
      %v2257 = vpop.permute.xlu0 %2256
      %2258 = vrot.lane.b32.xlu0 %v2223, 32
      %v2259 = vpop.permute.xlu0 %2258
      %2260 = vrot.lane.b32.xlu0 %v2226, 32
      %v2261 = vpop.permute.xlu0 %2260
      %2262 = vrot.lane.b32.xlu0 %v2229, 32
      %v2263 = vpop.permute.xlu0 %2262
      %2264 = vrot.lane.b32.xlu0 %v2232, 32
      %v2265 = vpop.permute.xlu0 %2264
      %2266 = vrot.lane.b32.xlu0 %v2235, 32
      %v2267 = vpop.permute.xlu0 %2266
      %2268 = vrot.lane.b32.xlu0 %v2238, 32
      %v2269 = vpop.permute.xlu0 %2268
      %2270 = vrot.lane.b32.xlu0 %v2241, 32
      %v2271 = vpop.permute.xlu0 %2270
      %2272 = vrot.lane.b32.xlu0 %v2244, 32
      %v2273 = vpop.permute.xlu0 %2272
      %2274 = vrot.lane.b32.xlu0 %v2247, 32
      %v2275 = vpop.permute.xlu0 %2274
      %2276 = vrot.lane.b32.xlu0 %v2255, 32
      %v2277 = vpop.permute.xlu0 %2276
      %v2281 = vunpack.c.l.b16 %v691
      %v2282 = vunpack.c.l.b16 %v692
      %v2283 = vunpack.c.l.b16 %v693
      %v2284 = vpack.c.b16 %v732, %v2281
      %v2285 = vpack.c.b16 %v2071, %v1985
      %v2286 = vpack.c.b16 %v2073, %v2072
      %v2287 = vpack.c.b16 %v2283, %v2282
      %vm2288 = vsmask.f32 2304
      %v2290 = vshrl.u32 %v2284, 16
      %v2292 = vrot.slane %v2290, 5
      %v2293 = vshll.u32 %v2284, 16
      %v2295 = vrot.slane %v2293, 6
      %v2296 = vor.u32 %v2292, %v2295
      %v2297 = vrot.slane %v1182, 5
      %v2298 = vrot.slane %v1185, 6
      %v2299 = vor.u32 %v2297, %v2298
      %v2300 = vsel %vm2288, %v2296, %v2299
      %v2301 = vrot.slane %v1191, 5
      %v2302 = vrot.slane %v1194, 6
      %v2303 = vor.u32 %v2301, %v2302
      %v2304 = vsel %vm2288, %v2299, %v2303
      %v2305 = vrot.slane %v1200, 5
      %v2306 = vrot.slane %v1203, 6
      %v2307 = vor.u32 %v2305, %v2306
      %v2308 = vsel %vm2288, %v2303, %v2307
      %v2309 = vrot.slane %v1209, 5
      %v2310 = vrot.slane %v1212, 6
      %v2311 = vor.u32 %v2309, %v2310
      %v2312 = vsel %vm2288, %v2307, %v2311
      %v2313 = vrot.slane %v1394, 5
      %v2314 = vrot.slane %v1397, 6
      %v2315 = vor.u32 %v2313, %v2314
      %v2316 = vsel %vm2288, %v2311, %v2315
      %v2317 = vrot.slane %v1403, 5
      %v2318 = vrot.slane %v1406, 6
      %v2319 = vor.u32 %v2317, %v2318
      %v2320 = vsel %vm2288, %v2315, %v2319
      %v2321 = vrot.slane %v2026, 5
      %v2322 = vrot.slane %v2029, 6
      %v2323 = vor.u32 %v2321, %v2322
      %v2324 = vsel %vm2288, %v2319, %v2323
      %v2326 = vshrl.u32 %v2285, 16
      %v2328 = vrot.slane %v2326, 5
      %v2329 = vshll.u32 %v2285, 16
      %v2331 = vrot.slane %v2329, 6
      %v2332 = vor.u32 %v2328, %v2331
      %v2333 = vsel %vm2288, %v2323, %v2332
      %v2335 = vshrl.u32 %v2286, 16
      %v2337 = vrot.slane %v2335, 5
      %v2338 = vshll.u32 %v2286, 16
      %v2340 = vrot.slane %v2338, 6
      %v2341 = vor.u32 %v2337, %v2340
      %v2342 = vsel %vm2288, %v2332, %v2341
      %v2344 = vshrl.u32 %v2287, 16
      %v2346 = vrot.slane %v2344, 5
      %v2347 = vshll.u32 %v2287, 16
      %v2349 = vrot.slane %v2347, 6
      %v2350 = vor.u32 %v2346, %v2349
      %v2351 = vsel %vm2288, %v2341, %v2350
      %2352 = vrot.lane.b32.xlu0 %v2296, 40
      %v2353 = vpop.permute.xlu0 %2352
      %2354 = vrot.lane.b32.xlu0 %v2300, 40
      %v2355 = vpop.permute.xlu0 %2354
      %2356 = vrot.lane.b32.xlu0 %v2304, 40
      %v2357 = vpop.permute.xlu0 %2356
      %2358 = vrot.lane.b32.xlu0 %v2308, 40
      %v2359 = vpop.permute.xlu0 %2358
      %2360 = vrot.lane.b32.xlu0 %v2312, 40
      %v2361 = vpop.permute.xlu0 %2360
      %2362 = vrot.lane.b32.xlu0 %v2316, 40
      %v2363 = vpop.permute.xlu0 %2362
      %2364 = vrot.lane.b32.xlu0 %v2320, 40
      %v2365 = vpop.permute.xlu0 %2364
      %2366 = vrot.lane.b32.xlu0 %v2324, 40
      %v2367 = vpop.permute.xlu0 %2366
      %2368 = vrot.lane.b32.xlu0 %v2333, 40
      %v2369 = vpop.permute.xlu0 %2368
      %2370 = vrot.lane.b32.xlu0 %v2342, 40
      %v2371 = vpop.permute.xlu0 %2370
      %2372 = vrot.lane.b32.xlu0 %v2351, 40
      %v2373 = vpop.permute.xlu0 %2372
      %v2375 = vunpack.c.l.b16 %v694
      %v2376 = vpack.c.b16 %v2375, %v2282
      %v2377 = vrot.slane %v2284, 6
      %v2378 = vrot.slane %v1047, 6
      %v2379 = vsel %vm507, %v2377, %v2378
      %v2380 = vrot.slane %v1048, 6
      %v2381 = vsel %vm507, %v2378, %v2380
      %v2382 = vrot.slane %v1049, 6
      %v2383 = vsel %vm507, %v2380, %v2382
      %v2384 = vrot.slane %v1050, 6
      %v2385 = vsel %vm507, %v2382, %v2384
      %v2386 = vrot.slane %v1307, 6
      %v2387 = vsel %vm507, %v2384, %v2386
      %v2388 = vrot.slane %v1308, 6
      %v2389 = vsel %vm507, %v2386, %v2388
      %v2390 = vrot.slane %v1987, 6
      %v2391 = vsel %vm507, %v2388, %v2390
      %v2392 = vrot.slane %v2285, 6
      %v2393 = vsel %vm507, %v2390, %v2392
      %v2394 = vrot.slane %v2286, 6
      %v2395 = vsel %vm507, %v2392, %v2394
      %v2396 = vrot.slane %v2376, 6
      %v2397 = vsel %vm507, %v2394, %v2396
      %2398 = vrot.lane.b32.xlu0 %v2377, 48
      %v2399 = vpop.permute.xlu0 %2398
      %2400 = vrot.lane.b32.xlu0 %v2379, 48
      %v2401 = vpop.permute.xlu0 %2400
      %2402 = vrot.lane.b32.xlu0 %v2381, 48
      %v2403 = vpop.permute.xlu0 %2402
      %2404 = vrot.lane.b32.xlu0 %v2383, 48
      %v2405 = vpop.permute.xlu0 %2404
      %2406 = vrot.lane.b32.xlu0 %v2385, 48
      %v2407 = vpop.permute.xlu0 %2406
      %2408 = vrot.lane.b32.xlu0 %v2387, 48
      %v2409 = vpop.permute.xlu0 %2408
      %2410 = vrot.lane.b32.xlu0 %v2389, 48
      %v2411 = vpop.permute.xlu0 %2410
      %2412 = vrot.lane.b32.xlu0 %v2391, 48
      %v2413 = vpop.permute.xlu0 %2412
      %2414 = vrot.lane.b32.xlu0 %v2393, 48
      %v2415 = vpop.permute.xlu0 %2414
      %2416 = vrot.lane.b32.xlu0 %v2395, 48
      %v2417 = vpop.permute.xlu0 %2416
      %2418 = vrot.lane.b32.xlu0 %v2397, 48
      %v2419 = vpop.permute.xlu0 %2418
      %v2421 = vunpack.c.l.b16 %v695
      %v2422 = vpack.c.b16 %v732, %v2421
      %v2424 = vshrl.u32 %v2422, 16
      %v2426 = vrot.slane %v2424, 6
      %v2427 = vshll.u32 %v2422, 16
      %v2429 = vrot.slane %v2427, 7
      %v2430 = vor.u32 %v2426, %v2429
      %v2431 = vrot.slane %v1182, 6
      %v2432 = vrot.slane %v1185, 7
      %v2433 = vor.u32 %v2431, %v2432
      %v2434 = vsel %vm2078, %v2430, %v2433
      %v2435 = vrot.slane %v1191, 6
      %v2436 = vrot.slane %v1194, 7
      %v2437 = vor.u32 %v2435, %v2436
      %v2438 = vsel %vm2078, %v2433, %v2437
      %v2439 = vrot.slane %v1200, 6
      %v2440 = vrot.slane %v1203, 7
      %v2441 = vor.u32 %v2439, %v2440
      %v2442 = vsel %vm2078, %v2437, %v2441
      %v2443 = vrot.slane %v1209, 6
      %v2444 = vrot.slane %v1212, 7
      %v2445 = vor.u32 %v2443, %v2444
      %v2446 = vsel %vm2078, %v2441, %v2445
      %v2447 = vrot.slane %v1394, 6
      %v2448 = vrot.slane %v1397, 7
      %v2449 = vor.u32 %v2447, %v2448
      %v2450 = vsel %vm2078, %v2445, %v2449
      %v2451 = vrot.slane %v1403, 6
      %v2452 = vrot.slane %v1406, 7
      %v2453 = vor.u32 %v2451, %v2452
      %v2454 = vsel %vm2078, %v2449, %v2453
      %v2455 = vrot.slane %v2026, 6
      %v2456 = vrot.slane %v2029, 7
      %v2457 = vor.u32 %v2455, %v2456
      %v2458 = vsel %vm2078, %v2453, %v2457
      %v2459 = vrot.slane %v2326, 6
      %v2460 = vrot.slane %v2329, 7
      %v2461 = vor.u32 %v2459, %v2460
      %v2462 = vsel %vm2078, %v2457, %v2461
      %v2463 = vrot.slane %v2335, 6
      %v2464 = vrot.slane %v2338, 7
      %v2465 = vor.u32 %v2463, %v2464
      %v2466 = vsel %vm2078, %v2461, %v2465
      %v2468 = vshrl.u32 %v2376, 16
      %v2470 = vrot.slane %v2468, 6
      %v2471 = vshll.u32 %v2376, 16
      %v2473 = vrot.slane %v2471, 7
      %v2474 = vor.u32 %v2470, %v2473
      %v2475 = vsel %vm2078, %v2465, %v2474
      %2476 = vrot.lane.b32.xlu0 %v2430, 56
      %v2477 = vpop.permute.xlu0 %2476
      %2478 = vrot.lane.b32.xlu0 %v2434, 56
      %v2479 = vpop.permute.xlu0 %2478
      %2480 = vrot.lane.b32.xlu0 %v2438, 56
      %v2481 = vpop.permute.xlu0 %2480
      %2482 = vrot.lane.b32.xlu0 %v2442, 56
      %v2483 = vpop.permute.xlu0 %2482
      %2484 = vrot.lane.b32.xlu0 %v2446, 56
      %v2485 = vpop.permute.xlu0 %2484
      %2486 = vrot.lane.b32.xlu0 %v2450, 56
      %v2487 = vpop.permute.xlu0 %2486
      %2488 = vrot.lane.b32.xlu0 %v2454, 56
      %v2489 = vpop.permute.xlu0 %2488
      %2490 = vrot.lane.b32.xlu0 %v2458, 56
      %v2491 = vpop.permute.xlu0 %2490
      %2492 = vrot.lane.b32.xlu0 %v2462, 56
      %v2493 = vpop.permute.xlu0 %2492
      %2494 = vrot.lane.b32.xlu0 %v2466, 56
      %v2495 = vpop.permute.xlu0 %2494
      %2496 = vrot.lane.b32.xlu0 %v2475, 56
      %v2497 = vpop.permute.xlu0 %2496
      %v2499 = vunpack.c.l.b16 %v696
      %v2500 = vpack.c.b16 %v2282, %v2073
      %v2501 = vpack.c.b16 %v2499, %v2499
      %v2502 = vrot.slane %v808, 4
      %v2503 = vrot.slane %v804, 5
      %v2504 = vor.u32 %v2502, %v2503
      %v2505 = vrot.slane %v816, 4
      %v2506 = vrot.slane %v812, 5
      %v2507 = vor.u32 %v2505, %v2506
      %v2508 = vsel %vm1989, %v2504, %v2507
      %v2509 = vrot.slane %v824, 4
      %v2510 = vrot.slane %v820, 5
      %v2511 = vor.u32 %v2509, %v2510
      %v2512 = vsel %vm1989, %v2507, %v2511
      %v2513 = vrot.slane %v832, 4
      %v2514 = vrot.slane %v828, 5
      %v2515 = vor.u32 %v2513, %v2514
      %v2516 = vsel %vm1989, %v2511, %v2515
      %v2517 = vrot.slane %v1011, 4
      %v2518 = vrot.slane %v1014, 5
      %v2519 = vor.u32 %v2517, %v2518
      %v2520 = vsel %vm1989, %v2515, %v2519
      %v2521 = vrot.slane %v1513, 4
      %v2522 = vrot.slane %v1509, 5
      %v2523 = vor.u32 %v2521, %v2522
      %v2524 = vsel %vm1989, %v2519, %v2523
      %v2525 = vrot.slane %v1521, 4
      %v2526 = vrot.slane %v1517, 5
      %v2527 = vor.u32 %v2525, %v2526
      %v2528 = vsel %vm1989, %v2523, %v2527
      %v2529 = vrot.slane %v2116, 4
      %v2530 = vrot.slane %v2119, 5
      %v2531 = vor.u32 %v2529, %v2530
      %v2532 = vsel %vm1989, %v2527, %v2531
      %v2533 = vrot.slane %v2125, 4
      %v2534 = vrot.slane %v2128, 5
      %v2535 = vor.u32 %v2533, %v2534
      %v2536 = vsel %vm1989, %v2531, %v2535
      %v2538 = vshrl.u32 %v2500, 16
      %v2540 = vrot.slane %v2538, 4
      %v2541 = vshll.u32 %v2500, 16
      %v2543 = vrot.slane %v2541, 5
      %v2544 = vor.u32 %v2540, %v2543
      %v2545 = vsel %vm1989, %v2535, %v2544
      %v2547 = vshrl.u32 %v2501, 16
      %v2549 = vrot.slane %v2547, 4
      %v2550 = vshll.u32 %v2501, 16
      %v2552 = vrot.slane %v2550, 5
      %v2553 = vor.u32 %v2549, %v2552
      %v2554 = vsel %vm1989, %v2544, %v2553
      %2555 = vrot.lane.b32.xlu0 %v2504, 64
      %v2556 = vpop.permute.xlu0 %2555
      %2557 = vrot.lane.b32.xlu0 %v2508, 64
      %v2558 = vpop.permute.xlu0 %2557
      %2559 = vrot.lane.b32.xlu0 %v2512, 64
      %v2560 = vpop.permute.xlu0 %2559
      %2561 = vrot.lane.b32.xlu0 %v2516, 64
      %v2562 = vpop.permute.xlu0 %2561
      %2563 = vrot.lane.b32.xlu0 %v2520, 64
      %v2564 = vpop.permute.xlu0 %2563
      %2565 = vrot.lane.b32.xlu0 %v2524, 64
      %v2566 = vpop.permute.xlu0 %2565
      %2567 = vrot.lane.b32.xlu0 %v2528, 64
      %v2568 = vpop.permute.xlu0 %2567
      %2569 = vrot.lane.b32.xlu0 %v2532, 64
      %v2570 = vpop.permute.xlu0 %2569
      %2571 = vrot.lane.b32.xlu0 %v2536, 64
      %v2572 = vpop.permute.xlu0 %2571
      %2573 = vrot.lane.b32.xlu0 %v2545, 64
      %v2574 = vpop.permute.xlu0 %2573
      %2575 = vrot.lane.b32.xlu0 %v2554, 64
      %v2576 = vpop.permute.xlu0 %2575
      %v2578 = vunpack.c.l.b16 %v697
      %v2579 = vpack.c.b16 %v2578, %v2499
      %v2580 = vrot.slane %v747, 5
      %v2581 = vrot.slane %v748, 5
      %v2582 = vsel %vm553, %v2580, %v2581
      %v2583 = vrot.slane %v749, 5
      %v2584 = vsel %vm553, %v2581, %v2583
      %v2585 = vrot.slane %v750, 5
      %v2586 = vsel %vm553, %v2583, %v2585
      %v2587 = vrot.slane %v964, 5
      %v2588 = vsel %vm553, %v2585, %v2587
      %v2589 = vrot.slane %v1477, 5
      %v2590 = vsel %vm553, %v2587, %v2589
      %v2591 = vrot.slane %v1478, 5
      %v2592 = vsel %vm553, %v2589, %v2591
      %v2593 = vrot.slane %v1986, 5
      %v2594 = vsel %vm553, %v2591, %v2593
      %v2595 = vrot.slane %v2076, 5
      %v2596 = vsel %vm553, %v2593, %v2595
      %v2597 = vrot.slane %v2500, 5
      %v2598 = vsel %vm553, %v2595, %v2597
      %v2599 = vrot.slane %v2579, 5
      %v2600 = vsel %vm553, %v2597, %v2599
      %2601 = vrot.lane.b32.xlu0 %v2580, 72
      %v2602 = vpop.permute.xlu0 %2601
      %2603 = vrot.lane.b32.xlu0 %v2582, 72
      %v2604 = vpop.permute.xlu0 %2603
      %2605 = vrot.lane.b32.xlu0 %v2584, 72
      %v2606 = vpop.permute.xlu0 %2605
      %2607 = vrot.lane.b32.xlu0 %v2586, 72
      %v2608 = vpop.permute.xlu0 %2607
      %2609 = vrot.lane.b32.xlu0 %v2588, 72
      %v2610 = vpop.permute.xlu0 %2609
      %2611 = vrot.lane.b32.xlu0 %v2590, 72
      %v2612 = vpop.permute.xlu0 %2611
      %2613 = vrot.lane.b32.xlu0 %v2592, 72
      %v2614 = vpop.permute.xlu0 %2613
      %2615 = vrot.lane.b32.xlu0 %v2594, 72
      %v2616 = vpop.permute.xlu0 %2615
      %2617 = vrot.lane.b32.xlu0 %v2596, 72
      %v2618 = vpop.permute.xlu0 %2617
      %2619 = vrot.lane.b32.xlu0 %v2598, 72
      %v2620 = vpop.permute.xlu0 %2619
      %2621 = vrot.lane.b32.xlu0 %v2600, 72
      %v2622 = vpop.permute.xlu0 %2621
      %v2624 = vunpack.c.l.b16 %v698
      %v2625 = vpack.c.b16 %v733, %v2624
      %v2627 = vshrl.u32 %v2625, 16
      %v2629 = vrot.slane %v2627, 5
      %v2630 = vshll.u32 %v2625, 16
      %v2632 = vrot.slane %v2630, 6
      %v2633 = vor.u32 %v2629, %v2632
      %v2634 = vrot.slane %v816, 5
      %v2635 = vrot.slane %v812, 6
      %v2636 = vor.u32 %v2634, %v2635
      %v2637 = vsel %vm2288, %v2633, %v2636
      %v2638 = vrot.slane %v824, 5
      %v2639 = vrot.slane %v820, 6
      %v2640 = vor.u32 %v2638, %v2639
      %v2641 = vsel %vm2288, %v2636, %v2640
      %v2642 = vrot.slane %v832, 5
      %v2643 = vrot.slane %v828, 6
      %v2644 = vor.u32 %v2642, %v2643
      %v2645 = vsel %vm2288, %v2640, %v2644
      %v2646 = vrot.slane %v1011, 5
      %v2647 = vrot.slane %v1014, 6
      %v2648 = vor.u32 %v2646, %v2647
      %v2649 = vsel %vm2288, %v2644, %v2648
      %v2650 = vrot.slane %v1513, 5
      %v2651 = vrot.slane %v1509, 6
      %v2652 = vor.u32 %v2650, %v2651
      %v2653 = vsel %vm2288, %v2648, %v2652
      %v2654 = vrot.slane %v1521, 5
      %v2655 = vrot.slane %v1517, 6
      %v2656 = vor.u32 %v2654, %v2655
      %v2657 = vsel %vm2288, %v2652, %v2656
      %v2658 = vrot.slane %v2116, 5
      %v2659 = vrot.slane %v2119, 6
      %v2660 = vor.u32 %v2658, %v2659
      %v2661 = vsel %vm2288, %v2656, %v2660
      %v2662 = vrot.slane %v2125, 5
      %v2663 = vrot.slane %v2128, 6
      %v2664 = vor.u32 %v2662, %v2663
      %v2665 = vsel %vm2288, %v2660, %v2664
      %v2666 = vrot.slane %v2538, 5
      %v2667 = vrot.slane %v2541, 6
      %v2668 = vor.u32 %v2666, %v2667
      %v2669 = vsel %vm2288, %v2664, %v2668
      %v2671 = vshrl.u32 %v2579, 16
      %v2673 = vrot.slane %v2671, 5
      %v2674 = vshll.u32 %v2579, 16
      %v2676 = vrot.slane %v2674, 6
      %v2677 = vor.u32 %v2673, %v2676
      %v2678 = vsel %vm2288, %v2668, %v2677
      %2679 = vrot.lane.b32.xlu0 %v2633, 80
      %v2680 = vpop.permute.xlu0 %2679
      %2681 = vrot.lane.b32.xlu0 %v2637, 80
      %v2682 = vpop.permute.xlu0 %2681
      %2683 = vrot.lane.b32.xlu0 %v2641, 80
      %v2684 = vpop.permute.xlu0 %2683
      %2685 = vrot.lane.b32.xlu0 %v2645, 80
      %v2686 = vpop.permute.xlu0 %2685
      %2687 = vrot.lane.b32.xlu0 %v2649, 80
      %v2688 = vpop.permute.xlu0 %2687
      %2689 = vrot.lane.b32.xlu0 %v2653, 80
      %v2690 = vpop.permute.xlu0 %2689
      %2691 = vrot.lane.b32.xlu0 %v2657, 80
      %v2692 = vpop.permute.xlu0 %2691
      %2693 = vrot.lane.b32.xlu0 %v2661, 80
      %v2694 = vpop.permute.xlu0 %2693
      %2695 = vrot.lane.b32.xlu0 %v2665, 80
      %v2696 = vpop.permute.xlu0 %2695
      %2697 = vrot.lane.b32.xlu0 %v2669, 80
      %v2698 = vpop.permute.xlu0 %2697
      %2699 = vrot.lane.b32.xlu0 %v2678, 80
      %v2700 = vpop.permute.xlu0 %2699
      %v2703 = vsel %vm1627, %v1593, %v2044
      %v2705 = vsel %vm1627, %v745, %v2046
      %v2707 = vsel %vm1627, %v746, %v2048
      %v2709 = vsel %vm1627, %v747, %v2050
      %v2711 = vsel %vm1627, %v748, %v2052
      %v2713 = vsel %vm1627, %v749, %v2054
      %v2715 = vsel %vm1627, %v750, %v2056
      %v2717 = vsel %vm1627, %v964, %v2058
      %v2719 = vsel %vm1627, %v1477, %v2060
      %v2721 = vsel %vm1627, %v1478, %v2062
      %v2723 = vsel %vm1627, %v1986, %v2064
      %v2725 = vsel %vm1651, %v2703, %v2143
      %v2727 = vsel %vm1651, %v2705, %v2145
      %v2729 = vsel %vm1651, %v2707, %v2147
      %v2731 = vsel %vm1651, %v2709, %v2149
      %v2733 = vsel %vm1651, %v2711, %v2151
      %v2735 = vsel %vm1651, %v2713, %v2153
      %v2737 = vsel %vm1651, %v2715, %v2155
      %v2739 = vsel %vm1651, %v2717, %v2157
      %v2741 = vsel %vm1651, %v2719, %v2159
      %v2743 = vsel %vm1651, %v2721, %v2161
      %v2745 = vsel %vm1651, %v2723, %v2163
      %v2747 = vsel %vm1674, %v2725, %v2189
      %v2749 = vsel %vm1674, %v2727, %v2191
      %v2751 = vsel %vm1674, %v2729, %v2193
      %v2753 = vsel %vm1674, %v2731, %v2195
      %v2755 = vsel %vm1674, %v2733, %v2197
      %v2757 = vsel %vm1674, %v2735, %v2199
      %v2759 = vsel %vm1674, %v2737, %v2201
      %v2761 = vsel %vm1674, %v2739, %v2203
      %v2763 = vsel %vm1674, %v2741, %v2205
      %v2765 = vsel %vm1674, %v2743, %v2207
      %v2767 = vsel %vm1674, %v2745, %v2209
      %v2769 = vsel %vm1697, %v2747, %v2257
      %v2771 = vsel %vm1697, %v2749, %v2259
      %v2773 = vsel %vm1697, %v2751, %v2261
      %v2775 = vsel %vm1697, %v2753, %v2263
      %v2777 = vsel %vm1697, %v2755, %v2265
      %v2779 = vsel %vm1697, %v2757, %v2267
      %v2781 = vsel %vm1697, %v2759, %v2269
      %v2783 = vsel %vm1697, %v2761, %v2271
      %v2785 = vsel %vm1697, %v2763, %v2273
      %v2787 = vsel %vm1697, %v2765, %v2275
      %v2789 = vsel %vm1697, %v2767, %v2277
      %v2791 = vsel %vm1720, %v2769, %v2353
      %v2793 = vsel %vm1720, %v2771, %v2355
      %v2795 = vsel %vm1720, %v2773, %v2357
      %v2797 = vsel %vm1720, %v2775, %v2359
      %v2799 = vsel %vm1720, %v2777, %v2361
      %v2801 = vsel %vm1720, %v2779, %v2363
      %v2803 = vsel %vm1720, %v2781, %v2365
      %v2805 = vsel %vm1720, %v2783, %v2367
      %v2807 = vsel %vm1720, %v2785, %v2369
      %v2809 = vsel %vm1720, %v2787, %v2371
      %v2811 = vsel %vm1720, %v2789, %v2373
      %v2813 = vsel %vm1743, %v2791, %v2399
      %v2815 = vsel %vm1743, %v2793, %v2401
      %v2817 = vsel %vm1743, %v2795, %v2403
      %v2819 = vsel %vm1743, %v2797, %v2405
      %v2821 = vsel %vm1743, %v2799, %v2407
      %v2823 = vsel %vm1743, %v2801, %v2409
      %v2825 = vsel %vm1743, %v2803, %v2411
      %v2827 = vsel %vm1743, %v2805, %v2413
      %v2829 = vsel %vm1743, %v2807, %v2415
      %v2831 = vsel %vm1743, %v2809, %v2417
      %v2833 = vsel %vm1743, %v2811, %v2419
      %v2835 = vsel %vm1766, %v2813, %v2477
      %v2837 = vsel %vm1766, %v2815, %v2479
      %v2839 = vsel %vm1766, %v2817, %v2481
      %v2841 = vsel %vm1766, %v2819, %v2483
      %v2843 = vsel %vm1766, %v2821, %v2485
      %v2845 = vsel %vm1766, %v2823, %v2487
      %v2847 = vsel %vm1766, %v2825, %v2489
      %v2849 = vsel %vm1766, %v2827, %v2491
      %v2851 = vsel %vm1766, %v2829, %v2493
      %v2853 = vsel %vm1766, %v2831, %v2495
      %v2855 = vsel %vm1766, %v2833, %v2497
      %v2857 = vsel %vm1789, %v2835, %v2556
      %v2859 = vsel %vm1789, %v2837, %v2558
      %v2861 = vsel %vm1789, %v2839, %v2560
      %v2863 = vsel %vm1789, %v2841, %v2562
      %v2865 = vsel %vm1789, %v2843, %v2564
      %v2867 = vsel %vm1789, %v2845, %v2566
      %v2869 = vsel %vm1789, %v2847, %v2568
      %v2871 = vsel %vm1789, %v2849, %v2570
      %v2873 = vsel %vm1789, %v2851, %v2572
      %v2875 = vsel %vm1789, %v2853, %v2574
      %v2877 = vsel %vm1789, %v2855, %v2576
      %v2879 = vsel %vm1812, %v2857, %v2602
      %v2881 = vsel %vm1812, %v2859, %v2604
      %v2883 = vsel %vm1812, %v2861, %v2606
      %v2885 = vsel %vm1812, %v2863, %v2608
      %v2887 = vsel %vm1812, %v2865, %v2610
      %v2889 = vsel %vm1812, %v2867, %v2612
      %v2891 = vsel %vm1812, %v2869, %v2614
      %v2893 = vsel %vm1812, %v2871, %v2616
      %v2895 = vsel %vm1812, %v2873, %v2618
      %v2897 = vsel %vm1812, %v2875, %v2620
      %v2899 = vsel %vm1812, %v2877, %v2622
      %v2901 = vsel %vm1835, %v2879, %v2680
      %v2903 = vsel %vm1835, %v2881, %v2682
      %v2905 = vsel %vm1835, %v2883, %v2684
      %v2907 = vsel %vm1835, %v2885, %v2686
      %v2909 = vsel %vm1835, %v2887, %v2688
      %v2911 = vsel %vm1835, %v2889, %v2690
      %v2913 = vsel %vm1835, %v2891, %v2692
      %v2915 = vsel %vm1835, %v2893, %v2694
      %v2917 = vsel %vm1835, %v2895, %v2696
      %v2919 = vsel %vm1835, %v2897, %v2698
      %v2921 = vsel %vm1835, %v2899, %v2700
      %v2922 = vshrl.u32 %v2901, 16
      %v2924 = vrot.slane %v2922, 3
      %v2925 = vshll.u32 %v2901, 16
      %v2927 = vrot.slane %v2925, 4
      %v2928 = vor.u32 %v2924, %v2927
      %v2929 = vshrl.u32 %v2903, 16
      %v2931 = vrot.slane %v2929, 3
      %v2932 = vshll.u32 %v2903, 16
      %v2934 = vrot.slane %v2932, 4
      %v2935 = vor.u32 %v2931, %v2934
      %v2936 = vsel %vm965, %v2928, %v2935
      %v2937 = vshrl.u32 %v2905, 16
      %v2939 = vrot.slane %v2937, 3
      %v2940 = vshll.u32 %v2905, 16
      %v2942 = vrot.slane %v2940, 4
      %v2943 = vor.u32 %v2939, %v2942
      %v2944 = vsel %vm965, %v2935, %v2943
      %v2945 = vshrl.u32 %v2907, 16
      %v2947 = vrot.slane %v2945, 3
      %v2948 = vshll.u32 %v2907, 16
      %v2950 = vrot.slane %v2948, 4
      %v2951 = vor.u32 %v2947, %v2950
      %v2952 = vsel %vm965, %v2943, %v2951
      %v2953 = vshrl.u32 %v2909, 16
      %v2955 = vrot.slane %v2953, 3
      %v2956 = vshll.u32 %v2909, 16
      %v2958 = vrot.slane %v2956, 4
      %v2959 = vor.u32 %v2955, %v2958
      %v2960 = vsel %vm965, %v2951, %v2959
      %v2961 = vshrl.u32 %v2911, 16
      %v2963 = vrot.slane %v2961, 3
      %v2964 = vshll.u32 %v2911, 16
      %v2966 = vrot.slane %v2964, 4
      %v2967 = vor.u32 %v2963, %v2966
      %v2968 = vsel %vm965, %v2959, %v2967
      %v2969 = vshrl.u32 %v2913, 16
      %v2971 = vrot.slane %v2969, 3
      %v2972 = vshll.u32 %v2913, 16
      %v2974 = vrot.slane %v2972, 4
      %v2975 = vor.u32 %v2971, %v2974
      %v2976 = vsel %vm965, %v2967, %v2975
      %v2977 = vshrl.u32 %v2915, 16
      %v2979 = vrot.slane %v2977, 3
      %v2980 = vshll.u32 %v2915, 16
      %v2982 = vrot.slane %v2980, 4
      %v2983 = vor.u32 %v2979, %v2982
      %v2984 = vsel %vm965, %v2975, %v2983
      %v2985 = vshrl.u32 %v2917, 16
      %v2987 = vrot.slane %v2985, 3
      %v2988 = vshll.u32 %v2917, 16
      %v2990 = vrot.slane %v2988, 4
      %v2991 = vor.u32 %v2987, %v2990
      %v2992 = vsel %vm965, %v2983, %v2991
      %v2993 = vshrl.u32 %v2919, 16
      %v2995 = vrot.slane %v2993, 3
      %v2996 = vshll.u32 %v2919, 16
      %v2998 = vrot.slane %v2996, 4
      %v2999 = vor.u32 %v2995, %v2998
      %v3000 = vsel %vm965, %v2991, %v2999
      %v3001 = vshrl.u32 %v2921, 16
      %v3003 = vrot.slane %v3001, 3
      %v3004 = vshll.u32 %v2921, 16
      %v3006 = vrot.slane %v3004, 4
      %v3007 = vor.u32 %v3003, %v3006
      %v3008 = vsel %vm965, %v2999, %v3007
      %v3009 = vld [vmem:[%s3] sm:$0xf]
      %v3010 = vld [vmem:[%s3 + $0x4] sm:$0xf]
      %v3011 = vld [vmem:[%s3 + $0x8] sm:$0xf]
      %v3012 = vld [vmem:[%s3 + $0xc] sm:$0xf]
      %v3013 = vld [vmem:[%s3 + $0x10] sm:$0xf]
      %v3014 = vld [vmem:[%s3 + $0x14] sm:$0xf]
      %v3015 = vld [vmem:[%s3 + $0x18] sm:$0xf]
      %v3016 = vld [vmem:[%s3 + $0x1c] sm:$0xf]
      %v3017 = vld [vmem:[%s3 + $0x20] sm:$0xf]
      %v3018 = vld [vmem:[%s3 + $0x24] sm:$0xf]
      %v3019 = vld [vmem:[%s3 + $0x28] sm:$0xf]
      %v3020 = vld [vmem:[%s3 + $0x2c] sm:$0xf]
      %v3021 = vld [vmem:[%s3 + $0x30] sm:$0xf]
      %v3022 = vld [vmem:[%s3 + $0x34] sm:$0xf]
      %v3023 = vld [vmem:[%s3 + $0x38] sm:$0xf]
      %v3024 = vld [vmem:[%s3 + $0x3c] sm:$0xf]
      %v3025 = vld [vmem:[%s3 + $0x40] sm:$0xf]
      %v3026 = vld [vmem:[%s3 + $0x44] sm:$0xf]
      %v3027 = vld [vmem:[%s3 + $0x48] sm:$0xf]
      %v3028 = vld [vmem:[%s3 + $0x4c] sm:$0xf]
      %v3029 = vld [vmem:[%s3 + $0x50] sm:$0xf]
      %v3030 = vld [vmem:[%s3 + $0x54] sm:$0xf]
      %v3031 = vld [vmem:[%s3 + $0x58] sm:$0xf]
      %v3032 = vld [vmem:[%s3 + $0x5c] sm:$0xf]
      %v3033 = vld [vmem:[%s3 + $0x60] sm:$0xf]
      %v3034 = vld [vmem:[%s3 + $0x64] sm:$0xf]
      %v3035 = vld [vmem:[%s3 + $0x68] sm:$0xf]
      %v3063 = vunpack.c.l.b16 %v3009
      %v3064 = vunpack.c.l.b16 %v3010
      %v3065 = vunpack.c.l.b16 %v3011
      %v3066 = vunpack.c.l.b16 %v3012
      %v3067 = vunpack.c.l.b16 %v3013
      %v3068 = vunpack.c.l.b16 %v3014
      %v3069 = vunpack.c.l.b16 %v3015
      %v3070 = vunpack.c.l.b16 %v3016
      %v3071 = vunpack.c.l.b16 %v3017
      %v3072 = vunpack.c.l.b16 %v3018
      %v3073 = vunpack.c.l.b16 %v3019
      %v3074 = vunpack.c.l.b16 %v3020
      %v3075 = vunpack.c.l.b16 %v3021
      %v3076 = vunpack.c.l.b16 %v3022
      %v3077 = vunpack.c.l.b16 %v3023
      %v3078 = vunpack.c.l.b16 %v3024
      %v3079 = vunpack.c.l.b16 %v3025
      %v3080 = vunpack.c.l.b16 %v3026
      %v3081 = vunpack.c.l.b16 %v3027
      %v3082 = vunpack.c.l.b16 %v3028
      %v3083 = vunpack.c.l.b16 %v3029
      %v3084 = vunpack.c.l.b16 %v3030
      %v3085 = vunpack.c.l.b16 %v3031
      %v3086 = vunpack.c.l.b16 %v3032
      %v3087 = vunpack.c.l.b16 %v3033
      %v3088 = vunpack.c.l.b16 %v3034
      %v3089 = vunpack.c.l.b16 %v3035
      %v3090 = vpack.c.b16 %v3064, %v3063
      %v3091 = vpack.c.b16 %v3066, %v3065
      %v3092 = vpack.c.b16 %v3068, %v3067
      %v3093 = vpack.c.b16 %v3070, %v3069
      %v3094 = vpack.c.b16 %v3072, %v3071
      %v3095 = vpack.c.b16 %v3074, %v3073
      %v3096 = vpack.c.b16 %v3076, %v3075
      %v3097 = vpack.c.b16 %v3078, %v3077
      %v3098 = vpack.c.b16 %v3080, %v3079
      %v3099 = vpack.c.b16 %v3082, %v3081
      %v3100 = vpack.c.b16 %v3084, %v3083
      %v3101 = vpack.c.b16 %v3086, %v3085
      %v3102 = vpack.c.b16 %v3088, %v3087
      %v3103 = vpack.c.b16 %v3089, %v3089
      %v3118 = vsel %vm1858, %v2936, 0
      %v3121 = vsel %vm1858, %v2944, 0
      %v3124 = vsel %vm1858, %v2952, 0
      %v3127 = vsel %vm1858, %v2960, 0
      %v3130 = vsel %vm1858, %v2968, 0
      %v3133 = vsel %vm1858, %v2976, 0
      %v3136 = vsel %vm1858, %v2984, 0
      %v3139 = vsel %vm1858, %v2992, 0
      %v3142 = vsel %vm1858, %v3000, 0
      %v3145 = vsel %vm1858, %v3008, 0
      %v3148 = vsel %vm1858, %v3007, 0
      %vm3150 = vcmask 1043456
      %v3152 = vsel %vm3150, %v3103, 0
      %3154 = vmatprep.subr.bf16.mxu0 0
      %3155 = vmatpush1.bf16.msra.mxu0 %v3097
      %3156 = vmatprep.subr.bf16.mxu0 0
      %3157 = vmatpush1.bf16.msra.mxu0 %v3096
      %3158 = vmatprep.subr.bf16.mxu0 0
      %3159 = vmatpush1.bf16.msra.mxu0 %v3095
      %3160 = vmatprep.subr.bf16.mxu0 0
      %3161 = vmatpush1.bf16.msra.mxu0 %v3094
      %3162 = vmatprep.subr.bf16.mxu0 0
      %3163 = vmatpush1.bf16.msra.mxu0 %v3093
      %3164 = vmatprep.subr.bf16.mxu0 0
      %3165 = vmatpush1.bf16.msra.mxu0 %v3092
      %3166 = vmatprep.subr.bf16.mxu0 0
      %3167 = vmatpush1.bf16.msra.mxu0 %v3091
      %3168 = vmatprep.subr.bf16.mxu0 0
      %3169 = vmatpush1.bf16.msra.mxu0 %v3090
      %3170 = vmatprep.subr.bf16.mxu0 0
      %3171 = vmatpush2.bf16.msra.mxu0 0
      %3172 = vmatprep.subr.bf16.mxu0 0
      %3173 = vmatpush2.bf16.msra.mxu0 0
      %3174 = vmatprep.subr.bf16.mxu0 0
      %3175 = vmatpush2.bf16.msra.mxu0 %v3152
      %3176 = vmatprep.subr.bf16.mxu0 0
      %3177 = vmatpush2.bf16.msra.mxu0 %v3102
      %3178 = vmatprep.subr.bf16.mxu0 0
      %3179 = vmatpush2.bf16.msra.mxu0 %v3101
      %3180 = vmatprep.subr.bf16.mxu0 0
      %3181 = vmatpush2.bf16.msra.mxu0 %v3100
      %3182 = vmatprep.subr.bf16.mxu0 0
      %3183 = vmatpush2.bf16.msra.mxu0 %v3099
      %3184 = vmatprep.subr.bf16.mxu0 0
      %3185 = vmatpush2.bf16.msra.mxu0 %v3098
      %3186 = vmatprep.mubr.bf16.mxu0 %v3118
      %3187 = vmatmul.mubr.bf16.gmra.mxu0 %v1952
      %v3188 = vpop.f32.mrf.mxu0
      %v3189 = vadd.f32 0.0, %v3188
      %v3190 = vpop.f32.mrf.mxu0
      %v3191 = vpop.f32.mrf.mxu0
      %v3192 = vadd.f32 0.0, %v3191
      %v3193 = vpop.f32.mrf.mxu0
      %3194 = vmatprep.mubr.bf16.mxu0 %v3121
      %3195 = vmatmul.mubr.bf16.gmra.mxu0 %v1955
      %v3196 = vpop.f32.mrf.mxu0
      %v3197 = vadd.f32 0.0, %v3196
      %v3198 = vpop.f32.mrf.mxu0
      %v3199 = vpop.f32.mrf.mxu0
      %v3200 = vadd.f32 0.0, %v3199
      %v3201 = vpop.f32.mrf.mxu0
      %3202 = vmatprep.mubr.bf16.mxu0 %v3124
      %3203 = vmatmul.mubr.bf16.gmra.mxu0 %v1958
      %v3204 = vpop.f32.mrf.mxu0
      %v3205 = vadd.f32 0.0, %v3204
      %v3206 = vpop.f32.mrf.mxu0
      %v3207 = vpop.f32.mrf.mxu0
      %v3208 = vadd.f32 0.0, %v3207
      %v3209 = vpop.f32.mrf.mxu0
      %3210 = vmatprep.mubr.bf16.mxu0 %v3127
      %3211 = vmatmul.mubr.bf16.gmra.mxu0 %v1961
      %v3212 = vpop.f32.mrf.mxu0
      %v3213 = vadd.f32 0.0, %v3212
      %v3214 = vpop.f32.mrf.mxu0
      %v3215 = vpop.f32.mrf.mxu0
      %v3216 = vadd.f32 0.0, %v3215
      %v3217 = vpop.f32.mrf.mxu0
      %3218 = vmatprep.mubr.bf16.mxu0 %v3130
      %3219 = vmatmul.mubr.bf16.gmra.mxu0 %v1964
      %v3220 = vpop.f32.mrf.mxu0
      %v3221 = vadd.f32 0.0, %v3220
      %v3222 = vpop.f32.mrf.mxu0
      %v3223 = vpop.f32.mrf.mxu0
      %v3224 = vadd.f32 0.0, %v3223
      %v3225 = vpop.f32.mrf.mxu0
      %3226 = vmatprep.mubr.bf16.mxu0 %v3133
      %3227 = vmatmul.mubr.bf16.gmra.mxu0 %v1967
      %v3228 = vpop.f32.mrf.mxu0
      %v3229 = vadd.f32 0.0, %v3228
      %v3230 = vpop.f32.mrf.mxu0
      %v3231 = vpop.f32.mrf.mxu0
      %v3232 = vadd.f32 0.0, %v3231
      %v3233 = vpop.f32.mrf.mxu0
      %3234 = vmatprep.mubr.bf16.mxu0 %v3136
      %3235 = vmatmul.mubr.bf16.gmra.mxu0 %v1970
      %v3236 = vpop.f32.mrf.mxu0
      %v3237 = vadd.f32 0.0, %v3236
      %v3238 = vpop.f32.mrf.mxu0
      %v3239 = vpop.f32.mrf.mxu0
      %v3240 = vadd.f32 0.0, %v3239
      %v3241 = vpop.f32.mrf.mxu0
      %3242 = vmatprep.mubr.bf16.mxu0 %v3139
      %3243 = vmatmul.mubr.bf16.gmra.mxu0 %v1973
      %v3244 = vpop.f32.mrf.mxu0
      %v3245 = vadd.f32 0.0, %v3244
      %v3246 = vpop.f32.mrf.mxu0
      %v3247 = vpop.f32.mrf.mxu0
      %v3248 = vadd.f32 0.0, %v3247
      %v3249 = vpop.f32.mrf.mxu0
      %3250 = vmatprep.mubr.bf16.mxu0 %v3142
      %3251 = vmatmul.mubr.bf16.gmra.mxu0 %v1976
      %v3252 = vpop.f32.mrf.mxu0
      %v3253 = vadd.f32 0.0, %v3252
      %v3254 = vpop.f32.mrf.mxu0
      %v3255 = vpop.f32.mrf.mxu0
      %v3256 = vadd.f32 0.0, %v3255
      %v3257 = vpop.f32.mrf.mxu0
      %3258 = vmatprep.mubr.bf16.mxu0 %v3145
      %3259 = vmatmul.mubr.bf16.gmra.mxu0 %v1979
      %v3260 = vpop.f32.mrf.mxu0
      %v3261 = vadd.f32 0.0, %v3260
      %v3262 = vpop.f32.mrf.mxu0
      %v3263 = vpop.f32.mrf.mxu0
      %v3264 = vadd.f32 0.0, %v3263
      %v3265 = vpop.f32.mrf.mxu0
      %3266 = vmatprep.mubr.bf16.mxu0 %v3148
      %3267 = vmatmul.mubr.bf16.gmra.mxu0 %v1982
      %v3268 = vpop.f32.mrf.mxu0
      %v3269 = vadd.f32 0.0, %v3268
      %v3270 = vpop.f32.mrf.mxu0
      %v3271 = vpop.f32.mrf.mxu0
      %v3272 = vpop.f32.mrf.mxu0
      %3273 = vdwg.mxu0
      %v3274 = vpack.c.bf16 %v3192, %v3189
      %v3275 = vpack.c.bf16 %v3200, %v3197
      %v3276 = vpack.c.bf16 %v3208, %v3205
      %v3277 = vpack.c.bf16 %v3216, %v3213
      %v3278 = vpack.c.bf16 %v3224, %v3221
      %v3279 = vpack.c.bf16 %v3232, %v3229
      %v3280 = vpack.c.bf16 %v3240, %v3237
      %v3281 = vpack.c.bf16 %v3248, %v3245
      %v3282 = vpack.c.bf16 %v3256, %v3253
      %v3283 = vpack.c.bf16 %v3264, %v3261
      %v3284 = vpack.c.bf16 %v3269, %v3269
      %v3296 = vunpack.c.l.b16 %v3274
      %v3297 = vunpack.c.h.b16 %v3274
      %v3298 = vunpack.c.l.b16 %v3275
      %v3299 = vunpack.c.h.b16 %v3275
      %v3300 = vunpack.c.l.b16 %v3276
      %v3301 = vunpack.c.h.b16 %v3276
      %v3302 = vunpack.c.l.b16 %v3277
      %v3303 = vunpack.c.h.b16 %v3277
      %v3304 = vunpack.c.l.b16 %v3278
      %v3305 = vunpack.c.h.b16 %v3278
      %v3306 = vunpack.c.l.b16 %v3279
      %v3307 = vunpack.c.h.b16 %v3279
      %v3308 = vunpack.c.l.b16 %v3280
      %v3309 = vunpack.c.h.b16 %v3280
      %v3310 = vunpack.c.l.b16 %v3281
      %v3311 = vunpack.c.h.b16 %v3281
      %v3312 = vunpack.c.l.b16 %v3282
      %v3313 = vunpack.c.h.b16 %v3282
      %v3314 = vunpack.c.l.b16 %v3283
      %v3315 = vunpack.c.h.b16 %v3283
      %v3316 = vunpack.c.l.b16 %v3284
      %v3317 = vpack.c.b16 %v3296, %v3296
      %v3318 = vpack.c.b16 %v3297, %v3297
      %v3319 = vpack.c.b16 %v3298, %v3298
      %v3320 = vpack.c.b16 %v3299, %v3299
      %v3321 = vpack.c.b16 %v3300, %v3300
      %v3322 = vpack.c.b16 %v3301, %v3301
      %v3323 = vpack.c.b16 %v3302, %v3302
      %v3324 = vpack.c.b16 %v3303, %v3303
      %v3325 = vpack.c.b16 %v3304, %v3304
      %v3326 = vpack.c.b16 %v3305, %v3305
      %v3327 = vpack.c.b16 %v3306, %v3306
      %v3328 = vpack.c.b16 %v3307, %v3307
      %v3329 = vpack.c.b16 %v3308, %v3308
      %v3330 = vpack.c.b16 %v3309, %v3309
      %v3331 = vpack.c.b16 %v3310, %v3310
      %v3332 = vpack.c.b16 %v3311, %v3311
      %v3333 = vpack.c.b16 %v3312, %v3312
      %v3334 = vpack.c.b16 %v3313, %v3313
      %v3335 = vpack.c.b16 %v3314, %v3314
      %v3336 = vpack.c.b16 %v3315, %v3315
      %v3337 = vpack.c.b16 %v3316, %v3316
      %3359 = vst.msk [vmem:[%s425] sm:$0xf] %vm440, %v3317
      %3360 = vst.msk [vmem:[%s425 + $0x4] sm:$0xf] %vm440, %v3318
      %3361 = vst.msk [vmem:[%s425 + $0x8] sm:$0xf] %vm440, %v3319
      %3362 = vst.msk [vmem:[%s425 + $0xc] sm:$0xf] %vm440, %v3320
      %3363 = vst.msk [vmem:[%s425 + $0x10] sm:$0xf] %vm440, %v3321
      %3364 = vst.msk [vmem:[%s425 + $0x14] sm:$0xf] %vm440, %v3322
      %3365 = vst.msk [vmem:[%s425 + $0x18] sm:$0xf] %vm440, %v3323
      %3366 = vst.msk [vmem:[%s425 + $0x1c] sm:$0xf] %vm440, %v3324
      %3367 = vst.msk [vmem:[%s425 + $0x20] sm:$0xf] %vm440, %v3325
      %3368 = vst.msk [vmem:[%s425 + $0x24] sm:$0xf] %vm440, %v3326
      %3369 = vst.msk [vmem:[%s425 + $0x28] sm:$0xf] %vm440, %v3327
      %3370 = vst.msk [vmem:[%s425 + $0x2c] sm:$0xf] %vm440, %v3328
      %3371 = vst.msk [vmem:[%s425 + $0x30] sm:$0xf] %vm440, %v3329
      %3372 = vst.msk [vmem:[%s425 + $0x34] sm:$0xf] %vm440, %v3330
      %3373 = vst.msk [vmem:[%s425 + $0x38] sm:$0xf] %vm440, %v3331
      %3374 = vst.msk [vmem:[%s425 + $0x3c] sm:$0xf] %vm440, %v3332
      %3375 = vst.msk [vmem:[%s425 + $0x40] sm:$0xf] %vm440, %v3333
      %3376 = vst.msk [vmem:[%s425 + $0x44] sm:$0xf] %vm440, %v3334
      %3377 = vst.msk [vmem:[%s425 + $0x48] sm:$0xf] %vm440, %v3335
      %3378 = vst.msk [vmem:[%s425 + $0x4c] sm:$0xf] %vm440, %v3336
      %3379 = vst.msk [vmem:[%s425 + $0x50] sm:$0xf] %vm440, %v3337
      %v3380 = vld [vmem:[%s4] sm:$0xff]
      %v3381 = vld [vmem:[%s4 + $0x8] sm:$0xff]
      %v3382 = vld [vmem:[%s4 + $0x10] sm:$0xff]
      %v3383 = vld [vmem:[%s4 + $0x18] sm:$0xff]
      %v3384 = vld [vmem:[%s4 + $0x20] sm:$0xff]
      %v3385 = vld [vmem:[%s4 + $0x28] sm:$0xff]
      %v3386 = vld [vmem:[%s4 + $0x30] sm:$0xff]
      %v3387 = vld [vmem:[%s4 + $0x38] sm:$0xff]
      %v3388 = vld [vmem:[%s4 + $0x40] sm:$0xff]
      %v3389 = vld [vmem:[%s4 + $0x48] sm:$0xff]
      %v3390 = vld [vmem:[%s4 + $0x50] sm:$0xff]
      %v3391 = vld [vmem:[%s4 + $0x58] sm:$0xff]
      %v3392 = vld [vmem:[%s4 + $0x60] sm:$0xff]
      %v3393 = vld [vmem:[%s4 + $0x68] sm:$0xff]
      %v3394 = vld [vmem:[%s4 + $0x70] sm:$0xff]
      %v3395 = vld [vmem:[%s4 + $0x78] sm:$0xff]
      %v3396 = vld [vmem:[%s4 + $0x80] sm:$0xff]
      %v3397 = vld [vmem:[%s4 + $0x88] sm:$0xff]
      %v3398 = vld [vmem:[%s4 + $0x90] sm:$0xff]
      %v3399 = vld [vmem:[%s4 + $0x98] sm:$0xff]
      %v3400 = vld [vmem:[%s4 + $0xa0] sm:$0xff]
      %3402 = vset.pattern.permute.xlu0 0
      %3403 = vperm.xlu0 %3402, %v3380
      %v3404 = vpop.permute.xlu0 %3403
      %3407 = vset.pattern.permute.xlu0 0
      %3408 = vperm.xlu0 %3407, %v3381
      %v3409 = vpop.permute.xlu0 %3408
      %3412 = vset.pattern.permute.xlu0 0
      %3413 = vperm.xlu0 %3412, %v3382
      %v3414 = vpop.permute.xlu0 %3413
      %3417 = vset.pattern.permute.xlu0 0
      %3418 = vperm.xlu0 %3417, %v3383
      %v3419 = vpop.permute.xlu0 %3418
      %3422 = vset.pattern.permute.xlu0 0
      %3423 = vperm.xlu0 %3422, %v3384
      %v3424 = vpop.permute.xlu0 %3423
      %3427 = vset.pattern.permute.xlu0 0
      %3428 = vperm.xlu0 %3427, %v3385
      %v3429 = vpop.permute.xlu0 %3428
      %3432 = vset.pattern.permute.xlu0 0
      %3433 = vperm.xlu0 %3432, %v3386
      %v3434 = vpop.permute.xlu0 %3433
      %3437 = vset.pattern.permute.xlu0 0
      %3438 = vperm.xlu0 %3437, %v3387
      %v3439 = vpop.permute.xlu0 %3438
      %3442 = vset.pattern.permute.xlu0 0
      %3443 = vperm.xlu0 %3442, %v3388
      %v3444 = vpop.permute.xlu0 %3443
      %3447 = vset.pattern.permute.xlu0 0
      %3448 = vperm.xlu0 %3447, %v3389
      %v3449 = vpop.permute.xlu0 %3448
      %3452 = vset.pattern.permute.xlu0 0
      %3453 = vperm.xlu0 %3452, %v3390
      %v3454 = vpop.permute.xlu0 %3453
      %3457 = vset.pattern.permute.xlu0 0
      %3458 = vperm.xlu0 %3457, %v3391
      %v3459 = vpop.permute.xlu0 %3458
      %3462 = vset.pattern.permute.xlu0 0
      %3463 = vperm.xlu0 %3462, %v3392
      %v3464 = vpop.permute.xlu0 %3463
      %3467 = vset.pattern.permute.xlu0 0
      %3468 = vperm.xlu0 %3467, %v3393
      %v3469 = vpop.permute.xlu0 %3468
      %3472 = vset.pattern.permute.xlu0 0
      %3473 = vperm.xlu0 %3472, %v3394
      %v3474 = vpop.permute.xlu0 %3473
      %3477 = vset.pattern.permute.xlu0 0
      %3478 = vperm.xlu0 %3477, %v3395
      %v3479 = vpop.permute.xlu0 %3478
      %3482 = vset.pattern.permute.xlu0 0
      %3483 = vperm.xlu0 %3482, %v3396
      %v3484 = vpop.permute.xlu0 %3483
      %3487 = vset.pattern.permute.xlu0 0
      %3488 = vperm.xlu0 %3487, %v3397
      %v3489 = vpop.permute.xlu0 %3488
      %3492 = vset.pattern.permute.xlu0 0
      %3493 = vperm.xlu0 %3492, %v3398
      %v3494 = vpop.permute.xlu0 %3493
      %3497 = vset.pattern.permute.xlu0 0
      %3498 = vperm.xlu0 %3497, %v3399
      %v3499 = vpop.permute.xlu0 %3498
      %3502 = vset.pattern.permute.xlu0 0
      %3503 = vperm.xlu0 %3502, %v3400
      %v3504 = vpop.permute.xlu0 %3503
      %v3506 = vmul.f32 %v3189, %v3404
      %v3507 = vmul.f32 %v3192, %v3409
      %v3508 = vmul.f32 %v3197, %v3414
      %v3509 = vmul.f32 %v3200, %v3419
      %v3510 = vmul.f32 %v3205, %v3424
      %v3511 = vmul.f32 %v3208, %v3429
      %v3512 = vmul.f32 %v3213, %v3434
      %v3513 = vmul.f32 %v3216, %v3439
      %v3514 = vmul.f32 %v3221, %v3444
      %v3515 = vmul.f32 %v3224, %v3449
      %v3516 = vmul.f32 %v3229, %v3454
      %v3517 = vmul.f32 %v3232, %v3459
      %v3518 = vmul.f32 %v3237, %v3464
      %v3519 = vmul.f32 %v3240, %v3469
      %v3520 = vmul.f32 %v3245, %v3474
      %v3521 = vmul.f32 %v3248, %v3479
      %v3522 = vmul.f32 %v3253, %v3484
      %v3523 = vmul.f32 %v3256, %v3489
      %v3524 = vmul.f32 %v3261, %v3494
      %v3525 = vmul.f32 %v3264, %v3499
      %v3526 = vmul.f32 %v3269, %v3504
      %v3527 = vsel %vm1627, %v3506, 0.0
      %v3528 = vsel %vm1627, %v3507, 0.0
      %v3529 = vadd.f32 %v3527, %v3528
      %v3530 = vsel %vm1627, %v3508, 0.0
      %v3531 = vadd.f32 %v3529, %v3530
      %v3532 = vsel %vm1627, %v3509, 0.0
      %v3533 = vadd.f32 %v3531, %v3532
      %v3534 = vsel %vm1627, %v3510, 0.0
      %v3535 = vadd.f32 %v3533, %v3534
      %v3536 = vsel %vm1627, %v3511, 0.0
      %v3537 = vadd.f32 %v3535, %v3536
      %v3538 = vsel %vm1627, %v3512, 0.0
      %v3539 = vadd.f32 %v3537, %v3538
      %v3540 = vsel %vm1627, %v3513, 0.0
      %v3541 = vadd.f32 %v3539, %v3540
      %v3542 = vsel %vm1627, %v3514, 0.0
      %v3543 = vadd.f32 %v3541, %v3542
      %v3544 = vsel %vm1627, %v3515, 0.0
      %v3545 = vadd.f32 %v3543, %v3544
      %v3546 = vsel %vm1627, %v3516, 0.0
      %v3547 = vadd.f32 %v3545, %v3546
      %v3548 = vsel %vm1627, %v3517, 0.0
      %v3549 = vadd.f32 %v3547, %v3548
      %v3550 = vsel %vm1627, %v3518, 0.0
      %v3551 = vadd.f32 %v3549, %v3550
      %v3552 = vsel %vm1627, %v3519, 0.0
      %v3553 = vadd.f32 %v3551, %v3552
      %v3554 = vsel %vm1627, %v3520, 0.0
      %v3555 = vadd.f32 %v3553, %v3554
      %v3556 = vsel %vm1627, %v3521, 0.0
      %v3557 = vadd.f32 %v3555, %v3556
      %v3558 = vsel %vm1627, %v3522, 0.0
      %v3559 = vadd.f32 %v3557, %v3558
      %v3560 = vsel %vm1627, %v3523, 0.0
      %v3561 = vadd.f32 %v3559, %v3560
      %v3562 = vsel %vm1627, %v3524, 0.0
      %v3563 = vadd.f32 %v3561, %v3562
      %v3564 = vsel %vm1627, %v3525, 0.0
      %v3565 = vadd.f32 %v3563, %v3564
      %v3566 = vsel %vm1627, %v3526, 0.0
      %v3567 = vadd.f32 %v3565, %v3566
      %v3568 = vrot.slane %v3567, 4
      %v3569 = vadd.f32 %v3567, %v3568
      %v3570 = vrot.slane %v3569, 2
      %v3571 = vadd.f32 %v3569, %v3570
      %v3572 = vrot.slane %v3571, 1
      %v3573 = vadd.f32 %v3571, %v3572
      %3574 = vst.msk [vmem:[%s432] sm:$0x1] %vm446, %v3573
      %v3575 = vmul.f32 %v3506, %v3189
      %v3576 = vmul.f32 %v3507, %v3192
      %v3577 = vmul.f32 %v3508, %v3197
      %v3578 = vmul.f32 %v3509, %v3200
      %v3579 = vmul.f32 %v3510, %v3205
      %v3580 = vmul.f32 %v3511, %v3208
      %v3581 = vmul.f32 %v3512, %v3213
      %v3582 = vmul.f32 %v3513, %v3216
      %v3583 = vmul.f32 %v3514, %v3221
      %v3584 = vmul.f32 %v3515, %v3224
      %v3585 = vmul.f32 %v3516, %v3229
      %v3586 = vmul.f32 %v3517, %v3232
      %v3587 = vmul.f32 %v3518, %v3237
      %v3588 = vmul.f32 %v3519, %v3240
      %v3589 = vmul.f32 %v3520, %v3245
      %v3590 = vmul.f32 %v3521, %v3248
      %v3591 = vmul.f32 %v3522, %v3253
      %v3592 = vmul.f32 %v3523, %v3256
      %v3593 = vmul.f32 %v3524, %v3261
      %v3594 = vmul.f32 %v3525, %v3264
      %v3595 = vmul.f32 %v3526, %v3269
      %v3596 = vsel %vm1627, %v3575, 0.0
      %v3597 = vsel %vm1627, %v3576, 0.0
      %v3598 = vadd.f32 %v3596, %v3597
      %v3599 = vsel %vm1627, %v3577, 0.0
      %v3600 = vadd.f32 %v3598, %v3599
      %v3601 = vsel %vm1627, %v3578, 0.0
      %v3602 = vadd.f32 %v3600, %v3601
      %v3603 = vsel %vm1627, %v3579, 0.0
      %v3604 = vadd.f32 %v3602, %v3603
      %v3605 = vsel %vm1627, %v3580, 0.0
      %v3606 = vadd.f32 %v3604, %v3605
      %v3607 = vsel %vm1627, %v3581, 0.0
      %v3608 = vadd.f32 %v3606, %v3607
      %v3609 = vsel %vm1627, %v3582, 0.0
      %v3610 = vadd.f32 %v3608, %v3609
      %v3611 = vsel %vm1627, %v3583, 0.0
      %v3612 = vadd.f32 %v3610, %v3611
      %v3613 = vsel %vm1627, %v3584, 0.0
      %v3614 = vadd.f32 %v3612, %v3613
      %v3615 = vsel %vm1627, %v3585, 0.0
      %v3616 = vadd.f32 %v3614, %v3615
      %v3617 = vsel %vm1627, %v3586, 0.0
      %v3618 = vadd.f32 %v3616, %v3617
      %v3619 = vsel %vm1627, %v3587, 0.0
      %v3620 = vadd.f32 %v3618, %v3619
      %v3621 = vsel %vm1627, %v3588, 0.0
      %v3622 = vadd.f32 %v3620, %v3621
      %v3623 = vsel %vm1627, %v3589, 0.0
      %v3624 = vadd.f32 %v3622, %v3623
      %v3625 = vsel %vm1627, %v3590, 0.0
      %v3626 = vadd.f32 %v3624, %v3625
      %v3627 = vsel %vm1627, %v3591, 0.0
      %v3628 = vadd.f32 %v3626, %v3627
      %v3629 = vsel %vm1627, %v3592, 0.0
      %v3630 = vadd.f32 %v3628, %v3629
      %v3631 = vsel %vm1627, %v3593, 0.0
      %v3632 = vadd.f32 %v3630, %v3631
      %v3633 = vsel %vm1627, %v3594, 0.0
      %v3634 = vadd.f32 %v3632, %v3633
      %v3635 = vsel %vm1627, %v3595, 0.0
      %v3636 = vadd.f32 %v3634, %v3635
      %v3637 = vrot.slane %v3636, 4
      %v3638 = vadd.f32 %v3636, %v3637
      %v3639 = vrot.slane %v3638, 2
      %v3640 = vadd.f32 %v3638, %v3639
      %v3641 = vrot.slane %v3640, 1
      %v3642 = vadd.f32 %v3640, %v3641
      %3643 = vst.msk [vmem:[%s432 + $0x1] sm:$0x1] %vm446, %v3642
      %p3644 = scmp.lt.s32.totalorder %s22, 1
      %s3645 = scalar_select %p3644, %s22, 1
      %p3646 = scmp.lt.s32.totalorder %s23, 0
      %s3647 = scalar_select %p3646, %s23, 0
      %s3648 = smul.addr %s3647, 21
      %s3649 = smul.addr %s3645, 21
      %s3650 = sadd.s32 %s3648, %s3649
      %s3651 = smul.addr %s3650, 4
      %s3652 = scalar_lea.vmem %s5, %s3651
      %p3653 = scmp.lt.s32.totalorder %s22, 1
      %s3654 = scalar_select %p3653, %s22, 1
      %p3655 = scmp.lt.s32.totalorder %s23, 0
      %s3656 = scalar_select %p3655, %s23, 0
      %s3657 = sadd.s32 %s3656, %s3654
      %s3658 = smul.addr %s3657, 2
      %s3659 = scalar_lea.vmem %s6, %s3658
      // Predicated region
      $region41: #{send_down.8} parent=39 // pred_check
        %p3660 = pneg %p184
      $region42: #{send_down.8} parent=39 // pred_check_branch
        %3662 = sbr.rel (%p3660) target = $region44
      $region43: #{send_down.8} parent=39 // pred_region
        _
      $region44: #{send_down.8} parent=39 // pred_fallthru
        _
      // Predicated region
      $region45: #{send_down.8} parent=39 // pred_check
        %p3663 = pneg %p212
      $region46: #{send_down.8} parent=39 // pred_check_branch
        %3665 = sbr.rel (%p3663) target = $region48
      $region47: #{send_down.8} parent=39 // pred_region
        _
      $region48: #{send_down.8} parent=39 // pred_fallthru
        _
    $region40: #{send_down.8} parent=5 // pred_fallthru
      _
    %p3666 = scmp.le.s32.totalorder 2, %s13
    // Predicated region
    $region49: #{send_down.8} parent=5 // pred_check
      %p3667 = pneg %p3666
    $region50: #{send_down.8} parent=5 // pred_check_branch
      %3669 = sbr.rel (%p3667) target = $region52
    $region51: #{send_down.8} parent=5 // pred_region
      %s3670 = ssub.s32 %s13, 2
      // Predicated region
      $region53: #{send_down.8} parent=51 // pred_check
        %p3671 = pneg %p190
      $region54: #{send_down.8} parent=51 // pred_check_branch
        %3673 = sbr.rel (%p3671) target = $region56
      $region55: #{send_down.8} parent=51 // pred_region
        %p3674 = scmp.lt.s32.totalorder %s24, 1
        %s3675 = scalar_select %p3674, %s24, 1
        %p3676 = scmp.lt.s32.totalorder %s25, 0
        %s3677 = scalar_select %p3676, %s25, 0
        %s3678 = smul.addr %s3677, 21
        %s3679 = smul.addr %s3675, 21
        %s3680 = sadd.s32 %s3678, %s3679
        %s3681 = smul.addr %s3680, 4
        %s3682 = scalar_lea.vmem %s5, %s3681
      $region56: #{send_down.8} parent=51 // pred_fallthru
        _
      // Predicated region
      $region57: #{send_down.8} parent=51 // pred_check
        %p3683 = pneg %p218
      $region58: #{send_down.8} parent=51 // pred_check_branch
        %3685 = sbr.rel (%p3683) target = $region60
      $region59: #{send_down.8} parent=51 // pred_region
        %p3686 = scmp.lt.s32.totalorder %s24, 1
        %s3687 = scalar_select %p3686, %s24, 1
        %p3688 = scmp.lt.s32.totalorder %s25, 0
        %s3689 = scalar_select %p3688, %s25, 0
        %s3690 = sadd.s32 %s3689, %s3687
        %s3691 = smul.addr %s3690, 2
        %s3692 = scalar_lea.vmem %s6, %s3691
      $region60: #{send_down.8} parent=51 // pred_fallthru
        _
    $region52: #{send_down.8} parent=5 // pred_fallthru
      _
  $region6: #{send_down.8} parent=0 // loop_footer
    %s17 = sadd.s32 1, %s13
  $region7: #{send_down.8} parent=0 // loop_footer_branch
    %12 = sbr.rel target = $region3
  $region8: #{send_down.8} parent=0 // loop_exit
    _

</llo_original>
